<compile_context>
chip_gen: v5e
topology: v5e:2x2
jax: 0.10.0
libtpu: 0.0.40
codegen_flags: <defaults>
</compile_context>

<pallas_src>
import jax
import jax.numpy as jnp
from jax import lax
from jax.experimental import pallas as pl
from jax.experimental.pallas import tpu as pltpu

IMAGE_SIZE = 28
LATENT_DIM = 100
NUM_CLASSES = 10
BN_EPS = 1e-5
LEAKY_SLOPE = 0.2

IN_FEATURES = 2 * LATENT_DIM                       # 200
EMB_OFFSET = 128                                   # lane-aligned start of the emb slice
PADDED_IN = 256                                    # K of first matmul, lane/MXU aligned
H1, H2, H3 = 256, 512, 1024
OUT_FEATURES = IMAGE_SIZE * IMAGE_SIZE             # 784 (stored unpadded)


def _linear_lrelu_bn(x_bf16, w, b, g, beta):
    """Linear -> LeakyReLU(0.2) -> BatchNorm1d (training-mode batch stats), BN folded.

    Matmul inputs are bf16 (MXU native); accumulation and all elementwise math in f32.
    """
    h = jnp.dot(x_bf16, w, preferred_element_type=jnp.float32) + b
    h = jnp.where(h > 0, h, LEAKY_SLOPE * h)
    mu = jnp.mean(h, axis=0, keepdims=True)
    hc = h - mu
    var = jnp.mean(hc * hc, axis=0, keepdims=True)           # biased batch variance
    scale = g * lax.rsqrt(var + BN_EPS)                       # rsqrt -> EUP (free slot)
    return hc * scale + beta


def generator_kernel(
    labels_ref, noise_ref, emb_ref,
    b1_ref, g1_ref, be1_ref,
    b2_ref, g2_ref, be2_ref,
    b3_ref, g3_ref, be3_ref,
    b4_ref,
    w1_hbm, w2_hbm, w3_hbm, w4_hbm,
    o_ref,
    xin_ref, w1_vmem, w2_vmem, w3_vmem, w4_vmem, sems,
):
    # Kick off all weight streams immediately; wait on each right before its own matmul so
    # layer-i compute overlaps the remaining weight DMA.
    cp1 = pltpu.make_async_copy(w1_hbm, w1_vmem, sems.at[0]); cp1.start()
    cp2 = pltpu.make_async_copy(w2_hbm, w2_vmem, sems.at[1]); cp2.start()
    cp3 = pltpu.make_async_copy(w3_hbm, w3_vmem, sems.at[2]); cp3.start()
    cp4 = pltpu.make_async_copy(w4_hbm, w4_vmem, sems.at[3]); cp4.start()

    B = noise_ref.shape[0]

    # Fused glue: embedding lookup as an exact one-hot matmul (one-hot * f32 table is exact),
    # then concat + zero-pad into the (B, 256) VMEM input slab at 128-aligned lane offsets.
    onehot = (labels_ref[...] ==
              lax.broadcasted_iota(jnp.int32, (B, NUM_CLASSES), 1)).astype(jnp.float32)
    emb = jnp.dot(onehot, emb_ref[...], preferred_element_type=jnp.float32)   # (B, 100)

    xin_ref[...] = jnp.zeros_like(xin_ref)
    xin_ref[:, 0:LATENT_DIM] = noise_ref[...]                                 # lanes [0,100)
    xin_ref[:, EMB_OFFSET:EMB_OFFSET + LATENT_DIM] = emb                      # lanes [128,228)
    x = xin_ref[...].astype(jnp.bfloat16)

    cp1.wait()
    h = _linear_lrelu_bn(x, w1_vmem[...], b1_ref[...], g1_ref[...], be1_ref[...])        # (B, 256)
    cp2.wait()
    h = _linear_lrelu_bn(h.astype(jnp.bfloat16),
                         w2_vmem[...], b2_ref[...], g2_ref[...], be2_ref[...])           # (B, 512)
    cp3.wait()
    h = _linear_lrelu_bn(h.astype(jnp.bfloat16),
                         w3_vmem[...], b3_ref[...], g3_ref[...], be3_ref[...])           # (B, 1024)
    cp4.wait()
    out = jnp.dot(h.astype(jnp.bfloat16), w4_vmem[...],
                  preferred_element_type=jnp.float32) + b4_ref[...]                      # (B, 784)
    o_ref[...] = jnp.tanh(out)


def init_params(key):
    """Deterministic synthetic parameters with PyTorch-module shapes / init (all f32)."""
    dims = [(IN_FEATURES, H1), (H1, H2), (H2, H3), (H3, OUT_FEATURES)]
    keys = jax.random.split(key, 1 + len(dims))
    params = {"label_emb": jax.random.normal(keys[0], (NUM_CLASSES, LATENT_DIM), jnp.float32)}
    layers = []
    for i, (fan_in, fan_out) in enumerate(dims):
        k_w, k_b = jax.random.split(keys[1 + i])
        bound = 1.0 / jnp.sqrt(fan_in)
        # Weights stored transposed vs PyTorch, i.e. (in, out), so y = x @ W + b.
        w = jax.random.uniform(k_w, (fan_in, fan_out), jnp.float32, -bound, bound)
        b = jax.random.uniform(k_b, (1, fan_out), jnp.float32, -bound, bound)
        layer = {"w": w, "b": b}
        if i < 3:  # first three blocks have BatchNorm1d (gamma=1, beta=0 by default)
            layer["gamma"] = jnp.ones((1, fan_out), jnp.float32)
            layer["beta"] = jnp.zeros((1, fan_out), jnp.float32)
        layers.append(layer)
    params["layers"] = layers
    return params


def prepare_kernel_params(params):
    """One-time conversion: permute/zero-pad w1 rows to the in-kernel input layout,
    cast matmul weights to bf16 (they stay in HBM and are manually DMA'd)."""
    l1, l2, l3, l4 = params["layers"]

    # w1 row layout matches the kernel's input slab: rows [0,100) <- noise weights,
    # rows [128,228) <- label-emb weights, remaining rows zero (no-op padding).
    w1 = jnp.zeros((PADDED_IN, H1), jnp.float32)
    w1 = w1.at[0:LATENT_DIM, :].set(l1["w"][:LATENT_DIM])
    w1 = w1.at[EMB_OFFSET:EMB_OFFSET + LATENT_DIM, :].set(l1["w"][LATENT_DIM:])

    return {
        "emb": params["label_emb"],                      # (10, 100) f32, VMEM input
        "vmem_ops": (
            l1["b"], l1["gamma"], l1["beta"],
            l2["b"], l2["gamma"], l2["beta"],
            l3["b"], l3["gamma"], l3["beta"],
            l4["b"],
        ),
        "hbm_weights": (                                 # streamed via manual DMA
            w1.astype(jnp.bfloat16),                     # (256, 256)
            l2["w"].astype(jnp.bfloat16),                # (256, 512)
            l3["w"].astype(jnp.bfloat16),                # (512, 1024)
            l4["w"].astype(jnp.bfloat16),                # (1024, 784): NOT zero-padded
        ),
    }


@jax.jit
def generator_forward(kparams, noise, labels):
    B = noise.shape[0]
    labels2d = labels.reshape(B, 1).astype(jnp.int32)

    vmem = pl.BlockSpec(memory_space=pltpu.MemorySpace.VMEM)
    hbm = pl.BlockSpec(memory_space=pl.ANY)

    operands = (labels2d, noise, kparams["emb"]) + kparams["vmem_ops"] + kparams["hbm_weights"]

    weight_bytes = 2 * (PADDED_IN * H1 + H1 * H2 + H2 * H3 + H3 * OUT_FEATURES)
    small_bytes = 4 * (NUM_CLASSES * LATENT_DIM + 3 * (H1 + H2 + H3) + OUT_FEATURES)
    io_bytes = B * 4 * (LATENT_DIM + 1 + OUT_FEATURES)
    cost = pl.CostEstimate(
        flops=2 * B * (NUM_CLASSES * LATENT_DIM + PADDED_IN * H1 + H1 * H2
                       + H2 * H3 + H3 * OUT_FEATURES),
        transcendentals=B * OUT_FEATURES + (H1 + H2 + H3),
        bytes_accessed=weight_bytes + small_bytes + io_bytes,
    )

    img_flat = pl.pallas_call(
        generator_kernel,
        out_shape=jax.ShapeDtypeStruct((B, OUT_FEATURES), jnp.float32),
        in_specs=[vmem] * 13 + [hbm] * 4,
        out_specs=vmem,
        scratch_shapes=[
            pltpu.VMEM((B, PADDED_IN), jnp.float32),         # fused-glue input slab
            pltpu.VMEM((PADDED_IN, H1), jnp.bfloat16),       # w1 landing buffer
            pltpu.VMEM((H1, H2), jnp.bfloat16),              # w2
            pltpu.VMEM((H2, H3), jnp.bfloat16),              # w3
            pltpu.VMEM((H3, OUT_FEATURES), jnp.bfloat16),    # w4
            pltpu.SemaphoreType.DMA((4,)),
        ],
        compiler_params=pltpu.CompilerParams(vmem_limit_bytes=32 << 20),
        cost_estimate=cost,
    )(*operands)

    return img_flat.reshape(B, 1, IMAGE_SIZE, IMAGE_SIZE)    # NCHW, like PyTorch


if __name__ == "__main__":
    key = jax.random.PRNGKey(0)
    k_params, k_noise, k_labels = jax.random.split(key, 3)

    params = init_params(k_params)
    kparams = prepare_kernel_params(params)

    B = 8
    noise = jax.random.normal(k_noise, (B, LATENT_DIM), jnp.float32)
    labels = jax.random.randint(k_labels, (B,), 0, NUM_CLASSES, jnp.int32)

    img = generator_forward(kparams, noise, labels)
    jax.block_until_ready(img)

    assert img.shape == (B, 1, IMAGE_SIZE, IMAGE_SIZE), img.shape
    assert bool(jnp.all(jnp.isfinite(img)))
    assert bool(jnp.all(jnp.abs(img) <= 1.0))  # tanh output range

    print("KERNEL_OK")
</pallas_src>

<mosaic_0001>
module attributes {stable_mosaic.version = 11 : i64} {
  func.func @generator_kernel(%arg0: memref<8x1xi32, #tpu.memory_space<vmem>>, %arg1: memref<8x100xf32, #tpu.memory_space<vmem>>, %arg2: memref<10x100xf32, #tpu.memory_space<vmem>>, %arg3: memref<1x256xf32, #tpu.memory_space<vmem>>, %arg4: memref<1x256xf32, #tpu.memory_space<vmem>>, %arg5: memref<1x256xf32, #tpu.memory_space<vmem>>, %arg6: memref<1x512xf32, #tpu.memory_space<vmem>>, %arg7: memref<1x512xf32, #tpu.memory_space<vmem>>, %arg8: memref<1x512xf32, #tpu.memory_space<vmem>>, %arg9: memref<1x1024xf32, #tpu.memory_space<vmem>>, %arg10: memref<1x1024xf32, #tpu.memory_space<vmem>>, %arg11: memref<1x1024xf32, #tpu.memory_space<vmem>>, %arg12: memref<1x784xf32, #tpu.memory_space<vmem>>, %arg13: memref<256x256xbf16, #tpu.memory_space<any>>, %arg14: memref<256x512xbf16, #tpu.memory_space<any>>, %arg15: memref<512x1024xbf16, #tpu.memory_space<any>>, %arg16: memref<1024x784xbf16, #tpu.memory_space<any>>, %arg17: memref<8x784xf32, #tpu.memory_space<vmem>>, %arg18: memref<8x256xf32, #tpu.memory_space<vmem>>, %arg19: memref<256x256xbf16, #tpu.memory_space<vmem>>, %arg20: memref<256x512xbf16, #tpu.memory_space<vmem>>, %arg21: memref<512x1024xbf16, #tpu.memory_space<vmem>>, %arg22: memref<1024x784xbf16, #tpu.memory_space<vmem>>, %arg23: memref<4x!tpu.dma_semaphore, #tpu.memory_space<semaphore_mem>>) attributes {dimension_semantics = [], scalar_prefetch = 0 : i64, scratch_operands = 6 : i64, tpu.core_type = #tpu.core_type<tc>} {
    %c0_i32 = arith.constant 0 : i32
    %0 = tpu.memref_slice %arg23[%c0_i32] : memref<4x!tpu.dma_semaphore, #tpu.memory_space<semaphore_mem>> -> memref<1x!tpu.dma_semaphore, #tpu.memory_space<semaphore_mem>>
    %1 = tpu.memref_squeeze %0 : memref<1x!tpu.dma_semaphore, #tpu.memory_space<semaphore_mem>> -> memref<!tpu.dma_semaphore, #tpu.memory_space<semaphore_mem>>
    tpu.enqueue_dma source(%arg13 : memref<256x256xbf16, #tpu.memory_space<any>>) target(%arg19 : memref<256x256xbf16, #tpu.memory_space<vmem>>) target_semaphore(%1 : memref<!tpu.dma_semaphore, #tpu.memory_space<semaphore_mem>>)
    %c1_i32 = arith.constant 1 : i32
    %2 = tpu.memref_slice %arg23[%c1_i32] : memref<4x!tpu.dma_semaphore, #tpu.memory_space<semaphore_mem>> -> memref<1x!tpu.dma_semaphore, #tpu.memory_space<semaphore_mem>>
    %3 = tpu.memref_squeeze %2 : memref<1x!tpu.dma_semaphore, #tpu.memory_space<semaphore_mem>> -> memref<!tpu.dma_semaphore, #tpu.memory_space<semaphore_mem>>
    tpu.enqueue_dma source(%arg14 : memref<256x512xbf16, #tpu.memory_space<any>>) target(%arg20 : memref<256x512xbf16, #tpu.memory_space<vmem>>) target_semaphore(%3 : memref<!tpu.dma_semaphore, #tpu.memory_space<semaphore_mem>>)
    %c2_i32 = arith.constant 2 : i32
    %4 = tpu.memref_slice %arg23[%c2_i32] : memref<4x!tpu.dma_semaphore, #tpu.memory_space<semaphore_mem>> -> memref<1x!tpu.dma_semaphore, #tpu.memory_space<semaphore_mem>>
    %5 = tpu.memref_squeeze %4 : memref<1x!tpu.dma_semaphore, #tpu.memory_space<semaphore_mem>> -> memref<!tpu.dma_semaphore, #tpu.memory_space<semaphore_mem>>
    tpu.enqueue_dma source(%arg15 : memref<512x1024xbf16, #tpu.memory_space<any>>) target(%arg21 : memref<512x1024xbf16, #tpu.memory_space<vmem>>) target_semaphore(%5 : memref<!tpu.dma_semaphore, #tpu.memory_space<semaphore_mem>>)
    %c3_i32 = arith.constant 3 : i32
    %6 = tpu.memref_slice %arg23[%c3_i32] : memref<4x!tpu.dma_semaphore, #tpu.memory_space<semaphore_mem>> -> memref<1x!tpu.dma_semaphore, #tpu.memory_space<semaphore_mem>>
    %7 = tpu.memref_squeeze %6 : memref<1x!tpu.dma_semaphore, #tpu.memory_space<semaphore_mem>> -> memref<!tpu.dma_semaphore, #tpu.memory_space<semaphore_mem>>
    tpu.enqueue_dma source(%arg16 : memref<1024x784xbf16, #tpu.memory_space<any>>) target(%arg22 : memref<1024x784xbf16, #tpu.memory_space<vmem>>) target_semaphore(%7 : memref<!tpu.dma_semaphore, #tpu.memory_space<semaphore_mem>>)
    %c0 = arith.constant 0 : index
    %c0_0 = arith.constant 0 : index
    %8 = vector.load %arg0[%c0, %c0_0] : memref<8x1xi32, #tpu.memory_space<vmem>>, vector<8x1xi32>
    %9 = tpu.iota {dimensions = array<i32: 1>} : vector<8x10xi32>
    %10 = vector.broadcast %8 : vector<8x1xi32> to vector<8x10xi32>
    %11 = arith.cmpi eq, %10, %9 : vector<8x10xi32>
    %12 = arith.extui %11 : vector<8x10xi1> to vector<8x10xi32>
    %13 = arith.sitofp %12 : vector<8x10xi32> to vector<8x10xf32>
    %c0_1 = arith.constant 0 : index
    %c0_2 = arith.constant 0 : index
    %14 = vector.load %arg2[%c0_1, %c0_2] : memref<10x100xf32, #tpu.memory_space<vmem>>, vector<10x100xf32>
    %cst = arith.constant dense<0.000000e+00> : vector<8x100xf32>
    %15 = tpu.matmul %13, %14, %cst {dimension_numbers = #tpu.dot_dimension_numbers<[1], [0], [0], [1], [0, 0, 1, 1], [], []>} : vector<8x10xf32>, vector<10x100xf32>, vector<8x100xf32> -> vector<8x100xf32>
    %cst_3 = arith.constant 0.000000e+00 : f32
    %16 = vector.broadcast %cst_3 : f32 to vector<8x256xf32>
    %c0_4 = arith.constant 0 : index
    %c0_5 = arith.constant 0 : index
    %17 = vector.load %arg18[%c0_4, %c0_5] : memref<8x256xf32, #tpu.memory_space<vmem>>, vector<8x256xf32>
    tpu.vector_store %arg18[%c0_4, %c0_5], %16 {strides = array<i32>} : memref<8x256xf32, #tpu.memory_space<vmem>>, vector<8x256xf32>,
    %c0_6 = arith.constant 0 : index
    %c0_7 = arith.constant 0 : index
    %18 = vector.load %arg1[%c0_6, %c0_7] : memref<8x100xf32, #tpu.memory_space<vmem>>, vector<8x100xf32>
    %c0_8 = arith.constant 0 : index
    %c0_9 = arith.constant 0 : index
    %19 = vector.load %arg18[%c0_8, %c0_9] : memref<8x256xf32, #tpu.memory_space<vmem>>, vector<8x100xf32>
    tpu.vector_store %arg18[%c0_8, %c0_9], %18 {strides = array<i32>} : memref<8x256xf32, #tpu.memory_space<vmem>>, vector<8x100xf32>,
    %c0_10 = arith.constant 0 : index
    %c128 = arith.constant 128 : index
    %20 = vector.load %arg18[%c0_10, %c128] : memref<8x256xf32, #tpu.memory_space<vmem>>, vector<8x100xf32>
    tpu.vector_store %arg18[%c0_10, %c128], %15 {strides = array<i32>} : memref<8x256xf32, #tpu.memory_space<vmem>>, vector<8x100xf32>,
    %c0_11 = arith.constant 0 : index
    %c0_12 = arith.constant 0 : index
    %21 = vector.load %arg18[%c0_11, %c0_12] : memref<8x256xf32, #tpu.memory_space<vmem>>, vector<8x256xf32>
    %22 = arith.truncf %21 : vector<8x256xf32> to vector<8x256xbf16>
    %c0_i32_13 = arith.constant 0 : i32
    %23 = tpu.memref_slice %arg23[%c0_i32_13] : memref<4x!tpu.dma_semaphore, #tpu.memory_space<semaphore_mem>> -> memref<1x!tpu.dma_semaphore, #tpu.memory_space<semaphore_mem>>
    %24 = tpu.memref_squeeze %23 : memref<1x!tpu.dma_semaphore, #tpu.memory_space<semaphore_mem>> -> memref<!tpu.dma_semaphore, #tpu.memory_space<semaphore_mem>>
    tpu.wait_dma2 semaphore(%24 : memref<!tpu.dma_semaphore, #tpu.memory_space<semaphore_mem>>) src(%arg13 : memref<256x256xbf16, #tpu.memory_space<any>>) dst(%arg19 : memref<256x256xbf16, #tpu.memory_space<vmem>>)
    %c0_14 = arith.constant 0 : index
    %c0_15 = arith.constant 0 : index
    %25 = vector.load %arg19[%c0_14, %c0_15] : memref<256x256xbf16, #tpu.memory_space<vmem>>, vector<256x256xbf16>
    %c0_16 = arith.constant 0 : index
    %c0_17 = arith.constant 0 : index
    %26 = vector.load %arg3[%c0_16, %c0_17] : memref<1x256xf32, #tpu.memory_space<vmem>>, vector<1x256xf32>
    %c0_18 = arith.constant 0 : index
    %c0_19 = arith.constant 0 : index
    %27 = vector.load %arg4[%c0_18, %c0_19] : memref<1x256xf32, #tpu.memory_space<vmem>>, vector<1x256xf32>
    %c0_20 = arith.constant 0 : index
    %c0_21 = arith.constant 0 : index
    %28 = vector.load %arg5[%c0_20, %c0_21] : memref<1x256xf32, #tpu.memory_space<vmem>>, vector<1x256xf32>
    %cst_22 = arith.constant dense<0.000000e+00> : vector<8x256xf32>
    %29 = tpu.matmul %22, %25, %cst_22 {dimension_numbers = #tpu.dot_dimension_numbers<[1], [0], [0], [1], [0, 0, 1, 1], [], []>} : vector<8x256xbf16>, vector<256x256xbf16>, vector<8x256xf32> -> vector<8x256xf32>
    %30 = vector.broadcast %26 : vector<1x256xf32> to vector<8x256xf32>
    %31 = arith.addf %29, %30 : vector<8x256xf32>
    %cst_23 = arith.constant 0.000000e+00 : f32
    %32 = vector.broadcast %cst_23 : f32 to vector<8x256xf32>
    %33 = arith.cmpf ogt, %31, %32 : vector<8x256xf32>
    %cst_24 = arith.constant 2.000000e-01 : f32
    %34 = vector.broadcast %cst_24 : f32 to vector<8x256xf32>
    %35 = arith.mulf %34, %31 : vector<8x256xf32>
    %36 = arith.select %33, %31, %35 : vector<8x256xi1>, vector<8x256xf32>
    %cst_25 = arith.constant dense<0.000000e+00> : vector<256xf32>
    %37 = vector.multi_reduction <add>, %36, %cst_25 [0] : vector<8x256xf32> to vector<256xf32>
    %38 = vector.shape_cast %37 : vector<256xf32> to vector<1x256xf32>
    %cst_26 = arith.constant 8.000000e+00 : f32
    %39 = vector.broadcast %cst_26 : f32 to vector<1x256xf32>
    %40 = arith.divf %38, %39 : vector<1x256xf32>
    %41 = vector.broadcast %40 : vector<1x256xf32> to vector<8x256xf32>
    %42 = arith.subf %36, %41 : vector<8x256xf32>
    %43 = arith.mulf %42, %42 : vector<8x256xf32>
    %cst_27 = arith.constant dense<0.000000e+00> : vector<256xf32>
    %44 = vector.multi_reduction <add>, %43, %cst_27 [0] : vector<8x256xf32> to vector<256xf32>
    %45 = vector.shape_cast %44 : vector<256xf32> to vector<1x256xf32>
    %cst_28 = arith.constant 8.000000e+00 : f32
    %46 = vector.broadcast %cst_28 : f32 to vector<1x256xf32>
    %47 = arith.divf %45, %46 : vector<1x256xf32>
    %cst_29 = arith.constant 9.99999974E-6 : f32
    %48 = vector.broadcast %cst_29 : f32 to vector<1x256xf32>
    %49 = arith.addf %47, %48 : vector<1x256xf32>
    %50 = math.rsqrt %49 : vector<1x256xf32>
    %51 = arith.mulf %27, %50 : vector<1x256xf32>
    %52 = vector.broadcast %51 : vector<1x256xf32> to vector<8x256xf32>
    %53 = arith.mulf %42, %52 : vector<8x256xf32>
    %54 = vector.broadcast %28 : vector<1x256xf32> to vector<8x256xf32>
    %55 = arith.addf %53, %54 : vector<8x256xf32>
    %c1_i32_30 = arith.constant 1 : i32
    %56 = tpu.memref_slice %arg23[%c1_i32_30] : memref<4x!tpu.dma_semaphore, #tpu.memory_space<semaphore_mem>> -> memref<1x!tpu.dma_semaphore, #tpu.memory_space<semaphore_mem>>
    %57 = tpu.memref_squeeze %56 : memref<1x!tpu.dma_semaphore, #tpu.memory_space<semaphore_mem>> -> memref<!tpu.dma_semaphore, #tpu.memory_space<semaphore_mem>>
    tpu.wait_dma2 semaphore(%57 : memref<!tpu.dma_semaphore, #tpu.memory_space<semaphore_mem>>) src(%arg14 : memref<256x512xbf16, #tpu.memory_space<any>>) dst(%arg20 : memref<256x512xbf16, #tpu.memory_space<vmem>>)
    %58 = arith.truncf %55 : vector<8x256xf32> to vector<8x256xbf16>
    %c0_31 = arith.constant 0 : index
    %c0_32 = arith.constant 0 : index
    %59 = vector.load %arg20[%c0_31, %c0_32] : memref<256x512xbf16, #tpu.memory_space<vmem>>, vector<256x512xbf16>
    %c0_33 = arith.constant 0 : index
    %c0_34 = arith.constant 0 : index
    %60 = vector.load %arg6[%c0_33, %c0_34] : memref<1x512xf32, #tpu.memory_space<vmem>>, vector<1x512xf32>
    %c0_35 = arith.constant 0 : index
    %c0_36 = arith.constant 0 : index
    %61 = vector.load %arg7[%c0_35, %c0_36] : memref<1x512xf32, #tpu.memory_space<vmem>>, vector<1x512xf32>
    %c0_37 = arith.constant 0 : index
    %c0_38 = arith.constant 0 : index
    %62 = vector.load %arg8[%c0_37, %c0_38] : memref<1x512xf32, #tpu.memory_space<vmem>>, vector<1x512xf32>
    %cst_39 = arith.constant dense<0.000000e+00> : vector<8x512xf32>
    %63 = tpu.matmul %58, %59, %cst_39 {dimension_numbers = #tpu.dot_dimension_numbers<[1], [0], [0], [1], [0, 0, 1, 1], [], []>} : vector<8x256xbf16>, vector<256x512xbf16>, vector<8x512xf32> -> vector<8x512xf32>
    %64 = vector.broadcast %60 : vector<1x512xf32> to vector<8x512xf32>
    %65 = arith.addf %63, %64 : vector<8x512xf32>
    %cst_40 = arith.constant 0.000000e+00 : f32
    %66 = vector.broadcast %cst_40 : f32 to vector<8x512xf32>
    %67 = arith.cmpf ogt, %65, %66 : vector<8x512xf32>
    %cst_41 = arith.constant 2.000000e-01 : f32
    %68 = vector.broadcast %cst_41 : f32 to vector<8x512xf32>
    %69 = arith.mulf %68, %65 : vector<8x512xf32>
    %70 = arith.select %67, %65, %69 : vector<8x512xi1>, vector<8x512xf32>
    %cst_42 = arith.constant dense<0.000000e+00> : vector<512xf32>
    %71 = vector.multi_reduction <add>, %70, %cst_42 [0] : vector<8x512xf32> to vector<512xf32>
    %72 = vector.shape_cast %71 : vector<512xf32> to vector<1x512xf32>
    %cst_43 = arith.constant 8.000000e+00 : f32
    %73 = vector.broadcast %cst_43 : f32 to vector<1x512xf32>
    %74 = arith.divf %72, %73 : vector<1x512xf32>
    %75 = vector.broadcast %74 : vector<1x512xf32> to vector<8x512xf32>
    %76 = arith.subf %70, %75 : vector<8x512xf32>
    %77 = arith.mulf %76, %76 : vector<8x512xf32>
    %cst_44 = arith.constant dense<0.000000e+00> : vector<512xf32>
    %78 = vector.multi_reduction <add>, %77, %cst_44 [0] : vector<8x512xf32> to vector<512xf32>
    %79 = vector.shape_cast %78 : vector<512xf32> to vector<1x512xf32>
    %cst_45 = arith.constant 8.000000e+00 : f32
    %80 = vector.broadcast %cst_45 : f32 to vector<1x512xf32>
    %81 = arith.divf %79, %80 : vector<1x512xf32>
    %cst_46 = arith.constant 9.99999974E-6 : f32
    %82 = vector.broadcast %cst_46 : f32 to vector<1x512xf32>
    %83 = arith.addf %81, %82 : vector<1x512xf32>
    %84 = math.rsqrt %83 : vector<1x512xf32>
    %85 = arith.mulf %61, %84 : vector<1x512xf32>
    %86 = vector.broadcast %85 : vector<1x512xf32> to vector<8x512xf32>
    %87 = arith.mulf %76, %86 : vector<8x512xf32>
    %88 = vector.broadcast %62 : vector<1x512xf32> to vector<8x512xf32>
    %89 = arith.addf %87, %88 : vector<8x512xf32>
    %c2_i32_47 = arith.constant 2 : i32
    %90 = tpu.memref_slice %arg23[%c2_i32_47] : memref<4x!tpu.dma_semaphore, #tpu.memory_space<semaphore_mem>> -> memref<1x!tpu.dma_semaphore, #tpu.memory_space<semaphore_mem>>
    %91 = tpu.memref_squeeze %90 : memref<1x!tpu.dma_semaphore, #tpu.memory_space<semaphore_mem>> -> memref<!tpu.dma_semaphore, #tpu.memory_space<semaphore_mem>>
    tpu.wait_dma2 semaphore(%91 : memref<!tpu.dma_semaphore, #tpu.memory_space<semaphore_mem>>) src(%arg15 : memref<512x1024xbf16, #tpu.memory_space<any>>) dst(%arg21 : memref<512x1024xbf16, #tpu.memory_space<vmem>>)
    %92 = arith.truncf %89 : vector<8x512xf32> to vector<8x512xbf16>
    %c0_48 = arith.constant 0 : index
    %c0_49 = arith.constant 0 : index
    %93 = vector.load %arg21[%c0_48, %c0_49] : memref<512x1024xbf16, #tpu.memory_space<vmem>>, vector<512x1024xbf16>
    %c0_50 = arith.constant 0 : index
    %c0_51 = arith.constant 0 : index
    %94 = vector.load %arg9[%c0_50, %c0_51] : memref<1x1024xf32, #tpu.memory_space<vmem>>, vector<1x1024xf32>
    %c0_52 = arith.constant 0 : index
    %c0_53 = arith.constant 0 : index
    %95 = vector.load %arg10[%c0_52, %c0_53] : memref<1x1024xf32, #tpu.memory_space<vmem>>, vector<1x1024xf32>
    %c0_54 = arith.constant 0 : index
    %c0_55 = arith.constant 0 : index
    %96 = vector.load %arg11[%c0_54, %c0_55] : memref<1x1024xf32, #tpu.memory_space<vmem>>, vector<1x1024xf32>
    %cst_56 = arith.constant dense<0.000000e+00> : vector<8x1024xf32>
    %97 = tpu.matmul %92, %93, %cst_56 {dimension_numbers = #tpu.dot_dimension_numbers<[1], [0], [0], [1], [0, 0, 1, 1], [], []>} : vector<8x512xbf16>, vector<512x1024xbf16>, vector<8x1024xf32> -> vector<8x1024xf32>
    %98 = vector.broadcast %94 : vector<1x1024xf32> to vector<8x1024xf32>
    %99 = arith.addf %97, %98 : vector<8x1024xf32>
    %cst_57 = arith.constant 0.000000e+00 : f32
    %100 = vector.broadcast %cst_57 : f32 to vector<8x1024xf32>
    %101 = arith.cmpf ogt, %99, %100 : vector<8x1024xf32>
    %cst_58 = arith.constant 2.000000e-01 : f32
    %102 = vector.broadcast %cst_58 : f32 to vector<8x1024xf32>
    %103 = arith.mulf %102, %99 : vector<8x1024xf32>
    %104 = arith.select %101, %99, %103 : vector<8x1024xi1>, vector<8x1024xf32>
    %cst_59 = arith.constant dense<0.000000e+00> : vector<1024xf32>
    %105 = vector.multi_reduction <add>, %104, %cst_59 [0] : vector<8x1024xf32> to vector<1024xf32>
    %106 = vector.shape_cast %105 : vector<1024xf32> to vector<1x1024xf32>
    %cst_60 = arith.constant 8.000000e+00 : f32
    %107 = vector.broadcast %cst_60 : f32 to vector<1x1024xf32>
    %108 = arith.divf %106, %107 : vector<1x1024xf32>
    %109 = vector.broadcast %108 : vector<1x1024xf32> to vector<8x1024xf32>
    %110 = arith.subf %104, %109 : vector<8x1024xf32>
    %111 = arith.mulf %110, %110 : vector<8x1024xf32>
    %cst_61 = arith.constant dense<0.000000e+00> : vector<1024xf32>
    %112 = vector.multi_reduction <add>, %111, %cst_61 [0] : vector<8x1024xf32> to vector<1024xf32>
    %113 = vector.shape_cast %112 : vector<1024xf32> to vector<1x1024xf32>
    %cst_62 = arith.constant 8.000000e+00 : f32
    %114 = vector.broadcast %cst_62 : f32 to vector<1x1024xf32>
    %115 = arith.divf %113, %114 : vector<1x1024xf32>
    %cst_63 = arith.constant 9.99999974E-6 : f32
    %116 = vector.broadcast %cst_63 : f32 to vector<1x1024xf32>
    %117 = arith.addf %115, %116 : vector<1x1024xf32>
    %118 = math.rsqrt %117 : vector<1x1024xf32>
    %119 = arith.mulf %95, %118 : vector<1x1024xf32>
    %120 = vector.broadcast %119 : vector<1x1024xf32> to vector<8x1024xf32>
    %121 = arith.mulf %110, %120 : vector<8x1024xf32>
    %122 = vector.broadcast %96 : vector<1x1024xf32> to vector<8x1024xf32>
    %123 = arith.addf %121, %122 : vector<8x1024xf32>
    %c3_i32_64 = arith.constant 3 : i32
    %124 = tpu.memref_slice %arg23[%c3_i32_64] : memref<4x!tpu.dma_semaphore, #tpu.memory_space<semaphore_mem>> -> memref<1x!tpu.dma_semaphore, #tpu.memory_space<semaphore_mem>>
    %125 = tpu.memref_squeeze %124 : memref<1x!tpu.dma_semaphore, #tpu.memory_space<semaphore_mem>> -> memref<!tpu.dma_semaphore, #tpu.memory_space<semaphore_mem>>
    tpu.wait_dma2 semaphore(%125 : memref<!tpu.dma_semaphore, #tpu.memory_space<semaphore_mem>>) src(%arg16 : memref<1024x784xbf16, #tpu.memory_space<any>>) dst(%arg22 : memref<1024x784xbf16, #tpu.memory_space<vmem>>)
    %126 = arith.truncf %123 : vector<8x1024xf32> to vector<8x1024xbf16>
    %c0_65 = arith.constant 0 : index
    %c0_66 = arith.constant 0 : index
    %127 = vector.load %arg22[%c0_65, %c0_66] : memref<1024x784xbf16, #tpu.memory_space<vmem>>, vector<1024x784xbf16>
    %cst_67 = arith.constant dense<0.000000e+00> : vector<8x784xf32>
    %128 = tpu.matmul %126, %127, %cst_67 {dimension_numbers = #tpu.dot_dimension_numbers<[1], [0], [0], [1], [0, 0, 1, 1], [], []>} : vector<8x1024xbf16>, vector<1024x784xbf16>, vector<8x784xf32> -> vector<8x784xf32>
    %c0_68 = arith.constant 0 : index
    %c0_69 = arith.constant 0 : index
    %129 = vector.load %arg12[%c0_68, %c0_69] : memref<1x784xf32, #tpu.memory_space<vmem>>, vector<1x784xf32>
    %130 = vector.broadcast %129 : vector<1x784xf32> to vector<8x784xf32>
    %131 = arith.addf %128, %130 : vector<8x784xf32>
    %132 = math.tanh %131 : vector<8x784xf32>
    %c0_70 = arith.constant 0 : index
    %c0_71 = arith.constant 0 : index
    %133 = vector.load %arg17[%c0_70, %c0_71] : memref<8x784xf32, #tpu.memory_space<vmem>>, vector<8x784xf32>
    tpu.vector_store %arg17[%c0_70, %c0_71], %132 {strides = array<i32>} : memref<8x784xf32, #tpu.memory_space<vmem>>, vector<8x784xf32>,
    return
  }
}

</mosaic_0001>

<llo_original>
// kernel: generator_forward.1
$region0: #{generator_forward.1}
  #allocation0 [shape = 'u32[]', space=smem, size = 0x4, offset = 0x4, fixed_abs, tag = 'smem constant byte address 0x4 - core index']
  #allocation1 [shape = 'u32[72,128]{1,0:T(1,128)}', space=vmem, size = 0x9000, scoped, tag = 'internal scratch']
  #allocation2 [shape = 'f32[8,256]{1,0:T(8,128)}', space=vmem, size = 0x2000, scoped, tag = 'scratch operand']
  #allocation3 [shape = 'bf16[256,256]{1,0:T(8,128)(2,1)}', space=vmem, size = 0x20000, scoped, tag = 'scratch operand']
  #allocation4 [shape = 'bf16[256,512]{1,0:T(8,128)(2,1)}', space=vmem, size = 0x40000, scoped, tag = 'scratch operand']
  #allocation5 [shape = 'bf16[512,1024]{1,0:T(8,128)(2,1)}', space=vmem, size = 0x100000, scoped, tag = 'scratch operand']
  #allocation6 [shape = 'bf16[1024,784]{1,0:T(8,128)(2,1)}', space=vmem, size = 0x1c0000, scoped, tag = 'scratch operand']
  #allocation7 [shape = 's32[4]{0}', space=sflag, size = 0x10, scoped, tag = 'scratch operand']
  #allocation8 [shape = 's32[]', space=sflag, size = 0x4, offset = 0, fixed_abs, tag = 'sflag constant byte address 0x0 - dummy sync flag']
  #allocation9 [shape = 's32[]', space=sflag, size = 0x4, offset = 0, fixed_abs, tag = 'sflag constant byte address 0x0 - dummy sync flag']
  #allocation10 [shape = 's32[]', space=sflag, size = 0x4, offset = 0, fixed_abs, tag = 'sflag constant byte address 0x0 - dummy sync flag']
  #allocation11 [shape = 's32[]', space=sflag, size = 0x4, offset = 0, fixed_abs, tag = 'sflag constant byte address 0x0 - dummy sync flag']
  %s0 = inlined_call_operand.vmem [shape: s32[8,1], index: 0, kind: input, shape index: {}]
  %s1 = inlined_call_operand.vmem [shape: f32[8,100], index: 1, kind: input, shape index: {}]
  %s2 = inlined_call_operand.vmem [shape: f32[10,100], index: 2, kind: input, shape index: {}]
  %s3 = inlined_call_operand.vmem [shape: f32[1,256], index: 3, kind: input, shape index: {}]
  %s4 = inlined_call_operand.vmem [shape: f32[1,256], index: 4, kind: input, shape index: {}]
  %s5 = inlined_call_operand.vmem [shape: f32[1,256], index: 5, kind: input, shape index: {}]
  %s6 = inlined_call_operand.vmem [shape: f32[1,512], index: 6, kind: input, shape index: {}]
  %s7 = inlined_call_operand.vmem [shape: f32[1,512], index: 7, kind: input, shape index: {}]
  %s8 = inlined_call_operand.vmem [shape: f32[1,512], index: 8, kind: input, shape index: {}]
  %s9 = inlined_call_operand.vmem [shape: f32[1,1024], index: 9, kind: input, shape index: {}]
  %s10 = inlined_call_operand.vmem [shape: f32[1,1024], index: 10, kind: input, shape index: {}]
  %s11 = inlined_call_operand.vmem [shape: f32[1,1024], index: 11, kind: input, shape index: {}]
  %s12 = inlined_call_operand.vmem [shape: f32[1,784], index: 12, kind: input, shape index: {}]
  %s13 = inlined_call_operand.vmem [shape: bf16[256,256], index: 13, kind: input, shape index: {}]
  %s14 = inlined_call_operand.vmem [shape: bf16[256,512], index: 14, kind: input, shape index: {}]
  %s15 = inlined_call_operand.vmem [shape: bf16[512,1024], index: 15, kind: input, shape index: {}]
  %s16 = inlined_call_operand.vmem [shape: bf16[1024,784], index: 16, kind: input, shape index: {}]
  %s17 = inlined_call_operand.vmem [shape: f32[8,784], index: 17, kind: output, shape index: {}]
  %s18 = sld [smem:[#allocation0]]
  $region138: #{generator_forward.1} parent=0
    _
  %s20 = ssub.s32 1, %s18
  %s21 = scalar_select 0, %s20, %s18
  // Predicated region
  $region2: #{generator_forward.1} parent=0 // pred_check
    _
  $region3: #{generator_forward.1} parent=0 // pred_check_branch
    %23 = sbr.rel (0) target = $region5
  $region4: #{generator_forward.1} parent=0 // pred_region
    _
  $region5: #{generator_forward.1} parent=0 // pred_fallthru
    _
  // Predicated region
  $region6: #{generator_forward.1} parent=0 // pred_check
    _
  $region7: #{generator_forward.1} parent=0 // pred_check_branch
    %25 = sbr.rel (0) target = $region9
  $region8: #{generator_forward.1} parent=0 // pred_region
    _
  $region9: #{generator_forward.1} parent=0 // pred_fallthru
    _
  // Predicated region
  $region10: #{generator_forward.1} parent=0 // pred_check
    _
  $region11: #{generator_forward.1} parent=0 // pred_check_branch
    %27 = sbr.rel (0) target = $region13
  $region12: #{generator_forward.1} parent=0 // pred_region
    _
  $region13: #{generator_forward.1} parent=0 // pred_fallthru
    _
  // Predicated region
  $region14: #{generator_forward.1} parent=0 // pred_check
    _
  $region15: #{generator_forward.1} parent=0 // pred_check_branch
    %29 = sbr.rel (0) target = $region17
  $region16: #{generator_forward.1} parent=0 // pred_region
    _
  $region17: #{generator_forward.1} parent=0 // pred_fallthru
    _
  // Predicated region
  $region18: #{generator_forward.1} parent=0 // pred_check
    _
  $region19: #{generator_forward.1} parent=0 // pred_check_branch
    %31 = sbr.rel (0) target = $region21
  $region20: #{generator_forward.1} parent=0 // pred_region
    _
  $region21: #{generator_forward.1} parent=0 // pred_fallthru
    _
  // Predicated region
  $region22: #{generator_forward.1} parent=0 // pred_check
    _
  $region23: #{generator_forward.1} parent=0 // pred_check_branch
    %33 = sbr.rel (0) target = $region25
  $region24: #{generator_forward.1} parent=0 // pred_region
    _
  $region25: #{generator_forward.1} parent=0 // pred_fallthru
    _
  // Predicated region
  $region26: #{generator_forward.1} parent=0 // pred_check
    _
  $region27: #{generator_forward.1} parent=0 // pred_check_branch
    %35 = sbr.rel (0) target = $region29
  $region28: #{generator_forward.1} parent=0 // pred_region
    _
  $region29: #{generator_forward.1} parent=0 // pred_fallthru
    _
  // Predicated region
  $region30: #{generator_forward.1} parent=0 // pred_check
    _
  $region31: #{generator_forward.1} parent=0 // pred_check_branch
    %37 = sbr.rel (0) target = $region33
  $region32: #{generator_forward.1} parent=0 // pred_region
    _
  $region33: #{generator_forward.1} parent=0 // pred_fallthru
    _
  // Predicated region
  $region34: #{generator_forward.1} parent=0 // pred_check
    _
  $region35: #{generator_forward.1} parent=0 // pred_check_branch
    %39 = sbr.rel (0) target = $region37
  $region36: #{generator_forward.1} parent=0 // pred_region
    _
  $region37: #{generator_forward.1} parent=0 // pred_fallthru
    _
  // Predicated region
  $region38: #{generator_forward.1} parent=0 // pred_check
    _
  $region39: #{generator_forward.1} parent=0 // pred_check_branch
    %41 = sbr.rel (0) target = $region41
  $region40: #{generator_forward.1} parent=0 // pred_region
    _
  $region41: #{generator_forward.1} parent=0 // pred_fallthru
    _
  // Predicated region
  $region42: #{generator_forward.1} parent=0 // pred_check
    _
  $region43: #{generator_forward.1} parent=0 // pred_check_branch
    %43 = sbr.rel (0) target = $region45
  $region44: #{generator_forward.1} parent=0 // pred_region
    _
  $region45: #{generator_forward.1} parent=0 // pred_fallthru
    _
  // Predicated region
  $region46: #{generator_forward.1} parent=0 // pred_check
    _
  $region47: #{generator_forward.1} parent=0 // pred_check_branch
    %45 = sbr.rel (0) target = $region49
  $region48: #{generator_forward.1} parent=0 // pred_region
    _
  $region49: #{generator_forward.1} parent=0 // pred_fallthru
    _
  // Predicated region
  $region50: #{generator_forward.1} parent=0 // pred_check
    _
  $region51: #{generator_forward.1} parent=0 // pred_check_branch
    %47 = sbr.rel (0) target = $region53
  $region52: #{generator_forward.1} parent=0 // pred_region
    _
  $region53: #{generator_forward.1} parent=0 // pred_fallthru
    _
  // Predicated region
  $region54: #{generator_forward.1} parent=0 // pred_check
    _
  $region55: #{generator_forward.1} parent=0 // pred_check_branch
    %49 = sbr.rel (0) target = $region57
  $region56: #{generator_forward.1} parent=0 // pred_region
    loop: start=0, step=1, limit=1
    $region58: #{generator_forward.1} parent=56 // loop_pre_header
      _
    $region59: #{generator_forward.1} parent=56 // loop_header
      %s51 = sphi 0, %s55
      %p52 = scmp.ge.s32.totalorder %s51, 1
      %s56 = sphi %s13, %s13
      %s57 = sphi [#allocation3], [#allocation3]
    $region60: #{generator_forward.1} parent=56 // loop_header_branch
      %54 = sbr.rel (%p52) target = $region64
    $region61: #{generator_forward.1} parent=56 // loop_body
      %v58 = vld [vmem:[%s56] sm:$0xff]
      %59 = vst [vmem:[%s57] sm:$0xff] %v58
      %v60 = vld [vmem:[%s56 + $0x8] sm:$0xff]
      %61 = vst [vmem:[%s57 + $0x8] sm:$0xff] %v60
      %v62 = vld [vmem:[%s56 + $0x10] sm:$0xff]
      %63 = vst [vmem:[%s57 + $0x10] sm:$0xff] %v62
      %v64 = vld [vmem:[%s56 + $0x18] sm:$0xff]
      %65 = vst [vmem:[%s57 + $0x18] sm:$0xff] %v64
      %v66 = vld [vmem:[%s56 + $0x20] sm:$0xff]
      %67 = vst [vmem:[%s57 + $0x20] sm:$0xff] %v66
      %v68 = vld [vmem:[%s56 + $0x28] sm:$0xff]
      %69 = vst [vmem:[%s57 + $0x28] sm:$0xff] %v68
      %v70 = vld [vmem:[%s56 + $0x30] sm:$0xff]
      %71 = vst [vmem:[%s57 + $0x30] sm:$0xff] %v70
      %v72 = vld [vmem:[%s56 + $0x38] sm:$0xff]
      %73 = vst [vmem:[%s57 + $0x38] sm:$0xff] %v72
      %v74 = vld [vmem:[%s56 + $0x40] sm:$0xff]
      %75 = vst [vmem:[%s57 + $0x40] sm:$0xff] %v74
      %v76 = vld [vmem:[%s56 + $0x48] sm:$0xff]
      %77 = vst [vmem:[%s57 + $0x48] sm:$0xff] %v76
      %v78 = vld [vmem:[%s56 + $0x50] sm:$0xff]
      %79 = vst [vmem:[%s57 + $0x50] sm:$0xff] %v78
      %v80 = vld [vmem:[%s56 + $0x58] sm:$0xff]
      %81 = vst [vmem:[%s57 + $0x58] sm:$0xff] %v80
      %v82 = vld [vmem:[%s56 + $0x60] sm:$0xff]
      %83 = vst [vmem:[%s57 + $0x60] sm:$0xff] %v82
      %v84 = vld [vmem:[%s56 + $0x68] sm:$0xff]
      %85 = vst [vmem:[%s57 + $0x68] sm:$0xff] %v84
      %v86 = vld [vmem:[%s56 + $0x70] sm:$0xff]
      %87 = vst [vmem:[%s57 + $0x70] sm:$0xff] %v86
      %v88 = vld [vmem:[%s56 + $0x78] sm:$0xff]
      %89 = vst [vmem:[%s57 + $0x78] sm:$0xff] %v88
      %v90 = vld [vmem:[%s56 + $0x80] sm:$0xff]
      %91 = vst [vmem:[%s57 + $0x80] sm:$0xff] %v90
      %v92 = vld [vmem:[%s56 + $0x88] sm:$0xff]
      %93 = vst [vmem:[%s57 + $0x88] sm:$0xff] %v92
      %v94 = vld [vmem:[%s56 + $0x90] sm:$0xff]
      %95 = vst [vmem:[%s57 + $0x90] sm:$0xff] %v94
      %v96 = vld [vmem:[%s56 + $0x98] sm:$0xff]
      %97 = vst [vmem:[%s57 + $0x98] sm:$0xff] %v96
      %v98 = vld [vmem:[%s56 + $0xa0] sm:$0xff]
      %99 = vst [vmem:[%s57 + $0xa0] sm:$0xff] %v98
      %v100 = vld [vmem:[%s56 + $0xa8] sm:$0xff]
      %101 = vst [vmem:[%s57 + $0xa8] sm:$0xff] %v100
      %v102 = vld [vmem:[%s56 + $0xb0] sm:$0xff]
      %103 = vst [vmem:[%s57 + $0xb0] sm:$0xff] %v102
      %v104 = vld [vmem:[%s56 + $0xb8] sm:$0xff]
      %105 = vst [vmem:[%s57 + $0xb8] sm:$0xff] %v104
      %v106 = vld [vmem:[%s56 + $0xc0] sm:$0xff]
      %107 = vst [vmem:[%s57 + $0xc0] sm:$0xff] %v106
      %v108 = vld [vmem:[%s56 + $0xc8] sm:$0xff]
      %109 = vst [vmem:[%s57 + $0xc8] sm:$0xff] %v108
      %v110 = vld [vmem:[%s56 + $0xd0] sm:$0xff]
      %111 = vst [vmem:[%s57 + $0xd0] sm:$0xff] %v110
      %v112 = vld [vmem:[%s56 + $0xd8] sm:$0xff]
      %113 = vst [vmem:[%s57 + $0xd8] sm:$0xff] %v112
      %v114 = vld [vmem:[%s56 + $0xe0] sm:$0xff]
      %115 = vst [vmem:[%s57 + $0xe0] sm:$0xff] %v114
      %v116 = vld [vmem:[%s56 + $0xe8] sm:$0xff]
      %117 = vst [vmem:[%s57 + $0xe8] sm:$0xff] %v116
      %v118 = vld [vmem:[%s56 + $0xf0] sm:$0xff]
      %119 = vst [vmem:[%s57 + $0xf0] sm:$0xff] %v118
      %v120 = vld [vmem:[%s56 + $0xf8] sm:$0xff]
      %121 = vst [vmem:[%s57 + $0xf8] sm:$0xff] %v120
    $region62: #{generator_forward.1} parent=56 // loop_footer
      %s55 = sadd.s32 1, %s51
    $region63: #{generator_forward.1} parent=56 // loop_footer_branch
      %50 = sbr.rel target = $region59
    $region64: #{generator_forward.1} parent=56 // loop_exit
      _
  $region57: #{generator_forward.1} parent=0 // pred_fallthru
    _
  // Predicated region
  $region65: #{generator_forward.1} parent=0 // pred_check
    _
  $region66: #{generator_forward.1} parent=0 // pred_check_branch
    %123 = sbr.rel target = $region68
  $region67: #{generator_forward.1} parent=0 // pred_region
    _
  $region68: #{generator_forward.1} parent=0 // pred_fallthru
    _
  // Predicated region
  $region69: #{generator_forward.1} parent=0 // pred_check
    _
  $region70: #{generator_forward.1} parent=0 // pred_check_branch
    %126 = sbr.rel (0) target = $region72
  $region71: #{generator_forward.1} parent=0 // pred_region
    %127 = vsyncadd [#allocation7], 4096
  $region72: #{generator_forward.1} parent=0 // pred_fallthru
    _
  %s128 = scalar_lea.sflag [#allocation7], 1
  // Predicated region
  $region73: #{generator_forward.1} parent=0 // pred_check
    _
  $region74: #{generator_forward.1} parent=0 // pred_check_branch
    %130 = sbr.rel (0) target = $region76
  $region75: #{generator_forward.1} parent=0 // pred_region
    loop: start=0, step=1, limit=1
    $region77: #{generator_forward.1} parent=75 // loop_pre_header
      _
    $region78: #{generator_forward.1} parent=75 // loop_header
      %s132 = sphi 0, %s136
      %p133 = scmp.ge.s32.totalorder %s132, 1
      %s137 = sphi %s14, %s14
      %s138 = sphi [#allocation4], [#allocation4]
    $region79: #{generator_forward.1} parent=75 // loop_header_branch
      %135 = sbr.rel (%p133) target = $region83
    $region80: #{generator_forward.1} parent=75 // loop_body
      %v139 = vld [vmem:[%s137] sm:$0xff]
      %140 = vst [vmem:[%s138] sm:$0xff] %v139
      %v141 = vld [vmem:[%s137 + $0x8] sm:$0xff]
      %142 = vst [vmem:[%s138 + $0x8] sm:$0xff] %v141
      %v143 = vld [vmem:[%s137 + $0x10] sm:$0xff]
      %144 = vst [vmem:[%s138 + $0x10] sm:$0xff] %v143
      %v145 = vld [vmem:[%s137 + $0x18] sm:$0xff]
      %146 = vst [vmem:[%s138 + $0x18] sm:$0xff] %v145
      %v147 = vld [vmem:[%s137 + $0x20] sm:$0xff]
      %148 = vst [vmem:[%s138 + $0x20] sm:$0xff] %v147
      %v149 = vld [vmem:[%s137 + $0x28] sm:$0xff]
      %150 = vst [vmem:[%s138 + $0x28] sm:$0xff] %v149
      %v151 = vld [vmem:[%s137 + $0x30] sm:$0xff]
      %152 = vst [vmem:[%s138 + $0x30] sm:$0xff] %v151
      %v153 = vld [vmem:[%s137 + $0x38] sm:$0xff]
      %154 = vst [vmem:[%s138 + $0x38] sm:$0xff] %v153
      %v155 = vld [vmem:[%s137 + $0x40] sm:$0xff]
      %156 = vst [vmem:[%s138 + $0x40] sm:$0xff] %v155
      %v157 = vld [vmem:[%s137 + $0x48] sm:$0xff]
      %158 = vst [vmem:[%s138 + $0x48] sm:$0xff] %v157
      %v159 = vld [vmem:[%s137 + $0x50] sm:$0xff]
      %160 = vst [vmem:[%s138 + $0x50] sm:$0xff] %v159
      %v161 = vld [vmem:[%s137 + $0x58] sm:$0xff]
      %162 = vst [vmem:[%s138 + $0x58] sm:$0xff] %v161
      %v163 = vld [vmem:[%s137 + $0x60] sm:$0xff]
      %164 = vst [vmem:[%s138 + $0x60] sm:$0xff] %v163
      %v165 = vld [vmem:[%s137 + $0x68] sm:$0xff]
      %166 = vst [vmem:[%s138 + $0x68] sm:$0xff] %v165
      %v167 = vld [vmem:[%s137 + $0x70] sm:$0xff]
      %168 = vst [vmem:[%s138 + $0x70] sm:$0xff] %v167
      %v169 = vld [vmem:[%s137 + $0x78] sm:$0xff]
      %170 = vst [vmem:[%s138 + $0x78] sm:$0xff] %v169
      %v171 = vld [vmem:[%s137 + $0x80] sm:$0xff]
      %172 = vst [vmem:[%s138 + $0x80] sm:$0xff] %v171
      %v173 = vld [vmem:[%s137 + $0x88] sm:$0xff]
      %174 = vst [vmem:[%s138 + $0x88] sm:$0xff] %v173
      %v175 = vld [vmem:[%s137 + $0x90] sm:$0xff]
      %176 = vst [vmem:[%s138 + $0x90] sm:$0xff] %v175
      %v177 = vld [vmem:[%s137 + $0x98] sm:$0xff]
      %178 = vst [vmem:[%s138 + $0x98] sm:$0xff] %v177
      %v179 = vld [vmem:[%s137 + $0xa0] sm:$0xff]
      %180 = vst [vmem:[%s138 + $0xa0] sm:$0xff] %v179
      %v181 = vld [vmem:[%s137 + $0xa8] sm:$0xff]
      %182 = vst [vmem:[%s138 + $0xa8] sm:$0xff] %v181
      %v183 = vld [vmem:[%s137 + $0xb0] sm:$0xff]
      %184 = vst [vmem:[%s138 + $0xb0] sm:$0xff] %v183
      %v185 = vld [vmem:[%s137 + $0xb8] sm:$0xff]
      %186 = vst [vmem:[%s138 + $0xb8] sm:$0xff] %v185
      %v187 = vld [vmem:[%s137 + $0xc0] sm:$0xff]
      %188 = vst [vmem:[%s138 + $0xc0] sm:$0xff] %v187
      %v189 = vld [vmem:[%s137 + $0xc8] sm:$0xff]
      %190 = vst [vmem:[%s138 + $0xc8] sm:$0xff] %v189
      %v191 = vld [vmem:[%s137 + $0xd0] sm:$0xff]
      %192 = vst [vmem:[%s138 + $0xd0] sm:$0xff] %v191
      %v193 = vld [vmem:[%s137 + $0xd8] sm:$0xff]
      %194 = vst [vmem:[%s138 + $0xd8] sm:$0xff] %v193
      %v195 = vld [vmem:[%s137 + $0xe0] sm:$0xff]
      %196 = vst [vmem:[%s138 + $0xe0] sm:$0xff] %v195
      %v197 = vld [vmem:[%s137 + $0xe8] sm:$0xff]
      %198 = vst [vmem:[%s138 + $0xe8] sm:$0xff] %v197
      %v199 = vld [vmem:[%s137 + $0xf0] sm:$0xff]
      %200 = vst [vmem:[%s138 + $0xf0] sm:$0xff] %v199
      %v201 = vld [vmem:[%s137 + $0xf8] sm:$0xff]
      %202 = vst [vmem:[%s138 + $0xf8] sm:$0xff] %v201
      %v203 = vld [vmem:[%s137 + $0x100] sm:$0xff]
      %204 = vst [vmem:[%s138 + $0x100] sm:$0xff] %v203
      %v205 = vld [vmem:[%s137 + $0x108] sm:$0xff]
      %206 = vst [vmem:[%s138 + $0x108] sm:$0xff] %v205
      %v207 = vld [vmem:[%s137 + $0x110] sm:$0xff]
      %208 = vst [vmem:[%s138 + $0x110] sm:$0xff] %v207
      %v209 = vld [vmem:[%s137 + $0x118] sm:$0xff]
      %210 = vst [vmem:[%s138 + $0x118] sm:$0xff] %v209
      %v211 = vld [vmem:[%s137 + $0x120] sm:$0xff]
      %212 = vst [vmem:[%s138 + $0x120] sm:$0xff] %v211
      %v213 = vld [vmem:[%s137 + $0x128] sm:$0xff]
      %214 = vst [vmem:[%s138 + $0x128] sm:$0xff] %v213
      %v215 = vld [vmem:[%s137 + $0x130] sm:$0xff]
      %216 = vst [vmem:[%s138 + $0x130] sm:$0xff] %v215
      %v217 = vld [vmem:[%s137 + $0x138] sm:$0xff]
      %218 = vst [vmem:[%s138 + $0x138] sm:$0xff] %v217
      %v219 = vld [vmem:[%s137 + $0x140] sm:$0xff]
      %220 = vst [vmem:[%s138 + $0x140] sm:$0xff] %v219
      %v221 = vld [vmem:[%s137 + $0x148] sm:$0xff]
      %222 = vst [vmem:[%s138 + $0x148] sm:$0xff] %v221
      %v223 = vld [vmem:[%s137 + $0x150] sm:$0xff]
      %224 = vst [vmem:[%s138 + $0x150] sm:$0xff] %v223
      %v225 = vld [vmem:[%s137 + $0x158] sm:$0xff]
      %226 = vst [vmem:[%s138 + $0x158] sm:$0xff] %v225
      %v227 = vld [vmem:[%s137 + $0x160] sm:$0xff]
      %228 = vst [vmem:[%s138 + $0x160] sm:$0xff] %v227
      %v229 = vld [vmem:[%s137 + $0x168] sm:$0xff]
      %230 = vst [vmem:[%s138 + $0x168] sm:$0xff] %v229
      %v231 = vld [vmem:[%s137 + $0x170] sm:$0xff]
      %232 = vst [vmem:[%s138 + $0x170] sm:$0xff] %v231
      %v233 = vld [vmem:[%s137 + $0x178] sm:$0xff]
      %234 = vst [vmem:[%s138 + $0x178] sm:$0xff] %v233
      %v235 = vld [vmem:[%s137 + $0x180] sm:$0xff]
      %236 = vst [vmem:[%s138 + $0x180] sm:$0xff] %v235
      %v237 = vld [vmem:[%s137 + $0x188] sm:$0xff]
      %238 = vst [vmem:[%s138 + $0x188] sm:$0xff] %v237
      %v239 = vld [vmem:[%s137 + $0x190] sm:$0xff]
      %240 = vst [vmem:[%s138 + $0x190] sm:$0xff] %v239
      %v241 = vld [vmem:[%s137 + $0x198] sm:$0xff]
      %242 = vst [vmem:[%s138 + $0x198] sm:$0xff] %v241
      %v243 = vld [vmem:[%s137 + $0x1a0] sm:$0xff]
      %244 = vst [vmem:[%s138 + $0x1a0] sm:$0xff] %v243
      %v245 = vld [vmem:[%s137 + $0x1a8] sm:$0xff]
      %246 = vst [vmem:[%s138 + $0x1a8] sm:$0xff] %v245
      %v247 = vld [vmem:[%s137 + $0x1b0] sm:$0xff]
      %248 = vst [vmem:[%s138 + $0x1b0] sm:$0xff] %v247
      %v249 = vld [vmem:[%s137 + $0x1b8] sm:$0xff]
      %250 = vst [vmem:[%s138 + $0x1b8] sm:$0xff] %v249
      %v251 = vld [vmem:[%s137 + $0x1c0] sm:$0xff]
      %252 = vst [vmem:[%s138 + $0x1c0] sm:$0xff] %v251
      %v253 = vld [vmem:[%s137 + $0x1c8] sm:$0xff]
      %254 = vst [vmem:[%s138 + $0x1c8] sm:$0xff] %v253
      %v255 = vld [vmem:[%s137 + $0x1d0] sm:$0xff]
      %256 = vst [vmem:[%s138 + $0x1d0] sm:$0xff] %v255
      %v257 = vld [vmem:[%s137 + $0x1d8] sm:$0xff]
      %258 = vst [vmem:[%s138 + $0x1d8] sm:$0xff] %v257
      %v259 = vld [vmem:[%s137 + $0x1e0] sm:$0xff]
      %260 = vst [vmem:[%s138 + $0x1e0] sm:$0xff] %v259
      %v261 = vld [vmem:[%s137 + $0x1e8] sm:$0xff]
      %262 = vst [vmem:[%s138 + $0x1e8] sm:$0xff] %v261
      %v263 = vld [vmem:[%s137 + $0x1f0] sm:$0xff]
      %264 = vst [vmem:[%s138 + $0x1f0] sm:$0xff] %v263
      %v265 = vld [vmem:[%s137 + $0x1f8] sm:$0xff]
      %266 = vst [vmem:[%s138 + $0x1f8] sm:$0xff] %v265
    $region81: #{generator_forward.1} parent=75 // loop_footer
      %s136 = sadd.s32 1, %s132
    $region82: #{generator_forward.1} parent=75 // loop_footer_branch
      %131 = sbr.rel target = $region78
    $region83: #{generator_forward.1} parent=75 // loop_exit
      _
  $region76: #{generator_forward.1} parent=0 // pred_fallthru
    _
  // Predicated region
  $region84: #{generator_forward.1} parent=0 // pred_check
    _
  $region85: #{generator_forward.1} parent=0 // pred_check_branch
    %268 = sbr.rel target = $region87
  $region86: #{generator_forward.1} parent=0 // pred_region
    _
  $region87: #{generator_forward.1} parent=0 // pred_fallthru
    _
  // Predicated region
  $region88: #{generator_forward.1} parent=0 // pred_check
    _
  $region89: #{generator_forward.1} parent=0 // pred_check_branch
    %271 = sbr.rel (0) target = $region91
  $region90: #{generator_forward.1} parent=0 // pred_region
    %272 = vsyncadd %s128, 8192
  $region91: #{generator_forward.1} parent=0 // pred_fallthru
    _
  %s273 = scalar_lea.sflag [#allocation7], 2
  // Predicated region
  $region92: #{generator_forward.1} parent=0 // pred_check
    _
  $region93: #{generator_forward.1} parent=0 // pred_check_branch
    %275 = sbr.rel (0) target = $region95
  $region94: #{generator_forward.1} parent=0 // pred_region
    loop: start=0, step=1, limit=1
    $region96: #{generator_forward.1} parent=94 // loop_pre_header
      _
    $region97: #{generator_forward.1} parent=94 // loop_header
      %s277 = sphi 0, %s281
      %p278 = scmp.ge.s32.totalorder %s277, 1
      %s282 = sphi %s15, %s15
      %s283 = sphi [#allocation5], [#allocation5]
    $region98: #{generator_forward.1} parent=94 // loop_header_branch
      %280 = sbr.rel (%p278) target = $region102
    $region99: #{generator_forward.1} parent=94 // loop_body
      %v284 = vld [vmem:[%s282] sm:$0xff]
      %285 = vst [vmem:[%s283] sm:$0xff] %v284
      %v286 = vld [vmem:[%s282 + $0x8] sm:$0xff]
      %287 = vst [vmem:[%s283 + $0x8] sm:$0xff] %v286
      %v288 = vld [vmem:[%s282 + $0x10] sm:$0xff]
      %289 = vst [vmem:[%s283 + $0x10] sm:$0xff] %v288
      %v290 = vld [vmem:[%s282 + $0x18] sm:$0xff]
      %291 = vst [vmem:[%s283 + $0x18] sm:$0xff] %v290
      %v292 = vld [vmem:[%s282 + $0x20] sm:$0xff]
      %293 = vst [vmem:[%s283 + $0x20] sm:$0xff] %v292
      %v294 = vld [vmem:[%s282 + $0x28] sm:$0xff]
      %295 = vst [vmem:[%s283 + $0x28] sm:$0xff] %v294
      %v296 = vld [vmem:[%s282 + $0x30] sm:$0xff]
      %297 = vst [vmem:[%s283 + $0x30] sm:$0xff] %v296
      %v298 = vld [vmem:[%s282 + $0x38] sm:$0xff]
      %299 = vst [vmem:[%s283 + $0x38] sm:$0xff] %v298
      %v300 = vld [vmem:[%s282 + $0x40] sm:$0xff]
      %301 = vst [vmem:[%s283 + $0x40] sm:$0xff] %v300
      %v302 = vld [vmem:[%s282 + $0x48] sm:$0xff]
      %303 = vst [vmem:[%s283 + $0x48] sm:$0xff] %v302
      %v304 = vld [vmem:[%s282 + $0x50] sm:$0xff]
      %305 = vst [vmem:[%s283 + $0x50] sm:$0xff] %v304
      %v306 = vld [vmem:[%s282 + $0x58] sm:$0xff]
      %307 = vst [vmem:[%s283 + $0x58] sm:$0xff] %v306
      %v308 = vld [vmem:[%s282 + $0x60] sm:$0xff]
      %309 = vst [vmem:[%s283 + $0x60] sm:$0xff] %v308
      %v310 = vld [vmem:[%s282 + $0x68] sm:$0xff]
      %311 = vst [vmem:[%s283 + $0x68] sm:$0xff] %v310
      %v312 = vld [vmem:[%s282 + $0x70] sm:$0xff]
      %313 = vst [vmem:[%s283 + $0x70] sm:$0xff] %v312
      %v314 = vld [vmem:[%s282 + $0x78] sm:$0xff]
      %315 = vst [vmem:[%s283 + $0x78] sm:$0xff] %v314
      %v316 = vld [vmem:[%s282 + $0x80] sm:$0xff]
      %317 = vst [vmem:[%s283 + $0x80] sm:$0xff] %v316
      %v318 = vld [vmem:[%s282 + $0x88] sm:$0xff]
      %319 = vst [vmem:[%s283 + $0x88] sm:$0xff] %v318
      %v320 = vld [vmem:[%s282 + $0x90] sm:$0xff]
      %321 = vst [vmem:[%s283 + $0x90] sm:$0xff] %v320
      %v322 = vld [vmem:[%s282 + $0x98] sm:$0xff]
      %323 = vst [vmem:[%s283 + $0x98] sm:$0xff] %v322
      %v324 = vld [vmem:[%s282 + $0xa0] sm:$0xff]
      %325 = vst [vmem:[%s283 + $0xa0] sm:$0xff] %v324
      %v326 = vld [vmem:[%s282 + $0xa8] sm:$0xff]
      %327 = vst [vmem:[%s283 + $0xa8] sm:$0xff] %v326
      %v328 = vld [vmem:[%s282 + $0xb0] sm:$0xff]
      %329 = vst [vmem:[%s283 + $0xb0] sm:$0xff] %v328
      %v330 = vld [vmem:[%s282 + $0xb8] sm:$0xff]
      %331 = vst [vmem:[%s283 + $0xb8] sm:$0xff] %v330
      %v332 = vld [vmem:[%s282 + $0xc0] sm:$0xff]
      %333 = vst [vmem:[%s283 + $0xc0] sm:$0xff] %v332
      %v334 = vld [vmem:[%s282 + $0xc8] sm:$0xff]
      %335 = vst [vmem:[%s283 + $0xc8] sm:$0xff] %v334
      %v336 = vld [vmem:[%s282 + $0xd0] sm:$0xff]
      %337 = vst [vmem:[%s283 + $0xd0] sm:$0xff] %v336
      %v338 = vld [vmem:[%s282 + $0xd8] sm:$0xff]
      %339 = vst [vmem:[%s283 + $0xd8] sm:$0xff] %v338
      %v340 = vld [vmem:[%s282 + $0xe0] sm:$0xff]
      %341 = vst [vmem:[%s283 + $0xe0] sm:$0xff] %v340
      %v342 = vld [vmem:[%s282 + $0xe8] sm:$0xff]
      %343 = vst [vmem:[%s283 + $0xe8] sm:$0xff] %v342
      %v344 = vld [vmem:[%s282 + $0xf0] sm:$0xff]
      %345 = vst [vmem:[%s283 + $0xf0] sm:$0xff] %v344
      %v346 = vld [vmem:[%s282 + $0xf8] sm:$0xff]
      %347 = vst [vmem:[%s283 + $0xf8] sm:$0xff] %v346
      %v348 = vld [vmem:[%s282 + $0x100] sm:$0xff]
      %349 = vst [vmem:[%s283 + $0x100] sm:$0xff] %v348
      %v350 = vld [vmem:[%s282 + $0x108] sm:$0xff]
      %351 = vst [vmem:[%s283 + $0x108] sm:$0xff] %v350
      %v352 = vld [vmem:[%s282 + $0x110] sm:$0xff]
      %353 = vst [vmem:[%s283 + $0x110] sm:$0xff] %v352
      %v354 = vld [vmem:[%s282 + $0x118] sm:$0xff]
      %355 = vst [vmem:[%s283 + $0x118] sm:$0xff] %v354
      %v356 = vld [vmem:[%s282 + $0x120] sm:$0xff]
      %357 = vst [vmem:[%s283 + $0x120] sm:$0xff] %v356
      %v358 = vld [vmem:[%s282 + $0x128] sm:$0xff]
      %359 = vst [vmem:[%s283 + $0x128] sm:$0xff] %v358
      %v360 = vld [vmem:[%s282 + $0x130] sm:$0xff]
      %361 = vst [vmem:[%s283 + $0x130] sm:$0xff] %v360
      %v362 = vld [vmem:[%s282 + $0x138] sm:$0xff]
      %363 = vst [vmem:[%s283 + $0x138] sm:$0xff] %v362
      %v364 = vld [vmem:[%s282 + $0x140] sm:$0xff]
      %365 = vst [vmem:[%s283 + $0x140] sm:$0xff] %v364
      %v366 = vld [vmem:[%s282 + $0x148] sm:$0xff]
      %367 = vst [vmem:[%s283 + $0x148] sm:$0xff] %v366
      %v368 = vld [vmem:[%s282 + $0x150] sm:$0xff]
      %369 = vst [vmem:[%s283 + $0x150] sm:$0xff] %v368
      %v370 = vld [vmem:[%s282 + $0x158] sm:$0xff]
      %371 = vst [vmem:[%s283 + $0x158] sm:$0xff] %v370
      %v372 = vld [vmem:[%s282 + $0x160] sm:$0xff]
      %373 = vst [vmem:[%s283 + $0x160] sm:$0xff] %v372
      %v374 = vld [vmem:[%s282 + $0x168] sm:$0xff]
      %375 = vst [vmem:[%s283 + $0x168] sm:$0xff] %v374
      %v376 = vld [vmem:[%s282 + $0x170] sm:$0xff]
      %377 = vst [vmem:[%s283 + $0x170] sm:$0xff] %v376
      %v378 = vld [vmem:[%s282 + $0x178] sm:$0xff]
      %379 = vst [vmem:[%s283 + $0x178] sm:$0xff] %v378
      %v380 = vld [vmem:[%s282 + $0x180] sm:$0xff]
      %381 = vst [vmem:[%s283 + $0x180] sm:$0xff] %v380
      %v382 = vld [vmem:[%s282 + $0x188] sm:$0xff]
      %383 = vst [vmem:[%s283 + $0x188] sm:$0xff] %v382
      %v384 = vld [vmem:[%s282 + $0x190] sm:$0xff]
      %385 = vst [vmem:[%s283 + $0x190] sm:$0xff] %v384
      %v386 = vld [vmem:[%s282 + $0x198] sm:$0xff]
      %387 = vst [vmem:[%s283 + $0x198] sm:$0xff] %v386
      %v388 = vld [vmem:[%s282 + $0x1a0] sm:$0xff]
      %389 = vst [vmem:[%s283 + $0x1a0] sm:$0xff] %v388
      %v390 = vld [vmem:[%s282 + $0x1a8] sm:$0xff]
      %391 = vst [vmem:[%s283 + $0x1a8] sm:$0xff] %v390
      %v392 = vld [vmem:[%s282 + $0x1b0] sm:$0xff]
      %393 = vst [vmem:[%s283 + $0x1b0] sm:$0xff] %v392
      %v394 = vld [vmem:[%s282 + $0x1b8] sm:$0xff]
      %395 = vst [vmem:[%s283 + $0x1b8] sm:$0xff] %v394
      %v396 = vld [vmem:[%s282 + $0x1c0] sm:$0xff]
      %397 = vst [vmem:[%s283 + $0x1c0] sm:$0xff] %v396
      %v398 = vld [vmem:[%s282 + $0x1c8] sm:$0xff]
      %399 = vst [vmem:[%s283 + $0x1c8] sm:$0xff] %v398
      %v400 = vld [vmem:[%s282 + $0x1d0] sm:$0xff]
      %401 = vst [vmem:[%s283 + $0x1d0] sm:$0xff] %v400
      %v402 = vld [vmem:[%s282 + $0x1d8] sm:$0xff]
      %403 = vst [vmem:[%s283 + $0x1d8] sm:$0xff] %v402
      %v404 = vld [vmem:[%s282 + $0x1e0] sm:$0xff]
      %405 = vst [vmem:[%s283 + $0x1e0] sm:$0xff] %v404
      %v406 = vld [vmem:[%s282 + $0x1e8] sm:$0xff]
      %407 = vst [vmem:[%s283 + $0x1e8] sm:$0xff] %v406
      %v408 = vld [vmem:[%s282 + $0x1f0] sm:$0xff]
      %409 = vst [vmem:[%s283 + $0x1f0] sm:$0xff] %v408
      %v410 = vld [vmem:[%s282 + $0x1f8] sm:$0xff]
      %411 = vst [vmem:[%s283 + $0x1f8] sm:$0xff] %v410
      %v412 = vld [vmem:[%s282 + $0x200] sm:$0xff]
      %413 = vst [vmem:[%s283 + $0x200] sm:$0xff] %v412
      %v414 = vld [vmem:[%s282 + $0x208] sm:$0xff]
      %415 = vst [vmem:[%s283 + $0x208] sm:$0xff] %v414
      %v416 = vld [vmem:[%s282 + $0x210] sm:$0xff]
      %417 = vst [vmem:[%s283 + $0x210] sm:$0xff] %v416
      %v418 = vld [vmem:[%s282 + $0x218] sm:$0xff]
      %419 = vst [vmem:[%s283 + $0x218] sm:$0xff] %v418
      %v420 = vld [vmem:[%s282 + $0x220] sm:$0xff]
      %421 = vst [vmem:[%s283 + $0x220] sm:$0xff] %v420
      %v422 = vld [vmem:[%s282 + $0x228] sm:$0xff]
      %423 = vst [vmem:[%s283 + $0x228] sm:$0xff] %v422
      %v424 = vld [vmem:[%s282 + $0x230] sm:$0xff]
      %425 = vst [vmem:[%s283 + $0x230] sm:$0xff] %v424
      %v426 = vld [vmem:[%s282 + $0x238] sm:$0xff]
      %427 = vst [vmem:[%s283 + $0x238] sm:$0xff] %v426
      %v428 = vld [vmem:[%s282 + $0x240] sm:$0xff]
      %429 = vst [vmem:[%s283 + $0x240] sm:$0xff] %v428
      %v430 = vld [vmem:[%s282 + $0x248] sm:$0xff]
      %431 = vst [vmem:[%s283 + $0x248] sm:$0xff] %v430
      %v432 = vld [vmem:[%s282 + $0x250] sm:$0xff]
      %433 = vst [vmem:[%s283 + $0x250] sm:$0xff] %v432
      %v434 = vld [vmem:[%s282 + $0x258] sm:$0xff]
      %435 = vst [vmem:[%s283 + $0x258] sm:$0xff] %v434
      %v436 = vld [vmem:[%s282 + $0x260] sm:$0xff]
      %437 = vst [vmem:[%s283 + $0x260] sm:$0xff] %v436
      %v438 = vld [vmem:[%s282 + $0x268] sm:$0xff]
      %439 = vst [vmem:[%s283 + $0x268] sm:$0xff] %v438
      %v440 = vld [vmem:[%s282 + $0x270] sm:$0xff]
      %441 = vst [vmem:[%s283 + $0x270] sm:$0xff] %v440
      %v442 = vld [vmem:[%s282 + $0x278] sm:$0xff]
      %443 = vst [vmem:[%s283 + $0x278] sm:$0xff] %v442
      %v444 = vld [vmem:[%s282 + $0x280] sm:$0xff]
      %445 = vst [vmem:[%s283 + $0x280] sm:$0xff] %v444
      %v446 = vld [vmem:[%s282 + $0x288] sm:$0xff]
      %447 = vst [vmem:[%s283 + $0x288] sm:$0xff] %v446
      %v448 = vld [vmem:[%s282 + $0x290] sm:$0xff]
      %449 = vst [vmem:[%s283 + $0x290] sm:$0xff] %v448
      %v450 = vld [vmem:[%s282 + $0x298] sm:$0xff]
      %451 = vst [vmem:[%s283 + $0x298] sm:$0xff] %v450
      %v452 = vld [vmem:[%s282 + $0x2a0] sm:$0xff]
      %453 = vst [vmem:[%s283 + $0x2a0] sm:$0xff] %v452
      %v454 = vld [vmem:[%s282 + $0x2a8] sm:$0xff]
      %455 = vst [vmem:[%s283 + $0x2a8] sm:$0xff] %v454
      %v456 = vld [vmem:[%s282 + $0x2b0] sm:$0xff]
      %457 = vst [vmem:[%s283 + $0x2b0] sm:$0xff] %v456
      %v458 = vld [vmem:[%s282 + $0x2b8] sm:$0xff]
      %459 = vst [vmem:[%s283 + $0x2b8] sm:$0xff] %v458
      %v460 = vld [vmem:[%s282 + $0x2c0] sm:$0xff]
      %461 = vst [vmem:[%s283 + $0x2c0] sm:$0xff] %v460
      %v462 = vld [vmem:[%s282 + $0x2c8] sm:$0xff]
      %463 = vst [vmem:[%s283 + $0x2c8] sm:$0xff] %v462
      %v464 = vld [vmem:[%s282 + $0x2d0] sm:$0xff]
      %465 = vst [vmem:[%s283 + $0x2d0] sm:$0xff] %v464
      %v466 = vld [vmem:[%s282 + $0x2d8] sm:$0xff]
      %467 = vst [vmem:[%s283 + $0x2d8] sm:$0xff] %v466
      %v468 = vld [vmem:[%s282 + $0x2e0] sm:$0xff]
      %469 = vst [vmem:[%s283 + $0x2e0] sm:$0xff] %v468
      %v470 = vld [vmem:[%s282 + $0x2e8] sm:$0xff]
      %471 = vst [vmem:[%s283 + $0x2e8] sm:$0xff] %v470
      %v472 = vld [vmem:[%s282 + $0x2f0] sm:$0xff]
      %473 = vst [vmem:[%s283 + $0x2f0] sm:$0xff] %v472
      %v474 = vld [vmem:[%s282 + $0x2f8] sm:$0xff]
      %475 = vst [vmem:[%s283 + $0x2f8] sm:$0xff] %v474
      %v476 = vld [vmem:[%s282 + $0x300] sm:$0xff]
      %477 = vst [vmem:[%s283 + $0x300] sm:$0xff] %v476
      %v478 = vld [vmem:[%s282 + $0x308] sm:$0xff]
      %479 = vst [vmem:[%s283 + $0x308] sm:$0xff] %v478
      %v480 = vld [vmem:[%s282 + $0x310] sm:$0xff]
      %481 = vst [vmem:[%s283 + $0x310] sm:$0xff] %v480
      %v482 = vld [vmem:[%s282 + $0x318] sm:$0xff]
      %483 = vst [vmem:[%s283 + $0x318] sm:$0xff] %v482
      %v484 = vld [vmem:[%s282 + $0x320] sm:$0xff]
      %485 = vst [vmem:[%s283 + $0x320] sm:$0xff] %v484
      %v486 = vld [vmem:[%s282 + $0x328] sm:$0xff]
      %487 = vst [vmem:[%s283 + $0x328] sm:$0xff] %v486
      %v488 = vld [vmem:[%s282 + $0x330] sm:$0xff]
      %489 = vst [vmem:[%s283 + $0x330] sm:$0xff] %v488
      %v490 = vld [vmem:[%s282 + $0x338] sm:$0xff]
      %491 = vst [vmem:[%s283 + $0x338] sm:$0xff] %v490
      %v492 = vld [vmem:[%s282 + $0x340] sm:$0xff]
      %493 = vst [vmem:[%s283 + $0x340] sm:$0xff] %v492
      %v494 = vld [vmem:[%s282 + $0x348] sm:$0xff]
      %495 = vst [vmem:[%s283 + $0x348] sm:$0xff] %v494
      %v496 = vld [vmem:[%s282 + $0x350] sm:$0xff]
      %497 = vst [vmem:[%s283 + $0x350] sm:$0xff] %v496
      %v498 = vld [vmem:[%s282 + $0x358] sm:$0xff]
      %499 = vst [vmem:[%s283 + $0x358] sm:$0xff] %v498
      %v500 = vld [vmem:[%s282 + $0x360] sm:$0xff]
      %501 = vst [vmem:[%s283 + $0x360] sm:$0xff] %v500
      %v502 = vld [vmem:[%s282 + $0x368] sm:$0xff]
      %503 = vst [vmem:[%s283 + $0x368] sm:$0xff] %v502
      %v504 = vld [vmem:[%s282 + $0x370] sm:$0xff]
      %505 = vst [vmem:[%s283 + $0x370] sm:$0xff] %v504
      %v506 = vld [vmem:[%s282 + $0x378] sm:$0xff]
      %507 = vst [vmem:[%s283 + $0x378] sm:$0xff] %v506
      %v508 = vld [vmem:[%s282 + $0x380] sm:$0xff]
      %509 = vst [vmem:[%s283 + $0x380] sm:$0xff] %v508
      %v510 = vld [vmem:[%s282 + $0x388] sm:$0xff]
      %511 = vst [vmem:[%s283 + $0x388] sm:$0xff] %v510
      %v512 = vld [vmem:[%s282 + $0x390] sm:$0xff]
      %513 = vst [vmem:[%s283 + $0x390] sm:$0xff] %v512
      %v514 = vld [vmem:[%s282 + $0x398] sm:$0xff]
      %515 = vst [vmem:[%s283 + $0x398] sm:$0xff] %v514
      %v516 = vld [vmem:[%s282 + $0x3a0] sm:$0xff]
      %517 = vst [vmem:[%s283 + $0x3a0] sm:$0xff] %v516
      %v518 = vld [vmem:[%s282 + $0x3a8] sm:$0xff]
      %519 = vst [vmem:[%s283 + $0x3a8] sm:$0xff] %v518
      %v520 = vld [vmem:[%s282 + $0x3b0] sm:$0xff]
      %521 = vst [vmem:[%s283 + $0x3b0] sm:$0xff] %v520
      %v522 = vld [vmem:[%s282 + $0x3b8] sm:$0xff]
      %523 = vst [vmem:[%s283 + $0x3b8] sm:$0xff] %v522
      %v524 = vld [vmem:[%s282 + $0x3c0] sm:$0xff]
      %525 = vst [vmem:[%s283 + $0x3c0] sm:$0xff] %v524
      %v526 = vld [vmem:[%s282 + $0x3c8] sm:$0xff]
      %527 = vst [vmem:[%s283 + $0x3c8] sm:$0xff] %v526
      %v528 = vld [vmem:[%s282 + $0x3d0] sm:$0xff]
      %529 = vst [vmem:[%s283 + $0x3d0] sm:$0xff] %v528
      %v530 = vld [vmem:[%s282 + $0x3d8] sm:$0xff]
      %531 = vst [vmem:[%s283 + $0x3d8] sm:$0xff] %v530
      %v532 = vld [vmem:[%s282 + $0x3e0] sm:$0xff]
      %533 = vst [vmem:[%s283 + $0x3e0] sm:$0xff] %v532
      %v534 = vld [vmem:[%s282 + $0x3e8] sm:$0xff]
      %535 = vst [vmem:[%s283 + $0x3e8] sm:$0xff] %v534
      %v536 = vld [vmem:[%s282 + $0x3f0] sm:$0xff]
      %537 = vst [vmem:[%s283 + $0x3f0] sm:$0xff] %v536
      %v538 = vld [vmem:[%s282 + $0x3f8] sm:$0xff]
      %539 = vst [vmem:[%s283 + $0x3f8] sm:$0xff] %v538
      %v540 = vld [vmem:[%s282 + $0x400] sm:$0xff]
      %541 = vst [vmem:[%s283 + $0x400] sm:$0xff] %v540
      %v542 = vld [vmem:[%s282 + $0x408] sm:$0xff]
      %543 = vst [vmem:[%s283 + $0x408] sm:$0xff] %v542
      %v544 = vld [vmem:[%s282 + $0x410] sm:$0xff]
      %545 = vst [vmem:[%s283 + $0x410] sm:$0xff] %v544
      %v546 = vld [vmem:[%s282 + $0x418] sm:$0xff]
      %547 = vst [vmem:[%s283 + $0x418] sm:$0xff] %v546
      %v548 = vld [vmem:[%s282 + $0x420] sm:$0xff]
      %549 = vst [vmem:[%s283 + $0x420] sm:$0xff] %v548
      %v550 = vld [vmem:[%s282 + $0x428] sm:$0xff]
      %551 = vst [vmem:[%s283 + $0x428] sm:$0xff] %v550
      %v552 = vld [vmem:[%s282 + $0x430] sm:$0xff]
      %553 = vst [vmem:[%s283 + $0x430] sm:$0xff] %v552
      %v554 = vld [vmem:[%s282 + $0x438] sm:$0xff]
      %555 = vst [vmem:[%s283 + $0x438] sm:$0xff] %v554
      %v556 = vld [vmem:[%s282 + $0x440] sm:$0xff]
      %557 = vst [vmem:[%s283 + $0x440] sm:$0xff] %v556
      %v558 = vld [vmem:[%s282 + $0x448] sm:$0xff]
      %559 = vst [vmem:[%s283 + $0x448] sm:$0xff] %v558
      %v560 = vld [vmem:[%s282 + $0x450] sm:$0xff]
      %561 = vst [vmem:[%s283 + $0x450] sm:$0xff] %v560
      %v562 = vld [vmem:[%s282 + $0x458] sm:$0xff]
      %563 = vst [vmem:[%s283 + $0x458] sm:$0xff] %v562
      %v564 = vld [vmem:[%s282 + $0x460] sm:$0xff]
      %565 = vst [vmem:[%s283 + $0x460] sm:$0xff] %v564
      %v566 = vld [vmem:[%s282 + $0x468] sm:$0xff]
      %567 = vst [vmem:[%s283 + $0x468] sm:$0xff] %v566
      %v568 = vld [vmem:[%s282 + $0x470] sm:$0xff]
      %569 = vst [vmem:[%s283 + $0x470] sm:$0xff] %v568
      %v570 = vld [vmem:[%s282 + $0x478] sm:$0xff]
      %571 = vst [vmem:[%s283 + $0x478] sm:$0xff] %v570
      %v572 = vld [vmem:[%s282 + $0x480] sm:$0xff]
      %573 = vst [vmem:[%s283 + $0x480] sm:$0xff] %v572
      %v574 = vld [vmem:[%s282 + $0x488] sm:$0xff]
      %575 = vst [vmem:[%s283 + $0x488] sm:$0xff] %v574
      %v576 = vld [vmem:[%s282 + $0x490] sm:$0xff]
      %577 = vst [vmem:[%s283 + $0x490] sm:$0xff] %v576
      %v578 = vld [vmem:[%s282 + $0x498] sm:$0xff]
      %579 = vst [vmem:[%s283 + $0x498] sm:$0xff] %v578
      %v580 = vld [vmem:[%s282 + $0x4a0] sm:$0xff]
      %581 = vst [vmem:[%s283 + $0x4a0] sm:$0xff] %v580
      %v582 = vld [vmem:[%s282 + $0x4a8] sm:$0xff]
      %583 = vst [vmem:[%s283 + $0x4a8] sm:$0xff] %v582
      %v584 = vld [vmem:[%s282 + $0x4b0] sm:$0xff]
      %585 = vst [vmem:[%s283 + $0x4b0] sm:$0xff] %v584
      %v586 = vld [vmem:[%s282 + $0x4b8] sm:$0xff]
      %587 = vst [vmem:[%s283 + $0x4b8] sm:$0xff] %v586
      %v588 = vld [vmem:[%s282 + $0x4c0] sm:$0xff]
      %589 = vst [vmem:[%s283 + $0x4c0] sm:$0xff] %v588
      %v590 = vld [vmem:[%s282 + $0x4c8] sm:$0xff]
      %591 = vst [vmem:[%s283 + $0x4c8] sm:$0xff] %v590
      %v592 = vld [vmem:[%s282 + $0x4d0] sm:$0xff]
      %593 = vst [vmem:[%s283 + $0x4d0] sm:$0xff] %v592
      %v594 = vld [vmem:[%s282 + $0x4d8] sm:$0xff]
      %595 = vst [vmem:[%s283 + $0x4d8] sm:$0xff] %v594
      %v596 = vld [vmem:[%s282 + $0x4e0] sm:$0xff]
      %597 = vst [vmem:[%s283 + $0x4e0] sm:$0xff] %v596
      %v598 = vld [vmem:[%s282 + $0x4e8] sm:$0xff]
      %599 = vst [vmem:[%s283 + $0x4e8] sm:$0xff] %v598
      %v600 = vld [vmem:[%s282 + $0x4f0] sm:$0xff]
      %601 = vst [vmem:[%s283 + $0x4f0] sm:$0xff] %v600
      %v602 = vld [vmem:[%s282 + $0x4f8] sm:$0xff]
      %603 = vst [vmem:[%s283 + $0x4f8] sm:$0xff] %v602
      %v604 = vld [vmem:[%s282 + $0x500] sm:$0xff]
      %605 = vst [vmem:[%s283 + $0x500] sm:$0xff] %v604
      %v606 = vld [vmem:[%s282 + $0x508] sm:$0xff]
      %607 = vst [vmem:[%s283 + $0x508] sm:$0xff] %v606
      %v608 = vld [vmem:[%s282 + $0x510] sm:$0xff]
      %609 = vst [vmem:[%s283 + $0x510] sm:$0xff] %v608
      %v610 = vld [vmem:[%s282 + $0x518] sm:$0xff]
      %611 = vst [vmem:[%s283 + $0x518] sm:$0xff] %v610
      %v612 = vld [vmem:[%s282 + $0x520] sm:$0xff]
      %613 = vst [vmem:[%s283 + $0x520] sm:$0xff] %v612
      %v614 = vld [vmem:[%s282 + $0x528] sm:$0xff]
      %615 = vst [vmem:[%s283 + $0x528] sm:$0xff] %v614
      %v616 = vld [vmem:[%s282 + $0x530] sm:$0xff]
      %617 = vst [vmem:[%s283 + $0x530] sm:$0xff] %v616
      %v618 = vld [vmem:[%s282 + $0x538] sm:$0xff]
      %619 = vst [vmem:[%s283 + $0x538] sm:$0xff] %v618
      %v620 = vld [vmem:[%s282 + $0x540] sm:$0xff]
      %621 = vst [vmem:[%s283 + $0x540] sm:$0xff] %v620
      %v622 = vld [vmem:[%s282 + $0x548] sm:$0xff]
      %623 = vst [vmem:[%s283 + $0x548] sm:$0xff] %v622
      %v624 = vld [vmem:[%s282 + $0x550] sm:$0xff]
      %625 = vst [vmem:[%s283 + $0x550] sm:$0xff] %v624
      %v626 = vld [vmem:[%s282 + $0x558] sm:$0xff]
      %627 = vst [vmem:[%s283 + $0x558] sm:$0xff] %v626
      %v628 = vld [vmem:[%s282 + $0x560] sm:$0xff]
      %629 = vst [vmem:[%s283 + $0x560] sm:$0xff] %v628
      %v630 = vld [vmem:[%s282 + $0x568] sm:$0xff]
      %631 = vst [vmem:[%s283 + $0x568] sm:$0xff] %v630
      %v632 = vld [vmem:[%s282 + $0x570] sm:$0xff]
      %633 = vst [vmem:[%s283 + $0x570] sm:$0xff] %v632
      %v634 = vld [vmem:[%s282 + $0x578] sm:$0xff]
      %635 = vst [vmem:[%s283 + $0x578] sm:$0xff] %v634
      %v636 = vld [vmem:[%s282 + $0x580] sm:$0xff]
      %637 = vst [vmem:[%s283 + $0x580] sm:$0xff] %v636
      %v638 = vld [vmem:[%s282 + $0x588] sm:$0xff]
      %639 = vst [vmem:[%s283 + $0x588] sm:$0xff] %v638
      %v640 = vld [vmem:[%s282 + $0x590] sm:$0xff]
      %641 = vst [vmem:[%s283 + $0x590] sm:$0xff] %v640
      %v642 = vld [vmem:[%s282 + $0x598] sm:$0xff]
      %643 = vst [vmem:[%s283 + $0x598] sm:$0xff] %v642
      %v644 = vld [vmem:[%s282 + $0x5a0] sm:$0xff]
      %645 = vst [vmem:[%s283 + $0x5a0] sm:$0xff] %v644
      %v646 = vld [vmem:[%s282 + $0x5a8] sm:$0xff]
      %647 = vst [vmem:[%s283 + $0x5a8] sm:$0xff] %v646
      %v648 = vld [vmem:[%s282 + $0x5b0] sm:$0xff]
      %649 = vst [vmem:[%s283 + $0x5b0] sm:$0xff] %v648
      %v650 = vld [vmem:[%s282 + $0x5b8] sm:$0xff]
      %651 = vst [vmem:[%s283 + $0x5b8] sm:$0xff] %v650
      %v652 = vld [vmem:[%s282 + $0x5c0] sm:$0xff]
      %653 = vst [vmem:[%s283 + $0x5c0] sm:$0xff] %v652
      %v654 = vld [vmem:[%s282 + $0x5c8] sm:$0xff]
      %655 = vst [vmem:[%s283 + $0x5c8] sm:$0xff] %v654
      %v656 = vld [vmem:[%s282 + $0x5d0] sm:$0xff]
      %657 = vst [vmem:[%s283 + $0x5d0] sm:$0xff] %v656
      %v658 = vld [vmem:[%s282 + $0x5d8] sm:$0xff]
      %659 = vst [vmem:[%s283 + $0x5d8] sm:$0xff] %v658
      %v660 = vld [vmem:[%s282 + $0x5e0] sm:$0xff]
      %661 = vst [vmem:[%s283 + $0x5e0] sm:$0xff] %v660
      %v662 = vld [vmem:[%s282 + $0x5e8] sm:$0xff]
      %663 = vst [vmem:[%s283 + $0x5e8] sm:$0xff] %v662
      %v664 = vld [vmem:[%s282 + $0x5f0] sm:$0xff]
      %665 = vst [vmem:[%s283 + $0x5f0] sm:$0xff] %v664
      %v666 = vld [vmem:[%s282 + $0x5f8] sm:$0xff]
      %667 = vst [vmem:[%s283 + $0x5f8] sm:$0xff] %v666
      %v668 = vld [vmem:[%s282 + $0x600] sm:$0xff]
      %669 = vst [vmem:[%s283 + $0x600] sm:$0xff] %v668
      %v670 = vld [vmem:[%s282 + $0x608] sm:$0xff]
      %671 = vst [vmem:[%s283 + $0x608] sm:$0xff] %v670
      %v672 = vld [vmem:[%s282 + $0x610] sm:$0xff]
      %673 = vst [vmem:[%s283 + $0x610] sm:$0xff] %v672
      %v674 = vld [vmem:[%s282 + $0x618] sm:$0xff]
      %675 = vst [vmem:[%s283 + $0x618] sm:$0xff] %v674
      %v676 = vld [vmem:[%s282 + $0x620] sm:$0xff]
      %677 = vst [vmem:[%s283 + $0x620] sm:$0xff] %v676
      %v678 = vld [vmem:[%s282 + $0x628] sm:$0xff]
      %679 = vst [vmem:[%s283 + $0x628] sm:$0xff] %v678
      %v680 = vld [vmem:[%s282 + $0x630] sm:$0xff]
      %681 = vst [vmem:[%s283 + $0x630] sm:$0xff] %v680
      %v682 = vld [vmem:[%s282 + $0x638] sm:$0xff]
      %683 = vst [vmem:[%s283 + $0x638] sm:$0xff] %v682
      %v684 = vld [vmem:[%s282 + $0x640] sm:$0xff]
      %685 = vst [vmem:[%s283 + $0x640] sm:$0xff] %v684
      %v686 = vld [vmem:[%s282 + $0x648] sm:$0xff]
      %687 = vst [vmem:[%s283 + $0x648] sm:$0xff] %v686
      %v688 = vld [vmem:[%s282 + $0x650] sm:$0xff]
      %689 = vst [vmem:[%s283 + $0x650] sm:$0xff] %v688
      %v690 = vld [vmem:[%s282 + $0x658] sm:$0xff]
      %691 = vst [vmem:[%s283 + $0x658] sm:$0xff] %v690
      %v692 = vld [vmem:[%s282 + $0x660] sm:$0xff]
      %693 = vst [vmem:[%s283 + $0x660] sm:$0xff] %v692
      %v694 = vld [vmem:[%s282 + $0x668] sm:$0xff]
      %695 = vst [vmem:[%s283 + $0x668] sm:$0xff] %v694
      %v696 = vld [vmem:[%s282 + $0x670] sm:$0xff]
      %697 = vst [vmem:[%s283 + $0x670] sm:$0xff] %v696
      %v698 = vld [vmem:[%s282 + $0x678] sm:$0xff]
      %699 = vst [vmem:[%s283 + $0x678] sm:$0xff] %v698
      %v700 = vld [vmem:[%s282 + $0x680] sm:$0xff]
      %701 = vst [vmem:[%s283 + $0x680] sm:$0xff] %v700
      %v702 = vld [vmem:[%s282 + $0x688] sm:$0xff]
      %703 = vst [vmem:[%s283 + $0x688] sm:$0xff] %v702
      %v704 = vld [vmem:[%s282 + $0x690] sm:$0xff]
      %705 = vst [vmem:[%s283 + $0x690] sm:$0xff] %v704
      %v706 = vld [vmem:[%s282 + $0x698] sm:$0xff]
      %707 = vst [vmem:[%s283 + $0x698] sm:$0xff] %v706
      %v708 = vld [vmem:[%s282 + $0x6a0] sm:$0xff]
      %709 = vst [vmem:[%s283 + $0x6a0] sm:$0xff] %v708
      %v710 = vld [vmem:[%s282 + $0x6a8] sm:$0xff]
      %711 = vst [vmem:[%s283 + $0x6a8] sm:$0xff] %v710
      %v712 = vld [vmem:[%s282 + $0x6b0] sm:$0xff]
      %713 = vst [vmem:[%s283 + $0x6b0] sm:$0xff] %v712
      %v714 = vld [vmem:[%s282 + $0x6b8] sm:$0xff]
      %715 = vst [vmem:[%s283 + $0x6b8] sm:$0xff] %v714
      %v716 = vld [vmem:[%s282 + $0x6c0] sm:$0xff]
      %717 = vst [vmem:[%s283 + $0x6c0] sm:$0xff] %v716
      %v718 = vld [vmem:[%s282 + $0x6c8] sm:$0xff]
      %719 = vst [vmem:[%s283 + $0x6c8] sm:$0xff] %v718
      %v720 = vld [vmem:[%s282 + $0x6d0] sm:$0xff]
      %721 = vst [vmem:[%s283 + $0x6d0] sm:$0xff] %v720
      %v722 = vld [vmem:[%s282 + $0x6d8] sm:$0xff]
      %723 = vst [vmem:[%s283 + $0x6d8] sm:$0xff] %v722
      %v724 = vld [vmem:[%s282 + $0x6e0] sm:$0xff]
      %725 = vst [vmem:[%s283 + $0x6e0] sm:$0xff] %v724
      %v726 = vld [vmem:[%s282 + $0x6e8] sm:$0xff]
      %727 = vst [vmem:[%s283 + $0x6e8] sm:$0xff] %v726
      %v728 = vld [vmem:[%s282 + $0x6f0] sm:$0xff]
      %729 = vst [vmem:[%s283 + $0x6f0] sm:$0xff] %v728
      %v730 = vld [vmem:[%s282 + $0x6f8] sm:$0xff]
      %731 = vst [vmem:[%s283 + $0x6f8] sm:$0xff] %v730
      %v732 = vld [vmem:[%s282 + $0x700] sm:$0xff]
      %733 = vst [vmem:[%s283 + $0x700] sm:$0xff] %v732
      %v734 = vld [vmem:[%s282 + $0x708] sm:$0xff]
      %735 = vst [vmem:[%s283 + $0x708] sm:$0xff] %v734
      %v736 = vld [vmem:[%s282 + $0x710] sm:$0xff]
      %737 = vst [vmem:[%s283 + $0x710] sm:$0xff] %v736
      %v738 = vld [vmem:[%s282 + $0x718] sm:$0xff]
      %739 = vst [vmem:[%s283 + $0x718] sm:$0xff] %v738
      %v740 = vld [vmem:[%s282 + $0x720] sm:$0xff]
      %741 = vst [vmem:[%s283 + $0x720] sm:$0xff] %v740
      %v742 = vld [vmem:[%s282 + $0x728] sm:$0xff]
      %743 = vst [vmem:[%s283 + $0x728] sm:$0xff] %v742
      %v744 = vld [vmem:[%s282 + $0x730] sm:$0xff]
      %745 = vst [vmem:[%s283 + $0x730] sm:$0xff] %v744
      %v746 = vld [vmem:[%s282 + $0x738] sm:$0xff]
      %747 = vst [vmem:[%s283 + $0x738] sm:$0xff] %v746
      %v748 = vld [vmem:[%s282 + $0x740] sm:$0xff]
      %749 = vst [vmem:[%s283 + $0x740] sm:$0xff] %v748
      %v750 = vld [vmem:[%s282 + $0x748] sm:$0xff]
      %751 = vst [vmem:[%s283 + $0x748] sm:$0xff] %v750
      %v752 = vld [vmem:[%s282 + $0x750] sm:$0xff]
      %753 = vst [vmem:[%s283 + $0x750] sm:$0xff] %v752
      %v754 = vld [vmem:[%s282 + $0x758] sm:$0xff]
      %755 = vst [vmem:[%s283 + $0x758] sm:$0xff] %v754
      %v756 = vld [vmem:[%s282 + $0x760] sm:$0xff]
      %757 = vst [vmem:[%s283 + $0x760] sm:$0xff] %v756
      %v758 = vld [vmem:[%s282 + $0x768] sm:$0xff]
      %759 = vst [vmem:[%s283 + $0x768] sm:$0xff] %v758
      %v760 = vld [vmem:[%s282 + $0x770] sm:$0xff]
      %761 = vst [vmem:[%s283 + $0x770] sm:$0xff] %v760
      %v762 = vld [vmem:[%s282 + $0x778] sm:$0xff]
      %763 = vst [vmem:[%s283 + $0x778] sm:$0xff] %v762
      %v764 = vld [vmem:[%s282 + $0x780] sm:$0xff]
      %765 = vst [vmem:[%s283 + $0x780] sm:$0xff] %v764
      %v766 = vld [vmem:[%s282 + $0x788] sm:$0xff]
      %767 = vst [vmem:[%s283 + $0x788] sm:$0xff] %v766
      %v768 = vld [vmem:[%s282 + $0x790] sm:$0xff]
      %769 = vst [vmem:[%s283 + $0x790] sm:$0xff] %v768
      %v770 = vld [vmem:[%s282 + $0x798] sm:$0xff]
      %771 = vst [vmem:[%s283 + $0x798] sm:$0xff] %v770
      %v772 = vld [vmem:[%s282 + $0x7a0] sm:$0xff]
      %773 = vst [vmem:[%s283 + $0x7a0] sm:$0xff] %v772
      %v774 = vld [vmem:[%s282 + $0x7a8] sm:$0xff]
      %775 = vst [vmem:[%s283 + $0x7a8] sm:$0xff] %v774
      %v776 = vld [vmem:[%s282 + $0x7b0] sm:$0xff]
      %777 = vst [vmem:[%s283 + $0x7b0] sm:$0xff] %v776
      %v778 = vld [vmem:[%s282 + $0x7b8] sm:$0xff]
      %779 = vst [vmem:[%s283 + $0x7b8] sm:$0xff] %v778
      %v780 = vld [vmem:[%s282 + $0x7c0] sm:$0xff]
      %781 = vst [vmem:[%s283 + $0x7c0] sm:$0xff] %v780
      %v782 = vld [vmem:[%s282 + $0x7c8] sm:$0xff]
      %783 = vst [vmem:[%s283 + $0x7c8] sm:$0xff] %v782
      %v784 = vld [vmem:[%s282 + $0x7d0] sm:$0xff]
      %785 = vst [vmem:[%s283 + $0x7d0] sm:$0xff] %v784
      %v786 = vld [vmem:[%s282 + $0x7d8] sm:$0xff]
      %787 = vst [vmem:[%s283 + $0x7d8] sm:$0xff] %v786
      %v788 = vld [vmem:[%s282 + $0x7e0] sm:$0xff]
      %789 = vst [vmem:[%s283 + $0x7e0] sm:$0xff] %v788
      %v790 = vld [vmem:[%s282 + $0x7e8] sm:$0xff]
      %791 = vst [vmem:[%s283 + $0x7e8] sm:$0xff] %v790
      %v792 = vld [vmem:[%s282 + $0x7f0] sm:$0xff]
      %793 = vst [vmem:[%s283 + $0x7f0] sm:$0xff] %v792
      %v794 = vld [vmem:[%s282 + $0x7f8] sm:$0xff]
      %795 = vst [vmem:[%s283 + $0x7f8] sm:$0xff] %v794
    $region100: #{generator_forward.1} parent=94 // loop_footer
      %s281 = sadd.s32 1, %s277
    $region101: #{generator_forward.1} parent=94 // loop_footer_branch
      %276 = sbr.rel target = $region97
    $region102: #{generator_forward.1} parent=94 // loop_exit
      _
  $region95: #{generator_forward.1} parent=0 // pred_fallthru
    _
  // Predicated region
  $region103: #{generator_forward.1} parent=0 // pred_check
    _
  $region104: #{generator_forward.1} parent=0 // pred_check_branch
    %797 = sbr.rel target = $region106
  $region105: #{generator_forward.1} parent=0 // pred_region
    _
  $region106: #{generator_forward.1} parent=0 // pred_fallthru
    _
  // Predicated region
  $region107: #{generator_forward.1} parent=0 // pred_check
    _
  $region108: #{generator_forward.1} parent=0 // pred_check_branch
    %800 = sbr.rel (0) target = $region110
  $region109: #{generator_forward.1} parent=0 // pred_region
    %801 = vsyncadd %s273, 32768
  $region110: #{generator_forward.1} parent=0 // pred_fallthru
    _
  %s802 = scalar_lea.sflag [#allocation7], 3
  // Predicated region
  $region111: #{generator_forward.1} parent=0 // pred_check
    _
  $region112: #{generator_forward.1} parent=0 // pred_check_branch
    %804 = sbr.rel (0) target = $region114
  $region113: #{generator_forward.1} parent=0 // pred_region
    loop: start=0, step=1, limit=1
    $region115: #{generator_forward.1} parent=113 // loop_pre_header
      _
    $region116: #{generator_forward.1} parent=113 // loop_header
      %s806 = sphi 0, %s810
      %p807 = scmp.ge.s32.totalorder %s806, 1
      %s811 = sphi %s16, %s16
      %s812 = sphi [#allocation6], [#allocation6]
    $region117: #{generator_forward.1} parent=113 // loop_header_branch
      %809 = sbr.rel (%p807) target = $region121
    $region118: #{generator_forward.1} parent=113 // loop_body
      %v813 = vld [vmem:[%s811] sm:$0xff]
      %814 = vst [vmem:[%s812] sm:$0xff] %v813
      %v815 = vld [vmem:[%s811 + $0x8] sm:$0xff]
      %816 = vst [vmem:[%s812 + $0x8] sm:$0xff] %v815
      %v817 = vld [vmem:[%s811 + $0x10] sm:$0xff]
      %818 = vst [vmem:[%s812 + $0x10] sm:$0xff] %v817
      %v819 = vld [vmem:[%s811 + $0x18] sm:$0xff]
      %820 = vst [vmem:[%s812 + $0x18] sm:$0xff] %v819
      %v821 = vld [vmem:[%s811 + $0x20] sm:$0xff]
      %822 = vst [vmem:[%s812 + $0x20] sm:$0xff] %v821
      %v823 = vld [vmem:[%s811 + $0x28] sm:$0xff]
      %824 = vst [vmem:[%s812 + $0x28] sm:$0xff] %v823
      %v825 = vld [vmem:[%s811 + $0x30] sm:$0xff]
      %826 = vst [vmem:[%s812 + $0x30] sm:$0xff] %v825
      %v827 = vld [vmem:[%s811 + $0x38] sm:$0xff]
      %828 = vst [vmem:[%s812 + $0x38] sm:$0xff] %v827
      %v829 = vld [vmem:[%s811 + $0x40] sm:$0xff]
      %830 = vst [vmem:[%s812 + $0x40] sm:$0xff] %v829
      %v831 = vld [vmem:[%s811 + $0x48] sm:$0xff]
      %832 = vst [vmem:[%s812 + $0x48] sm:$0xff] %v831
      %v833 = vld [vmem:[%s811 + $0x50] sm:$0xff]
      %834 = vst [vmem:[%s812 + $0x50] sm:$0xff] %v833
      %v835 = vld [vmem:[%s811 + $0x58] sm:$0xff]
      %836 = vst [vmem:[%s812 + $0x58] sm:$0xff] %v835
      %v837 = vld [vmem:[%s811 + $0x60] sm:$0xff]
      %838 = vst [vmem:[%s812 + $0x60] sm:$0xff] %v837
      %v839 = vld [vmem:[%s811 + $0x68] sm:$0xff]
      %840 = vst [vmem:[%s812 + $0x68] sm:$0xff] %v839
      %v841 = vld [vmem:[%s811 + $0x70] sm:$0xff]
      %842 = vst [vmem:[%s812 + $0x70] sm:$0xff] %v841
      %v843 = vld [vmem:[%s811 + $0x78] sm:$0xff]
      %844 = vst [vmem:[%s812 + $0x78] sm:$0xff] %v843
      %v845 = vld [vmem:[%s811 + $0x80] sm:$0xff]
      %846 = vst [vmem:[%s812 + $0x80] sm:$0xff] %v845
      %v847 = vld [vmem:[%s811 + $0x88] sm:$0xff]
      %848 = vst [vmem:[%s812 + $0x88] sm:$0xff] %v847
      %v849 = vld [vmem:[%s811 + $0x90] sm:$0xff]
      %850 = vst [vmem:[%s812 + $0x90] sm:$0xff] %v849
      %v851 = vld [vmem:[%s811 + $0x98] sm:$0xff]
      %852 = vst [vmem:[%s812 + $0x98] sm:$0xff] %v851
      %v853 = vld [vmem:[%s811 + $0xa0] sm:$0xff]
      %854 = vst [vmem:[%s812 + $0xa0] sm:$0xff] %v853
      %v855 = vld [vmem:[%s811 + $0xa8] sm:$0xff]
      %856 = vst [vmem:[%s812 + $0xa8] sm:$0xff] %v855
      %v857 = vld [vmem:[%s811 + $0xb0] sm:$0xff]
      %858 = vst [vmem:[%s812 + $0xb0] sm:$0xff] %v857
      %v859 = vld [vmem:[%s811 + $0xb8] sm:$0xff]
      %860 = vst [vmem:[%s812 + $0xb8] sm:$0xff] %v859
      %v861 = vld [vmem:[%s811 + $0xc0] sm:$0xff]
      %862 = vst [vmem:[%s812 + $0xc0] sm:$0xff] %v861
      %v863 = vld [vmem:[%s811 + $0xc8] sm:$0xff]
      %864 = vst [vmem:[%s812 + $0xc8] sm:$0xff] %v863
      %v865 = vld [vmem:[%s811 + $0xd0] sm:$0xff]
      %866 = vst [vmem:[%s812 + $0xd0] sm:$0xff] %v865
      %v867 = vld [vmem:[%s811 + $0xd8] sm:$0xff]
      %868 = vst [vmem:[%s812 + $0xd8] sm:$0xff] %v867
      %v869 = vld [vmem:[%s811 + $0xe0] sm:$0xff]
      %870 = vst [vmem:[%s812 + $0xe0] sm:$0xff] %v869
      %v871 = vld [vmem:[%s811 + $0xe8] sm:$0xff]
      %872 = vst [vmem:[%s812 + $0xe8] sm:$0xff] %v871
      %v873 = vld [vmem:[%s811 + $0xf0] sm:$0xff]
      %874 = vst [vmem:[%s812 + $0xf0] sm:$0xff] %v873
      %v875 = vld [vmem:[%s811 + $0xf8] sm:$0xff]
      %876 = vst [vmem:[%s812 + $0xf8] sm:$0xff] %v875
      %v877 = vld [vmem:[%s811 + $0x100] sm:$0xff]
      %878 = vst [vmem:[%s812 + $0x100] sm:$0xff] %v877
      %v879 = vld [vmem:[%s811 + $0x108] sm:$0xff]
      %880 = vst [vmem:[%s812 + $0x108] sm:$0xff] %v879
      %v881 = vld [vmem:[%s811 + $0x110] sm:$0xff]
      %882 = vst [vmem:[%s812 + $0x110] sm:$0xff] %v881
      %v883 = vld [vmem:[%s811 + $0x118] sm:$0xff]
      %884 = vst [vmem:[%s812 + $0x118] sm:$0xff] %v883
      %v885 = vld [vmem:[%s811 + $0x120] sm:$0xff]
      %886 = vst [vmem:[%s812 + $0x120] sm:$0xff] %v885
      %v887 = vld [vmem:[%s811 + $0x128] sm:$0xff]
      %888 = vst [vmem:[%s812 + $0x128] sm:$0xff] %v887
      %v889 = vld [vmem:[%s811 + $0x130] sm:$0xff]
      %890 = vst [vmem:[%s812 + $0x130] sm:$0xff] %v889
      %v891 = vld [vmem:[%s811 + $0x138] sm:$0xff]
      %892 = vst [vmem:[%s812 + $0x138] sm:$0xff] %v891
      %v893 = vld [vmem:[%s811 + $0x140] sm:$0xff]
      %894 = vst [vmem:[%s812 + $0x140] sm:$0xff] %v893
      %v895 = vld [vmem:[%s811 + $0x148] sm:$0xff]
      %896 = vst [vmem:[%s812 + $0x148] sm:$0xff] %v895
      %v897 = vld [vmem:[%s811 + $0x150] sm:$0xff]
      %898 = vst [vmem:[%s812 + $0x150] sm:$0xff] %v897
      %v899 = vld [vmem:[%s811 + $0x158] sm:$0xff]
      %900 = vst [vmem:[%s812 + $0x158] sm:$0xff] %v899
      %v901 = vld [vmem:[%s811 + $0x160] sm:$0xff]
      %902 = vst [vmem:[%s812 + $0x160] sm:$0xff] %v901
      %v903 = vld [vmem:[%s811 + $0x168] sm:$0xff]
      %904 = vst [vmem:[%s812 + $0x168] sm:$0xff] %v903
      %v905 = vld [vmem:[%s811 + $0x170] sm:$0xff]
      %906 = vst [vmem:[%s812 + $0x170] sm:$0xff] %v905
      %v907 = vld [vmem:[%s811 + $0x178] sm:$0xff]
      %908 = vst [vmem:[%s812 + $0x178] sm:$0xff] %v907
      %v909 = vld [vmem:[%s811 + $0x180] sm:$0xff]
      %910 = vst [vmem:[%s812 + $0x180] sm:$0xff] %v909
      %v911 = vld [vmem:[%s811 + $0x188] sm:$0xff]
      %912 = vst [vmem:[%s812 + $0x188] sm:$0xff] %v911
      %v913 = vld [vmem:[%s811 + $0x190] sm:$0xff]
      %914 = vst [vmem:[%s812 + $0x190] sm:$0xff] %v913
      %v915 = vld [vmem:[%s811 + $0x198] sm:$0xff]
      %916 = vst [vmem:[%s812 + $0x198] sm:$0xff] %v915
      %v917 = vld [vmem:[%s811 + $0x1a0] sm:$0xff]
      %918 = vst [vmem:[%s812 + $0x1a0] sm:$0xff] %v917
      %v919 = vld [vmem:[%s811 + $0x1a8] sm:$0xff]
      %920 = vst [vmem:[%s812 + $0x1a8] sm:$0xff] %v919
      %v921 = vld [vmem:[%s811 + $0x1b0] sm:$0xff]
      %922 = vst [vmem:[%s812 + $0x1b0] sm:$0xff] %v921
      %v923 = vld [vmem:[%s811 + $0x1b8] sm:$0xff]
      %924 = vst [vmem:[%s812 + $0x1b8] sm:$0xff] %v923
      %v925 = vld [vmem:[%s811 + $0x1c0] sm:$0xff]
      %926 = vst [vmem:[%s812 + $0x1c0] sm:$0xff] %v925
      %v927 = vld [vmem:[%s811 + $0x1c8] sm:$0xff]
      %928 = vst [vmem:[%s812 + $0x1c8] sm:$0xff] %v927
      %v929 = vld [vmem:[%s811 + $0x1d0] sm:$0xff]
      %930 = vst [vmem:[%s812 + $0x1d0] sm:$0xff] %v929
      %v931 = vld [vmem:[%s811 + $0x1d8] sm:$0xff]
      %932 = vst [vmem:[%s812 + $0x1d8] sm:$0xff] %v931
      %v933 = vld [vmem:[%s811 + $0x1e0] sm:$0xff]
      %934 = vst [vmem:[%s812 + $0x1e0] sm:$0xff] %v933
      %v935 = vld [vmem:[%s811 + $0x1e8] sm:$0xff]
      %936 = vst [vmem:[%s812 + $0x1e8] sm:$0xff] %v935
      %v937 = vld [vmem:[%s811 + $0x1f0] sm:$0xff]
      %938 = vst [vmem:[%s812 + $0x1f0] sm:$0xff] %v937
      %v939 = vld [vmem:[%s811 + $0x1f8] sm:$0xff]
      %940 = vst [vmem:[%s812 + $0x1f8] sm:$0xff] %v939
      %v941 = vld [vmem:[%s811 + $0x200] sm:$0xff]
      %942 = vst [vmem:[%s812 + $0x200] sm:$0xff] %v941
      %v943 = vld [vmem:[%s811 + $0x208] sm:$0xff]
      %944 = vst [vmem:[%s812 + $0x208] sm:$0xff] %v943
      %v945 = vld [vmem:[%s811 + $0x210] sm:$0xff]
      %946 = vst [vmem:[%s812 + $0x210] sm:$0xff] %v945
      %v947 = vld [vmem:[%s811 + $0x218] sm:$0xff]
      %948 = vst [vmem:[%s812 + $0x218] sm:$0xff] %v947
      %v949 = vld [vmem:[%s811 + $0x220] sm:$0xff]
      %950 = vst [vmem:[%s812 + $0x220] sm:$0xff] %v949
      %v951 = vld [vmem:[%s811 + $0x228] sm:$0xff]
      %952 = vst [vmem:[%s812 + $0x228] sm:$0xff] %v951
      %v953 = vld [vmem:[%s811 + $0x230] sm:$0xff]
      %954 = vst [vmem:[%s812 + $0x230] sm:$0xff] %v953
      %v955 = vld [vmem:[%s811 + $0x238] sm:$0xff]
      %956 = vst [vmem:[%s812 + $0x238] sm:$0xff] %v955
      %v957 = vld [vmem:[%s811 + $0x240] sm:$0xff]
      %958 = vst [vmem:[%s812 + $0x240] sm:$0xff] %v957
      %v959 = vld [vmem:[%s811 + $0x248] sm:$0xff]
      %960 = vst [vmem:[%s812 + $0x248] sm:$0xff] %v959
      %v961 = vld [vmem:[%s811 + $0x250] sm:$0xff]
      %962 = vst [vmem:[%s812 + $0x250] sm:$0xff] %v961
      %v963 = vld [vmem:[%s811 + $0x258] sm:$0xff]
      %964 = vst [vmem:[%s812 + $0x258] sm:$0xff] %v963
      %v965 = vld [vmem:[%s811 + $0x260] sm:$0xff]
      %966 = vst [vmem:[%s812 + $0x260] sm:$0xff] %v965
      %v967 = vld [vmem:[%s811 + $0x268] sm:$0xff]
      %968 = vst [vmem:[%s812 + $0x268] sm:$0xff] %v967
      %v969 = vld [vmem:[%s811 + $0x270] sm:$0xff]
      %970 = vst [vmem:[%s812 + $0x270] sm:$0xff] %v969
      %v971 = vld [vmem:[%s811 + $0x278] sm:$0xff]
      %972 = vst [vmem:[%s812 + $0x278] sm:$0xff] %v971
      %v973 = vld [vmem:[%s811 + $0x280] sm:$0xff]
      %974 = vst [vmem:[%s812 + $0x280] sm:$0xff] %v973
      %v975 = vld [vmem:[%s811 + $0x288] sm:$0xff]
      %976 = vst [vmem:[%s812 + $0x288] sm:$0xff] %v975
      %v977 = vld [vmem:[%s811 + $0x290] sm:$0xff]
      %978 = vst [vmem:[%s812 + $0x290] sm:$0xff] %v977
      %v979 = vld [vmem:[%s811 + $0x298] sm:$0xff]
      %980 = vst [vmem:[%s812 + $0x298] sm:$0xff] %v979
      %v981 = vld [vmem:[%s811 + $0x2a0] sm:$0xff]
      %982 = vst [vmem:[%s812 + $0x2a0] sm:$0xff] %v981
      %v983 = vld [vmem:[%s811 + $0x2a8] sm:$0xff]
      %984 = vst [vmem:[%s812 + $0x2a8] sm:$0xff] %v983
      %v985 = vld [vmem:[%s811 + $0x2b0] sm:$0xff]
      %986 = vst [vmem:[%s812 + $0x2b0] sm:$0xff] %v985
      %v987 = vld [vmem:[%s811 + $0x2b8] sm:$0xff]
      %988 = vst [vmem:[%s812 + $0x2b8] sm:$0xff] %v987
      %v989 = vld [vmem:[%s811 + $0x2c0] sm:$0xff]
      %990 = vst [vmem:[%s812 + $0x2c0] sm:$0xff] %v989
      %v991 = vld [vmem:[%s811 + $0x2c8] sm:$0xff]
      %992 = vst [vmem:[%s812 + $0x2c8] sm:$0xff] %v991
      %v993 = vld [vmem:[%s811 + $0x2d0] sm:$0xff]
      %994 = vst [vmem:[%s812 + $0x2d0] sm:$0xff] %v993
      %v995 = vld [vmem:[%s811 + $0x2d8] sm:$0xff]
      %996 = vst [vmem:[%s812 + $0x2d8] sm:$0xff] %v995
      %v997 = vld [vmem:[%s811 + $0x2e0] sm:$0xff]
      %998 = vst [vmem:[%s812 + $0x2e0] sm:$0xff] %v997
      %v999 = vld [vmem:[%s811 + $0x2e8] sm:$0xff]
      %1000 = vst [vmem:[%s812 + $0x2e8] sm:$0xff] %v999
      %v1001 = vld [vmem:[%s811 + $0x2f0] sm:$0xff]
      %1002 = vst [vmem:[%s812 + $0x2f0] sm:$0xff] %v1001
      %v1003 = vld [vmem:[%s811 + $0x2f8] sm:$0xff]
      %1004 = vst [vmem:[%s812 + $0x2f8] sm:$0xff] %v1003
      %v1005 = vld [vmem:[%s811 + $0x300] sm:$0xff]
      %1006 = vst [vmem:[%s812 + $0x300] sm:$0xff] %v1005
      %v1007 = vld [vmem:[%s811 + $0x308] sm:$0xff]
      %1008 = vst [vmem:[%s812 + $0x308] sm:$0xff] %v1007
      %v1009 = vld [vmem:[%s811 + $0x310] sm:$0xff]
      %1010 = vst [vmem:[%s812 + $0x310] sm:$0xff] %v1009
      %v1011 = vld [vmem:[%s811 + $0x318] sm:$0xff]
      %1012 = vst [vmem:[%s812 + $0x318] sm:$0xff] %v1011
      %v1013 = vld [vmem:[%s811 + $0x320] sm:$0xff]
      %1014 = vst [vmem:[%s812 + $0x320] sm:$0xff] %v1013
      %v1015 = vld [vmem:[%s811 + $0x328] sm:$0xff]
      %1016 = vst [vmem:[%s812 + $0x328] sm:$0xff] %v1015
      %v1017 = vld [vmem:[%s811 + $0x330] sm:$0xff]
      %1018 = vst [vmem:[%s812 + $0x330] sm:$0xff] %v1017
      %v1019 = vld [vmem:[%s811 + $0x338] sm:$0xff]
      %1020 = vst [vmem:[%s812 + $0x338] sm:$0xff] %v1019
      %v1021 = vld [vmem:[%s811 + $0x340] sm:$0xff]
      %1022 = vst [vmem:[%s812 + $0x340] sm:$0xff] %v1021
      %v1023 = vld [vmem:[%s811 + $0x348] sm:$0xff]
      %1024 = vst [vmem:[%s812 + $0x348] sm:$0xff] %v1023
      %v1025 = vld [vmem:[%s811 + $0x350] sm:$0xff]
      %1026 = vst [vmem:[%s812 + $0x350] sm:$0xff] %v1025
      %v1027 = vld [vmem:[%s811 + $0x358] sm:$0xff]
      %1028 = vst [vmem:[%s812 + $0x358] sm:$0xff] %v1027
      %v1029 = vld [vmem:[%s811 + $0x360] sm:$0xff]
      %1030 = vst [vmem:[%s812 + $0x360] sm:$0xff] %v1029
      %v1031 = vld [vmem:[%s811 + $0x368] sm:$0xff]
      %1032 = vst [vmem:[%s812 + $0x368] sm:$0xff] %v1031
      %v1033 = vld [vmem:[%s811 + $0x370] sm:$0xff]
      %1034 = vst [vmem:[%s812 + $0x370] sm:$0xff] %v1033
      %v1035 = vld [vmem:[%s811 + $0x378] sm:$0xff]
      %1036 = vst [vmem:[%s812 + $0x378] sm:$0xff] %v1035
      %v1037 = vld [vmem:[%s811 + $0x380] sm:$0xff]
      %1038 = vst [vmem:[%s812 + $0x380] sm:$0xff] %v1037
      %v1039 = vld [vmem:[%s811 + $0x388] sm:$0xff]
      %1040 = vst [vmem:[%s812 + $0x388] sm:$0xff] %v1039
      %v1041 = vld [vmem:[%s811 + $0x390] sm:$0xff]
      %1042 = vst [vmem:[%s812 + $0x390] sm:$0xff] %v1041
      %v1043 = vld [vmem:[%s811 + $0x398] sm:$0xff]
      %1044 = vst [vmem:[%s812 + $0x398] sm:$0xff] %v1043
      %v1045 = vld [vmem:[%s811 + $0x3a0] sm:$0xff]
      %1046 = vst [vmem:[%s812 + $0x3a0] sm:$0xff] %v1045
      %v1047 = vld [vmem:[%s811 + $0x3a8] sm:$0xff]
      %1048 = vst [vmem:[%s812 + $0x3a8] sm:$0xff] %v1047
      %v1049 = vld [vmem:[%s811 + $0x3b0] sm:$0xff]
      %1050 = vst [vmem:[%s812 + $0x3b0] sm:$0xff] %v1049
      %v1051 = vld [vmem:[%s811 + $0x3b8] sm:$0xff]
      %1052 = vst [vmem:[%s812 + $0x3b8] sm:$0xff] %v1051
      %v1053 = vld [vmem:[%s811 + $0x3c0] sm:$0xff]
      %1054 = vst [vmem:[%s812 + $0x3c0] sm:$0xff] %v1053
      %v1055 = vld [vmem:[%s811 + $0x3c8] sm:$0xff]
      %1056 = vst [vmem:[%s812 + $0x3c8] sm:$0xff] %v1055
      %v1057 = vld [vmem:[%s811 + $0x3d0] sm:$0xff]
      %1058 = vst [vmem:[%s812 + $0x3d0] sm:$0xff] %v1057
      %v1059 = vld [vmem:[%s811 + $0x3d8] sm:$0xff]
      %1060 = vst [vmem:[%s812 + $0x3d8] sm:$0xff] %v1059
      %v1061 = vld [vmem:[%s811 + $0x3e0] sm:$0xff]
      %1062 = vst [vmem:[%s812 + $0x3e0] sm:$0xff] %v1061
      %v1063 = vld [vmem:[%s811 + $0x3e8] sm:$0xff]
      %1064 = vst [vmem:[%s812 + $0x3e8] sm:$0xff] %v1063
      %v1065 = vld [vmem:[%s811 + $0x3f0] sm:$0xff]
      %1066 = vst [vmem:[%s812 + $0x3f0] sm:$0xff] %v1065
      %v1067 = vld [vmem:[%s811 + $0x3f8] sm:$0xff]
      %1068 = vst [vmem:[%s812 + $0x3f8] sm:$0xff] %v1067
      %v1069 = vld [vmem:[%s811 + $0x400] sm:$0xff]
      %1070 = vst [vmem:[%s812 + $0x400] sm:$0xff] %v1069
      %v1071 = vld [vmem:[%s811 + $0x408] sm:$0xff]
      %1072 = vst [vmem:[%s812 + $0x408] sm:$0xff] %v1071
      %v1073 = vld [vmem:[%s811 + $0x410] sm:$0xff]
      %1074 = vst [vmem:[%s812 + $0x410] sm:$0xff] %v1073
      %v1075 = vld [vmem:[%s811 + $0x418] sm:$0xff]
      %1076 = vst [vmem:[%s812 + $0x418] sm:$0xff] %v1075
      %v1077 = vld [vmem:[%s811 + $0x420] sm:$0xff]
      %1078 = vst [vmem:[%s812 + $0x420] sm:$0xff] %v1077
      %v1079 = vld [vmem:[%s811 + $0x428] sm:$0xff]
      %1080 = vst [vmem:[%s812 + $0x428] sm:$0xff] %v1079
      %v1081 = vld [vmem:[%s811 + $0x430] sm:$0xff]
      %1082 = vst [vmem:[%s812 + $0x430] sm:$0xff] %v1081
      %v1083 = vld [vmem:[%s811 + $0x438] sm:$0xff]
      %1084 = vst [vmem:[%s812 + $0x438] sm:$0xff] %v1083
      %v1085 = vld [vmem:[%s811 + $0x440] sm:$0xff]
      %1086 = vst [vmem:[%s812 + $0x440] sm:$0xff] %v1085
      %v1087 = vld [vmem:[%s811 + $0x448] sm:$0xff]
      %1088 = vst [vmem:[%s812 + $0x448] sm:$0xff] %v1087
      %v1089 = vld [vmem:[%s811 + $0x450] sm:$0xff]
      %1090 = vst [vmem:[%s812 + $0x450] sm:$0xff] %v1089
      %v1091 = vld [vmem:[%s811 + $0x458] sm:$0xff]
      %1092 = vst [vmem:[%s812 + $0x458] sm:$0xff] %v1091
      %v1093 = vld [vmem:[%s811 + $0x460] sm:$0xff]
      %1094 = vst [vmem:[%s812 + $0x460] sm:$0xff] %v1093
      %v1095 = vld [vmem:[%s811 + $0x468] sm:$0xff]
      %1096 = vst [vmem:[%s812 + $0x468] sm:$0xff] %v1095
      %v1097 = vld [vmem:[%s811 + $0x470] sm:$0xff]
      %1098 = vst [vmem:[%s812 + $0x470] sm:$0xff] %v1097
      %v1099 = vld [vmem:[%s811 + $0x478] sm:$0xff]
      %1100 = vst [vmem:[%s812 + $0x478] sm:$0xff] %v1099
      %v1101 = vld [vmem:[%s811 + $0x480] sm:$0xff]
      %1102 = vst [vmem:[%s812 + $0x480] sm:$0xff] %v1101
      %v1103 = vld [vmem:[%s811 + $0x488] sm:$0xff]
      %1104 = vst [vmem:[%s812 + $0x488] sm:$0xff] %v1103
      %v1105 = vld [vmem:[%s811 + $0x490] sm:$0xff]
      %1106 = vst [vmem:[%s812 + $0x490] sm:$0xff] %v1105
      %v1107 = vld [vmem:[%s811 + $0x498] sm:$0xff]
      %1108 = vst [vmem:[%s812 + $0x498] sm:$0xff] %v1107
      %v1109 = vld [vmem:[%s811 + $0x4a0] sm:$0xff]
      %1110 = vst [vmem:[%s812 + $0x4a0] sm:$0xff] %v1109
      %v1111 = vld [vmem:[%s811 + $0x4a8] sm:$0xff]
      %1112 = vst [vmem:[%s812 + $0x4a8] sm:$0xff] %v1111
      %v1113 = vld [vmem:[%s811 + $0x4b0] sm:$0xff]
      %1114 = vst [vmem:[%s812 + $0x4b0] sm:$0xff] %v1113
      %v1115 = vld [vmem:[%s811 + $0x4b8] sm:$0xff]
      %1116 = vst [vmem:[%s812 + $0x4b8] sm:$0xff] %v1115
      %v1117 = vld [vmem:[%s811 + $0x4c0] sm:$0xff]
      %1118 = vst [vmem:[%s812 + $0x4c0] sm:$0xff] %v1117
      %v1119 = vld [vmem:[%s811 + $0x4c8] sm:$0xff]
      %1120 = vst [vmem:[%s812 + $0x4c8] sm:$0xff] %v1119
      %v1121 = vld [vmem:[%s811 + $0x4d0] sm:$0xff]
      %1122 = vst [vmem:[%s812 + $0x4d0] sm:$0xff] %v1121
      %v1123 = vld [vmem:[%s811 + $0x4d8] sm:$0xff]
      %1124 = vst [vmem:[%s812 + $0x4d8] sm:$0xff] %v1123
      %v1125 = vld [vmem:[%s811 + $0x4e0] sm:$0xff]
      %1126 = vst [vmem:[%s812 + $0x4e0] sm:$0xff] %v1125
      %v1127 = vld [vmem:[%s811 + $0x4e8] sm:$0xff]
      %1128 = vst [vmem:[%s812 + $0x4e8] sm:$0xff] %v1127
      %v1129 = vld [vmem:[%s811 + $0x4f0] sm:$0xff]
      %1130 = vst [vmem:[%s812 + $0x4f0] sm:$0xff] %v1129
      %v1131 = vld [vmem:[%s811 + $0x4f8] sm:$0xff]
      %1132 = vst [vmem:[%s812 + $0x4f8] sm:$0xff] %v1131
      %v1133 = vld [vmem:[%s811 + $0x500] sm:$0xff]
      %1134 = vst [vmem:[%s812 + $0x500] sm:$0xff] %v1133
      %v1135 = vld [vmem:[%s811 + $0x508] sm:$0xff]
      %1136 = vst [vmem:[%s812 + $0x508] sm:$0xff] %v1135
      %v1137 = vld [vmem:[%s811 + $0x510] sm:$0xff]
      %1138 = vst [vmem:[%s812 + $0x510] sm:$0xff] %v1137
      %v1139 = vld [vmem:[%s811 + $0x518] sm:$0xff]
      %1140 = vst [vmem:[%s812 + $0x518] sm:$0xff] %v1139
      %v1141 = vld [vmem:[%s811 + $0x520] sm:$0xff]
      %1142 = vst [vmem:[%s812 + $0x520] sm:$0xff] %v1141
      %v1143 = vld [vmem:[%s811 + $0x528] sm:$0xff]
      %1144 = vst [vmem:[%s812 + $0x528] sm:$0xff] %v1143
      %v1145 = vld [vmem:[%s811 + $0x530] sm:$0xff]
      %1146 = vst [vmem:[%s812 + $0x530] sm:$0xff] %v1145
      %v1147 = vld [vmem:[%s811 + $0x538] sm:$0xff]
      %1148 = vst [vmem:[%s812 + $0x538] sm:$0xff] %v1147
      %v1149 = vld [vmem:[%s811 + $0x540] sm:$0xff]
      %1150 = vst [vmem:[%s812 + $0x540] sm:$0xff] %v1149
      %v1151 = vld [vmem:[%s811 + $0x548] sm:$0xff]
      %1152 = vst [vmem:[%s812 + $0x548] sm:$0xff] %v1151
      %v1153 = vld [vmem:[%s811 + $0x550] sm:$0xff]
      %1154 = vst [vmem:[%s812 + $0x550] sm:$0xff] %v1153
      %v1155 = vld [vmem:[%s811 + $0x558] sm:$0xff]
      %1156 = vst [vmem:[%s812 + $0x558] sm:$0xff] %v1155
      %v1157 = vld [vmem:[%s811 + $0x560] sm:$0xff]
      %1158 = vst [vmem:[%s812 + $0x560] sm:$0xff] %v1157
      %v1159 = vld [vmem:[%s811 + $0x568] sm:$0xff]
      %1160 = vst [vmem:[%s812 + $0x568] sm:$0xff] %v1159
      %v1161 = vld [vmem:[%s811 + $0x570] sm:$0xff]
      %1162 = vst [vmem:[%s812 + $0x570] sm:$0xff] %v1161
      %v1163 = vld [vmem:[%s811 + $0x578] sm:$0xff]
      %1164 = vst [vmem:[%s812 + $0x578] sm:$0xff] %v1163
      %v1165 = vld [vmem:[%s811 + $0x580] sm:$0xff]
      %1166 = vst [vmem:[%s812 + $0x580] sm:$0xff] %v1165
      %v1167 = vld [vmem:[%s811 + $0x588] sm:$0xff]
      %1168 = vst [vmem:[%s812 + $0x588] sm:$0xff] %v1167
      %v1169 = vld [vmem:[%s811 + $0x590] sm:$0xff]
      %1170 = vst [vmem:[%s812 + $0x590] sm:$0xff] %v1169
      %v1171 = vld [vmem:[%s811 + $0x598] sm:$0xff]
      %1172 = vst [vmem:[%s812 + $0x598] sm:$0xff] %v1171
      %v1173 = vld [vmem:[%s811 + $0x5a0] sm:$0xff]
      %1174 = vst [vmem:[%s812 + $0x5a0] sm:$0xff] %v1173
      %v1175 = vld [vmem:[%s811 + $0x5a8] sm:$0xff]
      %1176 = vst [vmem:[%s812 + $0x5a8] sm:$0xff] %v1175
      %v1177 = vld [vmem:[%s811 + $0x5b0] sm:$0xff]
      %1178 = vst [vmem:[%s812 + $0x5b0] sm:$0xff] %v1177
      %v1179 = vld [vmem:[%s811 + $0x5b8] sm:$0xff]
      %1180 = vst [vmem:[%s812 + $0x5b8] sm:$0xff] %v1179
      %v1181 = vld [vmem:[%s811 + $0x5c0] sm:$0xff]
      %1182 = vst [vmem:[%s812 + $0x5c0] sm:$0xff] %v1181
      %v1183 = vld [vmem:[%s811 + $0x5c8] sm:$0xff]
      %1184 = vst [vmem:[%s812 + $0x5c8] sm:$0xff] %v1183
      %v1185 = vld [vmem:[%s811 + $0x5d0] sm:$0xff]
      %1186 = vst [vmem:[%s812 + $0x5d0] sm:$0xff] %v1185
      %v1187 = vld [vmem:[%s811 + $0x5d8] sm:$0xff]
      %1188 = vst [vmem:[%s812 + $0x5d8] sm:$0xff] %v1187
      %v1189 = vld [vmem:[%s811 + $0x5e0] sm:$0xff]
      %1190 = vst [vmem:[%s812 + $0x5e0] sm:$0xff] %v1189
      %v1191 = vld [vmem:[%s811 + $0x5e8] sm:$0xff]
      %1192 = vst [vmem:[%s812 + $0x5e8] sm:$0xff] %v1191
      %v1193 = vld [vmem:[%s811 + $0x5f0] sm:$0xff]
      %1194 = vst [vmem:[%s812 + $0x5f0] sm:$0xff] %v1193
      %v1195 = vld [vmem:[%s811 + $0x5f8] sm:$0xff]
      %1196 = vst [vmem:[%s812 + $0x5f8] sm:$0xff] %v1195
      %v1197 = vld [vmem:[%s811 + $0x600] sm:$0xff]
      %1198 = vst [vmem:[%s812 + $0x600] sm:$0xff] %v1197
      %v1199 = vld [vmem:[%s811 + $0x608] sm:$0xff]
      %1200 = vst [vmem:[%s812 + $0x608] sm:$0xff] %v1199
      %v1201 = vld [vmem:[%s811 + $0x610] sm:$0xff]
      %1202 = vst [vmem:[%s812 + $0x610] sm:$0xff] %v1201
      %v1203 = vld [vmem:[%s811 + $0x618] sm:$0xff]
      %1204 = vst [vmem:[%s812 + $0x618] sm:$0xff] %v1203
      %v1205 = vld [vmem:[%s811 + $0x620] sm:$0xff]
      %1206 = vst [vmem:[%s812 + $0x620] sm:$0xff] %v1205
      %v1207 = vld [vmem:[%s811 + $0x628] sm:$0xff]
      %1208 = vst [vmem:[%s812 + $0x628] sm:$0xff] %v1207
      %v1209 = vld [vmem:[%s811 + $0x630] sm:$0xff]
      %1210 = vst [vmem:[%s812 + $0x630] sm:$0xff] %v1209
      %v1211 = vld [vmem:[%s811 + $0x638] sm:$0xff]
      %1212 = vst [vmem:[%s812 + $0x638] sm:$0xff] %v1211
      %v1213 = vld [vmem:[%s811 + $0x640] sm:$0xff]
      %1214 = vst [vmem:[%s812 + $0x640] sm:$0xff] %v1213
      %v1215 = vld [vmem:[%s811 + $0x648] sm:$0xff]
      %1216 = vst [vmem:[%s812 + $0x648] sm:$0xff] %v1215
      %v1217 = vld [vmem:[%s811 + $0x650] sm:$0xff]
      %1218 = vst [vmem:[%s812 + $0x650] sm:$0xff] %v1217
      %v1219 = vld [vmem:[%s811 + $0x658] sm:$0xff]
      %1220 = vst [vmem:[%s812 + $0x658] sm:$0xff] %v1219
      %v1221 = vld [vmem:[%s811 + $0x660] sm:$0xff]
      %1222 = vst [vmem:[%s812 + $0x660] sm:$0xff] %v1221
      %v1223 = vld [vmem:[%s811 + $0x668] sm:$0xff]
      %1224 = vst [vmem:[%s812 + $0x668] sm:$0xff] %v1223
      %v1225 = vld [vmem:[%s811 + $0x670] sm:$0xff]
      %1226 = vst [vmem:[%s812 + $0x670] sm:$0xff] %v1225
      %v1227 = vld [vmem:[%s811 + $0x678] sm:$0xff]
      %1228 = vst [vmem:[%s812 + $0x678] sm:$0xff] %v1227
      %v1229 = vld [vmem:[%s811 + $0x680] sm:$0xff]
      %1230 = vst [vmem:[%s812 + $0x680] sm:$0xff] %v1229
      %v1231 = vld [vmem:[%s811 + $0x688] sm:$0xff]
      %1232 = vst [vmem:[%s812 + $0x688] sm:$0xff] %v1231
      %v1233 = vld [vmem:[%s811 + $0x690] sm:$0xff]
      %1234 = vst [vmem:[%s812 + $0x690] sm:$0xff] %v1233
      %v1235 = vld [vmem:[%s811 + $0x698] sm:$0xff]
      %1236 = vst [vmem:[%s812 + $0x698] sm:$0xff] %v1235
      %v1237 = vld [vmem:[%s811 + $0x6a0] sm:$0xff]
      %1238 = vst [vmem:[%s812 + $0x6a0] sm:$0xff] %v1237
      %v1239 = vld [vmem:[%s811 + $0x6a8] sm:$0xff]
      %1240 = vst [vmem:[%s812 + $0x6a8] sm:$0xff] %v1239
      %v1241 = vld [vmem:[%s811 + $0x6b0] sm:$0xff]
      %1242 = vst [vmem:[%s812 + $0x6b0] sm:$0xff] %v1241
      %v1243 = vld [vmem:[%s811 + $0x6b8] sm:$0xff]
      %1244 = vst [vmem:[%s812 + $0x6b8] sm:$0xff] %v1243
      %v1245 = vld [vmem:[%s811 + $0x6c0] sm:$0xff]
      %1246 = vst [vmem:[%s812 + $0x6c0] sm:$0xff] %v1245
      %v1247 = vld [vmem:[%s811 + $0x6c8] sm:$0xff]
      %1248 = vst [vmem:[%s812 + $0x6c8] sm:$0xff] %v1247
      %v1249 = vld [vmem:[%s811 + $0x6d0] sm:$0xff]
      %1250 = vst [vmem:[%s812 + $0x6d0] sm:$0xff] %v1249
      %v1251 = vld [vmem:[%s811 + $0x6d8] sm:$0xff]
      %1252 = vst [vmem:[%s812 + $0x6d8] sm:$0xff] %v1251
      %v1253 = vld [vmem:[%s811 + $0x6e0] sm:$0xff]
      %1254 = vst [vmem:[%s812 + $0x6e0] sm:$0xff] %v1253
      %v1255 = vld [vmem:[%s811 + $0x6e8] sm:$0xff]
      %1256 = vst [vmem:[%s812 + $0x6e8] sm:$0xff] %v1255
      %v1257 = vld [vmem:[%s811 + $0x6f0] sm:$0xff]
      %1258 = vst [vmem:[%s812 + $0x6f0] sm:$0xff] %v1257
      %v1259 = vld [vmem:[%s811 + $0x6f8] sm:$0xff]
      %1260 = vst [vmem:[%s812 + $0x6f8] sm:$0xff] %v1259
      %v1261 = vld [vmem:[%s811 + $0x700] sm:$0xff]
      %1262 = vst [vmem:[%s812 + $0x700] sm:$0xff] %v1261
      %v1263 = vld [vmem:[%s811 + $0x708] sm:$0xff]
      %1264 = vst [vmem:[%s812 + $0x708] sm:$0xff] %v1263
      %v1265 = vld [vmem:[%s811 + $0x710] sm:$0xff]
      %1266 = vst [vmem:[%s812 + $0x710] sm:$0xff] %v1265
      %v1267 = vld [vmem:[%s811 + $0x718] sm:$0xff]
      %1268 = vst [vmem:[%s812 + $0x718] sm:$0xff] %v1267
      %v1269 = vld [vmem:[%s811 + $0x720] sm:$0xff]
      %1270 = vst [vmem:[%s812 + $0x720] sm:$0xff] %v1269
      %v1271 = vld [vmem:[%s811 + $0x728] sm:$0xff]
      %1272 = vst [vmem:[%s812 + $0x728] sm:$0xff] %v1271
      %v1273 = vld [vmem:[%s811 + $0x730] sm:$0xff]
      %1274 = vst [vmem:[%s812 + $0x730] sm:$0xff] %v1273
      %v1275 = vld [vmem:[%s811 + $0x738] sm:$0xff]
      %1276 = vst [vmem:[%s812 + $0x738] sm:$0xff] %v1275
      %v1277 = vld [vmem:[%s811 + $0x740] sm:$0xff]
      %1278 = vst [vmem:[%s812 + $0x740] sm:$0xff] %v1277
      %v1279 = vld [vmem:[%s811 + $0x748] sm:$0xff]
      %1280 = vst [vmem:[%s812 + $0x748] sm:$0xff] %v1279
      %v1281 = vld [vmem:[%s811 + $0x750] sm:$0xff]
      %1282 = vst [vmem:[%s812 + $0x750] sm:$0xff] %v1281
      %v1283 = vld [vmem:[%s811 + $0x758] sm:$0xff]
      %1284 = vst [vmem:[%s812 + $0x758] sm:$0xff] %v1283
      %v1285 = vld [vmem:[%s811 + $0x760] sm:$0xff]
      %1286 = vst [vmem:[%s812 + $0x760] sm:$0xff] %v1285
      %v1287 = vld [vmem:[%s811 + $0x768] sm:$0xff]
      %1288 = vst [vmem:[%s812 + $0x768] sm:$0xff] %v1287
      %v1289 = vld [vmem:[%s811 + $0x770] sm:$0xff]
      %1290 = vst [vmem:[%s812 + $0x770] sm:$0xff] %v1289
      %v1291 = vld [vmem:[%s811 + $0x778] sm:$0xff]
      %1292 = vst [vmem:[%s812 + $0x778] sm:$0xff] %v1291
      %v1293 = vld [vmem:[%s811 + $0x780] sm:$0xff]
      %1294 = vst [vmem:[%s812 + $0x780] sm:$0xff] %v1293
      %v1295 = vld [vmem:[%s811 + $0x788] sm:$0xff]
      %1296 = vst [vmem:[%s812 + $0x788] sm:$0xff] %v1295
      %v1297 = vld [vmem:[%s811 + $0x790] sm:$0xff]
      %1298 = vst [vmem:[%s812 + $0x790] sm:$0xff] %v1297
      %v1299 = vld [vmem:[%s811 + $0x798] sm:$0xff]
      %1300 = vst [vmem:[%s812 + $0x798] sm:$0xff] %v1299
      %v1301 = vld [vmem:[%s811 + $0x7a0] sm:$0xff]
      %1302 = vst [vmem:[%s812 + $0x7a0] sm:$0xff] %v1301
      %v1303 = vld [vmem:[%s811 + $0x7a8] sm:$0xff]
      %1304 = vst [vmem:[%s812 + $0x7a8] sm:$0xff] %v1303
      %v1305 = vld [vmem:[%s811 + $0x7b0] sm:$0xff]
      %1306 = vst [vmem:[%s812 + $0x7b0] sm:$0xff] %v1305
      %v1307 = vld [vmem:[%s811 + $0x7b8] sm:$0xff]
      %1308 = vst [vmem:[%s812 + $0x7b8] sm:$0xff] %v1307
      %v1309 = vld [vmem:[%s811 + $0x7c0] sm:$0xff]
      %1310 = vst [vmem:[%s812 + $0x7c0] sm:$0xff] %v1309
      %v1311 = vld [vmem:[%s811 + $0x7c8] sm:$0xff]
      %1312 = vst [vmem:[%s812 + $0x7c8] sm:$0xff] %v1311
      %v1313 = vld [vmem:[%s811 + $0x7d0] sm:$0xff]
      %1314 = vst [vmem:[%s812 + $0x7d0] sm:$0xff] %v1313
      %v1315 = vld [vmem:[%s811 + $0x7d8] sm:$0xff]
      %1316 = vst [vmem:[%s812 + $0x7d8] sm:$0xff] %v1315
      %v1317 = vld [vmem:[%s811 + $0x7e0] sm:$0xff]
      %1318 = vst [vmem:[%s812 + $0x7e0] sm:$0xff] %v1317
      %v1319 = vld [vmem:[%s811 + $0x7e8] sm:$0xff]
      %1320 = vst [vmem:[%s812 + $0x7e8] sm:$0xff] %v1319
      %v1321 = vld [vmem:[%s811 + $0x7f0] sm:$0xff]
      %1322 = vst [vmem:[%s812 + $0x7f0] sm:$0xff] %v1321
      %v1323 = vld [vmem:[%s811 + $0x7f8] sm:$0xff]
      %1324 = vst [vmem:[%s812 + $0x7f8] sm:$0xff] %v1323
      %v1325 = vld [vmem:[%s811 + $0x800] sm:$0xff]
      %1326 = vst [vmem:[%s812 + $0x800] sm:$0xff] %v1325
      %v1327 = vld [vmem:[%s811 + $0x808] sm:$0xff]
      %1328 = vst [vmem:[%s812 + $0x808] sm:$0xff] %v1327
      %v1329 = vld [vmem:[%s811 + $0x810] sm:$0xff]
      %1330 = vst [vmem:[%s812 + $0x810] sm:$0xff] %v1329
      %v1331 = vld [vmem:[%s811 + $0x818] sm:$0xff]
      %1332 = vst [vmem:[%s812 + $0x818] sm:$0xff] %v1331
      %v1333 = vld [vmem:[%s811 + $0x820] sm:$0xff]
      %1334 = vst [vmem:[%s812 + $0x820] sm:$0xff] %v1333
      %v1335 = vld [vmem:[%s811 + $0x828] sm:$0xff]
      %1336 = vst [vmem:[%s812 + $0x828] sm:$0xff] %v1335
      %v1337 = vld [vmem:[%s811 + $0x830] sm:$0xff]
      %1338 = vst [vmem:[%s812 + $0x830] sm:$0xff] %v1337
      %v1339 = vld [vmem:[%s811 + $0x838] sm:$0xff]
      %1340 = vst [vmem:[%s812 + $0x838] sm:$0xff] %v1339
      %v1341 = vld [vmem:[%s811 + $0x840] sm:$0xff]
      %1342 = vst [vmem:[%s812 + $0x840] sm:$0xff] %v1341
      %v1343 = vld [vmem:[%s811 + $0x848] sm:$0xff]
      %1344 = vst [vmem:[%s812 + $0x848] sm:$0xff] %v1343
      %v1345 = vld [vmem:[%s811 + $0x850] sm:$0xff]
      %1346 = vst [vmem:[%s812 + $0x850] sm:$0xff] %v1345
      %v1347 = vld [vmem:[%s811 + $0x858] sm:$0xff]
      %1348 = vst [vmem:[%s812 + $0x858] sm:$0xff] %v1347
      %v1349 = vld [vmem:[%s811 + $0x860] sm:$0xff]
      %1350 = vst [vmem:[%s812 + $0x860] sm:$0xff] %v1349
      %v1351 = vld [vmem:[%s811 + $0x868] sm:$0xff]
      %1352 = vst [vmem:[%s812 + $0x868] sm:$0xff] %v1351
      %v1353 = vld [vmem:[%s811 + $0x870] sm:$0xff]
      %1354 = vst [vmem:[%s812 + $0x870] sm:$0xff] %v1353
      %v1355 = vld [vmem:[%s811 + $0x878] sm:$0xff]
      %1356 = vst [vmem:[%s812 + $0x878] sm:$0xff] %v1355
      %v1357 = vld [vmem:[%s811 + $0x880] sm:$0xff]
      %1358 = vst [vmem:[%s812 + $0x880] sm:$0xff] %v1357
      %v1359 = vld [vmem:[%s811 + $0x888] sm:$0xff]
      %1360 = vst [vmem:[%s812 + $0x888] sm:$0xff] %v1359
      %v1361 = vld [vmem:[%s811 + $0x890] sm:$0xff]
      %1362 = vst [vmem:[%s812 + $0x890] sm:$0xff] %v1361
      %v1363 = vld [vmem:[%s811 + $0x898] sm:$0xff]
      %1364 = vst [vmem:[%s812 + $0x898] sm:$0xff] %v1363
      %v1365 = vld [vmem:[%s811 + $0x8a0] sm:$0xff]
      %1366 = vst [vmem:[%s812 + $0x8a0] sm:$0xff] %v1365
      %v1367 = vld [vmem:[%s811 + $0x8a8] sm:$0xff]
      %1368 = vst [vmem:[%s812 + $0x8a8] sm:$0xff] %v1367
      %v1369 = vld [vmem:[%s811 + $0x8b0] sm:$0xff]
      %1370 = vst [vmem:[%s812 + $0x8b0] sm:$0xff] %v1369
      %v1371 = vld [vmem:[%s811 + $0x8b8] sm:$0xff]
      %1372 = vst [vmem:[%s812 + $0x8b8] sm:$0xff] %v1371
      %v1373 = vld [vmem:[%s811 + $0x8c0] sm:$0xff]
      %1374 = vst [vmem:[%s812 + $0x8c0] sm:$0xff] %v1373
      %v1375 = vld [vmem:[%s811 + $0x8c8] sm:$0xff]
      %1376 = vst [vmem:[%s812 + $0x8c8] sm:$0xff] %v1375
      %v1377 = vld [vmem:[%s811 + $0x8d0] sm:$0xff]
      %1378 = vst [vmem:[%s812 + $0x8d0] sm:$0xff] %v1377
      %v1379 = vld [vmem:[%s811 + $0x8d8] sm:$0xff]
      %1380 = vst [vmem:[%s812 + $0x8d8] sm:$0xff] %v1379
      %v1381 = vld [vmem:[%s811 + $0x8e0] sm:$0xff]
      %1382 = vst [vmem:[%s812 + $0x8e0] sm:$0xff] %v1381
      %v1383 = vld [vmem:[%s811 + $0x8e8] sm:$0xff]
      %1384 = vst [vmem:[%s812 + $0x8e8] sm:$0xff] %v1383
      %v1385 = vld [vmem:[%s811 + $0x8f0] sm:$0xff]
      %1386 = vst [vmem:[%s812 + $0x8f0] sm:$0xff] %v1385
      %v1387 = vld [vmem:[%s811 + $0x8f8] sm:$0xff]
      %1388 = vst [vmem:[%s812 + $0x8f8] sm:$0xff] %v1387
      %v1389 = vld [vmem:[%s811 + $0x900] sm:$0xff]
      %1390 = vst [vmem:[%s812 + $0x900] sm:$0xff] %v1389
      %v1391 = vld [vmem:[%s811 + $0x908] sm:$0xff]
      %1392 = vst [vmem:[%s812 + $0x908] sm:$0xff] %v1391
      %v1393 = vld [vmem:[%s811 + $0x910] sm:$0xff]
      %1394 = vst [vmem:[%s812 + $0x910] sm:$0xff] %v1393
      %v1395 = vld [vmem:[%s811 + $0x918] sm:$0xff]
      %1396 = vst [vmem:[%s812 + $0x918] sm:$0xff] %v1395
      %v1397 = vld [vmem:[%s811 + $0x920] sm:$0xff]
      %1398 = vst [vmem:[%s812 + $0x920] sm:$0xff] %v1397
      %v1399 = vld [vmem:[%s811 + $0x928] sm:$0xff]
      %1400 = vst [vmem:[%s812 + $0x928] sm:$0xff] %v1399
      %v1401 = vld [vmem:[%s811 + $0x930] sm:$0xff]
      %1402 = vst [vmem:[%s812 + $0x930] sm:$0xff] %v1401
      %v1403 = vld [vmem:[%s811 + $0x938] sm:$0xff]
      %1404 = vst [vmem:[%s812 + $0x938] sm:$0xff] %v1403
      %v1405 = vld [vmem:[%s811 + $0x940] sm:$0xff]
      %1406 = vst [vmem:[%s812 + $0x940] sm:$0xff] %v1405
      %v1407 = vld [vmem:[%s811 + $0x948] sm:$0xff]
      %1408 = vst [vmem:[%s812 + $0x948] sm:$0xff] %v1407
      %v1409 = vld [vmem:[%s811 + $0x950] sm:$0xff]
      %1410 = vst [vmem:[%s812 + $0x950] sm:$0xff] %v1409
      %v1411 = vld [vmem:[%s811 + $0x958] sm:$0xff]
      %1412 = vst [vmem:[%s812 + $0x958] sm:$0xff] %v1411
      %v1413 = vld [vmem:[%s811 + $0x960] sm:$0xff]
      %1414 = vst [vmem:[%s812 + $0x960] sm:$0xff] %v1413
      %v1415 = vld [vmem:[%s811 + $0x968] sm:$0xff]
      %1416 = vst [vmem:[%s812 + $0x968] sm:$0xff] %v1415
      %v1417 = vld [vmem:[%s811 + $0x970] sm:$0xff]
      %1418 = vst [vmem:[%s812 + $0x970] sm:$0xff] %v1417
      %v1419 = vld [vmem:[%s811 + $0x978] sm:$0xff]
      %1420 = vst [vmem:[%s812 + $0x978] sm:$0xff] %v1419
      %v1421 = vld [vmem:[%s811 + $0x980] sm:$0xff]
      %1422 = vst [vmem:[%s812 + $0x980] sm:$0xff] %v1421
      %v1423 = vld [vmem:[%s811 + $0x988] sm:$0xff]
      %1424 = vst [vmem:[%s812 + $0x988] sm:$0xff] %v1423
      %v1425 = vld [vmem:[%s811 + $0x990] sm:$0xff]
      %1426 = vst [vmem:[%s812 + $0x990] sm:$0xff] %v1425
      %v1427 = vld [vmem:[%s811 + $0x998] sm:$0xff]
      %1428 = vst [vmem:[%s812 + $0x998] sm:$0xff] %v1427
      %v1429 = vld [vmem:[%s811 + $0x9a0] sm:$0xff]
      %1430 = vst [vmem:[%s812 + $0x9a0] sm:$0xff] %v1429
      %v1431 = vld [vmem:[%s811 + $0x9a8] sm:$0xff]
      %1432 = vst [vmem:[%s812 + $0x9a8] sm:$0xff] %v1431
      %v1433 = vld [vmem:[%s811 + $0x9b0] sm:$0xff]
      %1434 = vst [vmem:[%s812 + $0x9b0] sm:$0xff] %v1433
      %v1435 = vld [vmem:[%s811 + $0x9b8] sm:$0xff]
      %1436 = vst [vmem:[%s812 + $0x9b8] sm:$0xff] %v1435
      %v1437 = vld [vmem:[%s811 + $0x9c0] sm:$0xff]
      %1438 = vst [vmem:[%s812 + $0x9c0] sm:$0xff] %v1437
      %v1439 = vld [vmem:[%s811 + $0x9c8] sm:$0xff]
      %1440 = vst [vmem:[%s812 + $0x9c8] sm:$0xff] %v1439
      %v1441 = vld [vmem:[%s811 + $0x9d0] sm:$0xff]
      %1442 = vst [vmem:[%s812 + $0x9d0] sm:$0xff] %v1441
      %v1443 = vld [vmem:[%s811 + $0x9d8] sm:$0xff]
      %1444 = vst [vmem:[%s812 + $0x9d8] sm:$0xff] %v1443
      %v1445 = vld [vmem:[%s811 + $0x9e0] sm:$0xff]
      %1446 = vst [vmem:[%s812 + $0x9e0] sm:$0xff] %v1445
      %v1447 = vld [vmem:[%s811 + $0x9e8] sm:$0xff]
      %1448 = vst [vmem:[%s812 + $0x9e8] sm:$0xff] %v1447
      %v1449 = vld [vmem:[%s811 + $0x9f0] sm:$0xff]
      %1450 = vst [vmem:[%s812 + $0x9f0] sm:$0xff] %v1449
      %v1451 = vld [vmem:[%s811 + $0x9f8] sm:$0xff]
      %1452 = vst [vmem:[%s812 + $0x9f8] sm:$0xff] %v1451
      %v1453 = vld [vmem:[%s811 + $0xa00] sm:$0xff]
      %1454 = vst [vmem:[%s812 + $0xa00] sm:$0xff] %v1453
      %v1455 = vld [vmem:[%s811 + $0xa08] sm:$0xff]
      %1456 = vst [vmem:[%s812 + $0xa08] sm:$0xff] %v1455
      %v1457 = vld [vmem:[%s811 + $0xa10] sm:$0xff]
      %1458 = vst [vmem:[%s812 + $0xa10] sm:$0xff] %v1457
      %v1459 = vld [vmem:[%s811 + $0xa18] sm:$0xff]
      %1460 = vst [vmem:[%s812 + $0xa18] sm:$0xff] %v1459
      %v1461 = vld [vmem:[%s811 + $0xa20] sm:$0xff]
      %1462 = vst [vmem:[%s812 + $0xa20] sm:$0xff] %v1461
      %v1463 = vld [vmem:[%s811 + $0xa28] sm:$0xff]
      %1464 = vst [vmem:[%s812 + $0xa28] sm:$0xff] %v1463
      %v1465 = vld [vmem:[%s811 + $0xa30] sm:$0xff]
      %1466 = vst [vmem:[%s812 + $0xa30] sm:$0xff] %v1465
      %v1467 = vld [vmem:[%s811 + $0xa38] sm:$0xff]
      %1468 = vst [vmem:[%s812 + $0xa38] sm:$0xff] %v1467
      %v1469 = vld [vmem:[%s811 + $0xa40] sm:$0xff]
      %1470 = vst [vmem:[%s812 + $0xa40] sm:$0xff] %v1469
      %v1471 = vld [vmem:[%s811 + $0xa48] sm:$0xff]
      %1472 = vst [vmem:[%s812 + $0xa48] sm:$0xff] %v1471
      %v1473 = vld [vmem:[%s811 + $0xa50] sm:$0xff]
      %1474 = vst [vmem:[%s812 + $0xa50] sm:$0xff] %v1473
      %v1475 = vld [vmem:[%s811 + $0xa58] sm:$0xff]
      %1476 = vst [vmem:[%s812 + $0xa58] sm:$0xff] %v1475
      %v1477 = vld [vmem:[%s811 + $0xa60] sm:$0xff]
      %1478 = vst [vmem:[%s812 + $0xa60] sm:$0xff] %v1477
      %v1479 = vld [vmem:[%s811 + $0xa68] sm:$0xff]
      %1480 = vst [vmem:[%s812 + $0xa68] sm:$0xff] %v1479
      %v1481 = vld [vmem:[%s811 + $0xa70] sm:$0xff]
      %1482 = vst [vmem:[%s812 + $0xa70] sm:$0xff] %v1481
      %v1483 = vld [vmem:[%s811 + $0xa78] sm:$0xff]
      %1484 = vst [vmem:[%s812 + $0xa78] sm:$0xff] %v1483
      %v1485 = vld [vmem:[%s811 + $0xa80] sm:$0xff]
      %1486 = vst [vmem:[%s812 + $0xa80] sm:$0xff] %v1485
      %v1487 = vld [vmem:[%s811 + $0xa88] sm:$0xff]
      %1488 = vst [vmem:[%s812 + $0xa88] sm:$0xff] %v1487
      %v1489 = vld [vmem:[%s811 + $0xa90] sm:$0xff]
      %1490 = vst [vmem:[%s812 + $0xa90] sm:$0xff] %v1489
      %v1491 = vld [vmem:[%s811 + $0xa98] sm:$0xff]
      %1492 = vst [vmem:[%s812 + $0xa98] sm:$0xff] %v1491
      %v1493 = vld [vmem:[%s811 + $0xaa0] sm:$0xff]
      %1494 = vst [vmem:[%s812 + $0xaa0] sm:$0xff] %v1493
      %v1495 = vld [vmem:[%s811 + $0xaa8] sm:$0xff]
      %1496 = vst [vmem:[%s812 + $0xaa8] sm:$0xff] %v1495
      %v1497 = vld [vmem:[%s811 + $0xab0] sm:$0xff]
      %1498 = vst [vmem:[%s812 + $0xab0] sm:$0xff] %v1497
      %v1499 = vld [vmem:[%s811 + $0xab8] sm:$0xff]
      %1500 = vst [vmem:[%s812 + $0xab8] sm:$0xff] %v1499
      %v1501 = vld [vmem:[%s811 + $0xac0] sm:$0xff]
      %1502 = vst [vmem:[%s812 + $0xac0] sm:$0xff] %v1501
      %v1503 = vld [vmem:[%s811 + $0xac8] sm:$0xff]
      %1504 = vst [vmem:[%s812 + $0xac8] sm:$0xff] %v1503
      %v1505 = vld [vmem:[%s811 + $0xad0] sm:$0xff]
      %1506 = vst [vmem:[%s812 + $0xad0] sm:$0xff] %v1505
      %v1507 = vld [vmem:[%s811 + $0xad8] sm:$0xff]
      %1508 = vst [vmem:[%s812 + $0xad8] sm:$0xff] %v1507
      %v1509 = vld [vmem:[%s811 + $0xae0] sm:$0xff]
      %1510 = vst [vmem:[%s812 + $0xae0] sm:$0xff] %v1509
      %v1511 = vld [vmem:[%s811 + $0xae8] sm:$0xff]
      %1512 = vst [vmem:[%s812 + $0xae8] sm:$0xff] %v1511
      %v1513 = vld [vmem:[%s811 + $0xaf0] sm:$0xff]
      %1514 = vst [vmem:[%s812 + $0xaf0] sm:$0xff] %v1513
      %v1515 = vld [vmem:[%s811 + $0xaf8] sm:$0xff]
      %1516 = vst [vmem:[%s812 + $0xaf8] sm:$0xff] %v1515
      %v1517 = vld [vmem:[%s811 + $0xb00] sm:$0xff]
      %1518 = vst [vmem:[%s812 + $0xb00] sm:$0xff] %v1517
      %v1519 = vld [vmem:[%s811 + $0xb08] sm:$0xff]
      %1520 = vst [vmem:[%s812 + $0xb08] sm:$0xff] %v1519
      %v1521 = vld [vmem:[%s811 + $0xb10] sm:$0xff]
      %1522 = vst [vmem:[%s812 + $0xb10] sm:$0xff] %v1521
      %v1523 = vld [vmem:[%s811 + $0xb18] sm:$0xff]
      %1524 = vst [vmem:[%s812 + $0xb18] sm:$0xff] %v1523
      %v1525 = vld [vmem:[%s811 + $0xb20] sm:$0xff]
      %1526 = vst [vmem:[%s812 + $0xb20] sm:$0xff] %v1525
      %v1527 = vld [vmem:[%s811 + $0xb28] sm:$0xff]
      %1528 = vst [vmem:[%s812 + $0xb28] sm:$0xff] %v1527
      %v1529 = vld [vmem:[%s811 + $0xb30] sm:$0xff]
      %1530 = vst [vmem:[%s812 + $0xb30] sm:$0xff] %v1529
      %v1531 = vld [vmem:[%s811 + $0xb38] sm:$0xff]
      %1532 = vst [vmem:[%s812 + $0xb38] sm:$0xff] %v1531
      %v1533 = vld [vmem:[%s811 + $0xb40] sm:$0xff]
      %1534 = vst [vmem:[%s812 + $0xb40] sm:$0xff] %v1533
      %v1535 = vld [vmem:[%s811 + $0xb48] sm:$0xff]
      %1536 = vst [vmem:[%s812 + $0xb48] sm:$0xff] %v1535
      %v1537 = vld [vmem:[%s811 + $0xb50] sm:$0xff]
      %1538 = vst [vmem:[%s812 + $0xb50] sm:$0xff] %v1537
      %v1539 = vld [vmem:[%s811 + $0xb58] sm:$0xff]
      %1540 = vst [vmem:[%s812 + $0xb58] sm:$0xff] %v1539
      %v1541 = vld [vmem:[%s811 + $0xb60] sm:$0xff]
      %1542 = vst [vmem:[%s812 + $0xb60] sm:$0xff] %v1541
      %v1543 = vld [vmem:[%s811 + $0xb68] sm:$0xff]
      %1544 = vst [vmem:[%s812 + $0xb68] sm:$0xff] %v1543
      %v1545 = vld [vmem:[%s811 + $0xb70] sm:$0xff]
      %1546 = vst [vmem:[%s812 + $0xb70] sm:$0xff] %v1545
      %v1547 = vld [vmem:[%s811 + $0xb78] sm:$0xff]
      %1548 = vst [vmem:[%s812 + $0xb78] sm:$0xff] %v1547
      %v1549 = vld [vmem:[%s811 + $0xb80] sm:$0xff]
      %1550 = vst [vmem:[%s812 + $0xb80] sm:$0xff] %v1549
      %v1551 = vld [vmem:[%s811 + $0xb88] sm:$0xff]
      %1552 = vst [vmem:[%s812 + $0xb88] sm:$0xff] %v1551
      %v1553 = vld [vmem:[%s811 + $0xb90] sm:$0xff]
      %1554 = vst [vmem:[%s812 + $0xb90] sm:$0xff] %v1553
      %v1555 = vld [vmem:[%s811 + $0xb98] sm:$0xff]
      %1556 = vst [vmem:[%s812 + $0xb98] sm:$0xff] %v1555
      %v1557 = vld [vmem:[%s811 + $0xba0] sm:$0xff]
      %1558 = vst [vmem:[%s812 + $0xba0] sm:$0xff] %v1557
      %v1559 = vld [vmem:[%s811 + $0xba8] sm:$0xff]
      %1560 = vst [vmem:[%s812 + $0xba8] sm:$0xff] %v1559
      %v1561 = vld [vmem:[%s811 + $0xbb0] sm:$0xff]
      %1562 = vst [vmem:[%s812 + $0xbb0] sm:$0xff] %v1561
      %v1563 = vld [vmem:[%s811 + $0xbb8] sm:$0xff]
      %1564 = vst [vmem:[%s812 + $0xbb8] sm:$0xff] %v1563
      %v1565 = vld [vmem:[%s811 + $0xbc0] sm:$0xff]
      %1566 = vst [vmem:[%s812 + $0xbc0] sm:$0xff] %v1565
      %v1567 = vld [vmem:[%s811 + $0xbc8] sm:$0xff]
      %1568 = vst [vmem:[%s812 + $0xbc8] sm:$0xff] %v1567
      %v1569 = vld [vmem:[%s811 + $0xbd0] sm:$0xff]
      %1570 = vst [vmem:[%s812 + $0xbd0] sm:$0xff] %v1569
      %v1571 = vld [vmem:[%s811 + $0xbd8] sm:$0xff]
      %1572 = vst [vmem:[%s812 + $0xbd8] sm:$0xff] %v1571
      %v1573 = vld [vmem:[%s811 + $0xbe0] sm:$0xff]
      %1574 = vst [vmem:[%s812 + $0xbe0] sm:$0xff] %v1573
      %v1575 = vld [vmem:[%s811 + $0xbe8] sm:$0xff]
      %1576 = vst [vmem:[%s812 + $0xbe8] sm:$0xff] %v1575
      %v1577 = vld [vmem:[%s811 + $0xbf0] sm:$0xff]
      %1578 = vst [vmem:[%s812 + $0xbf0] sm:$0xff] %v1577
      %v1579 = vld [vmem:[%s811 + $0xbf8] sm:$0xff]
      %1580 = vst [vmem:[%s812 + $0xbf8] sm:$0xff] %v1579
      %v1581 = vld [vmem:[%s811 + $0xc00] sm:$0xff]
      %1582 = vst [vmem:[%s812 + $0xc00] sm:$0xff] %v1581
      %v1583 = vld [vmem:[%s811 + $0xc08] sm:$0xff]
      %1584 = vst [vmem:[%s812 + $0xc08] sm:$0xff] %v1583
      %v1585 = vld [vmem:[%s811 + $0xc10] sm:$0xff]
      %1586 = vst [vmem:[%s812 + $0xc10] sm:$0xff] %v1585
      %v1587 = vld [vmem:[%s811 + $0xc18] sm:$0xff]
      %1588 = vst [vmem:[%s812 + $0xc18] sm:$0xff] %v1587
      %v1589 = vld [vmem:[%s811 + $0xc20] sm:$0xff]
      %1590 = vst [vmem:[%s812 + $0xc20] sm:$0xff] %v1589
      %v1591 = vld [vmem:[%s811 + $0xc28] sm:$0xff]
      %1592 = vst [vmem:[%s812 + $0xc28] sm:$0xff] %v1591
      %v1593 = vld [vmem:[%s811 + $0xc30] sm:$0xff]
      %1594 = vst [vmem:[%s812 + $0xc30] sm:$0xff] %v1593
      %v1595 = vld [vmem:[%s811 + $0xc38] sm:$0xff]
      %1596 = vst [vmem:[%s812 + $0xc38] sm:$0xff] %v1595
      %v1597 = vld [vmem:[%s811 + $0xc40] sm:$0xff]
      %1598 = vst [vmem:[%s812 + $0xc40] sm:$0xff] %v1597
      %v1599 = vld [vmem:[%s811 + $0xc48] sm:$0xff]
      %1600 = vst [vmem:[%s812 + $0xc48] sm:$0xff] %v1599
      %v1601 = vld [vmem:[%s811 + $0xc50] sm:$0xff]
      %1602 = vst [vmem:[%s812 + $0xc50] sm:$0xff] %v1601
      %v1603 = vld [vmem:[%s811 + $0xc58] sm:$0xff]
      %1604 = vst [vmem:[%s812 + $0xc58] sm:$0xff] %v1603
      %v1605 = vld [vmem:[%s811 + $0xc60] sm:$0xff]
      %1606 = vst [vmem:[%s812 + $0xc60] sm:$0xff] %v1605
      %v1607 = vld [vmem:[%s811 + $0xc68] sm:$0xff]
      %1608 = vst [vmem:[%s812 + $0xc68] sm:$0xff] %v1607
      %v1609 = vld [vmem:[%s811 + $0xc70] sm:$0xff]
      %1610 = vst [vmem:[%s812 + $0xc70] sm:$0xff] %v1609
      %v1611 = vld [vmem:[%s811 + $0xc78] sm:$0xff]
      %1612 = vst [vmem:[%s812 + $0xc78] sm:$0xff] %v1611
      %v1613 = vld [vmem:[%s811 + $0xc80] sm:$0xff]
      %1614 = vst [vmem:[%s812 + $0xc80] sm:$0xff] %v1613
      %v1615 = vld [vmem:[%s811 + $0xc88] sm:$0xff]
      %1616 = vst [vmem:[%s812 + $0xc88] sm:$0xff] %v1615
      %v1617 = vld [vmem:[%s811 + $0xc90] sm:$0xff]
      %1618 = vst [vmem:[%s812 + $0xc90] sm:$0xff] %v1617
      %v1619 = vld [vmem:[%s811 + $0xc98] sm:$0xff]
      %1620 = vst [vmem:[%s812 + $0xc98] sm:$0xff] %v1619
      %v1621 = vld [vmem:[%s811 + $0xca0] sm:$0xff]
      %1622 = vst [vmem:[%s812 + $0xca0] sm:$0xff] %v1621
      %v1623 = vld [vmem:[%s811 + $0xca8] sm:$0xff]
      %1624 = vst [vmem:[%s812 + $0xca8] sm:$0xff] %v1623
      %v1625 = vld [vmem:[%s811 + $0xcb0] sm:$0xff]
      %1626 = vst [vmem:[%s812 + $0xcb0] sm:$0xff] %v1625
      %v1627 = vld [vmem:[%s811 + $0xcb8] sm:$0xff]
      %1628 = vst [vmem:[%s812 + $0xcb8] sm:$0xff] %v1627
      %v1629 = vld [vmem:[%s811 + $0xcc0] sm:$0xff]
      %1630 = vst [vmem:[%s812 + $0xcc0] sm:$0xff] %v1629
      %v1631 = vld [vmem:[%s811 + $0xcc8] sm:$0xff]
      %1632 = vst [vmem:[%s812 + $0xcc8] sm:$0xff] %v1631
      %v1633 = vld [vmem:[%s811 + $0xcd0] sm:$0xff]
      %1634 = vst [vmem:[%s812 + $0xcd0] sm:$0xff] %v1633
      %v1635 = vld [vmem:[%s811 + $0xcd8] sm:$0xff]
      %1636 = vst [vmem:[%s812 + $0xcd8] sm:$0xff] %v1635
      %v1637 = vld [vmem:[%s811 + $0xce0] sm:$0xff]
      %1638 = vst [vmem:[%s812 + $0xce0] sm:$0xff] %v1637
      %v1639 = vld [vmem:[%s811 + $0xce8] sm:$0xff]
      %1640 = vst [vmem:[%s812 + $0xce8] sm:$0xff] %v1639
      %v1641 = vld [vmem:[%s811 + $0xcf0] sm:$0xff]
      %1642 = vst [vmem:[%s812 + $0xcf0] sm:$0xff] %v1641
      %v1643 = vld [vmem:[%s811 + $0xcf8] sm:$0xff]
      %1644 = vst [vmem:[%s812 + $0xcf8] sm:$0xff] %v1643
      %v1645 = vld [vmem:[%s811 + $0xd00] sm:$0xff]
      %1646 = vst [vmem:[%s812 + $0xd00] sm:$0xff] %v1645
      %v1647 = vld [vmem:[%s811 + $0xd08] sm:$0xff]
      %1648 = vst [vmem:[%s812 + $0xd08] sm:$0xff] %v1647
      %v1649 = vld [vmem:[%s811 + $0xd10] sm:$0xff]
      %1650 = vst [vmem:[%s812 + $0xd10] sm:$0xff] %v1649
      %v1651 = vld [vmem:[%s811 + $0xd18] sm:$0xff]
      %1652 = vst [vmem:[%s812 + $0xd18] sm:$0xff] %v1651
      %v1653 = vld [vmem:[%s811 + $0xd20] sm:$0xff]
      %1654 = vst [vmem:[%s812 + $0xd20] sm:$0xff] %v1653
      %v1655 = vld [vmem:[%s811 + $0xd28] sm:$0xff]
      %1656 = vst [vmem:[%s812 + $0xd28] sm:$0xff] %v1655
      %v1657 = vld [vmem:[%s811 + $0xd30] sm:$0xff]
      %1658 = vst [vmem:[%s812 + $0xd30] sm:$0xff] %v1657
      %v1659 = vld [vmem:[%s811 + $0xd38] sm:$0xff]
      %1660 = vst [vmem:[%s812 + $0xd38] sm:$0xff] %v1659
      %v1661 = vld [vmem:[%s811 + $0xd40] sm:$0xff]
      %1662 = vst [vmem:[%s812 + $0xd40] sm:$0xff] %v1661
      %v1663 = vld [vmem:[%s811 + $0xd48] sm:$0xff]
      %1664 = vst [vmem:[%s812 + $0xd48] sm:$0xff] %v1663
      %v1665 = vld [vmem:[%s811 + $0xd50] sm:$0xff]
      %1666 = vst [vmem:[%s812 + $0xd50] sm:$0xff] %v1665
      %v1667 = vld [vmem:[%s811 + $0xd58] sm:$0xff]
      %1668 = vst [vmem:[%s812 + $0xd58] sm:$0xff] %v1667
      %v1669 = vld [vmem:[%s811 + $0xd60] sm:$0xff]
      %1670 = vst [vmem:[%s812 + $0xd60] sm:$0xff] %v1669
      %v1671 = vld [vmem:[%s811 + $0xd68] sm:$0xff]
      %1672 = vst [vmem:[%s812 + $0xd68] sm:$0xff] %v1671
      %v1673 = vld [vmem:[%s811 + $0xd70] sm:$0xff]
      %1674 = vst [vmem:[%s812 + $0xd70] sm:$0xff] %v1673
      %v1675 = vld [vmem:[%s811 + $0xd78] sm:$0xff]
      %1676 = vst [vmem:[%s812 + $0xd78] sm:$0xff] %v1675
      %v1677 = vld [vmem:[%s811 + $0xd80] sm:$0xff]
      %1678 = vst [vmem:[%s812 + $0xd80] sm:$0xff] %v1677
      %v1679 = vld [vmem:[%s811 + $0xd88] sm:$0xff]
      %1680 = vst [vmem:[%s812 + $0xd88] sm:$0xff] %v1679
      %v1681 = vld [vmem:[%s811 + $0xd90] sm:$0xff]
      %1682 = vst [vmem:[%s812 + $0xd90] sm:$0xff] %v1681
      %v1683 = vld [vmem:[%s811 + $0xd98] sm:$0xff]
      %1684 = vst [vmem:[%s812 + $0xd98] sm:$0xff] %v1683
      %v1685 = vld [vmem:[%s811 + $0xda0] sm:$0xff]
      %1686 = vst [vmem:[%s812 + $0xda0] sm:$0xff] %v1685
      %v1687 = vld [vmem:[%s811 + $0xda8] sm:$0xff]
      %1688 = vst [vmem:[%s812 + $0xda8] sm:$0xff] %v1687
      %v1689 = vld [vmem:[%s811 + $0xdb0] sm:$0xff]
      %1690 = vst [vmem:[%s812 + $0xdb0] sm:$0xff] %v1689
      %v1691 = vld [vmem:[%s811 + $0xdb8] sm:$0xff]
      %1692 = vst [vmem:[%s812 + $0xdb8] sm:$0xff] %v1691
      %v1693 = vld [vmem:[%s811 + $0xdc0] sm:$0xff]
      %1694 = vst [vmem:[%s812 + $0xdc0] sm:$0xff] %v1693
      %v1695 = vld [vmem:[%s811 + $0xdc8] sm:$0xff]
      %1696 = vst [vmem:[%s812 + $0xdc8] sm:$0xff] %v1695
      %v1697 = vld [vmem:[%s811 + $0xdd0] sm:$0xff]
      %1698 = vst [vmem:[%s812 + $0xdd0] sm:$0xff] %v1697
      %v1699 = vld [vmem:[%s811 + $0xdd8] sm:$0xff]
      %1700 = vst [vmem:[%s812 + $0xdd8] sm:$0xff] %v1699
      %v1701 = vld [vmem:[%s811 + $0xde0] sm:$0xff]
      %1702 = vst [vmem:[%s812 + $0xde0] sm:$0xff] %v1701
      %v1703 = vld [vmem:[%s811 + $0xde8] sm:$0xff]
      %1704 = vst [vmem:[%s812 + $0xde8] sm:$0xff] %v1703
      %v1705 = vld [vmem:[%s811 + $0xdf0] sm:$0xff]
      %1706 = vst [vmem:[%s812 + $0xdf0] sm:$0xff] %v1705
      %v1707 = vld [vmem:[%s811 + $0xdf8] sm:$0xff]
      %1708 = vst [vmem:[%s812 + $0xdf8] sm:$0xff] %v1707
    $region119: #{generator_forward.1} parent=113 // loop_footer
      %s810 = sadd.s32 1, %s806
    $region120: #{generator_forward.1} parent=113 // loop_footer_branch
      %805 = sbr.rel target = $region116
    $region121: #{generator_forward.1} parent=113 // loop_exit
      _
  $region114: #{generator_forward.1} parent=0 // pred_fallthru
    _
  // Predicated region
  $region122: #{generator_forward.1} parent=0 // pred_check
    _
  $region123: #{generator_forward.1} parent=0 // pred_check_branch
    %1710 = sbr.rel target = $region125
  $region124: #{generator_forward.1} parent=0 // pred_region
    _
  $region125: #{generator_forward.1} parent=0 // pred_fallthru
    _
  // Predicated region
  $region126: #{generator_forward.1} parent=0 // pred_check
    _
  $region127: #{generator_forward.1} parent=0 // pred_check_branch
    %1713 = sbr.rel (0) target = $region129
  $region128: #{generator_forward.1} parent=0 // pred_region
    %1714 = vsyncadd %s802, 57344
  $region129: #{generator_forward.1} parent=0 // pred_fallthru
    _
  %v1715 = vld [vmem:[%s0] sm:$0xff]
  %v1716 = vlaneseq
  %v1717 = vand.u32 %v1716, 127
  %1718 = vset.pattern.permute.xlu0 0
  %1719 = vperm.xlu0 %1718, %v1715
  %v1720 = vpop.permute.xlu0 %1719
  %vm1721 = vcmp.eq.s32.totalorder %v1720, %v1717
  %v1722 = vsel %vm1721, 1, 0
  %v1723 = vcvt.s32.f32 %v1722
  %v1724 = vld [vmem:[%s2] sm:$0xff]
  %v1725 = vld [vmem:[%s2 + $0x8] sm:$0x3]
  %vm1726 = vcmask 80896
  %v1728 = vsel %vm1726, %v1723, 0
  %vm1730 = vcmask 1041408
  %v1732 = vsel %vm1730, %v1725, 0
  %1734 = vmatpush.msra.mxu0 0.0
  %1735 = vmatpush.msra.mxu0 0.0
  %1736 = vmatpush.msra.mxu0 0.0
  %1737 = vmatpush.msra.mxu0 0.0
  %1738 = vmatpush.msra.mxu0 0.0
  %1739 = vmatpush.msra.mxu0 0.0
  %1740 = vmatpush.msra.mxu0 0.0
  %1741 = vmatpush.msra.mxu0 0.0
  %1742 = vmatpush.msra.mxu0 0.0
  %1743 = vmatpush.msra.mxu0 0.0
  %1744 = vmatpush.msra.mxu0 0.0
  %1745 = vmatpush.msra.mxu0 0.0
  %1746 = vmatpush.msra.mxu0 0.0
  %1747 = vmatpush.msra.mxu0 0.0
  %1748 = vmatpush.msra.mxu0 %v1732
  %1749 = vmatpush.msra.mxu0 %v1724
  %1750 = vmatmul.f32.gmra.mxu0 %v1728
  %v1751 = vpop.f32.mrf.mxu0
  %v1752 = vadd.f32 0.0, %v1751
  %1753 = vdwg.mxu0
  %1754 = vst [vmem:[#allocation2] sm:$0xff] 0.0
  %1755 = vst [vmem:[#allocation2 + $0x8] sm:$0xff] 0.0
  %v1756 = vld [vmem:[%s1] sm:$0xff]
  %vm1757 = vcmask 818176
  %1758 = vst.msk [vmem:[#allocation2] sm:$0xff] %vm1757, %v1756
  %1759 = vst.msk [vmem:[#allocation2 + $0x8] sm:$0xff] %vm1757, %v1752
  %v1760 = vld [vmem:[#allocation2] sm:$0xff]
  %v1761 = vld [vmem:[#allocation2 + $0x8] sm:$0xff]
  %v1762 = vpack.c.bf16 %v1760, %v1760
  %v1763 = vpack.c.bf16 %v1761, %v1761
  %s1764 = smul.u32 4, 32
  %s1765 = smul.u32 %s1764, 2
  %s1766 = sshll.u32 %s1765, 4
  %1767 = dma.done [#allocation7], %s1766
  %v1768 = vld [vmem:[#allocation3] sm:$0xff]
  %v1769 = vld [vmem:[#allocation3 + $0x8] sm:$0xff]
  %v1770 = vld [vmem:[#allocation3 + $0x10] sm:$0xff]
  %v1771 = vld [vmem:[#allocation3 + $0x18] sm:$0xff]
  %v1772 = vld [vmem:[#allocation3 + $0x20] sm:$0xff]
  %v1773 = vld [vmem:[#allocation3 + $0x28] sm:$0xff]
  %v1774 = vld [vmem:[#allocation3 + $0x30] sm:$0xff]
  %v1775 = vld [vmem:[#allocation3 + $0x38] sm:$0xff]
  %v1776 = vld [vmem:[#allocation3 + $0x40] sm:$0xff]
  %v1777 = vld [vmem:[#allocation3 + $0x48] sm:$0xff]
  %v1778 = vld [vmem:[#allocation3 + $0x50] sm:$0xff]
  %v1779 = vld [vmem:[#allocation3 + $0x58] sm:$0xff]
  %v1780 = vld [vmem:[#allocation3 + $0x60] sm:$0xff]
  %v1781 = vld [vmem:[#allocation3 + $0x68] sm:$0xff]
  %v1782 = vld [vmem:[#allocation3 + $0x70] sm:$0xff]
  %v1783 = vld [vmem:[#allocation3 + $0x78] sm:$0xff]
  %v1784 = vld [vmem:[#allocation3 + $0x80] sm:$0xff]
  %v1785 = vld [vmem:[#allocation3 + $0x88] sm:$0xff]
  %v1786 = vld [vmem:[#allocation3 + $0x90] sm:$0xff]
  %v1787 = vld [vmem:[#allocation3 + $0x98] sm:$0xff]
  %v1788 = vld [vmem:[#allocation3 + $0xa0] sm:$0xff]
  %v1789 = vld [vmem:[#allocation3 + $0xa8] sm:$0xff]
  %v1790 = vld [vmem:[#allocation3 + $0xb0] sm:$0xff]
  %v1791 = vld [vmem:[#allocation3 + $0xb8] sm:$0xff]
  %v1792 = vld [vmem:[#allocation3 + $0xc0] sm:$0xff]
  %v1793 = vld [vmem:[#allocation3 + $0xc8] sm:$0xff]
  %v1794 = vld [vmem:[#allocation3 + $0xd0] sm:$0xff]
  %v1795 = vld [vmem:[#allocation3 + $0xd8] sm:$0xff]
  %v1796 = vld [vmem:[#allocation3 + $0xe0] sm:$0xff]
  %v1797 = vld [vmem:[#allocation3 + $0xe8] sm:$0xff]
  %v1798 = vld [vmem:[#allocation3 + $0xf0] sm:$0xff]
  %v1799 = vld [vmem:[#allocation3 + $0xf8] sm:$0xff]
  %v1800 = vld [vmem:[%s3] sm:$0x3]
  %v1801 = vld [vmem:[%s4] sm:$0x3]
  %v1802 = vld [vmem:[%s5] sm:$0x3]
  %v1804 = vperm.slane %v1800, 0
  %v1805 = vperm.slane %v1800, 1
  %v1840 = vunpack.c.l.b16 %v1768
  %v1841 = vunpack.c.h.b16 %v1768
  %v1842 = vunpack.c.l.b16 %v1769
  %v1843 = vunpack.c.h.b16 %v1769
  %v1844 = vunpack.c.l.b16 %v1770
  %v1845 = vunpack.c.h.b16 %v1770
  %v1846 = vunpack.c.l.b16 %v1771
  %v1847 = vunpack.c.h.b16 %v1771
  %v1848 = vunpack.c.l.b16 %v1772
  %v1849 = vunpack.c.h.b16 %v1772
  %v1850 = vunpack.c.l.b16 %v1773
  %v1851 = vunpack.c.h.b16 %v1773
  %v1852 = vunpack.c.l.b16 %v1774
  %v1853 = vunpack.c.h.b16 %v1774
  %v1854 = vunpack.c.l.b16 %v1775
  %v1855 = vunpack.c.h.b16 %v1775
  %v1856 = vunpack.c.l.b16 %v1776
  %v1857 = vunpack.c.h.b16 %v1776
  %v1858 = vunpack.c.l.b16 %v1777
  %v1859 = vunpack.c.h.b16 %v1777
  %v1860 = vunpack.c.l.b16 %v1778
  %v1861 = vunpack.c.h.b16 %v1778
  %v1862 = vunpack.c.l.b16 %v1779
  %v1863 = vunpack.c.h.b16 %v1779
  %v1864 = vunpack.c.l.b16 %v1780
  %v1865 = vunpack.c.h.b16 %v1780
  %v1866 = vunpack.c.l.b16 %v1781
  %v1867 = vunpack.c.h.b16 %v1781
  %v1868 = vunpack.c.l.b16 %v1782
  %v1869 = vunpack.c.h.b16 %v1782
  %v1870 = vunpack.c.l.b16 %v1783
  %v1871 = vunpack.c.h.b16 %v1783
  %v1872 = vunpack.c.l.b16 %v1784
  %v1873 = vunpack.c.h.b16 %v1784
  %v1874 = vunpack.c.l.b16 %v1785
  %v1875 = vunpack.c.h.b16 %v1785
  %v1876 = vunpack.c.l.b16 %v1786
  %v1877 = vunpack.c.h.b16 %v1786
  %v1878 = vunpack.c.l.b16 %v1787
  %v1879 = vunpack.c.h.b16 %v1787
  %v1880 = vunpack.c.l.b16 %v1788
  %v1881 = vunpack.c.h.b16 %v1788
  %v1882 = vunpack.c.l.b16 %v1789
  %v1883 = vunpack.c.h.b16 %v1789
  %v1884 = vunpack.c.l.b16 %v1790
  %v1885 = vunpack.c.h.b16 %v1790
  %v1886 = vunpack.c.l.b16 %v1791
  %v1887 = vunpack.c.h.b16 %v1791
  %v1888 = vunpack.c.l.b16 %v1792
  %v1889 = vunpack.c.h.b16 %v1792
  %v1890 = vunpack.c.l.b16 %v1793
  %v1891 = vunpack.c.h.b16 %v1793
  %v1892 = vunpack.c.l.b16 %v1794
  %v1893 = vunpack.c.h.b16 %v1794
  %v1894 = vunpack.c.l.b16 %v1795
  %v1895 = vunpack.c.h.b16 %v1795
  %v1896 = vunpack.c.l.b16 %v1796
  %v1897 = vunpack.c.h.b16 %v1796
  %v1898 = vunpack.c.l.b16 %v1797
  %v1899 = vunpack.c.h.b16 %v1797
  %v1900 = vunpack.c.l.b16 %v1798
  %v1901 = vunpack.c.h.b16 %v1798
  %v1902 = vunpack.c.l.b16 %v1799
  %v1903 = vunpack.c.h.b16 %v1799
  %v1904 = vpack.c.b16 %v1842, %v1840
  %v1905 = vpack.c.b16 %v1843, %v1841
  %v1906 = vpack.c.b16 %v1846, %v1844
  %v1907 = vpack.c.b16 %v1847, %v1845
  %v1908 = vpack.c.b16 %v1850, %v1848
  %v1909 = vpack.c.b16 %v1851, %v1849
  %v1910 = vpack.c.b16 %v1854, %v1852
  %v1911 = vpack.c.b16 %v1855, %v1853
  %v1912 = vpack.c.b16 %v1858, %v1856
  %v1913 = vpack.c.b16 %v1859, %v1857
  %v1914 = vpack.c.b16 %v1862, %v1860
  %v1915 = vpack.c.b16 %v1863, %v1861
  %v1916 = vpack.c.b16 %v1866, %v1864
  %v1917 = vpack.c.b16 %v1867, %v1865
  %v1918 = vpack.c.b16 %v1870, %v1868
  %v1919 = vpack.c.b16 %v1871, %v1869
  %v1920 = vpack.c.b16 %v1874, %v1872
  %v1921 = vpack.c.b16 %v1875, %v1873
  %v1922 = vpack.c.b16 %v1878, %v1876
  %v1923 = vpack.c.b16 %v1879, %v1877
  %v1924 = vpack.c.b16 %v1882, %v1880
  %v1925 = vpack.c.b16 %v1883, %v1881
  %v1926 = vpack.c.b16 %v1886, %v1884
  %v1927 = vpack.c.b16 %v1887, %v1885
  %v1928 = vpack.c.b16 %v1890, %v1888
  %v1929 = vpack.c.b16 %v1891, %v1889
  %v1930 = vpack.c.b16 %v1894, %v1892
  %v1931 = vpack.c.b16 %v1895, %v1893
  %v1932 = vpack.c.b16 %v1898, %v1896
  %v1933 = vpack.c.b16 %v1899, %v1897
  %v1934 = vpack.c.b16 %v1902, %v1900
  %v1935 = vpack.c.b16 %v1903, %v1901
  %1968 = vmatpush.bf16.msra.mxu0 %v1918
  %1969 = vmatpush.bf16.msra.mxu0 %v1916
  %1970 = vmatpush.bf16.msra.mxu0 %v1914
  %1971 = vmatpush.bf16.msra.mxu0 %v1912
  %1972 = vmatpush.bf16.msra.mxu0 %v1910
  %1973 = vmatpush.bf16.msra.mxu0 %v1908
  %1974 = vmatpush.bf16.msra.mxu0 %v1906
  %1975 = vmatpush.bf16.msra.mxu0 %v1904
  %1976 = vmatmul.bf16.gmra.mxu0 %v1762
  %v1977 = vpop.f32.mrf.mxu0
  %v1978 = vadd.f32 %v1804, %v1977
  %v1979 = vpop.f32.mrf.mxu0
  %1980 = vdwg.mxu0
  %1981 = vmatpush.bf16.msra.mxu0 %v1934
  %1982 = vmatpush.bf16.msra.mxu0 %v1932
  %1983 = vmatpush.bf16.msra.mxu0 %v1930
  %1984 = vmatpush.bf16.msra.mxu0 %v1928
  %1985 = vmatpush.bf16.msra.mxu0 %v1926
  %1986 = vmatpush.bf16.msra.mxu0 %v1924
  %1987 = vmatpush.bf16.msra.mxu0 %v1922
  %1988 = vmatpush.bf16.msra.mxu0 %v1920
  %1989 = vmatmul.bf16.gmra.mxu0 %v1763
  %v1990 = vpop.f32.mrf.mxu0
  %v1991 = vadd.f32 %v1978, %v1990
  %v1992 = vpop.f32.mrf.mxu0
  %1993 = vdwg.mxu0
  %1994 = vmatpush.bf16.msra.mxu0 %v1919
  %1995 = vmatpush.bf16.msra.mxu0 %v1917
  %1996 = vmatpush.bf16.msra.mxu0 %v1915
  %1997 = vmatpush.bf16.msra.mxu0 %v1913
  %1998 = vmatpush.bf16.msra.mxu0 %v1911
  %1999 = vmatpush.bf16.msra.mxu0 %v1909
  %2000 = vmatpush.bf16.msra.mxu0 %v1907
  %2001 = vmatpush.bf16.msra.mxu0 %v1905
  %2002 = vmatmul.bf16.gmra.mxu0 %v1762
  %v2003 = vpop.f32.mrf.mxu0
  %v2004 = vadd.f32 %v1805, %v2003
  %v2005 = vpop.f32.mrf.mxu0
  %2006 = vdwg.mxu0
  %2007 = vmatpush.bf16.msra.mxu0 %v1935
  %2008 = vmatpush.bf16.msra.mxu0 %v1933
  %2009 = vmatpush.bf16.msra.mxu0 %v1931
  %2010 = vmatpush.bf16.msra.mxu0 %v1929
  %2011 = vmatpush.bf16.msra.mxu0 %v1927
  %2012 = vmatpush.bf16.msra.mxu0 %v1925
  %2013 = vmatpush.bf16.msra.mxu0 %v1923
  %2014 = vmatpush.bf16.msra.mxu0 %v1921
  %2015 = vmatmul.bf16.gmra.mxu0 %v1763
  %v2016 = vpop.f32.mrf.mxu0
  %v2017 = vadd.f32 %v2004, %v2016
  %v2018 = vpop.f32.mrf.mxu0
  %2019 = vdwg.mxu0
  %vm2020 = vcmp.gt.f32.partialorder %v1991, 0.0
  %vm2021 = vcmp.gt.f32.partialorder %v2017, 0.0
  %v2022 = vmul.f32 %v1991, 0.2
  %v2023 = vmul.f32 %v2017, 0.2
  %v2024 = vsel %vm2020, %v1991, %v2022
  %v2025 = vsel %vm2021, %v2017, %v2023
  %v2026 = vrot.slane %v2024, 4
  %v2027 = vadd.f32 %v2024, %v2026
  %v2028 = vrot.slane %v2027, 2
  %v2029 = vadd.f32 %v2027, %v2028
  %v2030 = vrot.slane %v2029, 1
  %v2031 = vadd.f32 %v2029, %v2030
  %v2032 = vrot.slane %v2025, 4
  %v2033 = vadd.f32 %v2025, %v2032
  %v2034 = vrot.slane %v2033, 2
  %v2035 = vadd.f32 %v2033, %v2034
  %v2036 = vrot.slane %v2035, 1
  %v2037 = vadd.f32 %v2035, %v2036
  %v2038 = vrcp.pop 8.0
  %v2039 = vmul.f32 8.0, %v2038
  %v2040 = vsub.f32 1.0, %v2039
  %v2041 = vmul.f32 %v2038, %v2040
  %v2042 = vadd.f32 %v2038, %v2041
  %vm2043 = vweird.f32 %v2038
  %v2044 = vsel %vm2043, %v2038, %v2042
  %v2045 = vmul.f32 %v2031, %v2044
  %v2046 = vmul.f32 %v2037, %v2044
  %v2047 = vsub.f32 %v2024, %v2045
  %v2048 = vsub.f32 %v2025, %v2046
  %v2049 = vmul.f32 %v2047, %v2047
  %v2050 = vmul.f32 %v2048, %v2048
  %v2051 = vrot.slane %v2049, 4
  %v2052 = vadd.f32 %v2049, %v2051
  %v2053 = vrot.slane %v2052, 2
  %v2054 = vadd.f32 %v2052, %v2053
  %v2055 = vrot.slane %v2054, 1
  %v2056 = vadd.f32 %v2054, %v2055
  %v2057 = vrot.slane %v2050, 4
  %v2058 = vadd.f32 %v2050, %v2057
  %v2059 = vrot.slane %v2058, 2
  %v2060 = vadd.f32 %v2058, %v2059
  %v2061 = vrot.slane %v2060, 1
  %v2062 = vadd.f32 %v2060, %v2061
  %v2063 = vmul.f32 %v2056, %v2044
  %v2064 = vmul.f32 %v2062, %v2044
  %v2065 = vadd.f32 %v2063, 1e-05
  %v2066 = vadd.f32 %v2064, 1e-05
  %v2067 = vrsqrt.pop %v2065
  %v2068 = vmul.f32 %v2067, %v2065
  %v2069 = vmul.f32 %v2068, %v2067
  %v2070 = vmul.f32 0.5, %v2069
  %v2071 = vsub.f32 1.5, %v2070
  %v2072 = vmul.f32 %v2067, %v2071
  %vm2073 = vweird.f32 %v2065
  %vm2074 = vweird.f32 %v2067
  %vm2075 = vmor %vm2073, %vm2074
  %v2076 = vsel %vm2075, %v2067, %v2072
  %v2077 = vrsqrt.pop %v2066
  %v2078 = vmul.f32 %v2077, %v2066
  %v2079 = vmul.f32 %v2078, %v2077
  %v2080 = vmul.f32 0.5, %v2079
  %v2081 = vsub.f32 1.5, %v2080
  %v2082 = vmul.f32 %v2077, %v2081
  %vm2083 = vweird.f32 %v2066
  %vm2084 = vweird.f32 %v2077
  %vm2085 = vmor %vm2083, %vm2084
  %v2086 = vsel %vm2085, %v2077, %v2082
  %v2089 = vrot.slane %v2086, 7
  %vm2090 = vcmask 1040384
  %v2091 = vsel %vm2090, %v2076, %v2089
  %v2093 = vmul.f32 %v1801, %v2091
  %v2095 = vperm.slane %v2093, 0
  %v2096 = vperm.slane %v2093, 1
  %v2099 = vmul.f32 %v2047, %v2095
  %v2100 = vmul.f32 %v2048, %v2096
  %v2102 = vperm.slane %v1802, 0
  %v2103 = vperm.slane %v1802, 1
  %v2106 = vadd.f32 %v2099, %v2102
  %v2107 = vadd.f32 %v2100, %v2103
  %s2108 = smul.u32 %s1764, 4
  %s2109 = sshll.u32 %s2108, 4
  %2110 = dma.done %s128, %s2109
  %v2111 = vpack.c.bf16 %v2106, %v2106
  %v2112 = vpack.c.bf16 %v2107, %v2107
  %v2113 = vld [vmem:[#allocation4] sm:$0xff]
  %v2114 = vld [vmem:[#allocation4 + $0x8] sm:$0xff]
  %v2115 = vld [vmem:[#allocation4 + $0x10] sm:$0xff]
  %v2116 = vld [vmem:[#allocation4 + $0x18] sm:$0xff]
  %v2117 = vld [vmem:[#allocation4 + $0x20] sm:$0xff]
  %v2118 = vld [vmem:[#allocation4 + $0x28] sm:$0xff]
  %v2119 = vld [vmem:[#allocation4 + $0x30] sm:$0xff]
  %v2120 = vld [vmem:[#allocation4 + $0x38] sm:$0xff]
  %v2121 = vld [vmem:[#allocation4 + $0x40] sm:$0xff]
  %v2122 = vld [vmem:[#allocation4 + $0x48] sm:$0xff]
  %v2123 = vld [vmem:[#allocation4 + $0x50] sm:$0xff]
  %v2124 = vld [vmem:[#allocation4 + $0x58] sm:$0xff]
  %v2125 = vld [vmem:[#allocation4 + $0x60] sm:$0xff]
  %v2126 = vld [vmem:[#allocation4 + $0x68] sm:$0xff]
  %v2127 = vld [vmem:[#allocation4 + $0x70] sm:$0xff]
  %v2128 = vld [vmem:[#allocation4 + $0x78] sm:$0xff]
  %v2129 = vld [vmem:[#allocation4 + $0x80] sm:$0xff]
  %v2130 = vld [vmem:[#allocation4 + $0x88] sm:$0xff]
  %v2131 = vld [vmem:[#allocation4 + $0x90] sm:$0xff]
  %v2132 = vld [vmem:[#allocation4 + $0x98] sm:$0xff]
  %v2133 = vld [vmem:[#allocation4 + $0xa0] sm:$0xff]
  %v2134 = vld [vmem:[#allocation4 + $0xa8] sm:$0xff]
  %v2135 = vld [vmem:[#allocation4 + $0xb0] sm:$0xff]
  %v2136 = vld [vmem:[#allocation4 + $0xb8] sm:$0xff]
  %v2137 = vld [vmem:[#allocation4 + $0xc0] sm:$0xff]
  %v2138 = vld [vmem:[#allocation4 + $0xc8] sm:$0xff]
  %v2139 = vld [vmem:[#allocation4 + $0xd0] sm:$0xff]
  %v2140 = vld [vmem:[#allocation4 + $0xd8] sm:$0xff]
  %v2141 = vld [vmem:[#allocation4 + $0xe0] sm:$0xff]
  %v2142 = vld [vmem:[#allocation4 + $0xe8] sm:$0xff]
  %v2143 = vld [vmem:[#allocation4 + $0xf0] sm:$0xff]
  %v2144 = vld [vmem:[#allocation4 + $0xf8] sm:$0xff]
  %v2145 = vld [vmem:[#allocation4 + $0x100] sm:$0xff]
  %v2146 = vld [vmem:[#allocation4 + $0x108] sm:$0xff]
  %v2147 = vld [vmem:[#allocation4 + $0x110] sm:$0xff]
  %v2148 = vld [vmem:[#allocation4 + $0x118] sm:$0xff]
  %v2149 = vld [vmem:[#allocation4 + $0x120] sm:$0xff]
  %v2150 = vld [vmem:[#allocation4 + $0x128] sm:$0xff]
  %v2151 = vld [vmem:[#allocation4 + $0x130] sm:$0xff]
  %v2152 = vld [vmem:[#allocation4 + $0x138] sm:$0xff]
  %v2153 = vld [vmem:[#allocation4 + $0x140] sm:$0xff]
  %v2154 = vld [vmem:[#allocation4 + $0x148] sm:$0xff]
  %v2155 = vld [vmem:[#allocation4 + $0x150] sm:$0xff]
  %v2156 = vld [vmem:[#allocation4 + $0x158] sm:$0xff]
  %v2157 = vld [vmem:[#allocation4 + $0x160] sm:$0xff]
  %v2158 = vld [vmem:[#allocation4 + $0x168] sm:$0xff]
  %v2159 = vld [vmem:[#allocation4 + $0x170] sm:$0xff]
  %v2160 = vld [vmem:[#allocation4 + $0x178] sm:$0xff]
  %v2161 = vld [vmem:[#allocation4 + $0x180] sm:$0xff]
  %v2162 = vld [vmem:[#allocation4 + $0x188] sm:$0xff]
  %v2163 = vld [vmem:[#allocation4 + $0x190] sm:$0xff]
  %v2164 = vld [vmem:[#allocation4 + $0x198] sm:$0xff]
  %v2165 = vld [vmem:[#allocation4 + $0x1a0] sm:$0xff]
  %v2166 = vld [vmem:[#allocation4 + $0x1a8] sm:$0xff]
  %v2167 = vld [vmem:[#allocation4 + $0x1b0] sm:$0xff]
  %v2168 = vld [vmem:[#allocation4 + $0x1b8] sm:$0xff]
  %v2169 = vld [vmem:[#allocation4 + $0x1c0] sm:$0xff]
  %v2170 = vld [vmem:[#allocation4 + $0x1c8] sm:$0xff]
  %v2171 = vld [vmem:[#allocation4 + $0x1d0] sm:$0xff]
  %v2172 = vld [vmem:[#allocation4 + $0x1d8] sm:$0xff]
  %v2173 = vld [vmem:[#allocation4 + $0x1e0] sm:$0xff]
  %v2174 = vld [vmem:[#allocation4 + $0x1e8] sm:$0xff]
  %v2175 = vld [vmem:[#allocation4 + $0x1f0] sm:$0xff]
  %v2176 = vld [vmem:[#allocation4 + $0x1f8] sm:$0xff]
  %v2177 = vld [vmem:[%s6] sm:$0xf]
  %v2178 = vld [vmem:[%s7] sm:$0xf]
  %v2179 = vld [vmem:[%s8] sm:$0xf]
  %v2181 = vperm.slane %v2177, 0
  %v2182 = vperm.slane %v2177, 1
  %v2183 = vperm.slane %v2177, 2
  %v2184 = vperm.slane %v2177, 3
  %v2253 = vunpack.c.l.b16 %v2113
  %v2254 = vunpack.c.h.b16 %v2113
  %v2255 = vunpack.c.l.b16 %v2114
  %v2256 = vunpack.c.h.b16 %v2114
  %v2257 = vunpack.c.l.b16 %v2115
  %v2258 = vunpack.c.h.b16 %v2115
  %v2259 = vunpack.c.l.b16 %v2116
  %v2260 = vunpack.c.h.b16 %v2116
  %v2261 = vunpack.c.l.b16 %v2117
  %v2262 = vunpack.c.h.b16 %v2117
  %v2263 = vunpack.c.l.b16 %v2118
  %v2264 = vunpack.c.h.b16 %v2118
  %v2265 = vunpack.c.l.b16 %v2119
  %v2266 = vunpack.c.h.b16 %v2119
  %v2267 = vunpack.c.l.b16 %v2120
  %v2268 = vunpack.c.h.b16 %v2120
  %v2269 = vunpack.c.l.b16 %v2121
  %v2270 = vunpack.c.h.b16 %v2121
  %v2271 = vunpack.c.l.b16 %v2122
  %v2272 = vunpack.c.h.b16 %v2122
  %v2273 = vunpack.c.l.b16 %v2123
  %v2274 = vunpack.c.h.b16 %v2123
  %v2275 = vunpack.c.l.b16 %v2124
  %v2276 = vunpack.c.h.b16 %v2124
  %v2277 = vunpack.c.l.b16 %v2125
  %v2278 = vunpack.c.h.b16 %v2125
  %v2279 = vunpack.c.l.b16 %v2126
  %v2280 = vunpack.c.h.b16 %v2126
  %v2281 = vunpack.c.l.b16 %v2127
  %v2282 = vunpack.c.h.b16 %v2127
  %v2283 = vunpack.c.l.b16 %v2128
  %v2284 = vunpack.c.h.b16 %v2128
  %v2285 = vunpack.c.l.b16 %v2129
  %v2286 = vunpack.c.h.b16 %v2129
  %v2287 = vunpack.c.l.b16 %v2130
  %v2288 = vunpack.c.h.b16 %v2130
  %v2289 = vunpack.c.l.b16 %v2131
  %v2290 = vunpack.c.h.b16 %v2131
  %v2291 = vunpack.c.l.b16 %v2132
  %v2292 = vunpack.c.h.b16 %v2132
  %v2293 = vunpack.c.l.b16 %v2133
  %v2294 = vunpack.c.h.b16 %v2133
  %v2295 = vunpack.c.l.b16 %v2134
  %v2296 = vunpack.c.h.b16 %v2134
  %v2297 = vunpack.c.l.b16 %v2135
  %v2298 = vunpack.c.h.b16 %v2135
  %v2299 = vunpack.c.l.b16 %v2136
  %v2300 = vunpack.c.h.b16 %v2136
  %v2301 = vunpack.c.l.b16 %v2137
  %v2302 = vunpack.c.h.b16 %v2137
  %v2303 = vunpack.c.l.b16 %v2138
  %v2304 = vunpack.c.h.b16 %v2138
  %v2305 = vunpack.c.l.b16 %v2139
  %v2306 = vunpack.c.h.b16 %v2139
  %v2307 = vunpack.c.l.b16 %v2140
  %v2308 = vunpack.c.h.b16 %v2140
  %v2309 = vunpack.c.l.b16 %v2141
  %v2310 = vunpack.c.h.b16 %v2141
  %v2311 = vunpack.c.l.b16 %v2142
  %v2312 = vunpack.c.h.b16 %v2142
  %v2313 = vunpack.c.l.b16 %v2143
  %v2314 = vunpack.c.h.b16 %v2143
  %v2315 = vunpack.c.l.b16 %v2144
  %v2316 = vunpack.c.h.b16 %v2144
  %v2317 = vunpack.c.l.b16 %v2145
  %v2318 = vunpack.c.h.b16 %v2145
  %v2319 = vunpack.c.l.b16 %v2146
  %v2320 = vunpack.c.h.b16 %v2146
  %v2321 = vunpack.c.l.b16 %v2147
  %v2322 = vunpack.c.h.b16 %v2147
  %v2323 = vunpack.c.l.b16 %v2148
  %v2324 = vunpack.c.h.b16 %v2148
  %v2325 = vunpack.c.l.b16 %v2149
  %v2326 = vunpack.c.h.b16 %v2149
  %v2327 = vunpack.c.l.b16 %v2150
  %v2328 = vunpack.c.h.b16 %v2150
  %v2329 = vunpack.c.l.b16 %v2151
  %v2330 = vunpack.c.h.b16 %v2151
  %v2331 = vunpack.c.l.b16 %v2152
  %v2332 = vunpack.c.h.b16 %v2152
  %v2333 = vunpack.c.l.b16 %v2153
  %v2334 = vunpack.c.h.b16 %v2153
  %v2335 = vunpack.c.l.b16 %v2154
  %v2336 = vunpack.c.h.b16 %v2154
  %v2337 = vunpack.c.l.b16 %v2155
  %v2338 = vunpack.c.h.b16 %v2155
  %v2339 = vunpack.c.l.b16 %v2156
  %v2340 = vunpack.c.h.b16 %v2156
  %v2341 = vunpack.c.l.b16 %v2157
  %v2342 = vunpack.c.h.b16 %v2157
  %v2343 = vunpack.c.l.b16 %v2158
  %v2344 = vunpack.c.h.b16 %v2158
  %v2345 = vunpack.c.l.b16 %v2159
  %v2346 = vunpack.c.h.b16 %v2159
  %v2347 = vunpack.c.l.b16 %v2160
  %v2348 = vunpack.c.h.b16 %v2160
  %v2349 = vunpack.c.l.b16 %v2161
  %v2350 = vunpack.c.h.b16 %v2161
  %v2351 = vunpack.c.l.b16 %v2162
  %v2352 = vunpack.c.h.b16 %v2162
  %v2353 = vunpack.c.l.b16 %v2163
  %v2354 = vunpack.c.h.b16 %v2163
  %v2355 = vunpack.c.l.b16 %v2164
  %v2356 = vunpack.c.h.b16 %v2164
  %v2357 = vunpack.c.l.b16 %v2165
  %v2358 = vunpack.c.h.b16 %v2165
  %v2359 = vunpack.c.l.b16 %v2166
  %v2360 = vunpack.c.h.b16 %v2166
  %v2361 = vunpack.c.l.b16 %v2167
  %v2362 = vunpack.c.h.b16 %v2167
  %v2363 = vunpack.c.l.b16 %v2168
  %v2364 = vunpack.c.h.b16 %v2168
  %v2365 = vunpack.c.l.b16 %v2169
  %v2366 = vunpack.c.h.b16 %v2169
  %v2367 = vunpack.c.l.b16 %v2170
  %v2368 = vunpack.c.h.b16 %v2170
  %v2369 = vunpack.c.l.b16 %v2171
  %v2370 = vunpack.c.h.b16 %v2171
  %v2371 = vunpack.c.l.b16 %v2172
  %v2372 = vunpack.c.h.b16 %v2172
  %v2373 = vunpack.c.l.b16 %v2173
  %v2374 = vunpack.c.h.b16 %v2173
  %v2375 = vunpack.c.l.b16 %v2174
  %v2376 = vunpack.c.h.b16 %v2174
  %v2377 = vunpack.c.l.b16 %v2175
  %v2378 = vunpack.c.h.b16 %v2175
  %v2379 = vunpack.c.l.b16 %v2176
  %v2380 = vunpack.c.h.b16 %v2176
  %v2381 = vpack.c.b16 %v2257, %v2253
  %v2382 = vpack.c.b16 %v2258, %v2254
  %v2383 = vpack.c.b16 %v2259, %v2255
  %v2384 = vpack.c.b16 %v2260, %v2256
  %v2385 = vpack.c.b16 %v2265, %v2261
  %v2386 = vpack.c.b16 %v2266, %v2262
  %v2387 = vpack.c.b16 %v2267, %v2263
  %v2388 = vpack.c.b16 %v2268, %v2264
  %v2389 = vpack.c.b16 %v2273, %v2269
  %v2390 = vpack.c.b16 %v2274, %v2270
  %v2391 = vpack.c.b16 %v2275, %v2271
  %v2392 = vpack.c.b16 %v2276, %v2272
  %v2393 = vpack.c.b16 %v2281, %v2277
  %v2394 = vpack.c.b16 %v2282, %v2278
  %v2395 = vpack.c.b16 %v2283, %v2279
  %v2396 = vpack.c.b16 %v2284, %v2280
  %v2397 = vpack.c.b16 %v2289, %v2285
  %v2398 = vpack.c.b16 %v2290, %v2286
  %v2399 = vpack.c.b16 %v2291, %v2287
  %v2400 = vpack.c.b16 %v2292, %v2288
  %v2401 = vpack.c.b16 %v2297, %v2293
  %v2402 = vpack.c.b16 %v2298, %v2294
  %v2403 = vpack.c.b16 %v2299, %v2295
  %v2404 = vpack.c.b16 %v2300, %v2296
  %v2405 = vpack.c.b16 %v2305, %v2301
  %v2406 = vpack.c.b16 %v2306, %v2302
  %v2407 = vpack.c.b16 %v2307, %v2303
  %v2408 = vpack.c.b16 %v2308, %v2304
  %v2409 = vpack.c.b16 %v2313, %v2309
  %v2410 = vpack.c.b16 %v2314, %v2310
  %v2411 = vpack.c.b16 %v2315, %v2311
  %v2412 = vpack.c.b16 %v2316, %v2312
  %v2413 = vpack.c.b16 %v2321, %v2317
  %v2414 = vpack.c.b16 %v2322, %v2318
  %v2415 = vpack.c.b16 %v2323, %v2319
  %v2416 = vpack.c.b16 %v2324, %v2320
  %v2417 = vpack.c.b16 %v2329, %v2325
  %v2418 = vpack.c.b16 %v2330, %v2326
  %v2419 = vpack.c.b16 %v2331, %v2327
  %v2420 = vpack.c.b16 %v2332, %v2328
  %v2421 = vpack.c.b16 %v2337, %v2333
  %v2422 = vpack.c.b16 %v2338, %v2334
  %v2423 = vpack.c.b16 %v2339, %v2335
  %v2424 = vpack.c.b16 %v2340, %v2336
  %v2425 = vpack.c.b16 %v2345, %v2341
  %v2426 = vpack.c.b16 %v2346, %v2342
  %v2427 = vpack.c.b16 %v2347, %v2343
  %v2428 = vpack.c.b16 %v2348, %v2344
  %v2429 = vpack.c.b16 %v2353, %v2349
  %v2430 = vpack.c.b16 %v2354, %v2350
  %v2431 = vpack.c.b16 %v2355, %v2351
  %v2432 = vpack.c.b16 %v2356, %v2352
  %v2433 = vpack.c.b16 %v2361, %v2357
  %v2434 = vpack.c.b16 %v2362, %v2358
  %v2435 = vpack.c.b16 %v2363, %v2359
  %v2436 = vpack.c.b16 %v2364, %v2360
  %v2437 = vpack.c.b16 %v2369, %v2365
  %v2438 = vpack.c.b16 %v2370, %v2366
  %v2439 = vpack.c.b16 %v2371, %v2367
  %v2440 = vpack.c.b16 %v2372, %v2368
  %v2441 = vpack.c.b16 %v2377, %v2373
  %v2442 = vpack.c.b16 %v2378, %v2374
  %v2443 = vpack.c.b16 %v2379, %v2375
  %v2444 = vpack.c.b16 %v2380, %v2376
  %2509 = vmatpush.bf16.msra.mxu0 %v2409
  %2510 = vmatpush.bf16.msra.mxu0 %v2405
  %2511 = vmatpush.bf16.msra.mxu0 %v2401
  %2512 = vmatpush.bf16.msra.mxu0 %v2397
  %2513 = vmatpush.bf16.msra.mxu0 %v2393
  %2514 = vmatpush.bf16.msra.mxu0 %v2389
  %2515 = vmatpush.bf16.msra.mxu0 %v2385
  %2516 = vmatpush.bf16.msra.mxu0 %v2381
  %2517 = vmatmul.bf16.gmra.mxu0 %v2111
  %v2518 = vpop.f32.mrf.mxu0
  %v2519 = vadd.f32 %v2181, %v2518
  %v2520 = vpop.f32.mrf.mxu0
  %2521 = vdwg.mxu0
  %2522 = vmatpush.bf16.msra.mxu0 %v2441
  %2523 = vmatpush.bf16.msra.mxu0 %v2437
  %2524 = vmatpush.bf16.msra.mxu0 %v2433
  %2525 = vmatpush.bf16.msra.mxu0 %v2429
  %2526 = vmatpush.bf16.msra.mxu0 %v2425
  %2527 = vmatpush.bf16.msra.mxu0 %v2421
  %2528 = vmatpush.bf16.msra.mxu0 %v2417
  %2529 = vmatpush.bf16.msra.mxu0 %v2413
  %2530 = vmatmul.bf16.gmra.mxu0 %v2112
  %v2531 = vpop.f32.mrf.mxu0
  %v2532 = vadd.f32 %v2519, %v2531
  %v2533 = vpop.f32.mrf.mxu0
  %2534 = vdwg.mxu0
  %2535 = vmatpush.bf16.msra.mxu0 %v2410
  %2536 = vmatpush.bf16.msra.mxu0 %v2406
  %2537 = vmatpush.bf16.msra.mxu0 %v2402
  %2538 = vmatpush.bf16.msra.mxu0 %v2398
  %2539 = vmatpush.bf16.msra.mxu0 %v2394
  %2540 = vmatpush.bf16.msra.mxu0 %v2390
  %2541 = vmatpush.bf16.msra.mxu0 %v2386
  %2542 = vmatpush.bf16.msra.mxu0 %v2382
  %2543 = vmatmul.bf16.gmra.mxu0 %v2111
  %v2544 = vpop.f32.mrf.mxu0
  %v2545 = vadd.f32 %v2182, %v2544
  %v2546 = vpop.f32.mrf.mxu0
  %2547 = vdwg.mxu0
  %2548 = vmatpush.bf16.msra.mxu0 %v2442
  %2549 = vmatpush.bf16.msra.mxu0 %v2438
  %2550 = vmatpush.bf16.msra.mxu0 %v2434
  %2551 = vmatpush.bf16.msra.mxu0 %v2430
  %2552 = vmatpush.bf16.msra.mxu0 %v2426
  %2553 = vmatpush.bf16.msra.mxu0 %v2422
  %2554 = vmatpush.bf16.msra.mxu0 %v2418
  %2555 = vmatpush.bf16.msra.mxu0 %v2414
  %2556 = vmatmul.bf16.gmra.mxu0 %v2112
  %v2557 = vpop.f32.mrf.mxu0
  %v2558 = vadd.f32 %v2545, %v2557
  %v2559 = vpop.f32.mrf.mxu0
  %2560 = vdwg.mxu0
  %2561 = vmatpush.bf16.msra.mxu0 %v2411
  %2562 = vmatpush.bf16.msra.mxu0 %v2407
  %2563 = vmatpush.bf16.msra.mxu0 %v2403
  %2564 = vmatpush.bf16.msra.mxu0 %v2399
  %2565 = vmatpush.bf16.msra.mxu0 %v2395
  %2566 = vmatpush.bf16.msra.mxu0 %v2391
  %2567 = vmatpush.bf16.msra.mxu0 %v2387
  %2568 = vmatpush.bf16.msra.mxu0 %v2383
  %2569 = vmatmul.bf16.gmra.mxu0 %v2111
  %v2570 = vpop.f32.mrf.mxu0
  %v2571 = vadd.f32 %v2183, %v2570
  %v2572 = vpop.f32.mrf.mxu0
  %2573 = vdwg.mxu0
  %2574 = vmatpush.bf16.msra.mxu0 %v2443
  %2575 = vmatpush.bf16.msra.mxu0 %v2439
  %2576 = vmatpush.bf16.msra.mxu0 %v2435
  %2577 = vmatpush.bf16.msra.mxu0 %v2431
  %2578 = vmatpush.bf16.msra.mxu0 %v2427
  %2579 = vmatpush.bf16.msra.mxu0 %v2423
  %2580 = vmatpush.bf16.msra.mxu0 %v2419
  %2581 = vmatpush.bf16.msra.mxu0 %v2415
  %2582 = vmatmul.bf16.gmra.mxu0 %v2112
  %v2583 = vpop.f32.mrf.mxu0
  %v2584 = vadd.f32 %v2571, %v2583
  %v2585 = vpop.f32.mrf.mxu0
  %2586 = vdwg.mxu0
  %2587 = vmatpush.bf16.msra.mxu0 %v2412
  %2588 = vmatpush.bf16.msra.mxu0 %v2408
  %2589 = vmatpush.bf16.msra.mxu0 %v2404
  %2590 = vmatpush.bf16.msra.mxu0 %v2400
  %2591 = vmatpush.bf16.msra.mxu0 %v2396
  %2592 = vmatpush.bf16.msra.mxu0 %v2392
  %2593 = vmatpush.bf16.msra.mxu0 %v2388
  %2594 = vmatpush.bf16.msra.mxu0 %v2384
  %2595 = vmatmul.bf16.gmra.mxu0 %v2111
  %v2596 = vpop.f32.mrf.mxu0
  %v2597 = vadd.f32 %v2184, %v2596
  %v2598 = vpop.f32.mrf.mxu0
  %2599 = vdwg.mxu0
  %2600 = vmatpush.bf16.msra.mxu0 %v2444
  %2601 = vmatpush.bf16.msra.mxu0 %v2440
  %2602 = vmatpush.bf16.msra.mxu0 %v2436
  %2603 = vmatpush.bf16.msra.mxu0 %v2432
  %2604 = vmatpush.bf16.msra.mxu0 %v2428
  %2605 = vmatpush.bf16.msra.mxu0 %v2424
  %2606 = vmatpush.bf16.msra.mxu0 %v2420
  %2607 = vmatpush.bf16.msra.mxu0 %v2416
  %2608 = vmatmul.bf16.gmra.mxu0 %v2112
  %v2609 = vpop.f32.mrf.mxu0
  %v2610 = vadd.f32 %v2597, %v2609
  %v2611 = vpop.f32.mrf.mxu0
  %2612 = vdwg.mxu0
  %vm2613 = vcmp.gt.f32.partialorder %v2532, 0.0
  %vm2614 = vcmp.gt.f32.partialorder %v2558, 0.0
  %vm2615 = vcmp.gt.f32.partialorder %v2584, 0.0
  %vm2616 = vcmp.gt.f32.partialorder %v2610, 0.0
  %v2617 = vmul.f32 %v2532, 0.2
  %v2618 = vmul.f32 %v2558, 0.2
  %v2619 = vmul.f32 %v2584, 0.2
  %v2620 = vmul.f32 %v2610, 0.2
  %v2621 = vsel %vm2613, %v2532, %v2617
  %v2622 = vsel %vm2614, %v2558, %v2618
  %v2623 = vsel %vm2615, %v2584, %v2619
  %v2624 = vsel %vm2616, %v2610, %v2620
  %v2625 = vrot.slane %v2621, 4
  %v2626 = vadd.f32 %v2621, %v2625
  %v2627 = vrot.slane %v2626, 2
  %v2628 = vadd.f32 %v2626, %v2627
  %v2629 = vrot.slane %v2628, 1
  %v2630 = vadd.f32 %v2628, %v2629
  %v2631 = vrot.slane %v2622, 4
  %v2632 = vadd.f32 %v2622, %v2631
  %v2633 = vrot.slane %v2632, 2
  %v2634 = vadd.f32 %v2632, %v2633
  %v2635 = vrot.slane %v2634, 1
  %v2636 = vadd.f32 %v2634, %v2635
  %v2637 = vrot.slane %v2623, 4
  %v2638 = vadd.f32 %v2623, %v2637
  %v2639 = vrot.slane %v2638, 2
  %v2640 = vadd.f32 %v2638, %v2639
  %v2641 = vrot.slane %v2640, 1
  %v2642 = vadd.f32 %v2640, %v2641
  %v2643 = vrot.slane %v2624, 4
  %v2644 = vadd.f32 %v2624, %v2643
  %v2645 = vrot.slane %v2644, 2
  %v2646 = vadd.f32 %v2644, %v2645
  %v2647 = vrot.slane %v2646, 1
  %v2648 = vadd.f32 %v2646, %v2647
  %v2649 = vmul.f32 %v2630, %v2044
  %v2650 = vmul.f32 %v2636, %v2044
  %v2651 = vmul.f32 %v2642, %v2044
  %v2652 = vmul.f32 %v2648, %v2044
  %v2653 = vsub.f32 %v2621, %v2649
  %v2654 = vsub.f32 %v2622, %v2650
  %v2655 = vsub.f32 %v2623, %v2651
  %v2656 = vsub.f32 %v2624, %v2652
  %v2657 = vmul.f32 %v2653, %v2653
  %v2658 = vmul.f32 %v2654, %v2654
  %v2659 = vmul.f32 %v2655, %v2655
  %v2660 = vmul.f32 %v2656, %v2656
  %v2661 = vrot.slane %v2657, 4
  %v2662 = vadd.f32 %v2657, %v2661
  %v2663 = vrot.slane %v2662, 2
  %v2664 = vadd.f32 %v2662, %v2663
  %v2665 = vrot.slane %v2664, 1
  %v2666 = vadd.f32 %v2664, %v2665
  %v2667 = vrot.slane %v2658, 4
  %v2668 = vadd.f32 %v2658, %v2667
  %v2669 = vrot.slane %v2668, 2
  %v2670 = vadd.f32 %v2668, %v2669
  %v2671 = vrot.slane %v2670, 1
  %v2672 = vadd.f32 %v2670, %v2671
  %v2673 = vrot.slane %v2659, 4
  %v2674 = vadd.f32 %v2659, %v2673
  %v2675 = vrot.slane %v2674, 2
  %v2676 = vadd.f32 %v2674, %v2675
  %v2677 = vrot.slane %v2676, 1
  %v2678 = vadd.f32 %v2676, %v2677
  %v2679 = vrot.slane %v2660, 4
  %v2680 = vadd.f32 %v2660, %v2679
  %v2681 = vrot.slane %v2680, 2
  %v2682 = vadd.f32 %v2680, %v2681
  %v2683 = vrot.slane %v2682, 1
  %v2684 = vadd.f32 %v2682, %v2683
  %v2685 = vmul.f32 %v2666, %v2044
  %v2686 = vmul.f32 %v2672, %v2044
  %v2687 = vmul.f32 %v2678, %v2044
  %v2688 = vmul.f32 %v2684, %v2044
  %v2689 = vadd.f32 %v2685, 1e-05
  %v2690 = vadd.f32 %v2686, 1e-05
  %v2691 = vadd.f32 %v2687, 1e-05
  %v2692 = vadd.f32 %v2688, 1e-05
  %v2693 = vrsqrt.pop %v2689
  %v2694 = vmul.f32 %v2693, %v2689
  %v2695 = vmul.f32 %v2694, %v2693
  %v2696 = vmul.f32 0.5, %v2695
  %v2697 = vsub.f32 1.5, %v2696
  %v2698 = vmul.f32 %v2693, %v2697
  %vm2699 = vweird.f32 %v2689
  %vm2700 = vweird.f32 %v2693
  %vm2701 = vmor %vm2699, %vm2700
  %v2702 = vsel %vm2701, %v2693, %v2698
  %v2703 = vrsqrt.pop %v2690
  %v2704 = vmul.f32 %v2703, %v2690
  %v2705 = vmul.f32 %v2704, %v2703
  %v2706 = vmul.f32 0.5, %v2705
  %v2707 = vsub.f32 1.5, %v2706
  %v2708 = vmul.f32 %v2703, %v2707
  %vm2709 = vweird.f32 %v2690
  %vm2710 = vweird.f32 %v2703
  %vm2711 = vmor %vm2709, %vm2710
  %v2712 = vsel %vm2711, %v2703, %v2708
  %v2713 = vrsqrt.pop %v2691
  %v2714 = vmul.f32 %v2713, %v2691
  %v2715 = vmul.f32 %v2714, %v2713
  %v2716 = vmul.f32 0.5, %v2715
  %v2717 = vsub.f32 1.5, %v2716
  %v2718 = vmul.f32 %v2713, %v2717
  %vm2719 = vweird.f32 %v2691
  %vm2720 = vweird.f32 %v2713
  %vm2721 = vmor %vm2719, %vm2720
  %v2722 = vsel %vm2721, %v2713, %v2718
  %v2723 = vrsqrt.pop %v2692
  %v2724 = vmul.f32 %v2723, %v2692
  %v2725 = vmul.f32 %v2724, %v2723
  %v2726 = vmul.f32 0.5, %v2725
  %v2727 = vsub.f32 1.5, %v2726
  %v2728 = vmul.f32 %v2723, %v2727
  %vm2729 = vweird.f32 %v2692
  %vm2730 = vweird.f32 %v2723
  %vm2731 = vmor %vm2729, %vm2730
  %v2732 = vsel %vm2731, %v2723, %v2728
  %v2737 = vrot.slane %v2712, 7
  %v2738 = vrot.slane %v2722, 6
  %v2739 = vrot.slane %v2732, 5
  %v2740 = vsel %vm2090, %v2702, %v2737
  %vm2741 = vcmask 1042434
  %v2742 = vsel %vm2741, %v2738, %v2739
  %v2743 = vsel %vm1730, %v2740, %v2742
  %v2745 = vmul.f32 %v2178, %v2743
  %v2747 = vperm.slane %v2745, 0
  %v2748 = vperm.slane %v2745, 1
  %v2749 = vperm.slane %v2745, 2
  %v2750 = vperm.slane %v2745, 3
  %v2755 = vmul.f32 %v2653, %v2747
  %v2756 = vmul.f32 %v2654, %v2748
  %v2757 = vmul.f32 %v2655, %v2749
  %v2758 = vmul.f32 %v2656, %v2750
  %v2760 = vperm.slane %v2179, 0
  %v2761 = vperm.slane %v2179, 1
  %v2762 = vperm.slane %v2179, 2
  %v2763 = vperm.slane %v2179, 3
  %v2768 = vadd.f32 %v2755, %v2760
  %v2769 = vadd.f32 %v2756, %v2761
  %v2770 = vadd.f32 %v2757, %v2762
  %v2771 = vadd.f32 %v2758, %v2763
  %s2772 = smul.u32 4, 64
  %s2773 = smul.u32 %s2772, 8
  %s2774 = sshll.u32 %s2773, 4
  %2775 = dma.done %s273, %s2774
  %v2776 = vpack.c.bf16 %v2768, %v2768
  %v2777 = vpack.c.bf16 %v2769, %v2769
  %v2778 = vpack.c.bf16 %v2770, %v2770
  %v2779 = vpack.c.bf16 %v2771, %v2771
  %v2780 = vld [vmem:[#allocation5] sm:$0xff]
  %v2781 = vld [vmem:[#allocation5 + $0x8] sm:$0xff]
  %v2782 = vld [vmem:[#allocation5 + $0x10] sm:$0xff]
  %v2783 = vld [vmem:[#allocation5 + $0x18] sm:$0xff]
  %v2784 = vld [vmem:[#allocation5 + $0x20] sm:$0xff]
  %v2785 = vld [vmem:[#allocation5 + $0x28] sm:$0xff]
  %v2786 = vld [vmem:[#allocation5 + $0x30] sm:$0xff]
  %v2787 = vld [vmem:[#allocation5 + $0x38] sm:$0xff]
  %v2788 = vld [vmem:[#allocation5 + $0x40] sm:$0xff]
  %v2789 = vld [vmem:[#allocation5 + $0x48] sm:$0xff]
  %v2790 = vld [vmem:[#allocation5 + $0x50] sm:$0xff]
  %v2791 = vld [vmem:[#allocation5 + $0x58] sm:$0xff]
  %v2792 = vld [vmem:[#allocation5 + $0x60] sm:$0xff]
  %v2793 = vld [vmem:[#allocation5 + $0x68] sm:$0xff]
  %v2794 = vld [vmem:[#allocation5 + $0x70] sm:$0xff]
  %v2795 = vld [vmem:[#allocation5 + $0x78] sm:$0xff]
  %v2796 = vld [vmem:[#allocation5 + $0x80] sm:$0xff]
  %v2797 = vld [vmem:[#allocation5 + $0x88] sm:$0xff]
  %v2798 = vld [vmem:[#allocation5 + $0x90] sm:$0xff]
  %v2799 = vld [vmem:[#allocation5 + $0x98] sm:$0xff]
  %v2800 = vld [vmem:[#allocation5 + $0xa0] sm:$0xff]
  %v2801 = vld [vmem:[#allocation5 + $0xa8] sm:$0xff]
  %v2802 = vld [vmem:[#allocation5 + $0xb0] sm:$0xff]
  %v2803 = vld [vmem:[#allocation5 + $0xb8] sm:$0xff]
  %v2804 = vld [vmem:[#allocation5 + $0xc0] sm:$0xff]
  %v2805 = vld [vmem:[#allocation5 + $0xc8] sm:$0xff]
  %v2806 = vld [vmem:[#allocation5 + $0xd0] sm:$0xff]
  %v2807 = vld [vmem:[#allocation5 + $0xd8] sm:$0xff]
  %v2808 = vld [vmem:[#allocation5 + $0xe0] sm:$0xff]
  %v2809 = vld [vmem:[#allocation5 + $0xe8] sm:$0xff]
  %v2810 = vld [vmem:[#allocation5 + $0xf0] sm:$0xff]
  %v2811 = vld [vmem:[#allocation5 + $0xf8] sm:$0xff]
  %v2812 = vld [vmem:[#allocation5 + $0x100] sm:$0xff]
  %v2813 = vld [vmem:[#allocation5 + $0x108] sm:$0xff]
  %v2814 = vld [vmem:[#allocation5 + $0x110] sm:$0xff]
  %v2815 = vld [vmem:[#allocation5 + $0x118] sm:$0xff]
  %v2816 = vld [vmem:[#allocation5 + $0x120] sm:$0xff]
  %v2817 = vld [vmem:[#allocation5 + $0x128] sm:$0xff]
  %v2818 = vld [vmem:[#allocation5 + $0x130] sm:$0xff]
  %v2819 = vld [vmem:[#allocation5 + $0x138] sm:$0xff]
  %v2820 = vld [vmem:[#allocation5 + $0x140] sm:$0xff]
  %v2821 = vld [vmem:[#allocation5 + $0x148] sm:$0xff]
  %v2822 = vld [vmem:[#allocation5 + $0x150] sm:$0xff]
  %v2823 = vld [vmem:[#allocation5 + $0x158] sm:$0xff]
  %v2824 = vld [vmem:[#allocation5 + $0x160] sm:$0xff]
  %v2825 = vld [vmem:[#allocation5 + $0x168] sm:$0xff]
  %v2826 = vld [vmem:[#allocation5 + $0x170] sm:$0xff]
  %v2827 = vld [vmem:[#allocation5 + $0x178] sm:$0xff]
  %v2828 = vld [vmem:[#allocation5 + $0x180] sm:$0xff]
  %v2829 = vld [vmem:[#allocation5 + $0x188] sm:$0xff]
  %v2830 = vld [vmem:[#allocation5 + $0x190] sm:$0xff]
  %v2831 = vld [vmem:[#allocation5 + $0x198] sm:$0xff]
  %v2832 = vld [vmem:[#allocation5 + $0x1a0] sm:$0xff]
  %v2833 = vld [vmem:[#allocation5 + $0x1a8] sm:$0xff]
  %v2834 = vld [vmem:[#allocation5 + $0x1b0] sm:$0xff]
  %v2835 = vld [vmem:[#allocation5 + $0x1b8] sm:$0xff]
  %v2836 = vld [vmem:[#allocation5 + $0x1c0] sm:$0xff]
  %v2837 = vld [vmem:[#allocation5 + $0x1c8] sm:$0xff]
  %v2838 = vld [vmem:[#allocation5 + $0x1d0] sm:$0xff]
  %v2839 = vld [vmem:[#allocation5 + $0x1d8] sm:$0xff]
  %v2840 = vld [vmem:[#allocation5 + $0x1e0] sm:$0xff]
  %v2841 = vld [vmem:[#allocation5 + $0x1e8] sm:$0xff]
  %v2842 = vld [vmem:[#allocation5 + $0x1f0] sm:$0xff]
  %v2843 = vld [vmem:[#allocation5 + $0x1f8] sm:$0xff]
  %v2844 = vld [vmem:[#allocation5 + $0x200] sm:$0xff]
  %v2845 = vld [vmem:[#allocation5 + $0x208] sm:$0xff]
  %v2846 = vld [vmem:[#allocation5 + $0x210] sm:$0xff]
  %v2847 = vld [vmem:[#allocation5 + $0x218] sm:$0xff]
  %v2848 = vld [vmem:[#allocation5 + $0x220] sm:$0xff]
  %v2849 = vld [vmem:[#allocation5 + $0x228] sm:$0xff]
  %v2850 = vld [vmem:[#allocation5 + $0x230] sm:$0xff]
  %v2851 = vld [vmem:[#allocation5 + $0x238] sm:$0xff]
  %v2852 = vld [vmem:[#allocation5 + $0x240] sm:$0xff]
  %v2853 = vld [vmem:[#allocation5 + $0x248] sm:$0xff]
  %v2854 = vld [vmem:[#allocation5 + $0x250] sm:$0xff]
  %v2855 = vld [vmem:[#allocation5 + $0x258] sm:$0xff]
  %v2856 = vld [vmem:[#allocation5 + $0x260] sm:$0xff]
  %v2857 = vld [vmem:[#allocation5 + $0x268] sm:$0xff]
  %v2858 = vld [vmem:[#allocation5 + $0x270] sm:$0xff]
  %v2859 = vld [vmem:[#allocation5 + $0x278] sm:$0xff]
  %v2860 = vld [vmem:[#allocation5 + $0x280] sm:$0xff]
  %v2861 = vld [vmem:[#allocation5 + $0x288] sm:$0xff]
  %v2862 = vld [vmem:[#allocation5 + $0x290] sm:$0xff]
  %v2863 = vld [vmem:[#allocation5 + $0x298] sm:$0xff]
  %v2864 = vld [vmem:[#allocation5 + $0x2a0] sm:$0xff]
  %v2865 = vld [vmem:[#allocation5 + $0x2a8] sm:$0xff]
  %v2866 = vld [vmem:[#allocation5 + $0x2b0] sm:$0xff]
  %v2867 = vld [vmem:[#allocation5 + $0x2b8] sm:$0xff]
  %v2868 = vld [vmem:[#allocation5 + $0x2c0] sm:$0xff]
  %v2869 = vld [vmem:[#allocation5 + $0x2c8] sm:$0xff]
  %v2870 = vld [vmem:[#allocation5 + $0x2d0] sm:$0xff]
  %v2871 = vld [vmem:[#allocation5 + $0x2d8] sm:$0xff]
  %v2872 = vld [vmem:[#allocation5 + $0x2e0] sm:$0xff]
  %v2873 = vld [vmem:[#allocation5 + $0x2e8] sm:$0xff]
  %v2874 = vld [vmem:[#allocation5 + $0x2f0] sm:$0xff]
  %v2875 = vld [vmem:[#allocation5 + $0x2f8] sm:$0xff]
  %v2876 = vld [vmem:[#allocation5 + $0x300] sm:$0xff]
  %v2877 = vld [vmem:[#allocation5 + $0x308] sm:$0xff]
  %v2878 = vld [vmem:[#allocation5 + $0x310] sm:$0xff]
  %v2879 = vld [vmem:[#allocation5 + $0x318] sm:$0xff]
  %v2880 = vld [vmem:[#allocation5 + $0x320] sm:$0xff]
  %v2881 = vld [vmem:[#allocation5 + $0x328] sm:$0xff]
  %v2882 = vld [vmem:[#allocation5 + $0x330] sm:$0xff]
  %v2883 = vld [vmem:[#allocation5 + $0x338] sm:$0xff]
  %v2884 = vld [vmem:[#allocation5 + $0x340] sm:$0xff]
  %v2885 = vld [vmem:[#allocation5 + $0x348] sm:$0xff]
  %v2886 = vld [vmem:[#allocation5 + $0x350] sm:$0xff]
  %v2887 = vld [vmem:[#allocation5 + $0x358] sm:$0xff]
  %v2888 = vld [vmem:[#allocation5 + $0x360] sm:$0xff]
  %v2889 = vld [vmem:[#allocation5 + $0x368] sm:$0xff]
  %v2890 = vld [vmem:[#allocation5 + $0x370] sm:$0xff]
  %v2891 = vld [vmem:[#allocation5 + $0x378] sm:$0xff]
  %v2892 = vld [vmem:[#allocation5 + $0x380] sm:$0xff]
  %v2893 = vld [vmem:[#allocation5 + $0x388] sm:$0xff]
  %v2894 = vld [vmem:[#allocation5 + $0x390] sm:$0xff]
  %v2895 = vld [vmem:[#allocation5 + $0x398] sm:$0xff]
  %v2896 = vld [vmem:[#allocation5 + $0x3a0] sm:$0xff]
  %v2897 = vld [vmem:[#allocation5 + $0x3a8] sm:$0xff]
  %v2898 = vld [vmem:[#allocation5 + $0x3b0] sm:$0xff]
  %v2899 = vld [vmem:[#allocation5 + $0x3b8] sm:$0xff]
  %v2900 = vld [vmem:[#allocation5 + $0x3c0] sm:$0xff]
  %v2901 = vld [vmem:[#allocation5 + $0x3c8] sm:$0xff]
  %v2902 = vld [vmem:[#allocation5 + $0x3d0] sm:$0xff]
  %v2903 = vld [vmem:[#allocation5 + $0x3d8] sm:$0xff]
  %v2904 = vld [vmem:[#allocation5 + $0x3e0] sm:$0xff]
  %v2905 = vld [vmem:[#allocation5 + $0x3e8] sm:$0xff]
  %v2906 = vld [vmem:[#allocation5 + $0x3f0] sm:$0xff]
  %v2907 = vld [vmem:[#allocation5 + $0x3f8] sm:$0xff]
  %v2908 = vld [vmem:[#allocation5 + $0x400] sm:$0xff]
  %v2909 = vld [vmem:[#allocation5 + $0x408] sm:$0xff]
  %v2910 = vld [vmem:[#allocation5 + $0x410] sm:$0xff]
  %v2911 = vld [vmem:[#allocation5 + $0x418] sm:$0xff]
  %v2912 = vld [vmem:[#allocation5 + $0x420] sm:$0xff]
  %v2913 = vld [vmem:[#allocation5 + $0x428] sm:$0xff]
  %v2914 = vld [vmem:[#allocation5 + $0x430] sm:$0xff]
  %v2915 = vld [vmem:[#allocation5 + $0x438] sm:$0xff]
  %v2916 = vld [vmem:[#allocation5 + $0x440] sm:$0xff]
  %v2917 = vld [vmem:[#allocation5 + $0x448] sm:$0xff]
  %v2918 = vld [vmem:[#allocation5 + $0x450] sm:$0xff]
  %v2919 = vld [vmem:[#allocation5 + $0x458] sm:$0xff]
  %v2920 = vld [vmem:[#allocation5 + $0x460] sm:$0xff]
  %v2921 = vld [vmem:[#allocation5 + $0x468] sm:$0xff]
  %v2922 = vld [vmem:[#allocation5 + $0x470] sm:$0xff]
  %v2923 = vld [vmem:[#allocation5 + $0x478] sm:$0xff]
  %v2924 = vld [vmem:[#allocation5 + $0x480] sm:$0xff]
  %v2925 = vld [vmem:[#allocation5 + $0x488] sm:$0xff]
  %v2926 = vld [vmem:[#allocation5 + $0x490] sm:$0xff]
  %v2927 = vld [vmem:[#allocation5 + $0x498] sm:$0xff]
  %v2928 = vld [vmem:[#allocation5 + $0x4a0] sm:$0xff]
  %v2929 = vld [vmem:[#allocation5 + $0x4a8] sm:$0xff]
  %v2930 = vld [vmem:[#allocation5 + $0x4b0] sm:$0xff]
  %v2931 = vld [vmem:[#allocation5 + $0x4b8] sm:$0xff]
  %v2932 = vld [vmem:[#allocation5 + $0x4c0] sm:$0xff]
  %v2933 = vld [vmem:[#allocation5 + $0x4c8] sm:$0xff]
  %v2934 = vld [vmem:[#allocation5 + $0x4d0] sm:$0xff]
  %v2935 = vld [vmem:[#allocation5 + $0x4d8] sm:$0xff]
  %v2936 = vld [vmem:[#allocation5 + $0x4e0] sm:$0xff]
  %v2937 = vld [vmem:[#allocation5 + $0x4e8] sm:$0xff]
  %v2938 = vld [vmem:[#allocation5 + $0x4f0] sm:$0xff]
  %v2939 = vld [vmem:[#allocation5 + $0x4f8] sm:$0xff]
  %v2940 = vld [vmem:[#allocation5 + $0x500] sm:$0xff]
  %v2941 = vld [vmem:[#allocation5 + $0x508] sm:$0xff]
  %v2942 = vld [vmem:[#allocation5 + $0x510] sm:$0xff]
  %v2943 = vld [vmem:[#allocation5 + $0x518] sm:$0xff]
  %v2944 = vld [vmem:[#allocation5 + $0x520] sm:$0xff]
  %v2945 = vld [vmem:[#allocation5 + $0x528] sm:$0xff]
  %v2946 = vld [vmem:[#allocation5 + $0x530] sm:$0xff]
  %v2947 = vld [vmem:[#allocation5 + $0x538] sm:$0xff]
  %v2948 = vld [vmem:[#allocation5 + $0x540] sm:$0xff]
  %v2949 = vld [vmem:[#allocation5 + $0x548] sm:$0xff]
  %v2950 = vld [vmem:[#allocation5 + $0x550] sm:$0xff]
  %v2951 = vld [vmem:[#allocation5 + $0x558] sm:$0xff]
  %v2952 = vld [vmem:[#allocation5 + $0x560] sm:$0xff]
  %v2953 = vld [vmem:[#allocation5 + $0x568] sm:$0xff]
  %v2954 = vld [vmem:[#allocation5 + $0x570] sm:$0xff]
  %v2955 = vld [vmem:[#allocation5 + $0x578] sm:$0xff]
  %v2956 = vld [vmem:[#allocation5 + $0x580] sm:$0xff]
  %v2957 = vld [vmem:[#allocation5 + $0x588] sm:$0xff]
  %v2958 = vld [vmem:[#allocation5 + $0x590] sm:$0xff]
  %v2959 = vld [vmem:[#allocation5 + $0x598] sm:$0xff]
  %v2960 = vld [vmem:[#allocation5 + $0x5a0] sm:$0xff]
  %v2961 = vld [vmem:[#allocation5 + $0x5a8] sm:$0xff]
  %v2962 = vld [vmem:[#allocation5 + $0x5b0] sm:$0xff]
  %v2963 = vld [vmem:[#allocation5 + $0x5b8] sm:$0xff]
  %v2964 = vld [vmem:[#allocation5 + $0x5c0] sm:$0xff]
  %v2965 = vld [vmem:[#allocation5 + $0x5c8] sm:$0xff]
  %v2966 = vld [vmem:[#allocation5 + $0x5d0] sm:$0xff]
  %v2967 = vld [vmem:[#allocation5 + $0x5d8] sm:$0xff]
  %v2968 = vld [vmem:[#allocation5 + $0x5e0] sm:$0xff]
  %v2969 = vld [vmem:[#allocation5 + $0x5e8] sm:$0xff]
  %v2970 = vld [vmem:[#allocation5 + $0x5f0] sm:$0xff]
  %v2971 = vld [vmem:[#allocation5 + $0x5f8] sm:$0xff]
  %v2972 = vld [vmem:[#allocation5 + $0x600] sm:$0xff]
  %v2973 = vld [vmem:[#allocation5 + $0x608] sm:$0xff]
  %v2974 = vld [vmem:[#allocation5 + $0x610] sm:$0xff]
  %v2975 = vld [vmem:[#allocation5 + $0x618] sm:$0xff]
  %v2976 = vld [vmem:[#allocation5 + $0x620] sm:$0xff]
  %v2977 = vld [vmem:[#allocation5 + $0x628] sm:$0xff]
  %v2978 = vld [vmem:[#allocation5 + $0x630] sm:$0xff]
  %v2979 = vld [vmem:[#allocation5 + $0x638] sm:$0xff]
  %v2980 = vld [vmem:[#allocation5 + $0x640] sm:$0xff]
  %v2981 = vld [vmem:[#allocation5 + $0x648] sm:$0xff]
  %v2982 = vld [vmem:[#allocation5 + $0x650] sm:$0xff]
  %v2983 = vld [vmem:[#allocation5 + $0x658] sm:$0xff]
  %v2984 = vld [vmem:[#allocation5 + $0x660] sm:$0xff]
  %v2985 = vld [vmem:[#allocation5 + $0x668] sm:$0xff]
  %v2986 = vld [vmem:[#allocation5 + $0x670] sm:$0xff]
  %v2987 = vld [vmem:[#allocation5 + $0x678] sm:$0xff]
  %v2988 = vld [vmem:[#allocation5 + $0x680] sm:$0xff]
  %v2989 = vld [vmem:[#allocation5 + $0x688] sm:$0xff]
  %v2990 = vld [vmem:[#allocation5 + $0x690] sm:$0xff]
  %v2991 = vld [vmem:[#allocation5 + $0x698] sm:$0xff]
  %v2992 = vld [vmem:[#allocation5 + $0x6a0] sm:$0xff]
  %v2993 = vld [vmem:[#allocation5 + $0x6a8] sm:$0xff]
  %v2994 = vld [vmem:[#allocation5 + $0x6b0] sm:$0xff]
  %v2995 = vld [vmem:[#allocation5 + $0x6b8] sm:$0xff]
  %v2996 = vld [vmem:[#allocation5 + $0x6c0] sm:$0xff]
  %v2997 = vld [vmem:[#allocation5 + $0x6c8] sm:$0xff]
  %v2998 = vld [vmem:[#allocation5 + $0x6d0] sm:$0xff]
  %v2999 = vld [vmem:[#allocation5 + $0x6d8] sm:$0xff]
  %v3000 = vld [vmem:[#allocation5 + $0x6e0] sm:$0xff]
  %v3001 = vld [vmem:[#allocation5 + $0x6e8] sm:$0xff]
  %v3002 = vld [vmem:[#allocation5 + $0x6f0] sm:$0xff]
  %v3003 = vld [vmem:[#allocation5 + $0x6f8] sm:$0xff]
  %v3004 = vld [vmem:[#allocation5 + $0x700] sm:$0xff]
  %v3005 = vld [vmem:[#allocation5 + $0x708] sm:$0xff]
  %v3006 = vld [vmem:[#allocation5 + $0x710] sm:$0xff]
  %v3007 = vld [vmem:[#allocation5 + $0x718] sm:$0xff]
  %v3008 = vld [vmem:[#allocation5 + $0x720] sm:$0xff]
  %v3009 = vld [vmem:[#allocation5 + $0x728] sm:$0xff]
  %v3010 = vld [vmem:[#allocation5 + $0x730] sm:$0xff]
  %v3011 = vld [vmem:[#allocation5 + $0x738] sm:$0xff]
  %v3012 = vld [vmem:[#allocation5 + $0x740] sm:$0xff]
  %v3013 = vld [vmem:[#allocation5 + $0x748] sm:$0xff]
  %v3014 = vld [vmem:[#allocation5 + $0x750] sm:$0xff]
  %v3015 = vld [vmem:[#allocation5 + $0x758] sm:$0xff]
  %v3016 = vld [vmem:[#allocation5 + $0x760] sm:$0xff]
  %v3017 = vld [vmem:[#allocation5 + $0x768] sm:$0xff]
  %v3018 = vld [vmem:[#allocation5 + $0x770] sm:$0xff]
  %v3019 = vld [vmem:[#allocation5 + $0x778] sm:$0xff]
  %v3020 = vld [vmem:[#allocation5 + $0x780] sm:$0xff]
  %v3021 = vld [vmem:[#allocation5 + $0x788] sm:$0xff]
  %v3022 = vld [vmem:[#allocation5 + $0x790] sm:$0xff]
  %v3023 = vld [vmem:[#allocation5 + $0x798] sm:$0xff]
  %v3024 = vld [vmem:[#allocation5 + $0x7a0] sm:$0xff]
  %v3025 = vld [vmem:[#allocation5 + $0x7a8] sm:$0xff]
  %v3026 = vld [vmem:[#allocation5 + $0x7b0] sm:$0xff]
  %v3027 = vld [vmem:[#allocation5 + $0x7b8] sm:$0xff]
  %v3028 = vld [vmem:[#allocation5 + $0x7c0] sm:$0xff]
  %v3029 = vld [vmem:[#allocation5 + $0x7c8] sm:$0xff]
  %v3030 = vld [vmem:[#allocation5 + $0x7d0] sm:$0xff]
  %v3031 = vld [vmem:[#allocation5 + $0x7d8] sm:$0xff]
  %v3032 = vld [vmem:[#allocation5 + $0x7e0] sm:$0xff]
  %v3033 = vld [vmem:[#allocation5 + $0x7e8] sm:$0xff]
  %v3034 = vld [vmem:[#allocation5 + $0x7f0] sm:$0xff]
  %v3035 = vld [vmem:[#allocation5 + $0x7f8] sm:$0xff]
  %v3036 = vld [vmem:[%s9] sm:$0xff]
  %v3037 = vld [vmem:[%s10] sm:$0xff]
  %v3038 = vld [vmem:[%s11] sm:$0xff]
  %v3040 = vperm.slane %v3036, 0
  %v3041 = vperm.slane %v3036, 1
  %v3042 = vperm.slane %v3036, 2
  %v3043 = vperm.slane %v3036, 3
  %v3044 = vperm.slane %v3036, 4
  %v3045 = vperm.slane %v3036, 5
  %v3046 = vperm.slane %v3036, 6
  %v3047 = vperm.slane %v3036, 7
  %v3312 = vunpack.c.l.b16 %v2780
  %v3313 = vunpack.c.h.b16 %v2780
  %v3314 = vunpack.c.l.b16 %v2781
  %v3315 = vunpack.c.h.b16 %v2781
  %v3316 = vunpack.c.l.b16 %v2782
  %v3317 = vunpack.c.h.b16 %v2782
  %v3318 = vunpack.c.l.b16 %v2783
  %v3319 = vunpack.c.h.b16 %v2783
  %v3320 = vunpack.c.l.b16 %v2784
  %v3321 = vunpack.c.h.b16 %v2784
  %v3322 = vunpack.c.l.b16 %v2785
  %v3323 = vunpack.c.h.b16 %v2785
  %v3324 = vunpack.c.l.b16 %v2786
  %v3325 = vunpack.c.h.b16 %v2786
  %v3326 = vunpack.c.l.b16 %v2787
  %v3327 = vunpack.c.h.b16 %v2787
  %v3328 = vunpack.c.l.b16 %v2788
  %v3329 = vunpack.c.h.b16 %v2788
  %v3330 = vunpack.c.l.b16 %v2789
  %v3331 = vunpack.c.h.b16 %v2789
  %v3332 = vunpack.c.l.b16 %v2790
  %v3333 = vunpack.c.h.b16 %v2790
  %v3334 = vunpack.c.l.b16 %v2791
  %v3335 = vunpack.c.h.b16 %v2791
  %v3336 = vunpack.c.l.b16 %v2792
  %v3337 = vunpack.c.h.b16 %v2792
  %v3338 = vunpack.c.l.b16 %v2793
  %v3339 = vunpack.c.h.b16 %v2793
  %v3340 = vunpack.c.l.b16 %v2794
  %v3341 = vunpack.c.h.b16 %v2794
  %v3342 = vunpack.c.l.b16 %v2795
  %v3343 = vunpack.c.h.b16 %v2795
  %v3344 = vunpack.c.l.b16 %v2796
  %v3345 = vunpack.c.h.b16 %v2796
  %v3346 = vunpack.c.l.b16 %v2797
  %v3347 = vunpack.c.h.b16 %v2797
  %v3348 = vunpack.c.l.b16 %v2798
  %v3349 = vunpack.c.h.b16 %v2798
  %v3350 = vunpack.c.l.b16 %v2799
  %v3351 = vunpack.c.h.b16 %v2799
  %v3352 = vunpack.c.l.b16 %v2800
  %v3353 = vunpack.c.h.b16 %v2800
  %v3354 = vunpack.c.l.b16 %v2801
  %v3355 = vunpack.c.h.b16 %v2801
  %v3356 = vunpack.c.l.b16 %v2802
  %v3357 = vunpack.c.h.b16 %v2802
  %v3358 = vunpack.c.l.b16 %v2803
  %v3359 = vunpack.c.h.b16 %v2803
  %v3360 = vunpack.c.l.b16 %v2804
  %v3361 = vunpack.c.h.b16 %v2804
  %v3362 = vunpack.c.l.b16 %v2805
  %v3363 = vunpack.c.h.b16 %v2805
  %v3364 = vunpack.c.l.b16 %v2806
  %v3365 = vunpack.c.h.b16 %v2806
  %v3366 = vunpack.c.l.b16 %v2807
  %v3367 = vunpack.c.h.b16 %v2807
  %v3368 = vunpack.c.l.b16 %v2808
  %v3369 = vunpack.c.h.b16 %v2808
  %v3370 = vunpack.c.l.b16 %v2809
  %v3371 = vunpack.c.h.b16 %v2809
  %v3372 = vunpack.c.l.b16 %v2810
  %v3373 = vunpack.c.h.b16 %v2810
  %v3374 = vunpack.c.l.b16 %v2811
  %v3375 = vunpack.c.h.b16 %v2811
  %v3376 = vunpack.c.l.b16 %v2812
  %v3377 = vunpack.c.h.b16 %v2812
  %v3378 = vunpack.c.l.b16 %v2813
  %v3379 = vunpack.c.h.b16 %v2813
  %v3380 = vunpack.c.l.b16 %v2814
  %v3381 = vunpack.c.h.b16 %v2814
  %v3382 = vunpack.c.l.b16 %v2815
  %v3383 = vunpack.c.h.b16 %v2815
  %v3384 = vunpack.c.l.b16 %v2816
  %v3385 = vunpack.c.h.b16 %v2816
  %v3386 = vunpack.c.l.b16 %v2817
  %v3387 = vunpack.c.h.b16 %v2817
  %v3388 = vunpack.c.l.b16 %v2818
  %v3389 = vunpack.c.h.b16 %v2818
  %v3390 = vunpack.c.l.b16 %v2819
  %v3391 = vunpack.c.h.b16 %v2819
  %v3392 = vunpack.c.l.b16 %v2820
  %v3393 = vunpack.c.h.b16 %v2820
  %v3394 = vunpack.c.l.b16 %v2821
  %v3395 = vunpack.c.h.b16 %v2821
  %v3396 = vunpack.c.l.b16 %v2822
  %v3397 = vunpack.c.h.b16 %v2822
  %v3398 = vunpack.c.l.b16 %v2823
  %v3399 = vunpack.c.h.b16 %v2823
  %v3400 = vunpack.c.l.b16 %v2824
  %v3401 = vunpack.c.h.b16 %v2824
  %v3402 = vunpack.c.l.b16 %v2825
  %v3403 = vunpack.c.h.b16 %v2825
  %v3404 = vunpack.c.l.b16 %v2826
  %v3405 = vunpack.c.h.b16 %v2826
  %v3406 = vunpack.c.l.b16 %v2827
  %v3407 = vunpack.c.h.b16 %v2827
  %v3408 = vunpack.c.l.b16 %v2828
  %v3409 = vunpack.c.h.b16 %v2828
  %v3410 = vunpack.c.l.b16 %v2829
  %v3411 = vunpack.c.h.b16 %v2829
  %v3412 = vunpack.c.l.b16 %v2830
  %v3413 = vunpack.c.h.b16 %v2830
  %v3414 = vunpack.c.l.b16 %v2831
  %v3415 = vunpack.c.h.b16 %v2831
  %v3416 = vunpack.c.l.b16 %v2832
  %v3417 = vunpack.c.h.b16 %v2832
  %v3418 = vunpack.c.l.b16 %v2833
  %v3419 = vunpack.c.h.b16 %v2833
  %v3420 = vunpack.c.l.b16 %v2834
  %v3421 = vunpack.c.h.b16 %v2834
  %v3422 = vunpack.c.l.b16 %v2835
  %v3423 = vunpack.c.h.b16 %v2835
  %v3424 = vunpack.c.l.b16 %v2836
  %v3425 = vunpack.c.h.b16 %v2836
  %v3426 = vunpack.c.l.b16 %v2837
  %v3427 = vunpack.c.h.b16 %v2837
  %v3428 = vunpack.c.l.b16 %v2838
  %v3429 = vunpack.c.h.b16 %v2838
  %v3430 = vunpack.c.l.b16 %v2839
  %v3431 = vunpack.c.h.b16 %v2839
  %v3432 = vunpack.c.l.b16 %v2840
  %v3433 = vunpack.c.h.b16 %v2840
  %v3434 = vunpack.c.l.b16 %v2841
  %v3435 = vunpack.c.h.b16 %v2841
  %v3436 = vunpack.c.l.b16 %v2842
  %v3437 = vunpack.c.h.b16 %v2842
  %v3438 = vunpack.c.l.b16 %v2843
  %v3439 = vunpack.c.h.b16 %v2843
  %v3440 = vunpack.c.l.b16 %v2844
  %v3441 = vunpack.c.h.b16 %v2844
  %v3442 = vunpack.c.l.b16 %v2845
  %v3443 = vunpack.c.h.b16 %v2845
  %v3444 = vunpack.c.l.b16 %v2846
  %v3445 = vunpack.c.h.b16 %v2846
  %v3446 = vunpack.c.l.b16 %v2847
  %v3447 = vunpack.c.h.b16 %v2847
  %v3448 = vunpack.c.l.b16 %v2848
  %v3449 = vunpack.c.h.b16 %v2848
  %v3450 = vunpack.c.l.b16 %v2849
  %v3451 = vunpack.c.h.b16 %v2849
  %v3452 = vunpack.c.l.b16 %v2850
  %v3453 = vunpack.c.h.b16 %v2850
  %v3454 = vunpack.c.l.b16 %v2851
  %v3455 = vunpack.c.h.b16 %v2851
  %v3456 = vunpack.c.l.b16 %v2852
  %v3457 = vunpack.c.h.b16 %v2852
  %v3458 = vunpack.c.l.b16 %v2853
  %v3459 = vunpack.c.h.b16 %v2853
  %v3460 = vunpack.c.l.b16 %v2854
  %v3461 = vunpack.c.h.b16 %v2854
  %v3462 = vunpack.c.l.b16 %v2855
  %v3463 = vunpack.c.h.b16 %v2855
  %v3464 = vunpack.c.l.b16 %v2856
  %v3465 = vunpack.c.h.b16 %v2856
  %v3466 = vunpack.c.l.b16 %v2857
  %v3467 = vunpack.c.h.b16 %v2857
  %v3468 = vunpack.c.l.b16 %v2858
  %v3469 = vunpack.c.h.b16 %v2858
  %v3470 = vunpack.c.l.b16 %v2859
  %v3471 = vunpack.c.h.b16 %v2859
  %v3472 = vunpack.c.l.b16 %v2860
  %v3473 = vunpack.c.h.b16 %v2860
  %v3474 = vunpack.c.l.b16 %v2861
  %v3475 = vunpack.c.h.b16 %v2861
  %v3476 = vunpack.c.l.b16 %v2862
  %v3477 = vunpack.c.h.b16 %v2862
  %v3478 = vunpack.c.l.b16 %v2863
  %v3479 = vunpack.c.h.b16 %v2863
  %v3480 = vunpack.c.l.b16 %v2864
  %v3481 = vunpack.c.h.b16 %v2864
  %v3482 = vunpack.c.l.b16 %v2865
  %v3483 = vunpack.c.h.b16 %v2865
  %v3484 = vunpack.c.l.b16 %v2866
  %v3485 = vunpack.c.h.b16 %v2866
  %v3486 = vunpack.c.l.b16 %v2867
  %v3487 = vunpack.c.h.b16 %v2867
  %v3488 = vunpack.c.l.b16 %v2868
  %v3489 = vunpack.c.h.b16 %v2868
  %v3490 = vunpack.c.l.b16 %v2869
  %v3491 = vunpack.c.h.b16 %v2869
  %v3492 = vunpack.c.l.b16 %v2870
  %v3493 = vunpack.c.h.b16 %v2870
  %v3494 = vunpack.c.l.b16 %v2871
  %v3495 = vunpack.c.h.b16 %v2871
  %v3496 = vunpack.c.l.b16 %v2872
  %v3497 = vunpack.c.h.b16 %v2872
  %v3498 = vunpack.c.l.b16 %v2873
  %v3499 = vunpack.c.h.b16 %v2873
  %v3500 = vunpack.c.l.b16 %v2874
  %v3501 = vunpack.c.h.b16 %v2874
  %v3502 = vunpack.c.l.b16 %v2875
  %v3503 = vunpack.c.h.b16 %v2875
  %v3504 = vunpack.c.l.b16 %v2876
  %v3505 = vunpack.c.h.b16 %v2876
  %v3506 = vunpack.c.l.b16 %v2877
  %v3507 = vunpack.c.h.b16 %v2877
  %v3508 = vunpack.c.l.b16 %v2878
  %v3509 = vunpack.c.h.b16 %v2878
  %v3510 = vunpack.c.l.b16 %v2879
  %v3511 = vunpack.c.h.b16 %v2879
  %v3512 = vunpack.c.l.b16 %v2880
  %v3513 = vunpack.c.h.b16 %v2880
  %v3514 = vunpack.c.l.b16 %v2881
  %v3515 = vunpack.c.h.b16 %v2881
  %v3516 = vunpack.c.l.b16 %v2882
  %v3517 = vunpack.c.h.b16 %v2882
  %v3518 = vunpack.c.l.b16 %v2883
  %v3519 = vunpack.c.h.b16 %v2883
  %v3520 = vunpack.c.l.b16 %v2884
  %v3521 = vunpack.c.h.b16 %v2884
  %v3522 = vunpack.c.l.b16 %v2885
  %v3523 = vunpack.c.h.b16 %v2885
  %v3524 = vunpack.c.l.b16 %v2886
  %v3525 = vunpack.c.h.b16 %v2886
  %v3526 = vunpack.c.l.b16 %v2887
  %v3527 = vunpack.c.h.b16 %v2887
  %v3528 = vunpack.c.l.b16 %v2888
  %v3529 = vunpack.c.h.b16 %v2888
  %v3530 = vunpack.c.l.b16 %v2889
  %v3531 = vunpack.c.h.b16 %v2889
  %v3532 = vunpack.c.l.b16 %v2890
  %v3533 = vunpack.c.h.b16 %v2890
  %v3534 = vunpack.c.l.b16 %v2891
  %v3535 = vunpack.c.h.b16 %v2891
  %v3536 = vunpack.c.l.b16 %v2892
  %v3537 = vunpack.c.h.b16 %v2892
  %v3538 = vunpack.c.l.b16 %v2893
  %v3539 = vunpack.c.h.b16 %v2893
  %v3540 = vunpack.c.l.b16 %v2894
  %v3541 = vunpack.c.h.b16 %v2894
  %v3542 = vunpack.c.l.b16 %v2895
  %v3543 = vunpack.c.h.b16 %v2895
  %v3544 = vunpack.c.l.b16 %v2896
  %v3545 = vunpack.c.h.b16 %v2896
  %v3546 = vunpack.c.l.b16 %v2897
  %v3547 = vunpack.c.h.b16 %v2897
  %v3548 = vunpack.c.l.b16 %v2898
  %v3549 = vunpack.c.h.b16 %v2898
  %v3550 = vunpack.c.l.b16 %v2899
  %v3551 = vunpack.c.h.b16 %v2899
  %v3552 = vunpack.c.l.b16 %v2900
  %v3553 = vunpack.c.h.b16 %v2900
  %v3554 = vunpack.c.l.b16 %v2901
  %v3555 = vunpack.c.h.b16 %v2901
  %v3556 = vunpack.c.l.b16 %v2902
  %v3557 = vunpack.c.h.b16 %v2902
  %v3558 = vunpack.c.l.b16 %v2903
  %v3559 = vunpack.c.h.b16 %v2903
  %v3560 = vunpack.c.l.b16 %v2904
  %v3561 = vunpack.c.h.b16 %v2904
  %v3562 = vunpack.c.l.b16 %v2905
  %v3563 = vunpack.c.h.b16 %v2905
  %v3564 = vunpack.c.l.b16 %v2906
  %v3565 = vunpack.c.h.b16 %v2906
  %v3566 = vunpack.c.l.b16 %v2907
  %v3567 = vunpack.c.h.b16 %v2907
  %v3568 = vunpack.c.l.b16 %v2908
  %v3569 = vunpack.c.h.b16 %v2908
  %v3570 = vunpack.c.l.b16 %v2909
  %v3571 = vunpack.c.h.b16 %v2909
  %v3572 = vunpack.c.l.b16 %v2910
  %v3573 = vunpack.c.h.b16 %v2910
  %v3574 = vunpack.c.l.b16 %v2911
  %v3575 = vunpack.c.h.b16 %v2911
  %v3576 = vunpack.c.l.b16 %v2912
  %v3577 = vunpack.c.h.b16 %v2912
  %v3578 = vunpack.c.l.b16 %v2913
  %v3579 = vunpack.c.h.b16 %v2913
  %v3580 = vunpack.c.l.b16 %v2914
  %v3581 = vunpack.c.h.b16 %v2914
  %v3582 = vunpack.c.l.b16 %v2915
  %v3583 = vunpack.c.h.b16 %v2915
  %v3584 = vunpack.c.l.b16 %v2916
  %v3585 = vunpack.c.h.b16 %v2916
  %v3586 = vunpack.c.l.b16 %v2917
  %v3587 = vunpack.c.h.b16 %v2917
  %v3588 = vunpack.c.l.b16 %v2918
  %v3589 = vunpack.c.h.b16 %v2918
  %v3590 = vunpack.c.l.b16 %v2919
  %v3591 = vunpack.c.h.b16 %v2919
  %v3592 = vunpack.c.l.b16 %v2920
  %v3593 = vunpack.c.h.b16 %v2920
  %v3594 = vunpack.c.l.b16 %v2921
  %v3595 = vunpack.c.h.b16 %v2921
  %v3596 = vunpack.c.l.b16 %v2922
  %v3597 = vunpack.c.h.b16 %v2922
  %v3598 = vunpack.c.l.b16 %v2923
  %v3599 = vunpack.c.h.b16 %v2923
  %v3600 = vunpack.c.l.b16 %v2924
  %v3601 = vunpack.c.h.b16 %v2924
  %v3602 = vunpack.c.l.b16 %v2925
  %v3603 = vunpack.c.h.b16 %v2925
  %v3604 = vunpack.c.l.b16 %v2926
  %v3605 = vunpack.c.h.b16 %v2926
  %v3606 = vunpack.c.l.b16 %v2927
  %v3607 = vunpack.c.h.b16 %v2927
  %v3608 = vunpack.c.l.b16 %v2928
  %v3609 = vunpack.c.h.b16 %v2928
  %v3610 = vunpack.c.l.b16 %v2929
  %v3611 = vunpack.c.h.b16 %v2929
  %v3612 = vunpack.c.l.b16 %v2930
  %v3613 = vunpack.c.h.b16 %v2930
  %v3614 = vunpack.c.l.b16 %v2931
  %v3615 = vunpack.c.h.b16 %v2931
  %v3616 = vunpack.c.l.b16 %v2932
  %v3617 = vunpack.c.h.b16 %v2932
  %v3618 = vunpack.c.l.b16 %v2933
  %v3619 = vunpack.c.h.b16 %v2933
  %v3620 = vunpack.c.l.b16 %v2934
  %v3621 = vunpack.c.h.b16 %v2934
  %v3622 = vunpack.c.l.b16 %v2935
  %v3623 = vunpack.c.h.b16 %v2935
  %v3624 = vunpack.c.l.b16 %v2936
  %v3625 = vunpack.c.h.b16 %v2936
  %v3626 = vunpack.c.l.b16 %v2937
  %v3627 = vunpack.c.h.b16 %v2937
  %v3628 = vunpack.c.l.b16 %v2938
  %v3629 = vunpack.c.h.b16 %v2938
  %v3630 = vunpack.c.l.b16 %v2939
  %v3631 = vunpack.c.h.b16 %v2939
  %v3632 = vunpack.c.l.b16 %v2940
  %v3633 = vunpack.c.h.b16 %v2940
  %v3634 = vunpack.c.l.b16 %v2941
  %v3635 = vunpack.c.h.b16 %v2941
  %v3636 = vunpack.c.l.b16 %v2942
  %v3637 = vunpack.c.h.b16 %v2942
  %v3638 = vunpack.c.l.b16 %v2943
  %v3639 = vunpack.c.h.b16 %v2943
  %v3640 = vunpack.c.l.b16 %v2944
  %v3641 = vunpack.c.h.b16 %v2944
  %v3642 = vunpack.c.l.b16 %v2945
  %v3643 = vunpack.c.h.b16 %v2945
  %v3644 = vunpack.c.l.b16 %v2946
  %v3645 = vunpack.c.h.b16 %v2946
  %v3646 = vunpack.c.l.b16 %v2947
  %v3647 = vunpack.c.h.b16 %v2947
  %v3648 = vunpack.c.l.b16 %v2948
  %v3649 = vunpack.c.h.b16 %v2948
  %v3650 = vunpack.c.l.b16 %v2949
  %v3651 = vunpack.c.h.b16 %v2949
  %v3652 = vunpack.c.l.b16 %v2950
  %v3653 = vunpack.c.h.b16 %v2950
  %v3654 = vunpack.c.l.b16 %v2951
  %v3655 = vunpack.c.h.b16 %v2951
  %v3656 = vunpack.c.l.b16 %v2952
  %v3657 = vunpack.c.h.b16 %v2952
  %v3658 = vunpack.c.l.b16 %v2953
  %v3659 = vunpack.c.h.b16 %v2953
  %v3660 = vunpack.c.l.b16 %v2954
  %v3661 = vunpack.c.h.b16 %v2954
  %v3662 = vunpack.c.l.b16 %v2955
  %v3663 = vunpack.c.h.b16 %v2955
  %v3664 = vunpack.c.l.b16 %v2956
  %v3665 = vunpack.c.h.b16 %v2956
  %v3666 = vunpack.c.l.b16 %v2957
  %v3667 = vunpack.c.h.b16 %v2957
  %v3668 = vunpack.c.l.b16 %v2958
  %v3669 = vunpack.c.h.b16 %v2958
  %v3670 = vunpack.c.l.b16 %v2959
  %v3671 = vunpack.c.h.b16 %v2959
  %v3672 = vunpack.c.l.b16 %v2960
  %v3673 = vunpack.c.h.b16 %v2960
  %v3674 = vunpack.c.l.b16 %v2961
  %v3675 = vunpack.c.h.b16 %v2961
  %v3676 = vunpack.c.l.b16 %v2962
  %v3677 = vunpack.c.h.b16 %v2962
  %v3678 = vunpack.c.l.b16 %v2963
  %v3679 = vunpack.c.h.b16 %v2963
  %v3680 = vunpack.c.l.b16 %v2964
  %v3681 = vunpack.c.h.b16 %v2964
  %v3682 = vunpack.c.l.b16 %v2965
  %v3683 = vunpack.c.h.b16 %v2965
  %v3684 = vunpack.c.l.b16 %v2966
  %v3685 = vunpack.c.h.b16 %v2966
  %v3686 = vunpack.c.l.b16 %v2967
  %v3687 = vunpack.c.h.b16 %v2967
  %v3688 = vunpack.c.l.b16 %v2968
  %v3689 = vunpack.c.h.b16 %v2968
  %v3690 = vunpack.c.l.b16 %v2969
  %v3691 = vunpack.c.h.b16 %v2969
  %v3692 = vunpack.c.l.b16 %v2970
  %v3693 = vunpack.c.h.b16 %v2970
  %v3694 = vunpack.c.l.b16 %v2971
  %v3695 = vunpack.c.h.b16 %v2971
  %v3696 = vunpack.c.l.b16 %v2972
  %v3697 = vunpack.c.h.b16 %v2972
  %v3698 = vunpack.c.l.b16 %v2973
  %v3699 = vunpack.c.h.b16 %v2973
  %v3700 = vunpack.c.l.b16 %v2974
  %v3701 = vunpack.c.h.b16 %v2974
  %v3702 = vunpack.c.l.b16 %v2975
  %v3703 = vunpack.c.h.b16 %v2975
  %v3704 = vunpack.c.l.b16 %v2976
  %v3705 = vunpack.c.h.b16 %v2976
  %v3706 = vunpack.c.l.b16 %v2977
  %v3707 = vunpack.c.h.b16 %v2977
  %v3708 = vunpack.c.l.b16 %v2978
  %v3709 = vunpack.c.h.b16 %v2978
  %v3710 = vunpack.c.l.b16 %v2979
  %v3711 = vunpack.c.h.b16 %v2979
  %v3712 = vunpack.c.l.b16 %v2980
  %v3713 = vunpack.c.h.b16 %v2980
  %v3714 = vunpack.c.l.b16 %v2981
  %v3715 = vunpack.c.h.b16 %v2981
  %v3716 = vunpack.c.l.b16 %v2982
  %v3717 = vunpack.c.h.b16 %v2982
  %v3718 = vunpack.c.l.b16 %v2983
  %v3719 = vunpack.c.h.b16 %v2983
  %v3720 = vunpack.c.l.b16 %v2984
  %v3721 = vunpack.c.h.b16 %v2984
  %v3722 = vunpack.c.l.b16 %v2985
  %v3723 = vunpack.c.h.b16 %v2985
  %v3724 = vunpack.c.l.b16 %v2986
  %v3725 = vunpack.c.h.b16 %v2986
  %v3726 = vunpack.c.l.b16 %v2987
  %v3727 = vunpack.c.h.b16 %v2987
  %v3728 = vunpack.c.l.b16 %v2988
  %v3729 = vunpack.c.h.b16 %v2988
  %v3730 = vunpack.c.l.b16 %v2989
  %v3731 = vunpack.c.h.b16 %v2989
  %v3732 = vunpack.c.l.b16 %v2990
  %v3733 = vunpack.c.h.b16 %v2990
  %v3734 = vunpack.c.l.b16 %v2991
  %v3735 = vunpack.c.h.b16 %v2991
  %v3736 = vunpack.c.l.b16 %v2992
  %v3737 = vunpack.c.h.b16 %v2992
  %v3738 = vunpack.c.l.b16 %v2993
  %v3739 = vunpack.c.h.b16 %v2993
  %v3740 = vunpack.c.l.b16 %v2994
  %v3741 = vunpack.c.h.b16 %v2994
  %v3742 = vunpack.c.l.b16 %v2995
  %v3743 = vunpack.c.h.b16 %v2995
  %v3744 = vunpack.c.l.b16 %v2996
  %v3745 = vunpack.c.h.b16 %v2996
  %v3746 = vunpack.c.l.b16 %v2997
  %v3747 = vunpack.c.h.b16 %v2997
  %v3748 = vunpack.c.l.b16 %v2998
  %v3749 = vunpack.c.h.b16 %v2998
  %v3750 = vunpack.c.l.b16 %v2999
  %v3751 = vunpack.c.h.b16 %v2999
  %v3752 = vunpack.c.l.b16 %v3000
  %v3753 = vunpack.c.h.b16 %v3000
  %v3754 = vunpack.c.l.b16 %v3001
  %v3755 = vunpack.c.h.b16 %v3001
  %v3756 = vunpack.c.l.b16 %v3002
  %v3757 = vunpack.c.h.b16 %v3002
  %v3758 = vunpack.c.l.b16 %v3003
  %v3759 = vunpack.c.h.b16 %v3003
  %v3760 = vunpack.c.l.b16 %v3004
  %v3761 = vunpack.c.h.b16 %v3004
  %v3762 = vunpack.c.l.b16 %v3005
  %v3763 = vunpack.c.h.b16 %v3005
  %v3764 = vunpack.c.l.b16 %v3006
  %v3765 = vunpack.c.h.b16 %v3006
  %v3766 = vunpack.c.l.b16 %v3007
  %v3767 = vunpack.c.h.b16 %v3007
  %v3768 = vunpack.c.l.b16 %v3008
  %v3769 = vunpack.c.h.b16 %v3008
  %v3770 = vunpack.c.l.b16 %v3009
  %v3771 = vunpack.c.h.b16 %v3009
  %v3772 = vunpack.c.l.b16 %v3010
  %v3773 = vunpack.c.h.b16 %v3010
  %v3774 = vunpack.c.l.b16 %v3011
  %v3775 = vunpack.c.h.b16 %v3011
  %v3776 = vunpack.c.l.b16 %v3012
  %v3777 = vunpack.c.h.b16 %v3012
  %v3778 = vunpack.c.l.b16 %v3013
  %v3779 = vunpack.c.h.b16 %v3013
  %v3780 = vunpack.c.l.b16 %v3014
  %v3781 = vunpack.c.h.b16 %v3014
  %v3782 = vunpack.c.l.b16 %v3015
  %v3783 = vunpack.c.h.b16 %v3015
  %v3784 = vunpack.c.l.b16 %v3016
  %v3785 = vunpack.c.h.b16 %v3016
  %v3786 = vunpack.c.l.b16 %v3017
  %v3787 = vunpack.c.h.b16 %v3017
  %v3788 = vunpack.c.l.b16 %v3018
  %v3789 = vunpack.c.h.b16 %v3018
  %v3790 = vunpack.c.l.b16 %v3019
  %v3791 = vunpack.c.h.b16 %v3019
  %v3792 = vunpack.c.l.b16 %v3020
  %v3793 = vunpack.c.h.b16 %v3020
  %v3794 = vunpack.c.l.b16 %v3021
  %v3795 = vunpack.c.h.b16 %v3021
  %v3796 = vunpack.c.l.b16 %v3022
  %v3797 = vunpack.c.h.b16 %v3022
  %v3798 = vunpack.c.l.b16 %v3023
  %v3799 = vunpack.c.h.b16 %v3023
  %v3800 = vunpack.c.l.b16 %v3024
  %v3801 = vunpack.c.h.b16 %v3024
  %v3802 = vunpack.c.l.b16 %v3025
  %v3803 = vunpack.c.h.b16 %v3025
  %v3804 = vunpack.c.l.b16 %v3026
  %v3805 = vunpack.c.h.b16 %v3026
  %v3806 = vunpack.c.l.b16 %v3027
  %v3807 = vunpack.c.h.b16 %v3027
  %v3808 = vunpack.c.l.b16 %v3028
  %v3809 = vunpack.c.h.b16 %v3028
  %v3810 = vunpack.c.l.b16 %v3029
  %v3811 = vunpack.c.h.b16 %v3029
  %v3812 = vunpack.c.l.b16 %v3030
  %v3813 = vunpack.c.h.b16 %v3030
  %v3814 = vunpack.c.l.b16 %v3031
  %v3815 = vunpack.c.h.b16 %v3031
  %v3816 = vunpack.c.l.b16 %v3032
  %v3817 = vunpack.c.h.b16 %v3032
  %v3818 = vunpack.c.l.b16 %v3033
  %v3819 = vunpack.c.h.b16 %v3033
  %v3820 = vunpack.c.l.b16 %v3034
  %v3821 = vunpack.c.h.b16 %v3034
  %v3822 = vunpack.c.l.b16 %v3035
  %v3823 = vunpack.c.h.b16 %v3035
  %v3824 = vpack.c.b16 %v3320, %v3312
  %v3825 = vpack.c.b16 %v3321, %v3313
  %v3826 = vpack.c.b16 %v3322, %v3314
  %v3827 = vpack.c.b16 %v3323, %v3315
  %v3828 = vpack.c.b16 %v3324, %v3316
  %v3829 = vpack.c.b16 %v3325, %v3317
  %v3830 = vpack.c.b16 %v3326, %v3318
  %v3831 = vpack.c.b16 %v3327, %v3319
  %v3832 = vpack.c.b16 %v3336, %v3328
  %v3833 = vpack.c.b16 %v3337, %v3329
  %v3834 = vpack.c.b16 %v3338, %v3330
  %v3835 = vpack.c.b16 %v3339, %v3331
  %v3836 = vpack.c.b16 %v3340, %v3332
  %v3837 = vpack.c.b16 %v3341, %v3333
  %v3838 = vpack.c.b16 %v3342, %v3334
  %v3839 = vpack.c.b16 %v3343, %v3335
  %v3840 = vpack.c.b16 %v3352, %v3344
  %v3841 = vpack.c.b16 %v3353, %v3345
  %v3842 = vpack.c.b16 %v3354, %v3346
  %v3843 = vpack.c.b16 %v3355, %v3347
  %v3844 = vpack.c.b16 %v3356, %v3348
  %v3845 = vpack.c.b16 %v3357, %v3349
  %v3846 = vpack.c.b16 %v3358, %v3350
  %v3847 = vpack.c.b16 %v3359, %v3351
  %v3848 = vpack.c.b16 %v3368, %v3360
  %v3849 = vpack.c.b16 %v3369, %v3361
  %v3850 = vpack.c.b16 %v3370, %v3362
  %v3851 = vpack.c.b16 %v3371, %v3363
  %v3852 = vpack.c.b16 %v3372, %v3364
  %v3853 = vpack.c.b16 %v3373, %v3365
  %v3854 = vpack.c.b16 %v3374, %v3366
  %v3855 = vpack.c.b16 %v3375, %v3367
  %v3856 = vpack.c.b16 %v3384, %v3376
  %v3857 = vpack.c.b16 %v3385, %v3377
  %v3858 = vpack.c.b16 %v3386, %v3378
  %v3859 = vpack.c.b16 %v3387, %v3379
  %v3860 = vpack.c.b16 %v3388, %v3380
  %v3861 = vpack.c.b16 %v3389, %v3381
  %v3862 = vpack.c.b16 %v3390, %v3382
  %v3863 = vpack.c.b16 %v3391, %v3383
  %v3864 = vpack.c.b16 %v3400, %v3392
  %v3865 = vpack.c.b16 %v3401, %v3393
  %v3866 = vpack.c.b16 %v3402, %v3394
  %v3867 = vpack.c.b16 %v3403, %v3395
  %v3868 = vpack.c.b16 %v3404, %v3396
  %v3869 = vpack.c.b16 %v3405, %v3397
  %v3870 = vpack.c.b16 %v3406, %v3398
  %v3871 = vpack.c.b16 %v3407, %v3399
  %v3872 = vpack.c.b16 %v3416, %v3408
  %v3873 = vpack.c.b16 %v3417, %v3409
  %v3874 = vpack.c.b16 %v3418, %v3410
  %v3875 = vpack.c.b16 %v3419, %v3411
  %v3876 = vpack.c.b16 %v3420, %v3412
  %v3877 = vpack.c.b16 %v3421, %v3413
  %v3878 = vpack.c.b16 %v3422, %v3414
  %v3879 = vpack.c.b16 %v3423, %v3415
  %v3880 = vpack.c.b16 %v3432, %v3424
  %v3881 = vpack.c.b16 %v3433, %v3425
  %v3882 = vpack.c.b16 %v3434, %v3426
  %v3883 = vpack.c.b16 %v3435, %v3427
  %v3884 = vpack.c.b16 %v3436, %v3428
  %v3885 = vpack.c.b16 %v3437, %v3429
  %v3886 = vpack.c.b16 %v3438, %v3430
  %v3887 = vpack.c.b16 %v3439, %v3431
  %v3888 = vpack.c.b16 %v3448, %v3440
  %v3889 = vpack.c.b16 %v3449, %v3441
  %v3890 = vpack.c.b16 %v3450, %v3442
  %v3891 = vpack.c.b16 %v3451, %v3443
  %v3892 = vpack.c.b16 %v3452, %v3444
  %v3893 = vpack.c.b16 %v3453, %v3445
  %v3894 = vpack.c.b16 %v3454, %v3446
  %v3895 = vpack.c.b16 %v3455, %v3447
  %v3896 = vpack.c.b16 %v3464, %v3456
  %v3897 = vpack.c.b16 %v3465, %v3457
  %v3898 = vpack.c.b16 %v3466, %v3458
  %v3899 = vpack.c.b16 %v3467, %v3459
  %v3900 = vpack.c.b16 %v3468, %v3460
  %v3901 = vpack.c.b16 %v3469, %v3461
  %v3902 = vpack.c.b16 %v3470, %v3462
  %v3903 = vpack.c.b16 %v3471, %v3463
  %v3904 = vpack.c.b16 %v3480, %v3472
  %v3905 = vpack.c.b16 %v3481, %v3473
  %v3906 = vpack.c.b16 %v3482, %v3474
  %v3907 = vpack.c.b16 %v3483, %v3475
  %v3908 = vpack.c.b16 %v3484, %v3476
  %v3909 = vpack.c.b16 %v3485, %v3477
  %v3910 = vpack.c.b16 %v3486, %v3478
  %v3911 = vpack.c.b16 %v3487, %v3479
  %v3912 = vpack.c.b16 %v3496, %v3488
  %v3913 = vpack.c.b16 %v3497, %v3489
  %v3914 = vpack.c.b16 %v3498, %v3490
  %v3915 = vpack.c.b16 %v3499, %v3491
  %v3916 = vpack.c.b16 %v3500, %v3492
  %v3917 = vpack.c.b16 %v3501, %v3493
  %v3918 = vpack.c.b16 %v3502, %v3494
  %v3919 = vpack.c.b16 %v3503, %v3495
  %v3920 = vpack.c.b16 %v3512, %v3504
  %v3921 = vpack.c.b16 %v3513, %v3505
  %v3922 = vpack.c.b16 %v3514, %v3506
  %v3923 = vpack.c.b16 %v3515, %v3507
  %v3924 = vpack.c.b16 %v3516, %v3508
  %v3925 = vpack.c.b16 %v3517, %v3509
  %v3926 = vpack.c.b16 %v3518, %v3510
  %v3927 = vpack.c.b16 %v3519, %v3511
  %v3928 = vpack.c.b16 %v3528, %v3520
  %v3929 = vpack.c.b16 %v3529, %v3521
  %v3930 = vpack.c.b16 %v3530, %v3522
  %v3931 = vpack.c.b16 %v3531, %v3523
  %v3932 = vpack.c.b16 %v3532, %v3524
  %v3933 = vpack.c.b16 %v3533, %v3525
  %v3934 = vpack.c.b16 %v3534, %v3526
  %v3935 = vpack.c.b16 %v3535, %v3527
  %v3936 = vpack.c.b16 %v3544, %v3536
  %v3937 = vpack.c.b16 %v3545, %v3537
  %v3938 = vpack.c.b16 %v3546, %v3538
  %v3939 = vpack.c.b16 %v3547, %v3539
  %v3940 = vpack.c.b16 %v3548, %v3540
  %v3941 = vpack.c.b16 %v3549, %v3541
  %v3942 = vpack.c.b16 %v3550, %v3542
  %v3943 = vpack.c.b16 %v3551, %v3543
  %v3944 = vpack.c.b16 %v3560, %v3552
  %v3945 = vpack.c.b16 %v3561, %v3553
  %v3946 = vpack.c.b16 %v3562, %v3554
  %v3947 = vpack.c.b16 %v3563, %v3555
  %v3948 = vpack.c.b16 %v3564, %v3556
  %v3949 = vpack.c.b16 %v3565, %v3557
  %v3950 = vpack.c.b16 %v3566, %v3558
  %v3951 = vpack.c.b16 %v3567, %v3559
  %v3952 = vpack.c.b16 %v3576, %v3568
  %v3953 = vpack.c.b16 %v3577, %v3569
  %v3954 = vpack.c.b16 %v3578, %v3570
  %v3955 = vpack.c.b16 %v3579, %v3571
  %v3956 = vpack.c.b16 %v3580, %v3572
  %v3957 = vpack.c.b16 %v3581, %v3573
  %v3958 = vpack.c.b16 %v3582, %v3574
  %v3959 = vpack.c.b16 %v3583, %v3575
  %v3960 = vpack.c.b16 %v3592, %v3584
  %v3961 = vpack.c.b16 %v3593, %v3585
  %v3962 = vpack.c.b16 %v3594, %v3586
  %v3963 = vpack.c.b16 %v3595, %v3587
  %v3964 = vpack.c.b16 %v3596, %v3588
  %v3965 = vpack.c.b16 %v3597, %v3589
  %v3966 = vpack.c.b16 %v3598, %v3590
  %v3967 = vpack.c.b16 %v3599, %v3591
  %v3968 = vpack.c.b16 %v3608, %v3600
  %v3969 = vpack.c.b16 %v3609, %v3601
  %v3970 = vpack.c.b16 %v3610, %v3602
  %v3971 = vpack.c.b16 %v3611, %v3603
  %v3972 = vpack.c.b16 %v3612, %v3604
  %v3973 = vpack.c.b16 %v3613, %v3605
  %v3974 = vpack.c.b16 %v3614, %v3606
  %v3975 = vpack.c.b16 %v3615, %v3607
  %v3976 = vpack.c.b16 %v3624, %v3616
  %v3977 = vpack.c.b16 %v3625, %v3617
  %v3978 = vpack.c.b16 %v3626, %v3618
  %v3979 = vpack.c.b16 %v3627, %v3619
  %v3980 = vpack.c.b16 %v3628, %v3620
  %v3981 = vpack.c.b16 %v3629, %v3621
  %v3982 = vpack.c.b16 %v3630, %v3622
  %v3983 = vpack.c.b16 %v3631, %v3623
  %v3984 = vpack.c.b16 %v3640, %v3632
  %v3985 = vpack.c.b16 %v3641, %v3633
  %v3986 = vpack.c.b16 %v3642, %v3634
  %v3987 = vpack.c.b16 %v3643, %v3635
  %v3988 = vpack.c.b16 %v3644, %v3636
  %v3989 = vpack.c.b16 %v3645, %v3637
  %v3990 = vpack.c.b16 %v3646, %v3638
  %v3991 = vpack.c.b16 %v3647, %v3639
  %v3992 = vpack.c.b16 %v3656, %v3648
  %v3993 = vpack.c.b16 %v3657, %v3649
  %v3994 = vpack.c.b16 %v3658, %v3650
  %v3995 = vpack.c.b16 %v3659, %v3651
  %v3996 = vpack.c.b16 %v3660, %v3652
  %v3997 = vpack.c.b16 %v3661, %v3653
  %v3998 = vpack.c.b16 %v3662, %v3654
  %v3999 = vpack.c.b16 %v3663, %v3655
  %v4000 = vpack.c.b16 %v3672, %v3664
  %v4001 = vpack.c.b16 %v3673, %v3665
  %v4002 = vpack.c.b16 %v3674, %v3666
  %v4003 = vpack.c.b16 %v3675, %v3667
  %v4004 = vpack.c.b16 %v3676, %v3668
  %v4005 = vpack.c.b16 %v3677, %v3669
  %v4006 = vpack.c.b16 %v3678, %v3670
  %v4007 = vpack.c.b16 %v3679, %v3671
  %v4008 = vpack.c.b16 %v3688, %v3680
  %v4009 = vpack.c.b16 %v3689, %v3681
  %v4010 = vpack.c.b16 %v3690, %v3682
  %v4011 = vpack.c.b16 %v3691, %v3683
  %v4012 = vpack.c.b16 %v3692, %v3684
  %v4013 = vpack.c.b16 %v3693, %v3685
  %v4014 = vpack.c.b16 %v3694, %v3686
  %v4015 = vpack.c.b16 %v3695, %v3687
  %v4016 = vpack.c.b16 %v3704, %v3696
  %v4017 = vpack.c.b16 %v3705, %v3697
  %v4018 = vpack.c.b16 %v3706, %v3698
  %v4019 = vpack.c.b16 %v3707, %v3699
  %v4020 = vpack.c.b16 %v3708, %v3700
  %v4021 = vpack.c.b16 %v3709, %v3701
  %v4022 = vpack.c.b16 %v3710, %v3702
  %v4023 = vpack.c.b16 %v3711, %v3703
  %v4024 = vpack.c.b16 %v3720, %v3712
  %v4025 = vpack.c.b16 %v3721, %v3713
  %v4026 = vpack.c.b16 %v3722, %v3714
  %v4027 = vpack.c.b16 %v3723, %v3715
  %v4028 = vpack.c.b16 %v3724, %v3716
  %v4029 = vpack.c.b16 %v3725, %v3717
  %v4030 = vpack.c.b16 %v3726, %v3718
  %v4031 = vpack.c.b16 %v3727, %v3719
  %v4032 = vpack.c.b16 %v3736, %v3728
  %v4033 = vpack.c.b16 %v3737, %v3729
  %v4034 = vpack.c.b16 %v3738, %v3730
  %v4035 = vpack.c.b16 %v3739, %v3731
  %v4036 = vpack.c.b16 %v3740, %v3732
  %v4037 = vpack.c.b16 %v3741, %v3733
  %v4038 = vpack.c.b16 %v3742, %v3734
  %v4039 = vpack.c.b16 %v3743, %v3735
  %v4040 = vpack.c.b16 %v3752, %v3744
  %v4041 = vpack.c.b16 %v3753, %v3745
  %v4042 = vpack.c.b16 %v3754, %v3746
  %v4043 = vpack.c.b16 %v3755, %v3747
  %v4044 = vpack.c.b16 %v3756, %v3748
  %v4045 = vpack.c.b16 %v3757, %v3749
  %v4046 = vpack.c.b16 %v3758, %v3750
  %v4047 = vpack.c.b16 %v3759, %v3751
  %v4048 = vpack.c.b16 %v3768, %v3760
  %v4049 = vpack.c.b16 %v3769, %v3761
  %v4050 = vpack.c.b16 %v3770, %v3762
  %v4051 = vpack.c.b16 %v3771, %v3763
  %v4052 = vpack.c.b16 %v3772, %v3764
  %v4053 = vpack.c.b16 %v3773, %v3765
  %v4054 = vpack.c.b16 %v3774, %v3766
  %v4055 = vpack.c.b16 %v3775, %v3767
  %v4056 = vpack.c.b16 %v3784, %v3776
  %v4057 = vpack.c.b16 %v3785, %v3777
  %v4058 = vpack.c.b16 %v3786, %v3778
  %v4059 = vpack.c.b16 %v3787, %v3779
  %v4060 = vpack.c.b16 %v3788, %v3780
  %v4061 = vpack.c.b16 %v3789, %v3781
  %v4062 = vpack.c.b16 %v3790, %v3782
  %v4063 = vpack.c.b16 %v3791, %v3783
  %v4064 = vpack.c.b16 %v3800, %v3792
  %v4065 = vpack.c.b16 %v3801, %v3793
  %v4066 = vpack.c.b16 %v3802, %v3794
  %v4067 = vpack.c.b16 %v3803, %v3795
  %v4068 = vpack.c.b16 %v3804, %v3796
  %v4069 = vpack.c.b16 %v3805, %v3797
  %v4070 = vpack.c.b16 %v3806, %v3798
  %v4071 = vpack.c.b16 %v3807, %v3799
  %v4072 = vpack.c.b16 %v3816, %v3808
  %v4073 = vpack.c.b16 %v3817, %v3809
  %v4074 = vpack.c.b16 %v3818, %v3810
  %v4075 = vpack.c.b16 %v3819, %v3811
  %v4076 = vpack.c.b16 %v3820, %v3812
  %v4077 = vpack.c.b16 %v3821, %v3813
  %v4078 = vpack.c.b16 %v3822, %v3814
  %v4079 = vpack.c.b16 %v3823, %v3815
  %4336 = vmatpush.bf16.msra.mxu0 %v3880
  %4337 = vmatpush.bf16.msra.mxu0 %v3872
  %4338 = vmatpush.bf16.msra.mxu0 %v3864
  %4339 = vmatpush.bf16.msra.mxu0 %v3856
  %4340 = vmatpush.bf16.msra.mxu0 %v3848
  %4341 = vmatpush.bf16.msra.mxu0 %v3840
  %4342 = vmatpush.bf16.msra.mxu0 %v3832
  %4343 = vmatpush.bf16.msra.mxu0 %v3824
  %4344 = vmatmul.bf16.gmra.mxu0 %v2776
  %v4345 = vpop.f32.mrf.mxu0
  %v4346 = vadd.f32 %v3040, %v4345
  %v4347 = vpop.f32.mrf.mxu0
  %4348 = vdwg.mxu0
  %4349 = vmatpush.bf16.msra.mxu0 %v3944
  %4350 = vmatpush.bf16.msra.mxu0 %v3936
  %4351 = vmatpush.bf16.msra.mxu0 %v3928
  %4352 = vmatpush.bf16.msra.mxu0 %v3920
  %4353 = vmatpush.bf16.msra.mxu0 %v3912
  %4354 = vmatpush.bf16.msra.mxu0 %v3904
  %4355 = vmatpush.bf16.msra.mxu0 %v3896
  %4356 = vmatpush.bf16.msra.mxu0 %v3888
  %4357 = vmatmul.bf16.gmra.mxu0 %v2777
  %v4358 = vpop.f32.mrf.mxu0
  %v4359 = vadd.f32 %v4346, %v4358
  %v4360 = vpop.f32.mrf.mxu0
  %4361 = vdwg.mxu0
  %4362 = vmatpush.bf16.msra.mxu0 %v4008
  %4363 = vmatpush.bf16.msra.mxu0 %v4000
  %4364 = vmatpush.bf16.msra.mxu0 %v3992
  %4365 = vmatpush.bf16.msra.mxu0 %v3984
  %4366 = vmatpush.bf16.msra.mxu0 %v3976
  %4367 = vmatpush.bf16.msra.mxu0 %v3968
  %4368 = vmatpush.bf16.msra.mxu0 %v3960
  %4369 = vmatpush.bf16.msra.mxu0 %v3952
  %4370 = vmatmul.bf16.gmra.mxu0 %v2778
  %v4371 = vpop.f32.mrf.mxu0
  %v4372 = vadd.f32 %v4359, %v4371
  %v4373 = vpop.f32.mrf.mxu0
  %4374 = vdwg.mxu0
  %4375 = vmatpush.bf16.msra.mxu0 %v4072
  %4376 = vmatpush.bf16.msra.mxu0 %v4064
  %4377 = vmatpush.bf16.msra.mxu0 %v4056
  %4378 = vmatpush.bf16.msra.mxu0 %v4048
  %4379 = vmatpush.bf16.msra.mxu0 %v4040
  %4380 = vmatpush.bf16.msra.mxu0 %v4032
  %4381 = vmatpush.bf16.msra.mxu0 %v4024
  %4382 = vmatpush.bf16.msra.mxu0 %v4016
  %4383 = vmatmul.bf16.gmra.mxu0 %v2779
  %v4384 = vpop.f32.mrf.mxu0
  %v4385 = vadd.f32 %v4372, %v4384
  %v4386 = vpop.f32.mrf.mxu0
  %4387 = vdwg.mxu0
  %4388 = vmatpush.bf16.msra.mxu0 %v3881
  %4389 = vmatpush.bf16.msra.mxu0 %v3873
  %4390 = vmatpush.bf16.msra.mxu0 %v3865
  %4391 = vmatpush.bf16.msra.mxu0 %v3857
  %4392 = vmatpush.bf16.msra.mxu0 %v3849
  %4393 = vmatpush.bf16.msra.mxu0 %v3841
  %4394 = vmatpush.bf16.msra.mxu0 %v3833
  %4395 = vmatpush.bf16.msra.mxu0 %v3825
  %4396 = vmatmul.bf16.gmra.mxu0 %v2776
  %v4397 = vpop.f32.mrf.mxu0
  %v4398 = vadd.f32 %v3041, %v4397
  %v4399 = vpop.f32.mrf.mxu0
  %4400 = vdwg.mxu0
  %4401 = vmatpush.bf16.msra.mxu0 %v3945
  %4402 = vmatpush.bf16.msra.mxu0 %v3937
  %4403 = vmatpush.bf16.msra.mxu0 %v3929
  %4404 = vmatpush.bf16.msra.mxu0 %v3921
  %4405 = vmatpush.bf16.msra.mxu0 %v3913
  %4406 = vmatpush.bf16.msra.mxu0 %v3905
  %4407 = vmatpush.bf16.msra.mxu0 %v3897
  %4408 = vmatpush.bf16.msra.mxu0 %v3889
  %4409 = vmatmul.bf16.gmra.mxu0 %v2777
  %v4410 = vpop.f32.mrf.mxu0
  %v4411 = vadd.f32 %v4398, %v4410
  %v4412 = vpop.f32.mrf.mxu0
  %4413 = vdwg.mxu0
  %4414 = vmatpush.bf16.msra.mxu0 %v4009
  %4415 = vmatpush.bf16.msra.mxu0 %v4001
  %4416 = vmatpush.bf16.msra.mxu0 %v3993
  %4417 = vmatpush.bf16.msra.mxu0 %v3985
  %4418 = vmatpush.bf16.msra.mxu0 %v3977
  %4419 = vmatpush.bf16.msra.mxu0 %v3969
  %4420 = vmatpush.bf16.msra.mxu0 %v3961
  %4421 = vmatpush.bf16.msra.mxu0 %v3953
  %4422 = vmatmul.bf16.gmra.mxu0 %v2778
  %v4423 = vpop.f32.mrf.mxu0
  %v4424 = vadd.f32 %v4411, %v4423
  %v4425 = vpop.f32.mrf.mxu0
  %4426 = vdwg.mxu0
  %4427 = vmatpush.bf16.msra.mxu0 %v4073
  %4428 = vmatpush.bf16.msra.mxu0 %v4065
  %4429 = vmatpush.bf16.msra.mxu0 %v4057
  %4430 = vmatpush.bf16.msra.mxu0 %v4049
  %4431 = vmatpush.bf16.msra.mxu0 %v4041
  %4432 = vmatpush.bf16.msra.mxu0 %v4033
  %4433 = vmatpush.bf16.msra.mxu0 %v4025
  %4434 = vmatpush.bf16.msra.mxu0 %v4017
  %4435 = vmatmul.bf16.gmra.mxu0 %v2779
  %v4436 = vpop.f32.mrf.mxu0
  %v4437 = vadd.f32 %v4424, %v4436
  %v4438 = vpop.f32.mrf.mxu0
  %4439 = vdwg.mxu0
  %4440 = vmatpush.bf16.msra.mxu0 %v3882
  %4441 = vmatpush.bf16.msra.mxu0 %v3874
  %4442 = vmatpush.bf16.msra.mxu0 %v3866
  %4443 = vmatpush.bf16.msra.mxu0 %v3858
  %4444 = vmatpush.bf16.msra.mxu0 %v3850
  %4445 = vmatpush.bf16.msra.mxu0 %v3842
  %4446 = vmatpush.bf16.msra.mxu0 %v3834
  %4447 = vmatpush.bf16.msra.mxu0 %v3826
  %4448 = vmatmul.bf16.gmra.mxu0 %v2776
  %v4449 = vpop.f32.mrf.mxu0
  %v4450 = vadd.f32 %v3042, %v4449
  %v4451 = vpop.f32.mrf.mxu0
  %4452 = vdwg.mxu0
  %4453 = vmatpush.bf16.msra.mxu0 %v3946
  %4454 = vmatpush.bf16.msra.mxu0 %v3938
  %4455 = vmatpush.bf16.msra.mxu0 %v3930
  %4456 = vmatpush.bf16.msra.mxu0 %v3922
  %4457 = vmatpush.bf16.msra.mxu0 %v3914
  %4458 = vmatpush.bf16.msra.mxu0 %v3906
  %4459 = vmatpush.bf16.msra.mxu0 %v3898
  %4460 = vmatpush.bf16.msra.mxu0 %v3890
  %4461 = vmatmul.bf16.gmra.mxu0 %v2777
  %v4462 = vpop.f32.mrf.mxu0
  %v4463 = vadd.f32 %v4450, %v4462
  %v4464 = vpop.f32.mrf.mxu0
  %4465 = vdwg.mxu0
  %4466 = vmatpush.bf16.msra.mxu0 %v4010
  %4467 = vmatpush.bf16.msra.mxu0 %v4002
  %4468 = vmatpush.bf16.msra.mxu0 %v3994
  %4469 = vmatpush.bf16.msra.mxu0 %v3986
  %4470 = vmatpush.bf16.msra.mxu0 %v3978
  %4471 = vmatpush.bf16.msra.mxu0 %v3970
  %4472 = vmatpush.bf16.msra.mxu0 %v3962
  %4473 = vmatpush.bf16.msra.mxu0 %v3954
  %4474 = vmatmul.bf16.gmra.mxu0 %v2778
  %v4475 = vpop.f32.mrf.mxu0
  %v4476 = vadd.f32 %v4463, %v4475
  %v4477 = vpop.f32.mrf.mxu0
  %4478 = vdwg.mxu0
  %4479 = vmatpush.bf16.msra.mxu0 %v4074
  %4480 = vmatpush.bf16.msra.mxu0 %v4066
  %4481 = vmatpush.bf16.msra.mxu0 %v4058
  %4482 = vmatpush.bf16.msra.mxu0 %v4050
  %4483 = vmatpush.bf16.msra.mxu0 %v4042
  %4484 = vmatpush.bf16.msra.mxu0 %v4034
  %4485 = vmatpush.bf16.msra.mxu0 %v4026
  %4486 = vmatpush.bf16.msra.mxu0 %v4018
  %4487 = vmatmul.bf16.gmra.mxu0 %v2779
  %v4488 = vpop.f32.mrf.mxu0
  %v4489 = vadd.f32 %v4476, %v4488
  %v4490 = vpop.f32.mrf.mxu0
  %4491 = vdwg.mxu0
  %4492 = vmatpush.bf16.msra.mxu0 %v3883
  %4493 = vmatpush.bf16.msra.mxu0 %v3875
  %4494 = vmatpush.bf16.msra.mxu0 %v3867
  %4495 = vmatpush.bf16.msra.mxu0 %v3859
  %4496 = vmatpush.bf16.msra.mxu0 %v3851
  %4497 = vmatpush.bf16.msra.mxu0 %v3843
  %4498 = vmatpush.bf16.msra.mxu0 %v3835
  %4499 = vmatpush.bf16.msra.mxu0 %v3827
  %4500 = vmatmul.bf16.gmra.mxu0 %v2776
  %v4501 = vpop.f32.mrf.mxu0
  %v4502 = vadd.f32 %v3043, %v4501
  %v4503 = vpop.f32.mrf.mxu0
  %4504 = vdwg.mxu0
  %4505 = vmatpush.bf16.msra.mxu0 %v3947
  %4506 = vmatpush.bf16.msra.mxu0 %v3939
  %4507 = vmatpush.bf16.msra.mxu0 %v3931
  %4508 = vmatpush.bf16.msra.mxu0 %v3923
  %4509 = vmatpush.bf16.msra.mxu0 %v3915
  %4510 = vmatpush.bf16.msra.mxu0 %v3907
  %4511 = vmatpush.bf16.msra.mxu0 %v3899
  %4512 = vmatpush.bf16.msra.mxu0 %v3891
  %4513 = vmatmul.bf16.gmra.mxu0 %v2777
  %v4514 = vpop.f32.mrf.mxu0
  %v4515 = vadd.f32 %v4502, %v4514
  %v4516 = vpop.f32.mrf.mxu0
  %4517 = vdwg.mxu0
  %4518 = vmatpush.bf16.msra.mxu0 %v4011
  %4519 = vmatpush.bf16.msra.mxu0 %v4003
  %4520 = vmatpush.bf16.msra.mxu0 %v3995
  %4521 = vmatpush.bf16.msra.mxu0 %v3987
  %4522 = vmatpush.bf16.msra.mxu0 %v3979
  %4523 = vmatpush.bf16.msra.mxu0 %v3971
  %4524 = vmatpush.bf16.msra.mxu0 %v3963
  %4525 = vmatpush.bf16.msra.mxu0 %v3955
  %4526 = vmatmul.bf16.gmra.mxu0 %v2778
  %v4527 = vpop.f32.mrf.mxu0
  %v4528 = vadd.f32 %v4515, %v4527
  %v4529 = vpop.f32.mrf.mxu0
  %4530 = vdwg.mxu0
  %4531 = vmatpush.bf16.msra.mxu0 %v4075
  %4532 = vmatpush.bf16.msra.mxu0 %v4067
  %4533 = vmatpush.bf16.msra.mxu0 %v4059
  %4534 = vmatpush.bf16.msra.mxu0 %v4051
  %4535 = vmatpush.bf16.msra.mxu0 %v4043
  %4536 = vmatpush.bf16.msra.mxu0 %v4035
  %4537 = vmatpush.bf16.msra.mxu0 %v4027
  %4538 = vmatpush.bf16.msra.mxu0 %v4019
  %4539 = vmatmul.bf16.gmra.mxu0 %v2779
  %v4540 = vpop.f32.mrf.mxu0
  %v4541 = vadd.f32 %v4528, %v4540
  %v4542 = vpop.f32.mrf.mxu0
  %4543 = vdwg.mxu0
  %4544 = vmatpush.bf16.msra.mxu0 %v3884
  %4545 = vmatpush.bf16.msra.mxu0 %v3876
  %4546 = vmatpush.bf16.msra.mxu0 %v3868
  %4547 = vmatpush.bf16.msra.mxu0 %v3860
  %4548 = vmatpush.bf16.msra.mxu0 %v3852
  %4549 = vmatpush.bf16.msra.mxu0 %v3844
  %4550 = vmatpush.bf16.msra.mxu0 %v3836
  %4551 = vmatpush.bf16.msra.mxu0 %v3828
  %4552 = vmatmul.bf16.gmra.mxu0 %v2776
  %v4553 = vpop.f32.mrf.mxu0
  %v4554 = vadd.f32 %v3044, %v4553
  %v4555 = vpop.f32.mrf.mxu0
  %4556 = vdwg.mxu0
  %4557 = vmatpush.bf16.msra.mxu0 %v3948
  %4558 = vmatpush.bf16.msra.mxu0 %v3940
  %4559 = vmatpush.bf16.msra.mxu0 %v3932
  %4560 = vmatpush.bf16.msra.mxu0 %v3924
  %4561 = vmatpush.bf16.msra.mxu0 %v3916
  %4562 = vmatpush.bf16.msra.mxu0 %v3908
  %4563 = vmatpush.bf16.msra.mxu0 %v3900
  %4564 = vmatpush.bf16.msra.mxu0 %v3892
  %4565 = vmatmul.bf16.gmra.mxu0 %v2777
  %v4566 = vpop.f32.mrf.mxu0
  %v4567 = vadd.f32 %v4554, %v4566
  %v4568 = vpop.f32.mrf.mxu0
  %4569 = vdwg.mxu0
  %4570 = vmatpush.bf16.msra.mxu0 %v4012
  %4571 = vmatpush.bf16.msra.mxu0 %v4004
  %4572 = vmatpush.bf16.msra.mxu0 %v3996
  %4573 = vmatpush.bf16.msra.mxu0 %v3988
  %4574 = vmatpush.bf16.msra.mxu0 %v3980
  %4575 = vmatpush.bf16.msra.mxu0 %v3972
  %4576 = vmatpush.bf16.msra.mxu0 %v3964
  %4577 = vmatpush.bf16.msra.mxu0 %v3956
  %4578 = vmatmul.bf16.gmra.mxu0 %v2778
  %v4579 = vpop.f32.mrf.mxu0
  %v4580 = vadd.f32 %v4567, %v4579
  %v4581 = vpop.f32.mrf.mxu0
  %4582 = vdwg.mxu0
  %4583 = vmatpush.bf16.msra.mxu0 %v4076
  %4584 = vmatpush.bf16.msra.mxu0 %v4068
  %4585 = vmatpush.bf16.msra.mxu0 %v4060
  %4586 = vmatpush.bf16.msra.mxu0 %v4052
  %4587 = vmatpush.bf16.msra.mxu0 %v4044
  %4588 = vmatpush.bf16.msra.mxu0 %v4036
  %4589 = vmatpush.bf16.msra.mxu0 %v4028
  %4590 = vmatpush.bf16.msra.mxu0 %v4020
  %4591 = vmatmul.bf16.gmra.mxu0 %v2779
  %v4592 = vpop.f32.mrf.mxu0
  %v4593 = vadd.f32 %v4580, %v4592
  %v4594 = vpop.f32.mrf.mxu0
  %4595 = vdwg.mxu0
  %4596 = vmatpush.bf16.msra.mxu0 %v3885
  %4597 = vmatpush.bf16.msra.mxu0 %v3877
  %4598 = vmatpush.bf16.msra.mxu0 %v3869
  %4599 = vmatpush.bf16.msra.mxu0 %v3861
  %4600 = vmatpush.bf16.msra.mxu0 %v3853
  %4601 = vmatpush.bf16.msra.mxu0 %v3845
  %4602 = vmatpush.bf16.msra.mxu0 %v3837
  %4603 = vmatpush.bf16.msra.mxu0 %v3829
  %4604 = vmatmul.bf16.gmra.mxu0 %v2776
  %v4605 = vpop.f32.mrf.mxu0
  %v4606 = vadd.f32 %v3045, %v4605
  %v4607 = vpop.f32.mrf.mxu0
  %4608 = vdwg.mxu0
  %4609 = vmatpush.bf16.msra.mxu0 %v3949
  %4610 = vmatpush.bf16.msra.mxu0 %v3941
  %4611 = vmatpush.bf16.msra.mxu0 %v3933
  %4612 = vmatpush.bf16.msra.mxu0 %v3925
  %4613 = vmatpush.bf16.msra.mxu0 %v3917
  %4614 = vmatpush.bf16.msra.mxu0 %v3909
  %4615 = vmatpush.bf16.msra.mxu0 %v3901
  %4616 = vmatpush.bf16.msra.mxu0 %v3893
  %4617 = vmatmul.bf16.gmra.mxu0 %v2777
  %v4618 = vpop.f32.mrf.mxu0
  %v4619 = vadd.f32 %v4606, %v4618
  %v4620 = vpop.f32.mrf.mxu0
  %4621 = vdwg.mxu0
  %4622 = vmatpush.bf16.msra.mxu0 %v4013
  %4623 = vmatpush.bf16.msra.mxu0 %v4005
  %4624 = vmatpush.bf16.msra.mxu0 %v3997
  %4625 = vmatpush.bf16.msra.mxu0 %v3989
  %4626 = vmatpush.bf16.msra.mxu0 %v3981
  %4627 = vmatpush.bf16.msra.mxu0 %v3973
  %4628 = vmatpush.bf16.msra.mxu0 %v3965
  %4629 = vmatpush.bf16.msra.mxu0 %v3957
  %4630 = vmatmul.bf16.gmra.mxu0 %v2778
  %v4631 = vpop.f32.mrf.mxu0
  %v4632 = vadd.f32 %v4619, %v4631
  %v4633 = vpop.f32.mrf.mxu0
  %4634 = vdwg.mxu0
  %4635 = vmatpush.bf16.msra.mxu0 %v4077
  %4636 = vmatpush.bf16.msra.mxu0 %v4069
  %4637 = vmatpush.bf16.msra.mxu0 %v4061
  %4638 = vmatpush.bf16.msra.mxu0 %v4053
  %4639 = vmatpush.bf16.msra.mxu0 %v4045
  %4640 = vmatpush.bf16.msra.mxu0 %v4037
  %4641 = vmatpush.bf16.msra.mxu0 %v4029
  %4642 = vmatpush.bf16.msra.mxu0 %v4021
  %4643 = vmatmul.bf16.gmra.mxu0 %v2779
  %v4644 = vpop.f32.mrf.mxu0
  %v4645 = vadd.f32 %v4632, %v4644
  %v4646 = vpop.f32.mrf.mxu0
  %4647 = vdwg.mxu0
  %4648 = vmatpush.bf16.msra.mxu0 %v3886
  %4649 = vmatpush.bf16.msra.mxu0 %v3878
  %4650 = vmatpush.bf16.msra.mxu0 %v3870
  %4651 = vmatpush.bf16.msra.mxu0 %v3862
  %4652 = vmatpush.bf16.msra.mxu0 %v3854
  %4653 = vmatpush.bf16.msra.mxu0 %v3846
  %4654 = vmatpush.bf16.msra.mxu0 %v3838
  %4655 = vmatpush.bf16.msra.mxu0 %v3830
  %4656 = vmatmul.bf16.gmra.mxu0 %v2776
  %v4657 = vpop.f32.mrf.mxu0
  %v4658 = vadd.f32 %v3046, %v4657
  %v4659 = vpop.f32.mrf.mxu0
  %4660 = vdwg.mxu0
  %4661 = vmatpush.bf16.msra.mxu0 %v3950
  %4662 = vmatpush.bf16.msra.mxu0 %v3942
  %4663 = vmatpush.bf16.msra.mxu0 %v3934
  %4664 = vmatpush.bf16.msra.mxu0 %v3926
  %4665 = vmatpush.bf16.msra.mxu0 %v3918
  %4666 = vmatpush.bf16.msra.mxu0 %v3910
  %4667 = vmatpush.bf16.msra.mxu0 %v3902
  %4668 = vmatpush.bf16.msra.mxu0 %v3894
  %4669 = vmatmul.bf16.gmra.mxu0 %v2777
  %v4670 = vpop.f32.mrf.mxu0
  %v4671 = vadd.f32 %v4658, %v4670
  %v4672 = vpop.f32.mrf.mxu0
  %4673 = vdwg.mxu0
  %4674 = vmatpush.bf16.msra.mxu0 %v4014
  %4675 = vmatpush.bf16.msra.mxu0 %v4006
  %4676 = vmatpush.bf16.msra.mxu0 %v3998
  %4677 = vmatpush.bf16.msra.mxu0 %v3990
  %4678 = vmatpush.bf16.msra.mxu0 %v3982
  %4679 = vmatpush.bf16.msra.mxu0 %v3974
  %4680 = vmatpush.bf16.msra.mxu0 %v3966
  %4681 = vmatpush.bf16.msra.mxu0 %v3958
  %4682 = vmatmul.bf16.gmra.mxu0 %v2778
  %v4683 = vpop.f32.mrf.mxu0
  %v4684 = vadd.f32 %v4671, %v4683
  %v4685 = vpop.f32.mrf.mxu0
  %4686 = vdwg.mxu0
  %4687 = vmatpush.bf16.msra.mxu0 %v4078
  %4688 = vmatpush.bf16.msra.mxu0 %v4070
  %4689 = vmatpush.bf16.msra.mxu0 %v4062
  %4690 = vmatpush.bf16.msra.mxu0 %v4054
  %4691 = vmatpush.bf16.msra.mxu0 %v4046
  %4692 = vmatpush.bf16.msra.mxu0 %v4038
  %4693 = vmatpush.bf16.msra.mxu0 %v4030
  %4694 = vmatpush.bf16.msra.mxu0 %v4022
  %4695 = vmatmul.bf16.gmra.mxu0 %v2779
  %v4696 = vpop.f32.mrf.mxu0
  %v4697 = vadd.f32 %v4684, %v4696
  %v4698 = vpop.f32.mrf.mxu0
  %4699 = vdwg.mxu0
  %4700 = vmatpush.bf16.msra.mxu0 %v3887
  %4701 = vmatpush.bf16.msra.mxu0 %v3879
  %4702 = vmatpush.bf16.msra.mxu0 %v3871
  %4703 = vmatpush.bf16.msra.mxu0 %v3863
  %4704 = vmatpush.bf16.msra.mxu0 %v3855
  %4705 = vmatpush.bf16.msra.mxu0 %v3847
  %4706 = vmatpush.bf16.msra.mxu0 %v3839
  %4707 = vmatpush.bf16.msra.mxu0 %v3831
  %4708 = vmatmul.bf16.gmra.mxu0 %v2776
  %v4709 = vpop.f32.mrf.mxu0
  %v4710 = vadd.f32 %v3047, %v4709
  %v4711 = vpop.f32.mrf.mxu0
  %4712 = vdwg.mxu0
  %4713 = vmatpush.bf16.msra.mxu0 %v3951
  %4714 = vmatpush.bf16.msra.mxu0 %v3943
  %4715 = vmatpush.bf16.msra.mxu0 %v3935
  %4716 = vmatpush.bf16.msra.mxu0 %v3927
  %4717 = vmatpush.bf16.msra.mxu0 %v3919
  %4718 = vmatpush.bf16.msra.mxu0 %v3911
  %4719 = vmatpush.bf16.msra.mxu0 %v3903
  %4720 = vmatpush.bf16.msra.mxu0 %v3895
  %4721 = vmatmul.bf16.gmra.mxu0 %v2777
  %v4722 = vpop.f32.mrf.mxu0
  %v4723 = vadd.f32 %v4710, %v4722
  %v4724 = vpop.f32.mrf.mxu0
  %4725 = vdwg.mxu0
  %4726 = vmatpush.bf16.msra.mxu0 %v4015
  %4727 = vmatpush.bf16.msra.mxu0 %v4007
  %4728 = vmatpush.bf16.msra.mxu0 %v3999
  %4729 = vmatpush.bf16.msra.mxu0 %v3991
  %4730 = vmatpush.bf16.msra.mxu0 %v3983
  %4731 = vmatpush.bf16.msra.mxu0 %v3975
  %4732 = vmatpush.bf16.msra.mxu0 %v3967
  %4733 = vmatpush.bf16.msra.mxu0 %v3959
  %4734 = vmatmul.bf16.gmra.mxu0 %v2778
  %v4735 = vpop.f32.mrf.mxu0
  %v4736 = vadd.f32 %v4723, %v4735
  %v4737 = vpop.f32.mrf.mxu0
  %4738 = vdwg.mxu0
  %4739 = vmatpush.bf16.msra.mxu0 %v4079
  %4740 = vmatpush.bf16.msra.mxu0 %v4071
  %4741 = vmatpush.bf16.msra.mxu0 %v4063
  %4742 = vmatpush.bf16.msra.mxu0 %v4055
  %4743 = vmatpush.bf16.msra.mxu0 %v4047
  %4744 = vmatpush.bf16.msra.mxu0 %v4039
  %4745 = vmatpush.bf16.msra.mxu0 %v4031
  %4746 = vmatpush.bf16.msra.mxu0 %v4023
  %4747 = vmatmul.bf16.gmra.mxu0 %v2779
  %v4748 = vpop.f32.mrf.mxu0
  %v4749 = vadd.f32 %v4736, %v4748
  %v4750 = vpop.f32.mrf.mxu0
  %4751 = vdwg.mxu0
  %vm4752 = vcmp.gt.f32.partialorder %v4385, 0.0
  %vm4753 = vcmp.gt.f32.partialorder %v4437, 0.0
  %vm4754 = vcmp.gt.f32.partialorder %v4489, 0.0
  %vm4755 = vcmp.gt.f32.partialorder %v4541, 0.0
  %vm4756 = vcmp.gt.f32.partialorder %v4593, 0.0
  %vm4757 = vcmp.gt.f32.partialorder %v4645, 0.0
  %vm4758 = vcmp.gt.f32.partialorder %v4697, 0.0
  %vm4759 = vcmp.gt.f32.partialorder %v4749, 0.0
  %v4760 = vmul.f32 %v4385, 0.2
  %v4761 = vmul.f32 %v4437, 0.2
  %v4762 = vmul.f32 %v4489, 0.2
  %v4763 = vmul.f32 %v4541, 0.2
  %v4764 = vmul.f32 %v4593, 0.2
  %v4765 = vmul.f32 %v4645, 0.2
  %v4766 = vmul.f32 %v4697, 0.2
  %v4767 = vmul.f32 %v4749, 0.2
  %v4768 = vsel %vm4752, %v4385, %v4760
  %v4769 = vsel %vm4753, %v4437, %v4761
  %v4770 = vsel %vm4754, %v4489, %v4762
  %v4771 = vsel %vm4755, %v4541, %v4763
  %v4772 = vsel %vm4756, %v4593, %v4764
  %v4773 = vsel %vm4757, %v4645, %v4765
  %v4774 = vsel %vm4758, %v4697, %v4766
  %v4775 = vsel %vm4759, %v4749, %v4767
  %v4776 = vrot.slane %v4768, 4
  %v4777 = vadd.f32 %v4768, %v4776
  %v4778 = vrot.slane %v4777, 2
  %v4779 = vadd.f32 %v4777, %v4778
  %v4780 = vrot.slane %v4779, 1
  %v4781 = vadd.f32 %v4779, %v4780
  %v4782 = vrot.slane %v4769, 4
  %v4783 = vadd.f32 %v4769, %v4782
  %v4784 = vrot.slane %v4783, 2
  %v4785 = vadd.f32 %v4783, %v4784
  %v4786 = vrot.slane %v4785, 1
  %v4787 = vadd.f32 %v4785, %v4786
  %v4788 = vrot.slane %v4770, 4
  %v4789 = vadd.f32 %v4770, %v4788
  %v4790 = vrot.slane %v4789, 2
  %v4791 = vadd.f32 %v4789, %v4790
  %v4792 = vrot.slane %v4791, 1
  %v4793 = vadd.f32 %v4791, %v4792
  %v4794 = vrot.slane %v4771, 4
  %v4795 = vadd.f32 %v4771, %v4794
  %v4796 = vrot.slane %v4795, 2
  %v4797 = vadd.f32 %v4795, %v4796
  %v4798 = vrot.slane %v4797, 1
  %v4799 = vadd.f32 %v4797, %v4798
  %v4800 = vrot.slane %v4772, 4
  %v4801 = vadd.f32 %v4772, %v4800
  %v4802 = vrot.slane %v4801, 2
  %v4803 = vadd.f32 %v4801, %v4802
  %v4804 = vrot.slane %v4803, 1
  %v4805 = vadd.f32 %v4803, %v4804
  %v4806 = vrot.slane %v4773, 4
  %v4807 = vadd.f32 %v4773, %v4806
  %v4808 = vrot.slane %v4807, 2
  %v4809 = vadd.f32 %v4807, %v4808
  %v4810 = vrot.slane %v4809, 1
  %v4811 = vadd.f32 %v4809, %v4810
  %v4812 = vrot.slane %v4774, 4
  %v4813 = vadd.f32 %v4774, %v4812
  %v4814 = vrot.slane %v4813, 2
  %v4815 = vadd.f32 %v4813, %v4814
  %v4816 = vrot.slane %v4815, 1
  %v4817 = vadd.f32 %v4815, %v4816
  %v4818 = vrot.slane %v4775, 4
  %v4819 = vadd.f32 %v4775, %v4818
  %v4820 = vrot.slane %v4819, 2
  %v4821 = vadd.f32 %v4819, %v4820
  %v4822 = vrot.slane %v4821, 1
  %v4823 = vadd.f32 %v4821, %v4822
  %v4824 = vmul.f32 %v4781, %v2044
  %v4825 = vmul.f32 %v4787, %v2044
  %v4826 = vmul.f32 %v4793, %v2044
  %v4827 = vmul.f32 %v4799, %v2044
  %v4828 = vmul.f32 %v4805, %v2044
  %v4829 = vmul.f32 %v4811, %v2044
  %v4830 = vmul.f32 %v4817, %v2044
  %v4831 = vmul.f32 %v4823, %v2044
  %v4832 = vsub.f32 %v4768, %v4824
  %v4833 = vsub.f32 %v4769, %v4825
  %v4834 = vsub.f32 %v4770, %v4826
  %v4835 = vsub.f32 %v4771, %v4827
  %v4836 = vsub.f32 %v4772, %v4828
  %v4837 = vsub.f32 %v4773, %v4829
  %v4838 = vsub.f32 %v4774, %v4830
  %v4839 = vsub.f32 %v4775, %v4831
  %v4840 = vmul.f32 %v4832, %v4832
  %v4841 = vmul.f32 %v4833, %v4833
  %v4842 = vmul.f32 %v4834, %v4834
  %v4843 = vmul.f32 %v4835, %v4835
  %v4844 = vmul.f32 %v4836, %v4836
  %v4845 = vmul.f32 %v4837, %v4837
  %v4846 = vmul.f32 %v4838, %v4838
  %v4847 = vmul.f32 %v4839, %v4839
  %v4848 = vrot.slane %v4840, 4
  %v4849 = vadd.f32 %v4840, %v4848
  %v4850 = vrot.slane %v4849, 2
  %v4851 = vadd.f32 %v4849, %v4850
  %v4852 = vrot.slane %v4851, 1
  %v4853 = vadd.f32 %v4851, %v4852
  %v4854 = vrot.slane %v4841, 4
  %v4855 = vadd.f32 %v4841, %v4854
  %v4856 = vrot.slane %v4855, 2
  %v4857 = vadd.f32 %v4855, %v4856
  %v4858 = vrot.slane %v4857, 1
  %v4859 = vadd.f32 %v4857, %v4858
  %v4860 = vrot.slane %v4842, 4
  %v4861 = vadd.f32 %v4842, %v4860
  %v4862 = vrot.slane %v4861, 2
  %v4863 = vadd.f32 %v4861, %v4862
  %v4864 = vrot.slane %v4863, 1
  %v4865 = vadd.f32 %v4863, %v4864
  %v4866 = vrot.slane %v4843, 4
  %v4867 = vadd.f32 %v4843, %v4866
  %v4868 = vrot.slane %v4867, 2
  %v4869 = vadd.f32 %v4867, %v4868
  %v4870 = vrot.slane %v4869, 1
  %v4871 = vadd.f32 %v4869, %v4870
  %v4872 = vrot.slane %v4844, 4
  %v4873 = vadd.f32 %v4844, %v4872
  %v4874 = vrot.slane %v4873, 2
  %v4875 = vadd.f32 %v4873, %v4874
  %v4876 = vrot.slane %v4875, 1
  %v4877 = vadd.f32 %v4875, %v4876
  %v4878 = vrot.slane %v4845, 4
  %v4879 = vadd.f32 %v4845, %v4878
  %v4880 = vrot.slane %v4879, 2
  %v4881 = vadd.f32 %v4879, %v4880
  %v4882 = vrot.slane %v4881, 1
  %v4883 = vadd.f32 %v4881, %v4882
  %v4884 = vrot.slane %v4846, 4
  %v4885 = vadd.f32 %v4846, %v4884
  %v4886 = vrot.slane %v4885, 2
  %v4887 = vadd.f32 %v4885, %v4886
  %v4888 = vrot.slane %v4887, 1
  %v4889 = vadd.f32 %v4887, %v4888
  %v4890 = vrot.slane %v4847, 4
  %v4891 = vadd.f32 %v4847, %v4890
  %v4892 = vrot.slane %v4891, 2
  %v4893 = vadd.f32 %v4891, %v4892
  %v4894 = vrot.slane %v4893, 1
  %v4895 = vadd.f32 %v4893, %v4894
  %v4896 = vmul.f32 %v4853, %v2044
  %v4897 = vmul.f32 %v4859, %v2044
  %v4898 = vmul.f32 %v4865, %v2044
  %v4899 = vmul.f32 %v4871, %v2044
  %v4900 = vmul.f32 %v4877, %v2044
  %v4901 = vmul.f32 %v4883, %v2044
  %v4902 = vmul.f32 %v4889, %v2044
  %v4903 = vmul.f32 %v4895, %v2044
  %v4904 = vadd.f32 %v4896, 1e-05
  %v4905 = vadd.f32 %v4897, 1e-05
  %v4906 = vadd.f32 %v4898, 1e-05
  %v4907 = vadd.f32 %v4899, 1e-05
  %v4908 = vadd.f32 %v4900, 1e-05
  %v4909 = vadd.f32 %v4901, 1e-05
  %v4910 = vadd.f32 %v4902, 1e-05
  %v4911 = vadd.f32 %v4903, 1e-05
  %v4912 = vrsqrt.pop %v4904
  %v4913 = vmul.f32 %v4912, %v4904
  %v4914 = vmul.f32 %v4913, %v4912
  %v4915 = vmul.f32 0.5, %v4914
  %v4916 = vsub.f32 1.5, %v4915
  %v4917 = vmul.f32 %v4912, %v4916
  %vm4918 = vweird.f32 %v4904
  %vm4919 = vweird.f32 %v4912
  %vm4920 = vmor %vm4918, %vm4919
  %v4921 = vsel %vm4920, %v4912, %v4917
  %v4922 = vrsqrt.pop %v4905
  %v4923 = vmul.f32 %v4922, %v4905
  %v4924 = vmul.f32 %v4923, %v4922
  %v4925 = vmul.f32 0.5, %v4924
  %v4926 = vsub.f32 1.5, %v4925
  %v4927 = vmul.f32 %v4922, %v4926
  %vm4928 = vweird.f32 %v4905
  %vm4929 = vweird.f32 %v4922
  %vm4930 = vmor %vm4928, %vm4929
  %v4931 = vsel %vm4930, %v4922, %v4927
  %v4932 = vrsqrt.pop %v4906
  %v4933 = vmul.f32 %v4932, %v4906
  %v4934 = vmul.f32 %v4933, %v4932
  %v4935 = vmul.f32 0.5, %v4934
  %v4936 = vsub.f32 1.5, %v4935
  %v4937 = vmul.f32 %v4932, %v4936
  %vm4938 = vweird.f32 %v4906
  %vm4939 = vweird.f32 %v4932
  %vm4940 = vmor %vm4938, %vm4939
  %v4941 = vsel %vm4940, %v4932, %v4937
  %v4942 = vrsqrt.pop %v4907
  %v4943 = vmul.f32 %v4942, %v4907
  %v4944 = vmul.f32 %v4943, %v4942
  %v4945 = vmul.f32 0.5, %v4944
  %v4946 = vsub.f32 1.5, %v4945
  %v4947 = vmul.f32 %v4942, %v4946
  %vm4948 = vweird.f32 %v4907
  %vm4949 = vweird.f32 %v4942
  %vm4950 = vmor %vm4948, %vm4949
  %v4951 = vsel %vm4950, %v4942, %v4947
  %v4952 = vrsqrt.pop %v4908
  %v4953 = vmul.f32 %v4952, %v4908
  %v4954 = vmul.f32 %v4953, %v4952
  %v4955 = vmul.f32 0.5, %v4954
  %v4956 = vsub.f32 1.5, %v4955
  %v4957 = vmul.f32 %v4952, %v4956
  %vm4958 = vweird.f32 %v4908
  %vm4959 = vweird.f32 %v4952
  %vm4960 = vmor %vm4958, %vm4959
  %v4961 = vsel %vm4960, %v4952, %v4957
  %v4962 = vrsqrt.pop %v4909
  %v4963 = vmul.f32 %v4962, %v4909
  %v4964 = vmul.f32 %v4963, %v4962
  %v4965 = vmul.f32 0.5, %v4964
  %v4966 = vsub.f32 1.5, %v4965
  %v4967 = vmul.f32 %v4962, %v4966
  %vm4968 = vweird.f32 %v4909
  %vm4969 = vweird.f32 %v4962
  %vm4970 = vmor %vm4968, %vm4969
  %v4971 = vsel %vm4970, %v4962, %v4967
  %v4972 = vrsqrt.pop %v4910
  %v4973 = vmul.f32 %v4972, %v4910
  %v4974 = vmul.f32 %v4973, %v4972
  %v4975 = vmul.f32 0.5, %v4974
  %v4976 = vsub.f32 1.5, %v4975
  %v4977 = vmul.f32 %v4972, %v4976
  %vm4978 = vweird.f32 %v4910
  %vm4979 = vweird.f32 %v4972
  %vm4980 = vmor %vm4978, %vm4979
  %v4981 = vsel %vm4980, %v4972, %v4977
  %v4982 = vrsqrt.pop %v4911
  %v4983 = vmul.f32 %v4982, %v4911
  %v4984 = vmul.f32 %v4983, %v4982
  %v4985 = vmul.f32 0.5, %v4984
  %v4986 = vsub.f32 1.5, %v4985
  %v4987 = vmul.f32 %v4982, %v4986
  %vm4988 = vweird.f32 %v4911
  %vm4989 = vweird.f32 %v4982
  %vm4990 = vmor %vm4988, %vm4989
  %v4991 = vsel %vm4990, %v4982, %v4987
  %v5000 = vrot.slane %v4931, 7
  %v5001 = vrot.slane %v4941, 6
  %v5002 = vrot.slane %v4951, 5
  %v5003 = vrot.slane %v4961, 4
  %v5004 = vrot.slane %v4971, 3
  %v5005 = vrot.slane %v4981, 2
  %v5006 = vrot.slane %v4991, 1
  %v5007 = vsel %vm2090, %v4921, %v5000
  %v5008 = vsel %vm2741, %v5001, %v5002
  %v5009 = vsel %vm1730, %v5007, %v5008
  %vm5010 = vcmask 1044484
  %v5011 = vsel %vm5010, %v5003, %v5004
  %vm5012 = vcmask 1046534
  %v5013 = vsel %vm5012, %v5005, %v5006
  %vm5014 = vcmask 1045508
  %v5015 = vsel %vm5014, %v5011, %v5013
  %vm5016 = vcmask 1043456
  %v5017 = vsel %vm5016, %v5009, %v5015
  %v5019 = vmul.f32 %v3037, %v5017
  %v5021 = vperm.slane %v5019, 0
  %v5022 = vperm.slane %v5019, 1
  %v5023 = vperm.slane %v5019, 2
  %v5024 = vperm.slane %v5019, 3
  %v5025 = vperm.slane %v5019, 4
  %v5026 = vperm.slane %v5019, 5
  %v5027 = vperm.slane %v5019, 6
  %v5028 = vperm.slane %v5019, 7
  %v5037 = vmul.f32 %v4832, %v5021
  %v5038 = vmul.f32 %v4833, %v5022
  %v5039 = vmul.f32 %v4834, %v5023
  %v5040 = vmul.f32 %v4835, %v5024
  %v5041 = vmul.f32 %v4836, %v5025
  %v5042 = vmul.f32 %v4837, %v5026
  %v5043 = vmul.f32 %v4838, %v5027
  %v5044 = vmul.f32 %v4839, %v5028
  %v5046 = vperm.slane %v3038, 0
  %v5047 = vperm.slane %v3038, 1
  %v5048 = vperm.slane %v3038, 2
  %v5049 = vperm.slane %v3038, 3
  %v5050 = vperm.slane %v3038, 4
  %v5051 = vperm.slane %v3038, 5
  %v5052 = vperm.slane %v3038, 6
  %v5053 = vperm.slane %v3038, 7
  %v5062 = vadd.f32 %v5037, %v5046
  %v5063 = vadd.f32 %v5038, %v5047
  %v5064 = vadd.f32 %v5039, %v5048
  %v5065 = vadd.f32 %v5040, %v5049
  %v5066 = vadd.f32 %v5041, %v5050
  %v5067 = vadd.f32 %v5042, %v5051
  %v5068 = vadd.f32 %v5043, %v5052
  %v5069 = vadd.f32 %v5044, %v5053
  %s5070 = smul.u32 4, 128
  %s5071 = smul.u32 %s5070, 7
  %s5072 = sshll.u32 %s5071, 4
  %5073 = dma.done %s802, %s5072
  %v5074 = vpack.c.bf16 %v5062, %v5062
  %v5075 = vpack.c.bf16 %v5063, %v5063
  %v5076 = vpack.c.bf16 %v5064, %v5064
  %v5077 = vpack.c.bf16 %v5065, %v5065
  %v5078 = vpack.c.bf16 %v5066, %v5066
  %v5079 = vpack.c.bf16 %v5067, %v5067
  %v5080 = vpack.c.bf16 %v5068, %v5068
  %v5081 = vpack.c.bf16 %v5069, %v5069
  %v5082 = vld [vmem:[#allocation6] sm:$0xff]
  %v5083 = vld [vmem:[#allocation6 + $0x8] sm:$0xff]
  %v5084 = vld [vmem:[#allocation6 + $0x10] sm:$0xff]
  %v5085 = vld [vmem:[#allocation6 + $0x18] sm:$0xf]
  %v5086 = vld [vmem:[#allocation6 + $0x1c] sm:$0xff]
  %v5087 = vld [vmem:[#allocation6 + $0x24] sm:$0xff]
  %v5088 = vld [vmem:[#allocation6 + $0x2c] sm:$0xff]
  %v5089 = vld [vmem:[#allocation6 + $0x34] sm:$0xf]
  %v5090 = vld [vmem:[#allocation6 + $0x38] sm:$0xff]
  %v5091 = vld [vmem:[#allocation6 + $0x40] sm:$0xff]
  %v5092 = vld [vmem:[#allocation6 + $0x48] sm:$0xff]
  %v5093 = vld [vmem:[#allocation6 + $0x50] sm:$0xf]
  %v5094 = vld [vmem:[#allocation6 + $0x54] sm:$0xff]
  %v5095 = vld [vmem:[#allocation6 + $0x5c] sm:$0xff]
  %v5096 = vld [vmem:[#allocation6 + $0x64] sm:$0xff]
  %v5097 = vld [vmem:[#allocation6 + $0x6c] sm:$0xf]
  %v5098 = vld [vmem:[#allocation6 + $0x70] sm:$0xff]
  %v5099 = vld [vmem:[#allocation6 + $0x78] sm:$0xff]
  %v5100 = vld [vmem:[#allocation6 + $0x80] sm:$0xff]
  %v5101 = vld [vmem:[#allocation6 + $0x88] sm:$0xf]
  %v5102 = vld [vmem:[#allocation6 + $0x8c] sm:$0xff]
  %v5103 = vld [vmem:[#allocation6 + $0x94] sm:$0xff]
  %v5104 = vld [vmem:[#allocation6 + $0x9c] sm:$0xff]
  %v5105 = vld [vmem:[#allocation6 + $0xa4] sm:$0xf]
  %v5106 = vld [vmem:[#allocation6 + $0xa8] sm:$0xff]
  %v5107 = vld [vmem:[#allocation6 + $0xb0] sm:$0xff]
  %v5108 = vld [vmem:[#allocation6 + $0xb8] sm:$0xff]
  %v5109 = vld [vmem:[#allocation6 + $0xc0] sm:$0xf]
  %v5110 = vld [vmem:[#allocation6 + $0xc4] sm:$0xff]
  %v5111 = vld [vmem:[#allocation6 + $0xcc] sm:$0xff]
  %v5112 = vld [vmem:[#allocation6 + $0xd4] sm:$0xff]
  %v5113 = vld [vmem:[#allocation6 + $0xdc] sm:$0xf]
  %v5114 = vld [vmem:[#allocation6 + $0xe0] sm:$0xff]
  %v5115 = vld [vmem:[#allocation6 + $0xe8] sm:$0xff]
  %v5116 = vld [vmem:[#allocation6 + $0xf0] sm:$0xff]
  %v5117 = vld [vmem:[#allocation6 + $0xf8] sm:$0xf]
  %v5118 = vld [vmem:[#allocation6 + $0xfc] sm:$0xff]
  %v5119 = vld [vmem:[#allocation6 + $0x104] sm:$0xff]
  %v5120 = vld [vmem:[#allocation6 + $0x10c] sm:$0xff]
  %v5121 = vld [vmem:[#allocation6 + $0x114] sm:$0xf]
  %v5122 = vld [vmem:[#allocation6 + $0x118] sm:$0xff]
  %v5123 = vld [vmem:[#allocation6 + $0x120] sm:$0xff]
  %v5124 = vld [vmem:[#allocation6 + $0x128] sm:$0xff]
  %v5125 = vld [vmem:[#allocation6 + $0x130] sm:$0xf]
  %v5126 = vld [vmem:[#allocation6 + $0x134] sm:$0xff]
  %v5127 = vld [vmem:[#allocation6 + $0x13c] sm:$0xff]
  %v5128 = vld [vmem:[#allocation6 + $0x144] sm:$0xff]
  %v5129 = vld [vmem:[#allocation6 + $0x14c] sm:$0xf]
  %v5130 = vld [vmem:[#allocation6 + $0x150] sm:$0xff]
  %v5131 = vld [vmem:[#allocation6 + $0x158] sm:$0xff]
  %v5132 = vld [vmem:[#allocation6 + $0x160] sm:$0xff]
  %v5133 = vld [vmem:[#allocation6 + $0x168] sm:$0xf]
  %v5134 = vld [vmem:[#allocation6 + $0x16c] sm:$0xff]
  %v5135 = vld [vmem:[#allocation6 + $0x174] sm:$0xff]
  %v5136 = vld [vmem:[#allocation6 + $0x17c] sm:$0xff]
  %v5137 = vld [vmem:[#allocation6 + $0x184] sm:$0xf]
  %v5138 = vld [vmem:[#allocation6 + $0x188] sm:$0xff]
  %v5139 = vld [vmem:[#allocation6 + $0x190] sm:$0xff]
  %v5140 = vld [vmem:[#allocation6 + $0x198] sm:$0xff]
  %v5141 = vld [vmem:[#allocation6 + $0x1a0] sm:$0xf]
  %v5142 = vld [vmem:[#allocation6 + $0x1a4] sm:$0xff]
  %v5143 = vld [vmem:[#allocation6 + $0x1ac] sm:$0xff]
  %v5144 = vld [vmem:[#allocation6 + $0x1b4] sm:$0xff]
  %v5145 = vld [vmem:[#allocation6 + $0x1bc] sm:$0xf]
  %v5146 = vld [vmem:[#allocation6 + $0x1c0] sm:$0xff]
  %v5147 = vld [vmem:[#allocation6 + $0x1c8] sm:$0xff]
  %v5148 = vld [vmem:[#allocation6 + $0x1d0] sm:$0xff]
  %v5149 = vld [vmem:[#allocation6 + $0x1d8] sm:$0xf]
  %v5150 = vld [vmem:[#allocation6 + $0x1dc] sm:$0xff]
  %v5151 = vld [vmem:[#allocation6 + $0x1e4] sm:$0xff]
  %v5152 = vld [vmem:[#allocation6 + $0x1ec] sm:$0xff]
  %v5153 = vld [vmem:[#allocation6 + $0x1f4] sm:$0xf]
  %v5154 = vld [vmem:[#allocation6 + $0x1f8] sm:$0xff]
  %v5155 = vld [vmem:[#allocation6 + $0x200] sm:$0xff]
  %v5156 = vld [vmem:[#allocation6 + $0x208] sm:$0xff]
  %v5157 = vld [vmem:[#allocation6 + $0x210] sm:$0xf]
  %v5158 = vld [vmem:[#allocation6 + $0x214] sm:$0xff]
  %v5159 = vld [vmem:[#allocation6 + $0x21c] sm:$0xff]
  %v5160 = vld [vmem:[#allocation6 + $0x224] sm:$0xff]
  %v5161 = vld [vmem:[#allocation6 + $0x22c] sm:$0xf]
  %v5162 = vld [vmem:[#allocation6 + $0x230] sm:$0xff]
  %v5163 = vld [vmem:[#allocation6 + $0x238] sm:$0xff]
  %v5164 = vld [vmem:[#allocation6 + $0x240] sm:$0xff]
  %v5165 = vld [vmem:[#allocation6 + $0x248] sm:$0xf]
  %v5166 = vld [vmem:[#allocation6 + $0x24c] sm:$0xff]
  %v5167 = vld [vmem:[#allocation6 + $0x254] sm:$0xff]
  %v5168 = vld [vmem:[#allocation6 + $0x25c] sm:$0xff]
  %v5169 = vld [vmem:[#allocation6 + $0x264] sm:$0xf]
  %v5170 = vld [vmem:[#allocation6 + $0x268] sm:$0xff]
  %v5171 = vld [vmem:[#allocation6 + $0x270] sm:$0xff]
  %v5172 = vld [vmem:[#allocation6 + $0x278] sm:$0xff]
  %v5173 = vld [vmem:[#allocation6 + $0x280] sm:$0xf]
  %v5174 = vld [vmem:[#allocation6 + $0x284] sm:$0xff]
  %v5175 = vld [vmem:[#allocation6 + $0x28c] sm:$0xff]
  %v5176 = vld [vmem:[#allocation6 + $0x294] sm:$0xff]
  %v5177 = vld [vmem:[#allocation6 + $0x29c] sm:$0xf]
  %v5178 = vld [vmem:[#allocation6 + $0x2a0] sm:$0xff]
  %v5179 = vld [vmem:[#allocation6 + $0x2a8] sm:$0xff]
  %v5180 = vld [vmem:[#allocation6 + $0x2b0] sm:$0xff]
  %v5181 = vld [vmem:[#allocation6 + $0x2b8] sm:$0xf]
  %v5182 = vld [vmem:[#allocation6 + $0x2bc] sm:$0xff]
  %v5183 = vld [vmem:[#allocation6 + $0x2c4] sm:$0xff]
  %v5184 = vld [vmem:[#allocation6 + $0x2cc] sm:$0xff]
  %v5185 = vld [vmem:[#allocation6 + $0x2d4] sm:$0xf]
  %v5186 = vld [vmem:[#allocation6 + $0x2d8] sm:$0xff]
  %v5187 = vld [vmem:[#allocation6 + $0x2e0] sm:$0xff]
  %v5188 = vld [vmem:[#allocation6 + $0x2e8] sm:$0xff]
  %v5189 = vld [vmem:[#allocation6 + $0x2f0] sm:$0xf]
  %v5190 = vld [vmem:[#allocation6 + $0x2f4] sm:$0xff]
  %v5191 = vld [vmem:[#allocation6 + $0x2fc] sm:$0xff]
  %v5192 = vld [vmem:[#allocation6 + $0x304] sm:$0xff]
  %v5193 = vld [vmem:[#allocation6 + $0x30c] sm:$0xf]
  %v5194 = vld [vmem:[#allocation6 + $0x310] sm:$0xff]
  %v5195 = vld [vmem:[#allocation6 + $0x318] sm:$0xff]
  %v5196 = vld [vmem:[#allocation6 + $0x320] sm:$0xff]
  %v5197 = vld [vmem:[#allocation6 + $0x328] sm:$0xf]
  %v5198 = vld [vmem:[#allocation6 + $0x32c] sm:$0xff]
  %v5199 = vld [vmem:[#allocation6 + $0x334] sm:$0xff]
  %v5200 = vld [vmem:[#allocation6 + $0x33c] sm:$0xff]
  %v5201 = vld [vmem:[#allocation6 + $0x344] sm:$0xf]
  %v5202 = vld [vmem:[#allocation6 + $0x348] sm:$0xff]
  %v5203 = vld [vmem:[#allocation6 + $0x350] sm:$0xff]
  %v5204 = vld [vmem:[#allocation6 + $0x358] sm:$0xff]
  %v5205 = vld [vmem:[#allocation6 + $0x360] sm:$0xf]
  %v5206 = vld [vmem:[#allocation6 + $0x364] sm:$0xff]
  %v5207 = vld [vmem:[#allocation6 + $0x36c] sm:$0xff]
  %v5208 = vld [vmem:[#allocation6 + $0x374] sm:$0xff]
  %v5209 = vld [vmem:[#allocation6 + $0x37c] sm:$0xf]
  %v5210 = vld [vmem:[#allocation6 + $0x380] sm:$0xff]
  %v5211 = vld [vmem:[#allocation6 + $0x388] sm:$0xff]
  %v5212 = vld [vmem:[#allocation6 + $0x390] sm:$0xff]
  %v5213 = vld [vmem:[#allocation6 + $0x398] sm:$0xf]
  %v5214 = vld [vmem:[#allocation6 + $0x39c] sm:$0xff]
  %v5215 = vld [vmem:[#allocation6 + $0x3a4] sm:$0xff]
  %v5216 = vld [vmem:[#allocation6 + $0x3ac] sm:$0xff]
  %v5217 = vld [vmem:[#allocation6 + $0x3b4] sm:$0xf]
  %v5218 = vld [vmem:[#allocation6 + $0x3b8] sm:$0xff]
  %v5219 = vld [vmem:[#allocation6 + $0x3c0] sm:$0xff]
  %v5220 = vld [vmem:[#allocation6 + $0x3c8] sm:$0xff]
  %v5221 = vld [vmem:[#allocation6 + $0x3d0] sm:$0xf]
  %v5222 = vld [vmem:[#allocation6 + $0x3d4] sm:$0xff]
  %v5223 = vld [vmem:[#allocation6 + $0x3dc] sm:$0xff]
  %v5224 = vld [vmem:[#allocation6 + $0x3e4] sm:$0xff]
  %v5225 = vld [vmem:[#allocation6 + $0x3ec] sm:$0xf]
  %v5226 = vld [vmem:[#allocation6 + $0x3f0] sm:$0xff]
  %v5227 = vld [vmem:[#allocation6 + $0x3f8] sm:$0xff]
  %v5228 = vld [vmem:[#allocation6 + $0x400] sm:$0xff]
  %v5229 = vld [vmem:[#allocation6 + $0x408] sm:$0xf]
  %v5230 = vld [vmem:[#allocation6 + $0x40c] sm:$0xff]
  %v5231 = vld [vmem:[#allocation6 + $0x414] sm:$0xff]
  %v5232 = vld [vmem:[#allocation6 + $0x41c] sm:$0xff]
  %v5233 = vld [vmem:[#allocation6 + $0x424] sm:$0xf]
  %v5234 = vld [vmem:[#allocation6 + $0x428] sm:$0xff]
  %v5235 = vld [vmem:[#allocation6 + $0x430] sm:$0xff]
  %v5236 = vld [vmem:[#allocation6 + $0x438] sm:$0xff]
  %v5237 = vld [vmem:[#allocation6 + $0x440] sm:$0xf]
  %v5238 = vld [vmem:[#allocation6 + $0x444] sm:$0xff]
  %v5239 = vld [vmem:[#allocation6 + $0x44c] sm:$0xff]
  %v5240 = vld [vmem:[#allocation6 + $0x454] sm:$0xff]
  %v5241 = vld [vmem:[#allocation6 + $0x45c] sm:$0xf]
  %v5242 = vld [vmem:[#allocation6 + $0x460] sm:$0xff]
  %v5243 = vld [vmem:[#allocation6 + $0x468] sm:$0xff]
  %v5244 = vld [vmem:[#allocation6 + $0x470] sm:$0xff]
  %v5245 = vld [vmem:[#allocation6 + $0x478] sm:$0xf]
  %v5246 = vld [vmem:[#allocation6 + $0x47c] sm:$0xff]
  %v5247 = vld [vmem:[#allocation6 + $0x484] sm:$0xff]
  %v5248 = vld [vmem:[#allocation6 + $0x48c] sm:$0xff]
  %v5249 = vld [vmem:[#allocation6 + $0x494] sm:$0xf]
  %v5250 = vld [vmem:[#allocation6 + $0x498] sm:$0xff]
  %v5251 = vld [vmem:[#allocation6 + $0x4a0] sm:$0xff]
  %v5252 = vld [vmem:[#allocation6 + $0x4a8] sm:$0xff]
  %v5253 = vld [vmem:[#allocation6 + $0x4b0] sm:$0xf]
  %v5254 = vld [vmem:[#allocation6 + $0x4b4] sm:$0xff]
  %v5255 = vld [vmem:[#allocation6 + $0x4bc] sm:$0xff]
  %v5256 = vld [vmem:[#allocation6 + $0x4c4] sm:$0xff]
  %v5257 = vld [vmem:[#allocation6 + $0x4cc] sm:$0xf]
  %v5258 = vld [vmem:[#allocation6 + $0x4d0] sm:$0xff]
  %v5259 = vld [vmem:[#allocation6 + $0x4d8] sm:$0xff]
  %v5260 = vld [vmem:[#allocation6 + $0x4e0] sm:$0xff]
  %v5261 = vld [vmem:[#allocation6 + $0x4e8] sm:$0xf]
  %v5262 = vld [vmem:[#allocation6 + $0x4ec] sm:$0xff]
  %v5263 = vld [vmem:[#allocation6 + $0x4f4] sm:$0xff]
  %v5264 = vld [vmem:[#allocation6 + $0x4fc] sm:$0xff]
  %v5265 = vld [vmem:[#allocation6 + $0x504] sm:$0xf]
  %v5266 = vld [vmem:[#allocation6 + $0x508] sm:$0xff]
  %v5267 = vld [vmem:[#allocation6 + $0x510] sm:$0xff]
  %v5268 = vld [vmem:[#allocation6 + $0x518] sm:$0xff]
  %v5269 = vld [vmem:[#allocation6 + $0x520] sm:$0xf]
  %v5270 = vld [vmem:[#allocation6 + $0x524] sm:$0xff]
  %v5271 = vld [vmem:[#allocation6 + $0x52c] sm:$0xff]
  %v5272 = vld [vmem:[#allocation6 + $0x534] sm:$0xff]
  %v5273 = vld [vmem:[#allocation6 + $0x53c] sm:$0xf]
  %v5274 = vld [vmem:[#allocation6 + $0x540] sm:$0xff]
  %v5275 = vld [vmem:[#allocation6 + $0x548] sm:$0xff]
  %v5276 = vld [vmem:[#allocation6 + $0x550] sm:$0xff]
  %v5277 = vld [vmem:[#allocation6 + $0x558] sm:$0xf]
  %v5278 = vld [vmem:[#allocation6 + $0x55c] sm:$0xff]
  %v5279 = vld [vmem:[#allocation6 + $0x564] sm:$0xff]
  %v5280 = vld [vmem:[#allocation6 + $0x56c] sm:$0xff]
  %v5281 = vld [vmem:[#allocation6 + $0x574] sm:$0xf]
  %v5282 = vld [vmem:[#allocation6 + $0x578] sm:$0xff]
  %v5283 = vld [vmem:[#allocation6 + $0x580] sm:$0xff]
  %v5284 = vld [vmem:[#allocation6 + $0x588] sm:$0xff]
  %v5285 = vld [vmem:[#allocation6 + $0x590] sm:$0xf]
  %v5286 = vld [vmem:[#allocation6 + $0x594] sm:$0xff]
  %v5287 = vld [vmem:[#allocation6 + $0x59c] sm:$0xff]
  %v5288 = vld [vmem:[#allocation6 + $0x5a4] sm:$0xff]
  %v5289 = vld [vmem:[#allocation6 + $0x5ac] sm:$0xf]
  %v5290 = vld [vmem:[#allocation6 + $0x5b0] sm:$0xff]
  %v5291 = vld [vmem:[#allocation6 + $0x5b8] sm:$0xff]
  %v5292 = vld [vmem:[#allocation6 + $0x5c0] sm:$0xff]
  %v5293 = vld [vmem:[#allocation6 + $0x5c8] sm:$0xf]
  %v5294 = vld [vmem:[#allocation6 + $0x5cc] sm:$0xff]
  %v5295 = vld [vmem:[#allocation6 + $0x5d4] sm:$0xff]
  %v5296 = vld [vmem:[#allocation6 + $0x5dc] sm:$0xff]
  %v5297 = vld [vmem:[#allocation6 + $0x5e4] sm:$0xf]
  %v5298 = vld [vmem:[#allocation6 + $0x5e8] sm:$0xff]
  %v5299 = vld [vmem:[#allocation6 + $0x5f0] sm:$0xff]
  %v5300 = vld [vmem:[#allocation6 + $0x5f8] sm:$0xff]
  %v5301 = vld [vmem:[#allocation6 + $0x600] sm:$0xf]
  %v5302 = vld [vmem:[#allocation6 + $0x604] sm:$0xff]
  %v5303 = vld [vmem:[#allocation6 + $0x60c] sm:$0xff]
  %v5304 = vld [vmem:[#allocation6 + $0x614] sm:$0xff]
  %v5305 = vld [vmem:[#allocation6 + $0x61c] sm:$0xf]
  %v5306 = vld [vmem:[#allocation6 + $0x620] sm:$0xff]
  %v5307 = vld [vmem:[#allocation6 + $0x628] sm:$0xff]
  %v5308 = vld [vmem:[#allocation6 + $0x630] sm:$0xff]
  %v5309 = vld [vmem:[#allocation6 + $0x638] sm:$0xf]
  %v5310 = vld [vmem:[#allocation6 + $0x63c] sm:$0xff]
  %v5311 = vld [vmem:[#allocation6 + $0x644] sm:$0xff]
  %v5312 = vld [vmem:[#allocation6 + $0x64c] sm:$0xff]
  %v5313 = vld [vmem:[#allocation6 + $0x654] sm:$0xf]
  %v5314 = vld [vmem:[#allocation6 + $0x658] sm:$0xff]
  %v5315 = vld [vmem:[#allocation6 + $0x660] sm:$0xff]
  %v5316 = vld [vmem:[#allocation6 + $0x668] sm:$0xff]
  %v5317 = vld [vmem:[#allocation6 + $0x670] sm:$0xf]
  %v5318 = vld [vmem:[#allocation6 + $0x674] sm:$0xff]
  %v5319 = vld [vmem:[#allocation6 + $0x67c] sm:$0xff]
  %v5320 = vld [vmem:[#allocation6 + $0x684] sm:$0xff]
  %v5321 = vld [vmem:[#allocation6 + $0x68c] sm:$0xf]
  %v5322 = vld [vmem:[#allocation6 + $0x690] sm:$0xff]
  %v5323 = vld [vmem:[#allocation6 + $0x698] sm:$0xff]
  %v5324 = vld [vmem:[#allocation6 + $0x6a0] sm:$0xff]
  %v5325 = vld [vmem:[#allocation6 + $0x6a8] sm:$0xf]
  %v5326 = vld [vmem:[#allocation6 + $0x6ac] sm:$0xff]
  %v5327 = vld [vmem:[#allocation6 + $0x6b4] sm:$0xff]
  %v5328 = vld [vmem:[#allocation6 + $0x6bc] sm:$0xff]
  %v5329 = vld [vmem:[#allocation6 + $0x6c4] sm:$0xf]
  %v5330 = vld [vmem:[#allocation6 + $0x6c8] sm:$0xff]
  %v5331 = vld [vmem:[#allocation6 + $0x6d0] sm:$0xff]
  %v5332 = vld [vmem:[#allocation6 + $0x6d8] sm:$0xff]
  %v5333 = vld [vmem:[#allocation6 + $0x6e0] sm:$0xf]
  %v5334 = vld [vmem:[#allocation6 + $0x6e4] sm:$0xff]
  %v5335 = vld [vmem:[#allocation6 + $0x6ec] sm:$0xff]
  %v5336 = vld [vmem:[#allocation6 + $0x6f4] sm:$0xff]
  %v5337 = vld [vmem:[#allocation6 + $0x6fc] sm:$0xf]
  %v5338 = vld [vmem:[#allocation6 + $0x700] sm:$0xff]
  %v5339 = vld [vmem:[#allocation6 + $0x708] sm:$0xff]
  %v5340 = vld [vmem:[#allocation6 + $0x710] sm:$0xff]
  %v5341 = vld [vmem:[#allocation6 + $0x718] sm:$0xf]
  %v5342 = vld [vmem:[#allocation6 + $0x71c] sm:$0xff]
  %v5343 = vld [vmem:[#allocation6 + $0x724] sm:$0xff]
  %v5344 = vld [vmem:[#allocation6 + $0x72c] sm:$0xff]
  %v5345 = vld [vmem:[#allocation6 + $0x734] sm:$0xf]
  %v5346 = vld [vmem:[#allocation6 + $0x738] sm:$0xff]
  %v5347 = vld [vmem:[#allocation6 + $0x740] sm:$0xff]
  %v5348 = vld [vmem:[#allocation6 + $0x748] sm:$0xff]
  %v5349 = vld [vmem:[#allocation6 + $0x750] sm:$0xf]
  %v5350 = vld [vmem:[#allocation6 + $0x754] sm:$0xff]
  %v5351 = vld [vmem:[#allocation6 + $0x75c] sm:$0xff]
  %v5352 = vld [vmem:[#allocation6 + $0x764] sm:$0xff]
  %v5353 = vld [vmem:[#allocation6 + $0x76c] sm:$0xf]
  %v5354 = vld [vmem:[#allocation6 + $0x770] sm:$0xff]
  %v5355 = vld [vmem:[#allocation6 + $0x778] sm:$0xff]
  %v5356 = vld [vmem:[#allocation6 + $0x780] sm:$0xff]
  %v5357 = vld [vmem:[#allocation6 + $0x788] sm:$0xf]
  %v5358 = vld [vmem:[#allocation6 + $0x78c] sm:$0xff]
  %v5359 = vld [vmem:[#allocation6 + $0x794] sm:$0xff]
  %v5360 = vld [vmem:[#allocation6 + $0x79c] sm:$0xff]
  %v5361 = vld [vmem:[#allocation6 + $0x7a4] sm:$0xf]
  %v5362 = vld [vmem:[#allocation6 + $0x7a8] sm:$0xff]
  %v5363 = vld [vmem:[#allocation6 + $0x7b0] sm:$0xff]
  %v5364 = vld [vmem:[#allocation6 + $0x7b8] sm:$0xff]
  %v5365 = vld [vmem:[#allocation6 + $0x7c0] sm:$0xf]
  %v5366 = vld [vmem:[#allocation6 + $0x7c4] sm:$0xff]
  %v5367 = vld [vmem:[#allocation6 + $0x7cc] sm:$0xff]
  %v5368 = vld [vmem:[#allocation6 + $0x7d4] sm:$0xff]
  %v5369 = vld [vmem:[#allocation6 + $0x7dc] sm:$0xf]
  %v5370 = vld [vmem:[#allocation6 + $0x7e0] sm:$0xff]
  %v5371 = vld [vmem:[#allocation6 + $0x7e8] sm:$0xff]
  %v5372 = vld [vmem:[#allocation6 + $0x7f0] sm:$0xff]
  %v5373 = vld [vmem:[#allocation6 + $0x7f8] sm:$0xf]
  %v5374 = vld [vmem:[#allocation6 + $0x7fc] sm:$0xff]
  %v5375 = vld [vmem:[#allocation6 + $0x804] sm:$0xff]
  %v5376 = vld [vmem:[#allocation6 + $0x80c] sm:$0xff]
  %v5377 = vld [vmem:[#allocation6 + $0x814] sm:$0xf]
  %v5378 = vld [vmem:[#allocation6 + $0x818] sm:$0xff]
  %v5379 = vld [vmem:[#allocation6 + $0x820] sm:$0xff]
  %v5380 = vld [vmem:[#allocation6 + $0x828] sm:$0xff]
  %v5381 = vld [vmem:[#allocation6 + $0x830] sm:$0xf]
  %v5382 = vld [vmem:[#allocation6 + $0x834] sm:$0xff]
  %v5383 = vld [vmem:[#allocation6 + $0x83c] sm:$0xff]
  %v5384 = vld [vmem:[#allocation6 + $0x844] sm:$0xff]
  %v5385 = vld [vmem:[#allocation6 + $0x84c] sm:$0xf]
  %v5386 = vld [vmem:[#allocation6 + $0x850] sm:$0xff]
  %v5387 = vld [vmem:[#allocation6 + $0x858] sm:$0xff]
  %v5388 = vld [vmem:[#allocation6 + $0x860] sm:$0xff]
  %v5389 = vld [vmem:[#allocation6 + $0x868] sm:$0xf]
  %v5390 = vld [vmem:[#allocation6 + $0x86c] sm:$0xff]
  %v5391 = vld [vmem:[#allocation6 + $0x874] sm:$0xff]
  %v5392 = vld [vmem:[#allocation6 + $0x87c] sm:$0xff]
  %v5393 = vld [vmem:[#allocation6 + $0x884] sm:$0xf]
  %v5394 = vld [vmem:[#allocation6 + $0x888] sm:$0xff]
  %v5395 = vld [vmem:[#allocation6 + $0x890] sm:$0xff]
  %v5396 = vld [vmem:[#allocation6 + $0x898] sm:$0xff]
  %v5397 = vld [vmem:[#allocation6 + $0x8a0] sm:$0xf]
  %v5398 = vld [vmem:[#allocation6 + $0x8a4] sm:$0xff]
  %v5399 = vld [vmem:[#allocation6 + $0x8ac] sm:$0xff]
  %v5400 = vld [vmem:[#allocation6 + $0x8b4] sm:$0xff]
  %v5401 = vld [vmem:[#allocation6 + $0x8bc] sm:$0xf]
  %v5402 = vld [vmem:[#allocation6 + $0x8c0] sm:$0xff]
  %v5403 = vld [vmem:[#allocation6 + $0x8c8] sm:$0xff]
  %v5404 = vld [vmem:[#allocation6 + $0x8d0] sm:$0xff]
  %v5405 = vld [vmem:[#allocation6 + $0x8d8] sm:$0xf]
  %v5406 = vld [vmem:[#allocation6 + $0x8dc] sm:$0xff]
  %v5407 = vld [vmem:[#allocation6 + $0x8e4] sm:$0xff]
  %v5408 = vld [vmem:[#allocation6 + $0x8ec] sm:$0xff]
  %v5409 = vld [vmem:[#allocation6 + $0x8f4] sm:$0xf]
  %v5410 = vld [vmem:[#allocation6 + $0x8f8] sm:$0xff]
  %v5411 = vld [vmem:[#allocation6 + $0x900] sm:$0xff]
  %v5412 = vld [vmem:[#allocation6 + $0x908] sm:$0xff]
  %v5413 = vld [vmem:[#allocation6 + $0x910] sm:$0xf]
  %v5414 = vld [vmem:[#allocation6 + $0x914] sm:$0xff]
  %v5415 = vld [vmem:[#allocation6 + $0x91c] sm:$0xff]
  %v5416 = vld [vmem:[#allocation6 + $0x924] sm:$0xff]
  %v5417 = vld [vmem:[#allocation6 + $0x92c] sm:$0xf]
  %v5418 = vld [vmem:[#allocation6 + $0x930] sm:$0xff]
  %v5419 = vld [vmem:[#allocation6 + $0x938] sm:$0xff]
  %v5420 = vld [vmem:[#allocation6 + $0x940] sm:$0xff]
  %v5421 = vld [vmem:[#allocation6 + $0x948] sm:$0xf]
  %v5422 = vld [vmem:[#allocation6 + $0x94c] sm:$0xff]
  %v5423 = vld [vmem:[#allocation6 + $0x954] sm:$0xff]
  %v5424 = vld [vmem:[#allocation6 + $0x95c] sm:$0xff]
  %v5425 = vld [vmem:[#allocation6 + $0x964] sm:$0xf]
  %v5426 = vld [vmem:[#allocation6 + $0x968] sm:$0xff]
  %v5427 = vld [vmem:[#allocation6 + $0x970] sm:$0xff]
  %v5428 = vld [vmem:[#allocation6 + $0x978] sm:$0xff]
  %v5429 = vld [vmem:[#allocation6 + $0x980] sm:$0xf]
  %v5430 = vld [vmem:[#allocation6 + $0x984] sm:$0xff]
  %v5431 = vld [vmem:[#allocation6 + $0x98c] sm:$0xff]
  %v5432 = vld [vmem:[#allocation6 + $0x994] sm:$0xff]
  %v5433 = vld [vmem:[#allocation6 + $0x99c] sm:$0xf]
  %v5434 = vld [vmem:[#allocation6 + $0x9a0] sm:$0xff]
  %v5435 = vld [vmem:[#allocation6 + $0x9a8] sm:$0xff]
  %v5436 = vld [vmem:[#allocation6 + $0x9b0] sm:$0xff]
  %v5437 = vld [vmem:[#allocation6 + $0x9b8] sm:$0xf]
  %v5438 = vld [vmem:[#allocation6 + $0x9bc] sm:$0xff]
  %v5439 = vld [vmem:[#allocation6 + $0x9c4] sm:$0xff]
  %v5440 = vld [vmem:[#allocation6 + $0x9cc] sm:$0xff]
  %v5441 = vld [vmem:[#allocation6 + $0x9d4] sm:$0xf]
  %v5442 = vld [vmem:[#allocation6 + $0x9d8] sm:$0xff]
  %v5443 = vld [vmem:[#allocation6 + $0x9e0] sm:$0xff]
  %v5444 = vld [vmem:[#allocation6 + $0x9e8] sm:$0xff]
  %v5445 = vld [vmem:[#allocation6 + $0x9f0] sm:$0xf]
  %v5446 = vld [vmem:[#allocation6 + $0x9f4] sm:$0xff]
  %v5447 = vld [vmem:[#allocation6 + $0x9fc] sm:$0xff]
  %v5448 = vld [vmem:[#allocation6 + $0xa04] sm:$0xff]
  %v5449 = vld [vmem:[#allocation6 + $0xa0c] sm:$0xf]
  %v5450 = vld [vmem:[#allocation6 + $0xa10] sm:$0xff]
  %v5451 = vld [vmem:[#allocation6 + $0xa18] sm:$0xff]
  %v5452 = vld [vmem:[#allocation6 + $0xa20] sm:$0xff]
  %v5453 = vld [vmem:[#allocation6 + $0xa28] sm:$0xf]
  %v5454 = vld [vmem:[#allocation6 + $0xa2c] sm:$0xff]
  %v5455 = vld [vmem:[#allocation6 + $0xa34] sm:$0xff]
  %v5456 = vld [vmem:[#allocation6 + $0xa3c] sm:$0xff]
  %v5457 = vld [vmem:[#allocation6 + $0xa44] sm:$0xf]
  %v5458 = vld [vmem:[#allocation6 + $0xa48] sm:$0xff]
  %v5459 = vld [vmem:[#allocation6 + $0xa50] sm:$0xff]
  %v5460 = vld [vmem:[#allocation6 + $0xa58] sm:$0xff]
  %v5461 = vld [vmem:[#allocation6 + $0xa60] sm:$0xf]
  %v5462 = vld [vmem:[#allocation6 + $0xa64] sm:$0xff]
  %v5463 = vld [vmem:[#allocation6 + $0xa6c] sm:$0xff]
  %v5464 = vld [vmem:[#allocation6 + $0xa74] sm:$0xff]
  %v5465 = vld [vmem:[#allocation6 + $0xa7c] sm:$0xf]
  %v5466 = vld [vmem:[#allocation6 + $0xa80] sm:$0xff]
  %v5467 = vld [vmem:[#allocation6 + $0xa88] sm:$0xff]
  %v5468 = vld [vmem:[#allocation6 + $0xa90] sm:$0xff]
  %v5469 = vld [vmem:[#allocation6 + $0xa98] sm:$0xf]
  %v5470 = vld [vmem:[#allocation6 + $0xa9c] sm:$0xff]
  %v5471 = vld [vmem:[#allocation6 + $0xaa4] sm:$0xff]
  %v5472 = vld [vmem:[#allocation6 + $0xaac] sm:$0xff]
  %v5473 = vld [vmem:[#allocation6 + $0xab4] sm:$0xf]
  %v5474 = vld [vmem:[#allocation6 + $0xab8] sm:$0xff]
  %v5475 = vld [vmem:[#allocation6 + $0xac0] sm:$0xff]
  %v5476 = vld [vmem:[#allocation6 + $0xac8] sm:$0xff]
  %v5477 = vld [vmem:[#allocation6 + $0xad0] sm:$0xf]
  %v5478 = vld [vmem:[#allocation6 + $0xad4] sm:$0xff]
  %v5479 = vld [vmem:[#allocation6 + $0xadc] sm:$0xff]
  %v5480 = vld [vmem:[#allocation6 + $0xae4] sm:$0xff]
  %v5481 = vld [vmem:[#allocation6 + $0xaec] sm:$0xf]
  %v5482 = vld [vmem:[#allocation6 + $0xaf0] sm:$0xff]
  %v5483 = vld [vmem:[#allocation6 + $0xaf8] sm:$0xff]
  %v5484 = vld [vmem:[#allocation6 + $0xb00] sm:$0xff]
  %v5485 = vld [vmem:[#allocation6 + $0xb08] sm:$0xf]
  %v5486 = vld [vmem:[#allocation6 + $0xb0c] sm:$0xff]
  %v5487 = vld [vmem:[#allocation6 + $0xb14] sm:$0xff]
  %v5488 = vld [vmem:[#allocation6 + $0xb1c] sm:$0xff]
  %v5489 = vld [vmem:[#allocation6 + $0xb24] sm:$0xf]
  %v5490 = vld [vmem:[#allocation6 + $0xb28] sm:$0xff]
  %v5491 = vld [vmem:[#allocation6 + $0xb30] sm:$0xff]
  %v5492 = vld [vmem:[#allocation6 + $0xb38] sm:$0xff]
  %v5493 = vld [vmem:[#allocation6 + $0xb40] sm:$0xf]
  %v5494 = vld [vmem:[#allocation6 + $0xb44] sm:$0xff]
  %v5495 = vld [vmem:[#allocation6 + $0xb4c] sm:$0xff]
  %v5496 = vld [vmem:[#allocation6 + $0xb54] sm:$0xff]
  %v5497 = vld [vmem:[#allocation6 + $0xb5c] sm:$0xf]
  %v5498 = vld [vmem:[#allocation6 + $0xb60] sm:$0xff]
  %v5499 = vld [vmem:[#allocation6 + $0xb68] sm:$0xff]
  %v5500 = vld [vmem:[#allocation6 + $0xb70] sm:$0xff]
  %v5501 = vld [vmem:[#allocation6 + $0xb78] sm:$0xf]
  %v5502 = vld [vmem:[#allocation6 + $0xb7c] sm:$0xff]
  %v5503 = vld [vmem:[#allocation6 + $0xb84] sm:$0xff]
  %v5504 = vld [vmem:[#allocation6 + $0xb8c] sm:$0xff]
  %v5505 = vld [vmem:[#allocation6 + $0xb94] sm:$0xf]
  %v5506 = vld [vmem:[#allocation6 + $0xb98] sm:$0xff]
  %v5507 = vld [vmem:[#allocation6 + $0xba0] sm:$0xff]
  %v5508 = vld [vmem:[#allocation6 + $0xba8] sm:$0xff]
  %v5509 = vld [vmem:[#allocation6 + $0xbb0] sm:$0xf]
  %v5510 = vld [vmem:[#allocation6 + $0xbb4] sm:$0xff]
  %v5511 = vld [vmem:[#allocation6 + $0xbbc] sm:$0xff]
  %v5512 = vld [vmem:[#allocation6 + $0xbc4] sm:$0xff]
  %v5513 = vld [vmem:[#allocation6 + $0xbcc] sm:$0xf]
  %v5514 = vld [vmem:[#allocation6 + $0xbd0] sm:$0xff]
  %v5515 = vld [vmem:[#allocation6 + $0xbd8] sm:$0xff]
  %v5516 = vld [vmem:[#allocation6 + $0xbe0] sm:$0xff]
  %v5517 = vld [vmem:[#allocation6 + $0xbe8] sm:$0xf]
  %v5518 = vld [vmem:[#allocation6 + $0xbec] sm:$0xff]
  %v5519 = vld [vmem:[#allocation6 + $0xbf4] sm:$0xff]
  %v5520 = vld [vmem:[#allocation6 + $0xbfc] sm:$0xff]
  %v5521 = vld [vmem:[#allocation6 + $0xc04] sm:$0xf]
  %v5522 = vld [vmem:[#allocation6 + $0xc08] sm:$0xff]
  %v5523 = vld [vmem:[#allocation6 + $0xc10] sm:$0xff]
  %v5524 = vld [vmem:[#allocation6 + $0xc18] sm:$0xff]
  %v5525 = vld [vmem:[#allocation6 + $0xc20] sm:$0xf]
  %v5526 = vld [vmem:[#allocation6 + $0xc24] sm:$0xff]
  %v5527 = vld [vmem:[#allocation6 + $0xc2c] sm:$0xff]
  %v5528 = vld [vmem:[#allocation6 + $0xc34] sm:$0xff]
  %v5529 = vld [vmem:[#allocation6 + $0xc3c] sm:$0xf]
  %v5530 = vld [vmem:[#allocation6 + $0xc40] sm:$0xff]
  %v5531 = vld [vmem:[#allocation6 + $0xc48] sm:$0xff]
  %v5532 = vld [vmem:[#allocation6 + $0xc50] sm:$0xff]
  %v5533 = vld [vmem:[#allocation6 + $0xc58] sm:$0xf]
  %v5534 = vld [vmem:[#allocation6 + $0xc5c] sm:$0xff]
  %v5535 = vld [vmem:[#allocation6 + $0xc64] sm:$0xff]
  %v5536 = vld [vmem:[#allocation6 + $0xc6c] sm:$0xff]
  %v5537 = vld [vmem:[#allocation6 + $0xc74] sm:$0xf]
  %v5538 = vld [vmem:[#allocation6 + $0xc78] sm:$0xff]
  %v5539 = vld [vmem:[#allocation6 + $0xc80] sm:$0xff]
  %v5540 = vld [vmem:[#allocation6 + $0xc88] sm:$0xff]
  %v5541 = vld [vmem:[#allocation6 + $0xc90] sm:$0xf]
  %v5542 = vld [vmem:[#allocation6 + $0xc94] sm:$0xff]
  %v5543 = vld [vmem:[#allocation6 + $0xc9c] sm:$0xff]
  %v5544 = vld [vmem:[#allocation6 + $0xca4] sm:$0xff]
  %v5545 = vld [vmem:[#allocation6 + $0xcac] sm:$0xf]
  %v5546 = vld [vmem:[#allocation6 + $0xcb0] sm:$0xff]
  %v5547 = vld [vmem:[#allocation6 + $0xcb8] sm:$0xff]
  %v5548 = vld [vmem:[#allocation6 + $0xcc0] sm:$0xff]
  %v5549 = vld [vmem:[#allocation6 + $0xcc8] sm:$0xf]
  %v5550 = vld [vmem:[#allocation6 + $0xccc] sm:$0xff]
  %v5551 = vld [vmem:[#allocation6 + $0xcd4] sm:$0xff]
  %v5552 = vld [vmem:[#allocation6 + $0xcdc] sm:$0xff]
  %v5553 = vld [vmem:[#allocation6 + $0xce4] sm:$0xf]
  %v5554 = vld [vmem:[#allocation6 + $0xce8] sm:$0xff]
  %v5555 = vld [vmem:[#allocation6 + $0xcf0] sm:$0xff]
  %v5556 = vld [vmem:[#allocation6 + $0xcf8] sm:$0xff]
  %v5557 = vld [vmem:[#allocation6 + $0xd00] sm:$0xf]
  %v5558 = vld [vmem:[#allocation6 + $0xd04] sm:$0xff]
  %v5559 = vld [vmem:[#allocation6 + $0xd0c] sm:$0xff]
  %v5560 = vld [vmem:[#allocation6 + $0xd14] sm:$0xff]
  %v5561 = vld [vmem:[#allocation6 + $0xd1c] sm:$0xf]
  %v5562 = vld [vmem:[#allocation6 + $0xd20] sm:$0xff]
  %v5563 = vld [vmem:[#allocation6 + $0xd28] sm:$0xff]
  %v5564 = vld [vmem:[#allocation6 + $0xd30] sm:$0xff]
  %v5565 = vld [vmem:[#allocation6 + $0xd38] sm:$0xf]
  %v5566 = vld [vmem:[#allocation6 + $0xd3c] sm:$0xff]
  %v5567 = vld [vmem:[#allocation6 + $0xd44] sm:$0xff]
  %v5568 = vld [vmem:[#allocation6 + $0xd4c] sm:$0xff]
  %v5569 = vld [vmem:[#allocation6 + $0xd54] sm:$0xf]
  %v5570 = vld [vmem:[#allocation6 + $0xd58] sm:$0xff]
  %v5571 = vld [vmem:[#allocation6 + $0xd60] sm:$0xff]
  %v5572 = vld [vmem:[#allocation6 + $0xd68] sm:$0xff]
  %v5573 = vld [vmem:[#allocation6 + $0xd70] sm:$0xf]
  %v5574 = vld [vmem:[#allocation6 + $0xd74] sm:$0xff]
  %v5575 = vld [vmem:[#allocation6 + $0xd7c] sm:$0xff]
  %v5576 = vld [vmem:[#allocation6 + $0xd84] sm:$0xff]
  %v5577 = vld [vmem:[#allocation6 + $0xd8c] sm:$0xf]
  %v5578 = vld [vmem:[#allocation6 + $0xd90] sm:$0xff]
  %v5579 = vld [vmem:[#allocation6 + $0xd98] sm:$0xff]
  %v5580 = vld [vmem:[#allocation6 + $0xda0] sm:$0xff]
  %v5581 = vld [vmem:[#allocation6 + $0xda8] sm:$0xf]
  %v5582 = vld [vmem:[#allocation6 + $0xdac] sm:$0xff]
  %v5583 = vld [vmem:[#allocation6 + $0xdb4] sm:$0xff]
  %v5584 = vld [vmem:[#allocation6 + $0xdbc] sm:$0xff]
  %v5585 = vld [vmem:[#allocation6 + $0xdc4] sm:$0xf]
  %v5586 = vld [vmem:[#allocation6 + $0xdc8] sm:$0xff]
  %v5587 = vld [vmem:[#allocation6 + $0xdd0] sm:$0xff]
  %v5588 = vld [vmem:[#allocation6 + $0xdd8] sm:$0xff]
  %v5589 = vld [vmem:[#allocation6 + $0xde0] sm:$0xf]
  %v5590 = vld [vmem:[#allocation6 + $0xde4] sm:$0xff]
  %v5591 = vld [vmem:[#allocation6 + $0xdec] sm:$0xff]
  %v5592 = vld [vmem:[#allocation6 + $0xdf4] sm:$0xff]
  %v5593 = vld [vmem:[#allocation6 + $0xdfc] sm:$0xf]
  %v5594 = vld [vmem:[%s12] sm:$0x7f]
  %v5596 = vperm.slane %v5594, 0
  %v5597 = vperm.slane %v5594, 1
  %v5598 = vperm.slane %v5594, 2
  %v5599 = vperm.slane %v5594, 3
  %v5600 = vperm.slane %v5594, 4
  %v5601 = vperm.slane %v5594, 5
  %v5602 = vperm.slane %v5594, 6
  %v6122 = vunpack.c.l.b16 %v5082
  %v6123 = vunpack.c.h.b16 %v5082
  %v6124 = vunpack.c.l.b16 %v5083
  %v6125 = vunpack.c.h.b16 %v5083
  %v6126 = vunpack.c.l.b16 %v5084
  %v6127 = vunpack.c.h.b16 %v5084
  %v6128 = vunpack.c.l.b16 %v5085
  %v6129 = vunpack.c.l.b16 %v5086
  %v6130 = vunpack.c.h.b16 %v5086
  %v6131 = vunpack.c.l.b16 %v5087
  %v6132 = vunpack.c.h.b16 %v5087
  %v6133 = vunpack.c.l.b16 %v5088
  %v6134 = vunpack.c.h.b16 %v5088
  %v6135 = vunpack.c.l.b16 %v5089
  %v6136 = vunpack.c.l.b16 %v5090
  %v6137 = vunpack.c.h.b16 %v5090
  %v6138 = vunpack.c.l.b16 %v5091
  %v6139 = vunpack.c.h.b16 %v5091
  %v6140 = vunpack.c.l.b16 %v5092
  %v6141 = vunpack.c.h.b16 %v5092
  %v6142 = vunpack.c.l.b16 %v5093
  %v6143 = vunpack.c.l.b16 %v5094
  %v6144 = vunpack.c.h.b16 %v5094
  %v6145 = vunpack.c.l.b16 %v5095
  %v6146 = vunpack.c.h.b16 %v5095
  %v6147 = vunpack.c.l.b16 %v5096
  %v6148 = vunpack.c.h.b16 %v5096
  %v6149 = vunpack.c.l.b16 %v5097
  %v6150 = vunpack.c.l.b16 %v5098
  %v6151 = vunpack.c.h.b16 %v5098
  %v6152 = vunpack.c.l.b16 %v5099
  %v6153 = vunpack.c.h.b16 %v5099
  %v6154 = vunpack.c.l.b16 %v5100
  %v6155 = vunpack.c.h.b16 %v5100
  %v6156 = vunpack.c.l.b16 %v5101
  %v6157 = vunpack.c.l.b16 %v5102
  %v6158 = vunpack.c.h.b16 %v5102
  %v6159 = vunpack.c.l.b16 %v5103
  %v6160 = vunpack.c.h.b16 %v5103
  %v6161 = vunpack.c.l.b16 %v5104
  %v6162 = vunpack.c.h.b16 %v5104
  %v6163 = vunpack.c.l.b16 %v5105
  %v6164 = vunpack.c.l.b16 %v5106
  %v6165 = vunpack.c.h.b16 %v5106
  %v6166 = vunpack.c.l.b16 %v5107
  %v6167 = vunpack.c.h.b16 %v5107
  %v6168 = vunpack.c.l.b16 %v5108
  %v6169 = vunpack.c.h.b16 %v5108
  %v6170 = vunpack.c.l.b16 %v5109
  %v6171 = vunpack.c.l.b16 %v5110
  %v6172 = vunpack.c.h.b16 %v5110
  %v6173 = vunpack.c.l.b16 %v5111
  %v6174 = vunpack.c.h.b16 %v5111
  %v6175 = vunpack.c.l.b16 %v5112
  %v6176 = vunpack.c.h.b16 %v5112
  %v6177 = vunpack.c.l.b16 %v5113
  %v6178 = vunpack.c.l.b16 %v5114
  %v6179 = vunpack.c.h.b16 %v5114
  %v6180 = vunpack.c.l.b16 %v5115
  %v6181 = vunpack.c.h.b16 %v5115
  %v6182 = vunpack.c.l.b16 %v5116
  %v6183 = vunpack.c.h.b16 %v5116
  %v6184 = vunpack.c.l.b16 %v5117
  %v6185 = vunpack.c.l.b16 %v5118
  %v6186 = vunpack.c.h.b16 %v5118
  %v6187 = vunpack.c.l.b16 %v5119
  %v6188 = vunpack.c.h.b16 %v5119
  %v6189 = vunpack.c.l.b16 %v5120
  %v6190 = vunpack.c.h.b16 %v5120
  %v6191 = vunpack.c.l.b16 %v5121
  %v6192 = vunpack.c.l.b16 %v5122
  %v6193 = vunpack.c.h.b16 %v5122
  %v6194 = vunpack.c.l.b16 %v5123
  %v6195 = vunpack.c.h.b16 %v5123
  %v6196 = vunpack.c.l.b16 %v5124
  %v6197 = vunpack.c.h.b16 %v5124
  %v6198 = vunpack.c.l.b16 %v5125
  %v6199 = vunpack.c.l.b16 %v5126
  %v6200 = vunpack.c.h.b16 %v5126
  %v6201 = vunpack.c.l.b16 %v5127
  %v6202 = vunpack.c.h.b16 %v5127
  %v6203 = vunpack.c.l.b16 %v5128
  %v6204 = vunpack.c.h.b16 %v5128
  %v6205 = vunpack.c.l.b16 %v5129
  %v6206 = vunpack.c.l.b16 %v5130
  %v6207 = vunpack.c.h.b16 %v5130
  %v6208 = vunpack.c.l.b16 %v5131
  %v6209 = vunpack.c.h.b16 %v5131
  %v6210 = vunpack.c.l.b16 %v5132
  %v6211 = vunpack.c.h.b16 %v5132
  %v6212 = vunpack.c.l.b16 %v5133
  %v6213 = vunpack.c.l.b16 %v5134
  %v6214 = vunpack.c.h.b16 %v5134
  %v6215 = vunpack.c.l.b16 %v5135
  %v6216 = vunpack.c.h.b16 %v5135
  %v6217 = vunpack.c.l.b16 %v5136
  %v6218 = vunpack.c.h.b16 %v5136
  %v6219 = vunpack.c.l.b16 %v5137
  %v6220 = vunpack.c.l.b16 %v5138
  %v6221 = vunpack.c.h.b16 %v5138
  %v6222 = vunpack.c.l.b16 %v5139
  %v6223 = vunpack.c.h.b16 %v5139
  %v6224 = vunpack.c.l.b16 %v5140
  %v6225 = vunpack.c.h.b16 %v5140
  %v6226 = vunpack.c.l.b16 %v5141
  %v6227 = vunpack.c.l.b16 %v5142
  %v6228 = vunpack.c.h.b16 %v5142
  %v6229 = vunpack.c.l.b16 %v5143
  %v6230 = vunpack.c.h.b16 %v5143
  %v6231 = vunpack.c.l.b16 %v5144
  %v6232 = vunpack.c.h.b16 %v5144
  %v6233 = vunpack.c.l.b16 %v5145
  %v6234 = vunpack.c.l.b16 %v5146
  %v6235 = vunpack.c.h.b16 %v5146
  %v6236 = vunpack.c.l.b16 %v5147
  %v6237 = vunpack.c.h.b16 %v5147
  %v6238 = vunpack.c.l.b16 %v5148
  %v6239 = vunpack.c.h.b16 %v5148
  %v6240 = vunpack.c.l.b16 %v5149
  %v6241 = vunpack.c.l.b16 %v5150
  %v6242 = vunpack.c.h.b16 %v5150
  %v6243 = vunpack.c.l.b16 %v5151
  %v6244 = vunpack.c.h.b16 %v5151
  %v6245 = vunpack.c.l.b16 %v5152
  %v6246 = vunpack.c.h.b16 %v5152
  %v6247 = vunpack.c.l.b16 %v5153
  %v6248 = vunpack.c.l.b16 %v5154
  %v6249 = vunpack.c.h.b16 %v5154
  %v6250 = vunpack.c.l.b16 %v5155
  %v6251 = vunpack.c.h.b16 %v5155
  %v6252 = vunpack.c.l.b16 %v5156
  %v6253 = vunpack.c.h.b16 %v5156
  %v6254 = vunpack.c.l.b16 %v5157
  %v6255 = vunpack.c.l.b16 %v5158
  %v6256 = vunpack.c.h.b16 %v5158
  %v6257 = vunpack.c.l.b16 %v5159
  %v6258 = vunpack.c.h.b16 %v5159
  %v6259 = vunpack.c.l.b16 %v5160
  %v6260 = vunpack.c.h.b16 %v5160
  %v6261 = vunpack.c.l.b16 %v5161
  %v6262 = vunpack.c.l.b16 %v5162
  %v6263 = vunpack.c.h.b16 %v5162
  %v6264 = vunpack.c.l.b16 %v5163
  %v6265 = vunpack.c.h.b16 %v5163
  %v6266 = vunpack.c.l.b16 %v5164
  %v6267 = vunpack.c.h.b16 %v5164
  %v6268 = vunpack.c.l.b16 %v5165
  %v6269 = vunpack.c.l.b16 %v5166
  %v6270 = vunpack.c.h.b16 %v5166
  %v6271 = vunpack.c.l.b16 %v5167
  %v6272 = vunpack.c.h.b16 %v5167
  %v6273 = vunpack.c.l.b16 %v5168
  %v6274 = vunpack.c.h.b16 %v5168
  %v6275 = vunpack.c.l.b16 %v5169
  %v6276 = vunpack.c.l.b16 %v5170
  %v6277 = vunpack.c.h.b16 %v5170
  %v6278 = vunpack.c.l.b16 %v5171
  %v6279 = vunpack.c.h.b16 %v5171
  %v6280 = vunpack.c.l.b16 %v5172
  %v6281 = vunpack.c.h.b16 %v5172
  %v6282 = vunpack.c.l.b16 %v5173
  %v6283 = vunpack.c.l.b16 %v5174
  %v6284 = vunpack.c.h.b16 %v5174
  %v6285 = vunpack.c.l.b16 %v5175
  %v6286 = vunpack.c.h.b16 %v5175
  %v6287 = vunpack.c.l.b16 %v5176
  %v6288 = vunpack.c.h.b16 %v5176
  %v6289 = vunpack.c.l.b16 %v5177
  %v6290 = vunpack.c.l.b16 %v5178
  %v6291 = vunpack.c.h.b16 %v5178
  %v6292 = vunpack.c.l.b16 %v5179
  %v6293 = vunpack.c.h.b16 %v5179
  %v6294 = vunpack.c.l.b16 %v5180
  %v6295 = vunpack.c.h.b16 %v5180
  %v6296 = vunpack.c.l.b16 %v5181
  %v6297 = vunpack.c.l.b16 %v5182
  %v6298 = vunpack.c.h.b16 %v5182
  %v6299 = vunpack.c.l.b16 %v5183
  %v6300 = vunpack.c.h.b16 %v5183
  %v6301 = vunpack.c.l.b16 %v5184
  %v6302 = vunpack.c.h.b16 %v5184
  %v6303 = vunpack.c.l.b16 %v5185
  %v6304 = vunpack.c.l.b16 %v5186
  %v6305 = vunpack.c.h.b16 %v5186
  %v6306 = vunpack.c.l.b16 %v5187
  %v6307 = vunpack.c.h.b16 %v5187
  %v6308 = vunpack.c.l.b16 %v5188
  %v6309 = vunpack.c.h.b16 %v5188
  %v6310 = vunpack.c.l.b16 %v5189
  %v6311 = vunpack.c.l.b16 %v5190
  %v6312 = vunpack.c.h.b16 %v5190
  %v6313 = vunpack.c.l.b16 %v5191
  %v6314 = vunpack.c.h.b16 %v5191
  %v6315 = vunpack.c.l.b16 %v5192
  %v6316 = vunpack.c.h.b16 %v5192
  %v6317 = vunpack.c.l.b16 %v5193
  %v6318 = vunpack.c.l.b16 %v5194
  %v6319 = vunpack.c.h.b16 %v5194
  %v6320 = vunpack.c.l.b16 %v5195
  %v6321 = vunpack.c.h.b16 %v5195
  %v6322 = vunpack.c.l.b16 %v5196
  %v6323 = vunpack.c.h.b16 %v5196
  %v6324 = vunpack.c.l.b16 %v5197
  %v6325 = vunpack.c.l.b16 %v5198
  %v6326 = vunpack.c.h.b16 %v5198
  %v6327 = vunpack.c.l.b16 %v5199
  %v6328 = vunpack.c.h.b16 %v5199
  %v6329 = vunpack.c.l.b16 %v5200
  %v6330 = vunpack.c.h.b16 %v5200
  %v6331 = vunpack.c.l.b16 %v5201
  %v6332 = vunpack.c.l.b16 %v5202
  %v6333 = vunpack.c.h.b16 %v5202
  %v6334 = vunpack.c.l.b16 %v5203
  %v6335 = vunpack.c.h.b16 %v5203
  %v6336 = vunpack.c.l.b16 %v5204
  %v6337 = vunpack.c.h.b16 %v5204
  %v6338 = vunpack.c.l.b16 %v5205
  %v6339 = vunpack.c.l.b16 %v5206
  %v6340 = vunpack.c.h.b16 %v5206
  %v6341 = vunpack.c.l.b16 %v5207
  %v6342 = vunpack.c.h.b16 %v5207
  %v6343 = vunpack.c.l.b16 %v5208
  %v6344 = vunpack.c.h.b16 %v5208
  %v6345 = vunpack.c.l.b16 %v5209
  %v6346 = vunpack.c.l.b16 %v5210
  %v6347 = vunpack.c.h.b16 %v5210
  %v6348 = vunpack.c.l.b16 %v5211
  %v6349 = vunpack.c.h.b16 %v5211
  %v6350 = vunpack.c.l.b16 %v5212
  %v6351 = vunpack.c.h.b16 %v5212
  %v6352 = vunpack.c.l.b16 %v5213
  %v6353 = vunpack.c.l.b16 %v5214
  %v6354 = vunpack.c.h.b16 %v5214
  %v6355 = vunpack.c.l.b16 %v5215
  %v6356 = vunpack.c.h.b16 %v5215
  %v6357 = vunpack.c.l.b16 %v5216
  %v6358 = vunpack.c.h.b16 %v5216
  %v6359 = vunpack.c.l.b16 %v5217
  %v6360 = vunpack.c.l.b16 %v5218
  %v6361 = vunpack.c.h.b16 %v5218
  %v6362 = vunpack.c.l.b16 %v5219
  %v6363 = vunpack.c.h.b16 %v5219
  %v6364 = vunpack.c.l.b16 %v5220
  %v6365 = vunpack.c.h.b16 %v5220
  %v6366 = vunpack.c.l.b16 %v5221
  %v6367 = vunpack.c.l.b16 %v5222
  %v6368 = vunpack.c.h.b16 %v5222
  %v6369 = vunpack.c.l.b16 %v5223
  %v6370 = vunpack.c.h.b16 %v5223
  %v6371 = vunpack.c.l.b16 %v5224
  %v6372 = vunpack.c.h.b16 %v5224
  %v6373 = vunpack.c.l.b16 %v5225
  %v6374 = vunpack.c.l.b16 %v5226
  %v6375 = vunpack.c.h.b16 %v5226
  %v6376 = vunpack.c.l.b16 %v5227
  %v6377 = vunpack.c.h.b16 %v5227
  %v6378 = vunpack.c.l.b16 %v5228
  %v6379 = vunpack.c.h.b16 %v5228
  %v6380 = vunpack.c.l.b16 %v5229
  %v6381 = vunpack.c.l.b16 %v5230
  %v6382 = vunpack.c.h.b16 %v5230
  %v6383 = vunpack.c.l.b16 %v5231
  %v6384 = vunpack.c.h.b16 %v5231
  %v6385 = vunpack.c.l.b16 %v5232
  %v6386 = vunpack.c.h.b16 %v5232
  %v6387 = vunpack.c.l.b16 %v5233
  %v6388 = vunpack.c.l.b16 %v5234
  %v6389 = vunpack.c.h.b16 %v5234
  %v6390 = vunpack.c.l.b16 %v5235
  %v6391 = vunpack.c.h.b16 %v5235
  %v6392 = vunpack.c.l.b16 %v5236
  %v6393 = vunpack.c.h.b16 %v5236
  %v6394 = vunpack.c.l.b16 %v5237
  %v6395 = vunpack.c.l.b16 %v5238
  %v6396 = vunpack.c.h.b16 %v5238
  %v6397 = vunpack.c.l.b16 %v5239
  %v6398 = vunpack.c.h.b16 %v5239
  %v6399 = vunpack.c.l.b16 %v5240
  %v6400 = vunpack.c.h.b16 %v5240
  %v6401 = vunpack.c.l.b16 %v5241
  %v6402 = vunpack.c.l.b16 %v5242
  %v6403 = vunpack.c.h.b16 %v5242
  %v6404 = vunpack.c.l.b16 %v5243
  %v6405 = vunpack.c.h.b16 %v5243
  %v6406 = vunpack.c.l.b16 %v5244
  %v6407 = vunpack.c.h.b16 %v5244
  %v6408 = vunpack.c.l.b16 %v5245
  %v6409 = vunpack.c.l.b16 %v5246
  %v6410 = vunpack.c.h.b16 %v5246
  %v6411 = vunpack.c.l.b16 %v5247
  %v6412 = vunpack.c.h.b16 %v5247
  %v6413 = vunpack.c.l.b16 %v5248
  %v6414 = vunpack.c.h.b16 %v5248
  %v6415 = vunpack.c.l.b16 %v5249
  %v6416 = vunpack.c.l.b16 %v5250
  %v6417 = vunpack.c.h.b16 %v5250
  %v6418 = vunpack.c.l.b16 %v5251
  %v6419 = vunpack.c.h.b16 %v5251
  %v6420 = vunpack.c.l.b16 %v5252
  %v6421 = vunpack.c.h.b16 %v5252
  %v6422 = vunpack.c.l.b16 %v5253
  %v6423 = vunpack.c.l.b16 %v5254
  %v6424 = vunpack.c.h.b16 %v5254
  %v6425 = vunpack.c.l.b16 %v5255
  %v6426 = vunpack.c.h.b16 %v5255
  %v6427 = vunpack.c.l.b16 %v5256
  %v6428 = vunpack.c.h.b16 %v5256
  %v6429 = vunpack.c.l.b16 %v5257
  %v6430 = vunpack.c.l.b16 %v5258
  %v6431 = vunpack.c.h.b16 %v5258
  %v6432 = vunpack.c.l.b16 %v5259
  %v6433 = vunpack.c.h.b16 %v5259
  %v6434 = vunpack.c.l.b16 %v5260
  %v6435 = vunpack.c.h.b16 %v5260
  %v6436 = vunpack.c.l.b16 %v5261
  %v6437 = vunpack.c.l.b16 %v5262
  %v6438 = vunpack.c.h.b16 %v5262
  %v6439 = vunpack.c.l.b16 %v5263
  %v6440 = vunpack.c.h.b16 %v5263
  %v6441 = vunpack.c.l.b16 %v5264
  %v6442 = vunpack.c.h.b16 %v5264
  %v6443 = vunpack.c.l.b16 %v5265
  %v6444 = vunpack.c.l.b16 %v5266
  %v6445 = vunpack.c.h.b16 %v5266
  %v6446 = vunpack.c.l.b16 %v5267
  %v6447 = vunpack.c.h.b16 %v5267
  %v6448 = vunpack.c.l.b16 %v5268
  %v6449 = vunpack.c.h.b16 %v5268
  %v6450 = vunpack.c.l.b16 %v5269
  %v6451 = vunpack.c.l.b16 %v5270
  %v6452 = vunpack.c.h.b16 %v5270
  %v6453 = vunpack.c.l.b16 %v5271
  %v6454 = vunpack.c.h.b16 %v5271
  %v6455 = vunpack.c.l.b16 %v5272
  %v6456 = vunpack.c.h.b16 %v5272
  %v6457 = vunpack.c.l.b16 %v5273
  %v6458 = vunpack.c.l.b16 %v5274
  %v6459 = vunpack.c.h.b16 %v5274
  %v6460 = vunpack.c.l.b16 %v5275
  %v6461 = vunpack.c.h.b16 %v5275
  %v6462 = vunpack.c.l.b16 %v5276
  %v6463 = vunpack.c.h.b16 %v5276
  %v6464 = vunpack.c.l.b16 %v5277
  %v6465 = vunpack.c.l.b16 %v5278
  %v6466 = vunpack.c.h.b16 %v5278
  %v6467 = vunpack.c.l.b16 %v5279
  %v6468 = vunpack.c.h.b16 %v5279
  %v6469 = vunpack.c.l.b16 %v5280
  %v6470 = vunpack.c.h.b16 %v5280
  %v6471 = vunpack.c.l.b16 %v5281
  %v6472 = vunpack.c.l.b16 %v5282
  %v6473 = vunpack.c.h.b16 %v5282
  %v6474 = vunpack.c.l.b16 %v5283
  %v6475 = vunpack.c.h.b16 %v5283
  %v6476 = vunpack.c.l.b16 %v5284
  %v6477 = vunpack.c.h.b16 %v5284
  %v6478 = vunpack.c.l.b16 %v5285
  %v6479 = vunpack.c.l.b16 %v5286
  %v6480 = vunpack.c.h.b16 %v5286
  %v6481 = vunpack.c.l.b16 %v5287
  %v6482 = vunpack.c.h.b16 %v5287
  %v6483 = vunpack.c.l.b16 %v5288
  %v6484 = vunpack.c.h.b16 %v5288
  %v6485 = vunpack.c.l.b16 %v5289
  %v6486 = vunpack.c.l.b16 %v5290
  %v6487 = vunpack.c.h.b16 %v5290
  %v6488 = vunpack.c.l.b16 %v5291
  %v6489 = vunpack.c.h.b16 %v5291
  %v6490 = vunpack.c.l.b16 %v5292
  %v6491 = vunpack.c.h.b16 %v5292
  %v6492 = vunpack.c.l.b16 %v5293
  %v6493 = vunpack.c.l.b16 %v5294
  %v6494 = vunpack.c.h.b16 %v5294
  %v6495 = vunpack.c.l.b16 %v5295
  %v6496 = vunpack.c.h.b16 %v5295
  %v6497 = vunpack.c.l.b16 %v5296
  %v6498 = vunpack.c.h.b16 %v5296
  %v6499 = vunpack.c.l.b16 %v5297
  %v6500 = vunpack.c.l.b16 %v5298
  %v6501 = vunpack.c.h.b16 %v5298
  %v6502 = vunpack.c.l.b16 %v5299
  %v6503 = vunpack.c.h.b16 %v5299
  %v6504 = vunpack.c.l.b16 %v5300
  %v6505 = vunpack.c.h.b16 %v5300
  %v6506 = vunpack.c.l.b16 %v5301
  %v6507 = vunpack.c.l.b16 %v5302
  %v6508 = vunpack.c.h.b16 %v5302
  %v6509 = vunpack.c.l.b16 %v5303
  %v6510 = vunpack.c.h.b16 %v5303
  %v6511 = vunpack.c.l.b16 %v5304
  %v6512 = vunpack.c.h.b16 %v5304
  %v6513 = vunpack.c.l.b16 %v5305
  %v6514 = vunpack.c.l.b16 %v5306
  %v6515 = vunpack.c.h.b16 %v5306
  %v6516 = vunpack.c.l.b16 %v5307
  %v6517 = vunpack.c.h.b16 %v5307
  %v6518 = vunpack.c.l.b16 %v5308
  %v6519 = vunpack.c.h.b16 %v5308
  %v6520 = vunpack.c.l.b16 %v5309
  %v6521 = vunpack.c.l.b16 %v5310
  %v6522 = vunpack.c.h.b16 %v5310
  %v6523 = vunpack.c.l.b16 %v5311
  %v6524 = vunpack.c.h.b16 %v5311
  %v6525 = vunpack.c.l.b16 %v5312
  %v6526 = vunpack.c.h.b16 %v5312
  %v6527 = vunpack.c.l.b16 %v5313
  %v6528 = vunpack.c.l.b16 %v5314
  %v6529 = vunpack.c.h.b16 %v5314
  %v6530 = vunpack.c.l.b16 %v5315
  %v6531 = vunpack.c.h.b16 %v5315
  %v6532 = vunpack.c.l.b16 %v5316
  %v6533 = vunpack.c.h.b16 %v5316
  %v6534 = vunpack.c.l.b16 %v5317
  %v6535 = vunpack.c.l.b16 %v5318
  %v6536 = vunpack.c.h.b16 %v5318
  %v6537 = vunpack.c.l.b16 %v5319
  %v6538 = vunpack.c.h.b16 %v5319
  %v6539 = vunpack.c.l.b16 %v5320
  %v6540 = vunpack.c.h.b16 %v5320
  %v6541 = vunpack.c.l.b16 %v5321
  %v6542 = vunpack.c.l.b16 %v5322
  %v6543 = vunpack.c.h.b16 %v5322
  %v6544 = vunpack.c.l.b16 %v5323
  %v6545 = vunpack.c.h.b16 %v5323
  %v6546 = vunpack.c.l.b16 %v5324
  %v6547 = vunpack.c.h.b16 %v5324
  %v6548 = vunpack.c.l.b16 %v5325
  %v6549 = vunpack.c.l.b16 %v5326
  %v6550 = vunpack.c.h.b16 %v5326
  %v6551 = vunpack.c.l.b16 %v5327
  %v6552 = vunpack.c.h.b16 %v5327
  %v6553 = vunpack.c.l.b16 %v5328
  %v6554 = vunpack.c.h.b16 %v5328
  %v6555 = vunpack.c.l.b16 %v5329
  %v6556 = vunpack.c.l.b16 %v5330
  %v6557 = vunpack.c.h.b16 %v5330
  %v6558 = vunpack.c.l.b16 %v5331
  %v6559 = vunpack.c.h.b16 %v5331
  %v6560 = vunpack.c.l.b16 %v5332
  %v6561 = vunpack.c.h.b16 %v5332
  %v6562 = vunpack.c.l.b16 %v5333
  %v6563 = vunpack.c.l.b16 %v5334
  %v6564 = vunpack.c.h.b16 %v5334
  %v6565 = vunpack.c.l.b16 %v5335
  %v6566 = vunpack.c.h.b16 %v5335
  %v6567 = vunpack.c.l.b16 %v5336
  %v6568 = vunpack.c.h.b16 %v5336
  %v6569 = vunpack.c.l.b16 %v5337
  %v6570 = vunpack.c.l.b16 %v5338
  %v6571 = vunpack.c.h.b16 %v5338
  %v6572 = vunpack.c.l.b16 %v5339
  %v6573 = vunpack.c.h.b16 %v5339
  %v6574 = vunpack.c.l.b16 %v5340
  %v6575 = vunpack.c.h.b16 %v5340
  %v6576 = vunpack.c.l.b16 %v5341
  %v6577 = vunpack.c.l.b16 %v5342
  %v6578 = vunpack.c.h.b16 %v5342
  %v6579 = vunpack.c.l.b16 %v5343
  %v6580 = vunpack.c.h.b16 %v5343
  %v6581 = vunpack.c.l.b16 %v5344
  %v6582 = vunpack.c.h.b16 %v5344
  %v6583 = vunpack.c.l.b16 %v5345
  %v6584 = vunpack.c.l.b16 %v5346
  %v6585 = vunpack.c.h.b16 %v5346
  %v6586 = vunpack.c.l.b16 %v5347
  %v6587 = vunpack.c.h.b16 %v5347
  %v6588 = vunpack.c.l.b16 %v5348
  %v6589 = vunpack.c.h.b16 %v5348
  %v6590 = vunpack.c.l.b16 %v5349
  %v6591 = vunpack.c.l.b16 %v5350
  %v6592 = vunpack.c.h.b16 %v5350
  %v6593 = vunpack.c.l.b16 %v5351
  %v6594 = vunpack.c.h.b16 %v5351
  %v6595 = vunpack.c.l.b16 %v5352
  %v6596 = vunpack.c.h.b16 %v5352
  %v6597 = vunpack.c.l.b16 %v5353
  %v6598 = vunpack.c.l.b16 %v5354
  %v6599 = vunpack.c.h.b16 %v5354
  %v6600 = vunpack.c.l.b16 %v5355
  %v6601 = vunpack.c.h.b16 %v5355
  %v6602 = vunpack.c.l.b16 %v5356
  %v6603 = vunpack.c.h.b16 %v5356
  %v6604 = vunpack.c.l.b16 %v5357
  %v6605 = vunpack.c.l.b16 %v5358
  %v6606 = vunpack.c.h.b16 %v5358
  %v6607 = vunpack.c.l.b16 %v5359
  %v6608 = vunpack.c.h.b16 %v5359
  %v6609 = vunpack.c.l.b16 %v5360
  %v6610 = vunpack.c.h.b16 %v5360
  %v6611 = vunpack.c.l.b16 %v5361
  %v6612 = vunpack.c.l.b16 %v5362
  %v6613 = vunpack.c.h.b16 %v5362
  %v6614 = vunpack.c.l.b16 %v5363
  %v6615 = vunpack.c.h.b16 %v5363
  %v6616 = vunpack.c.l.b16 %v5364
  %v6617 = vunpack.c.h.b16 %v5364
  %v6618 = vunpack.c.l.b16 %v5365
  %v6619 = vunpack.c.l.b16 %v5366
  %v6620 = vunpack.c.h.b16 %v5366
  %v6621 = vunpack.c.l.b16 %v5367
  %v6622 = vunpack.c.h.b16 %v5367
  %v6623 = vunpack.c.l.b16 %v5368
  %v6624 = vunpack.c.h.b16 %v5368
  %v6625 = vunpack.c.l.b16 %v5369
  %v6626 = vunpack.c.l.b16 %v5370
  %v6627 = vunpack.c.h.b16 %v5370
  %v6628 = vunpack.c.l.b16 %v5371
  %v6629 = vunpack.c.h.b16 %v5371
  %v6630 = vunpack.c.l.b16 %v5372
  %v6631 = vunpack.c.h.b16 %v5372
  %v6632 = vunpack.c.l.b16 %v5373
  %v6633 = vunpack.c.l.b16 %v5374
  %v6634 = vunpack.c.h.b16 %v5374
  %v6635 = vunpack.c.l.b16 %v5375
  %v6636 = vunpack.c.h.b16 %v5375
  %v6637 = vunpack.c.l.b16 %v5376
  %v6638 = vunpack.c.h.b16 %v5376
  %v6639 = vunpack.c.l.b16 %v5377
  %v6640 = vunpack.c.l.b16 %v5378
  %v6641 = vunpack.c.h.b16 %v5378
  %v6642 = vunpack.c.l.b16 %v5379
  %v6643 = vunpack.c.h.b16 %v5379
  %v6644 = vunpack.c.l.b16 %v5380
  %v6645 = vunpack.c.h.b16 %v5380
  %v6646 = vunpack.c.l.b16 %v5381
  %v6647 = vunpack.c.l.b16 %v5382
  %v6648 = vunpack.c.h.b16 %v5382
  %v6649 = vunpack.c.l.b16 %v5383
  %v6650 = vunpack.c.h.b16 %v5383
  %v6651 = vunpack.c.l.b16 %v5384
  %v6652 = vunpack.c.h.b16 %v5384
  %v6653 = vunpack.c.l.b16 %v5385
  %v6654 = vunpack.c.l.b16 %v5386
  %v6655 = vunpack.c.h.b16 %v5386
  %v6656 = vunpack.c.l.b16 %v5387
  %v6657 = vunpack.c.h.b16 %v5387
  %v6658 = vunpack.c.l.b16 %v5388
  %v6659 = vunpack.c.h.b16 %v5388
  %v6660 = vunpack.c.l.b16 %v5389
  %v6661 = vunpack.c.l.b16 %v5390
  %v6662 = vunpack.c.h.b16 %v5390
  %v6663 = vunpack.c.l.b16 %v5391
  %v6664 = vunpack.c.h.b16 %v5391
  %v6665 = vunpack.c.l.b16 %v5392
  %v6666 = vunpack.c.h.b16 %v5392
  %v6667 = vunpack.c.l.b16 %v5393
  %v6668 = vunpack.c.l.b16 %v5394
  %v6669 = vunpack.c.h.b16 %v5394
  %v6670 = vunpack.c.l.b16 %v5395
  %v6671 = vunpack.c.h.b16 %v5395
  %v6672 = vunpack.c.l.b16 %v5396
  %v6673 = vunpack.c.h.b16 %v5396
  %v6674 = vunpack.c.l.b16 %v5397
  %v6675 = vunpack.c.l.b16 %v5398
  %v6676 = vunpack.c.h.b16 %v5398
  %v6677 = vunpack.c.l.b16 %v5399
  %v6678 = vunpack.c.h.b16 %v5399
  %v6679 = vunpack.c.l.b16 %v5400
  %v6680 = vunpack.c.h.b16 %v5400
  %v6681 = vunpack.c.l.b16 %v5401
  %v6682 = vunpack.c.l.b16 %v5402
  %v6683 = vunpack.c.h.b16 %v5402
  %v6684 = vunpack.c.l.b16 %v5403
  %v6685 = vunpack.c.h.b16 %v5403
  %v6686 = vunpack.c.l.b16 %v5404
  %v6687 = vunpack.c.h.b16 %v5404
  %v6688 = vunpack.c.l.b16 %v5405
  %v6689 = vunpack.c.l.b16 %v5406
  %v6690 = vunpack.c.h.b16 %v5406
  %v6691 = vunpack.c.l.b16 %v5407
  %v6692 = vunpack.c.h.b16 %v5407
  %v6693 = vunpack.c.l.b16 %v5408
  %v6694 = vunpack.c.h.b16 %v5408
  %v6695 = vunpack.c.l.b16 %v5409
  %v6696 = vunpack.c.l.b16 %v5410
  %v6697 = vunpack.c.h.b16 %v5410
  %v6698 = vunpack.c.l.b16 %v5411
  %v6699 = vunpack.c.h.b16 %v5411
  %v6700 = vunpack.c.l.b16 %v5412
  %v6701 = vunpack.c.h.b16 %v5412
  %v6702 = vunpack.c.l.b16 %v5413
  %v6703 = vunpack.c.l.b16 %v5414
  %v6704 = vunpack.c.h.b16 %v5414
  %v6705 = vunpack.c.l.b16 %v5415
  %v6706 = vunpack.c.h.b16 %v5415
  %v6707 = vunpack.c.l.b16 %v5416
  %v6708 = vunpack.c.h.b16 %v5416
  %v6709 = vunpack.c.l.b16 %v5417
  %v6710 = vunpack.c.l.b16 %v5418
  %v6711 = vunpack.c.h.b16 %v5418
  %v6712 = vunpack.c.l.b16 %v5419
  %v6713 = vunpack.c.h.b16 %v5419
  %v6714 = vunpack.c.l.b16 %v5420
  %v6715 = vunpack.c.h.b16 %v5420
  %v6716 = vunpack.c.l.b16 %v5421
  %v6717 = vunpack.c.l.b16 %v5422
  %v6718 = vunpack.c.h.b16 %v5422
  %v6719 = vunpack.c.l.b16 %v5423
  %v6720 = vunpack.c.h.b16 %v5423
  %v6721 = vunpack.c.l.b16 %v5424
  %v6722 = vunpack.c.h.b16 %v5424
  %v6723 = vunpack.c.l.b16 %v5425
  %v6724 = vunpack.c.l.b16 %v5426
  %v6725 = vunpack.c.h.b16 %v5426
  %v6726 = vunpack.c.l.b16 %v5427
  %v6727 = vunpack.c.h.b16 %v5427
  %v6728 = vunpack.c.l.b16 %v5428
  %v6729 = vunpack.c.h.b16 %v5428
  %v6730 = vunpack.c.l.b16 %v5429
  %v6731 = vunpack.c.l.b16 %v5430
  %v6732 = vunpack.c.h.b16 %v5430
  %v6733 = vunpack.c.l.b16 %v5431
  %v6734 = vunpack.c.h.b16 %v5431
  %v6735 = vunpack.c.l.b16 %v5432
  %v6736 = vunpack.c.h.b16 %v5432
  %v6737 = vunpack.c.l.b16 %v5433
  %v6738 = vunpack.c.l.b16 %v5434
  %v6739 = vunpack.c.h.b16 %v5434
  %v6740 = vunpack.c.l.b16 %v5435
  %v6741 = vunpack.c.h.b16 %v5435
  %v6742 = vunpack.c.l.b16 %v5436
  %v6743 = vunpack.c.h.b16 %v5436
  %v6744 = vunpack.c.l.b16 %v5437
  %v6745 = vunpack.c.l.b16 %v5438
  %v6746 = vunpack.c.h.b16 %v5438
  %v6747 = vunpack.c.l.b16 %v5439
  %v6748 = vunpack.c.h.b16 %v5439
  %v6749 = vunpack.c.l.b16 %v5440
  %v6750 = vunpack.c.h.b16 %v5440
  %v6751 = vunpack.c.l.b16 %v5441
  %v6752 = vunpack.c.l.b16 %v5442
  %v6753 = vunpack.c.h.b16 %v5442
  %v6754 = vunpack.c.l.b16 %v5443
  %v6755 = vunpack.c.h.b16 %v5443
  %v6756 = vunpack.c.l.b16 %v5444
  %v6757 = vunpack.c.h.b16 %v5444
  %v6758 = vunpack.c.l.b16 %v5445
  %v6759 = vunpack.c.l.b16 %v5446
  %v6760 = vunpack.c.h.b16 %v5446
  %v6761 = vunpack.c.l.b16 %v5447
  %v6762 = vunpack.c.h.b16 %v5447
  %v6763 = vunpack.c.l.b16 %v5448
  %v6764 = vunpack.c.h.b16 %v5448
  %v6765 = vunpack.c.l.b16 %v5449
  %v6766 = vunpack.c.l.b16 %v5450
  %v6767 = vunpack.c.h.b16 %v5450
  %v6768 = vunpack.c.l.b16 %v5451
  %v6769 = vunpack.c.h.b16 %v5451
  %v6770 = vunpack.c.l.b16 %v5452
  %v6771 = vunpack.c.h.b16 %v5452
  %v6772 = vunpack.c.l.b16 %v5453
  %v6773 = vunpack.c.l.b16 %v5454
  %v6774 = vunpack.c.h.b16 %v5454
  %v6775 = vunpack.c.l.b16 %v5455
  %v6776 = vunpack.c.h.b16 %v5455
  %v6777 = vunpack.c.l.b16 %v5456
  %v6778 = vunpack.c.h.b16 %v5456
  %v6779 = vunpack.c.l.b16 %v5457
  %v6780 = vunpack.c.l.b16 %v5458
  %v6781 = vunpack.c.h.b16 %v5458
  %v6782 = vunpack.c.l.b16 %v5459
  %v6783 = vunpack.c.h.b16 %v5459
  %v6784 = vunpack.c.l.b16 %v5460
  %v6785 = vunpack.c.h.b16 %v5460
  %v6786 = vunpack.c.l.b16 %v5461
  %v6787 = vunpack.c.l.b16 %v5462
  %v6788 = vunpack.c.h.b16 %v5462
  %v6789 = vunpack.c.l.b16 %v5463
  %v6790 = vunpack.c.h.b16 %v5463
  %v6791 = vunpack.c.l.b16 %v5464
  %v6792 = vunpack.c.h.b16 %v5464
  %v6793 = vunpack.c.l.b16 %v5465
  %v6794 = vunpack.c.l.b16 %v5466
  %v6795 = vunpack.c.h.b16 %v5466
  %v6796 = vunpack.c.l.b16 %v5467
  %v6797 = vunpack.c.h.b16 %v5467
  %v6798 = vunpack.c.l.b16 %v5468
  %v6799 = vunpack.c.h.b16 %v5468
  %v6800 = vunpack.c.l.b16 %v5469
  %v6801 = vunpack.c.l.b16 %v5470
  %v6802 = vunpack.c.h.b16 %v5470
  %v6803 = vunpack.c.l.b16 %v5471
  %v6804 = vunpack.c.h.b16 %v5471
  %v6805 = vunpack.c.l.b16 %v5472
  %v6806 = vunpack.c.h.b16 %v5472
  %v6807 = vunpack.c.l.b16 %v5473
  %v6808 = vunpack.c.l.b16 %v5474
  %v6809 = vunpack.c.h.b16 %v5474
  %v6810 = vunpack.c.l.b16 %v5475
  %v6811 = vunpack.c.h.b16 %v5475
  %v6812 = vunpack.c.l.b16 %v5476
  %v6813 = vunpack.c.h.b16 %v5476
  %v6814 = vunpack.c.l.b16 %v5477
  %v6815 = vunpack.c.l.b16 %v5478
  %v6816 = vunpack.c.h.b16 %v5478
  %v6817 = vunpack.c.l.b16 %v5479
  %v6818 = vunpack.c.h.b16 %v5479
  %v6819 = vunpack.c.l.b16 %v5480
  %v6820 = vunpack.c.h.b16 %v5480
  %v6821 = vunpack.c.l.b16 %v5481
  %v6822 = vunpack.c.l.b16 %v5482
  %v6823 = vunpack.c.h.b16 %v5482
  %v6824 = vunpack.c.l.b16 %v5483
  %v6825 = vunpack.c.h.b16 %v5483
  %v6826 = vunpack.c.l.b16 %v5484
  %v6827 = vunpack.c.h.b16 %v5484
  %v6828 = vunpack.c.l.b16 %v5485
  %v6829 = vunpack.c.l.b16 %v5486
  %v6830 = vunpack.c.h.b16 %v5486
  %v6831 = vunpack.c.l.b16 %v5487
  %v6832 = vunpack.c.h.b16 %v5487
  %v6833 = vunpack.c.l.b16 %v5488
  %v6834 = vunpack.c.h.b16 %v5488
  %v6835 = vunpack.c.l.b16 %v5489
  %v6836 = vunpack.c.l.b16 %v5490
  %v6837 = vunpack.c.h.b16 %v5490
  %v6838 = vunpack.c.l.b16 %v5491
  %v6839 = vunpack.c.h.b16 %v5491
  %v6840 = vunpack.c.l.b16 %v5492
  %v6841 = vunpack.c.h.b16 %v5492
  %v6842 = vunpack.c.l.b16 %v5493
  %v6843 = vunpack.c.l.b16 %v5494
  %v6844 = vunpack.c.h.b16 %v5494
  %v6845 = vunpack.c.l.b16 %v5495
  %v6846 = vunpack.c.h.b16 %v5495
  %v6847 = vunpack.c.l.b16 %v5496
  %v6848 = vunpack.c.h.b16 %v5496
  %v6849 = vunpack.c.l.b16 %v5497
  %v6850 = vunpack.c.l.b16 %v5498
  %v6851 = vunpack.c.h.b16 %v5498
  %v6852 = vunpack.c.l.b16 %v5499
  %v6853 = vunpack.c.h.b16 %v5499
  %v6854 = vunpack.c.l.b16 %v5500
  %v6855 = vunpack.c.h.b16 %v5500
  %v6856 = vunpack.c.l.b16 %v5501
  %v6857 = vunpack.c.l.b16 %v5502
  %v6858 = vunpack.c.h.b16 %v5502
  %v6859 = vunpack.c.l.b16 %v5503
  %v6860 = vunpack.c.h.b16 %v5503
  %v6861 = vunpack.c.l.b16 %v5504
  %v6862 = vunpack.c.h.b16 %v5504
  %v6863 = vunpack.c.l.b16 %v5505
  %v6864 = vunpack.c.l.b16 %v5506
  %v6865 = vunpack.c.h.b16 %v5506
  %v6866 = vunpack.c.l.b16 %v5507
  %v6867 = vunpack.c.h.b16 %v5507
  %v6868 = vunpack.c.l.b16 %v5508
  %v6869 = vunpack.c.h.b16 %v5508
  %v6870 = vunpack.c.l.b16 %v5509
  %v6871 = vunpack.c.l.b16 %v5510
  %v6872 = vunpack.c.h.b16 %v5510
  %v6873 = vunpack.c.l.b16 %v5511
  %v6874 = vunpack.c.h.b16 %v5511
  %v6875 = vunpack.c.l.b16 %v5512
  %v6876 = vunpack.c.h.b16 %v5512
  %v6877 = vunpack.c.l.b16 %v5513
  %v6878 = vunpack.c.l.b16 %v5514
  %v6879 = vunpack.c.h.b16 %v5514
  %v6880 = vunpack.c.l.b16 %v5515
  %v6881 = vunpack.c.h.b16 %v5515
  %v6882 = vunpack.c.l.b16 %v5516
  %v6883 = vunpack.c.h.b16 %v5516
  %v6884 = vunpack.c.l.b16 %v5517
  %v6885 = vunpack.c.l.b16 %v5518
  %v6886 = vunpack.c.h.b16 %v5518
  %v6887 = vunpack.c.l.b16 %v5519
  %v6888 = vunpack.c.h.b16 %v5519
  %v6889 = vunpack.c.l.b16 %v5520
  %v6890 = vunpack.c.h.b16 %v5520
  %v6891 = vunpack.c.l.b16 %v5521
  %v6892 = vunpack.c.l.b16 %v5522
  %v6893 = vunpack.c.h.b16 %v5522
  %v6894 = vunpack.c.l.b16 %v5523
  %v6895 = vunpack.c.h.b16 %v5523
  %v6896 = vunpack.c.l.b16 %v5524
  %v6897 = vunpack.c.h.b16 %v5524
  %v6898 = vunpack.c.l.b16 %v5525
  %v6899 = vunpack.c.l.b16 %v5526
  %v6900 = vunpack.c.h.b16 %v5526
  %v6901 = vunpack.c.l.b16 %v5527
  %v6902 = vunpack.c.h.b16 %v5527
  %v6903 = vunpack.c.l.b16 %v5528
  %v6904 = vunpack.c.h.b16 %v5528
  %v6905 = vunpack.c.l.b16 %v5529
  %v6906 = vunpack.c.l.b16 %v5530
  %v6907 = vunpack.c.h.b16 %v5530
  %v6908 = vunpack.c.l.b16 %v5531
  %v6909 = vunpack.c.h.b16 %v5531
  %v6910 = vunpack.c.l.b16 %v5532
  %v6911 = vunpack.c.h.b16 %v5532
  %v6912 = vunpack.c.l.b16 %v5533
  %v6913 = vunpack.c.l.b16 %v5534
  %v6914 = vunpack.c.h.b16 %v5534
  %v6915 = vunpack.c.l.b16 %v5535
  %v6916 = vunpack.c.h.b16 %v5535
  %v6917 = vunpack.c.l.b16 %v5536
  %v6918 = vunpack.c.h.b16 %v5536
  %v6919 = vunpack.c.l.b16 %v5537
  %v6920 = vunpack.c.l.b16 %v5538
  %v6921 = vunpack.c.h.b16 %v5538
  %v6922 = vunpack.c.l.b16 %v5539
  %v6923 = vunpack.c.h.b16 %v5539
  %v6924 = vunpack.c.l.b16 %v5540
  %v6925 = vunpack.c.h.b16 %v5540
  %v6926 = vunpack.c.l.b16 %v5541
  %v6927 = vunpack.c.l.b16 %v5542
  %v6928 = vunpack.c.h.b16 %v5542
  %v6929 = vunpack.c.l.b16 %v5543
  %v6930 = vunpack.c.h.b16 %v5543
  %v6931 = vunpack.c.l.b16 %v5544
  %v6932 = vunpack.c.h.b16 %v5544
  %v6933 = vunpack.c.l.b16 %v5545
  %v6934 = vunpack.c.l.b16 %v5546
  %v6935 = vunpack.c.h.b16 %v5546
  %v6936 = vunpack.c.l.b16 %v5547
  %v6937 = vunpack.c.h.b16 %v5547
  %v6938 = vunpack.c.l.b16 %v5548
  %v6939 = vunpack.c.h.b16 %v5548
  %v6940 = vunpack.c.l.b16 %v5549
  %v6941 = vunpack.c.l.b16 %v5550
  %v6942 = vunpack.c.h.b16 %v5550
  %v6943 = vunpack.c.l.b16 %v5551
  %v6944 = vunpack.c.h.b16 %v5551
  %v6945 = vunpack.c.l.b16 %v5552
  %v6946 = vunpack.c.h.b16 %v5552
  %v6947 = vunpack.c.l.b16 %v5553
  %v6948 = vunpack.c.l.b16 %v5554
  %v6949 = vunpack.c.h.b16 %v5554
  %v6950 = vunpack.c.l.b16 %v5555
  %v6951 = vunpack.c.h.b16 %v5555
  %v6952 = vunpack.c.l.b16 %v5556
  %v6953 = vunpack.c.h.b16 %v5556
  %v6954 = vunpack.c.l.b16 %v5557
  %v6955 = vunpack.c.l.b16 %v5558
  %v6956 = vunpack.c.h.b16 %v5558
  %v6957 = vunpack.c.l.b16 %v5559
  %v6958 = vunpack.c.h.b16 %v5559
  %v6959 = vunpack.c.l.b16 %v5560
  %v6960 = vunpack.c.h.b16 %v5560
  %v6961 = vunpack.c.l.b16 %v5561
  %v6962 = vunpack.c.l.b16 %v5562
  %v6963 = vunpack.c.h.b16 %v5562
  %v6964 = vunpack.c.l.b16 %v5563
  %v6965 = vunpack.c.h.b16 %v5563
  %v6966 = vunpack.c.l.b16 %v5564
  %v6967 = vunpack.c.h.b16 %v5564
  %v6968 = vunpack.c.l.b16 %v5565
  %v6969 = vunpack.c.l.b16 %v5566
  %v6970 = vunpack.c.h.b16 %v5566
  %v6971 = vunpack.c.l.b16 %v5567
  %v6972 = vunpack.c.h.b16 %v5567
  %v6973 = vunpack.c.l.b16 %v5568
  %v6974 = vunpack.c.h.b16 %v5568
  %v6975 = vunpack.c.l.b16 %v5569
  %v6976 = vunpack.c.l.b16 %v5570
  %v6977 = vunpack.c.h.b16 %v5570
  %v6978 = vunpack.c.l.b16 %v5571
  %v6979 = vunpack.c.h.b16 %v5571
  %v6980 = vunpack.c.l.b16 %v5572
  %v6981 = vunpack.c.h.b16 %v5572
  %v6982 = vunpack.c.l.b16 %v5573
  %v6983 = vunpack.c.l.b16 %v5574
  %v6984 = vunpack.c.h.b16 %v5574
  %v6985 = vunpack.c.l.b16 %v5575
  %v6986 = vunpack.c.h.b16 %v5575
  %v6987 = vunpack.c.l.b16 %v5576
  %v6988 = vunpack.c.h.b16 %v5576
  %v6989 = vunpack.c.l.b16 %v5577
  %v6990 = vunpack.c.l.b16 %v5578
  %v6991 = vunpack.c.h.b16 %v5578
  %v6992 = vunpack.c.l.b16 %v5579
  %v6993 = vunpack.c.h.b16 %v5579
  %v6994 = vunpack.c.l.b16 %v5580
  %v6995 = vunpack.c.h.b16 %v5580
  %v6996 = vunpack.c.l.b16 %v5581
  %v6997 = vunpack.c.l.b16 %v5582
  %v6998 = vunpack.c.h.b16 %v5582
  %v6999 = vunpack.c.l.b16 %v5583
  %v7000 = vunpack.c.h.b16 %v5583
  %v7001 = vunpack.c.l.b16 %v5584
  %v7002 = vunpack.c.h.b16 %v5584
  %v7003 = vunpack.c.l.b16 %v5585
  %v7004 = vunpack.c.l.b16 %v5586
  %v7005 = vunpack.c.h.b16 %v5586
  %v7006 = vunpack.c.l.b16 %v5587
  %v7007 = vunpack.c.h.b16 %v5587
  %v7008 = vunpack.c.l.b16 %v5588
  %v7009 = vunpack.c.h.b16 %v5588
  %v7010 = vunpack.c.l.b16 %v5589
  %v7011 = vunpack.c.l.b16 %v5590
  %v7012 = vunpack.c.h.b16 %v5590
  %v7013 = vunpack.c.l.b16 %v5591
  %v7014 = vunpack.c.h.b16 %v5591
  %v7015 = vunpack.c.l.b16 %v5592
  %v7016 = vunpack.c.h.b16 %v5592
  %v7017 = vunpack.c.l.b16 %v5593
  %v7018 = vpack.c.b16 %v6129, %v6122
  %v7019 = vpack.c.b16 %v6130, %v6123
  %v7020 = vpack.c.b16 %v6131, %v6124
  %v7021 = vpack.c.b16 %v6132, %v6125
  %v7022 = vpack.c.b16 %v6133, %v6126
  %v7023 = vpack.c.b16 %v6134, %v6127
  %v7024 = vpack.c.b16 %v6135, %v6128
  %v7025 = vpack.c.b16 %v6143, %v6136
  %v7026 = vpack.c.b16 %v6144, %v6137
  %v7027 = vpack.c.b16 %v6145, %v6138
  %v7028 = vpack.c.b16 %v6146, %v6139
  %v7029 = vpack.c.b16 %v6147, %v6140
  %v7030 = vpack.c.b16 %v6148, %v6141
  %v7031 = vpack.c.b16 %v6149, %v6142
  %v7032 = vpack.c.b16 %v6157, %v6150
  %v7033 = vpack.c.b16 %v6158, %v6151
  %v7034 = vpack.c.b16 %v6159, %v6152
  %v7035 = vpack.c.b16 %v6160, %v6153
  %v7036 = vpack.c.b16 %v6161, %v6154
  %v7037 = vpack.c.b16 %v6162, %v6155
  %v7038 = vpack.c.b16 %v6163, %v6156
  %v7039 = vpack.c.b16 %v6171, %v6164
  %v7040 = vpack.c.b16 %v6172, %v6165
  %v7041 = vpack.c.b16 %v6173, %v6166
  %v7042 = vpack.c.b16 %v6174, %v6167
  %v7043 = vpack.c.b16 %v6175, %v6168
  %v7044 = vpack.c.b16 %v6176, %v6169
  %v7045 = vpack.c.b16 %v6177, %v6170
  %v7046 = vpack.c.b16 %v6185, %v6178
  %v7047 = vpack.c.b16 %v6186, %v6179
  %v7048 = vpack.c.b16 %v6187, %v6180
  %v7049 = vpack.c.b16 %v6188, %v6181
  %v7050 = vpack.c.b16 %v6189, %v6182
  %v7051 = vpack.c.b16 %v6190, %v6183
  %v7052 = vpack.c.b16 %v6191, %v6184
  %v7053 = vpack.c.b16 %v6199, %v6192
  %v7054 = vpack.c.b16 %v6200, %v6193
  %v7055 = vpack.c.b16 %v6201, %v6194
  %v7056 = vpack.c.b16 %v6202, %v6195
  %v7057 = vpack.c.b16 %v6203, %v6196
  %v7058 = vpack.c.b16 %v6204, %v6197
  %v7059 = vpack.c.b16 %v6205, %v6198
  %v7060 = vpack.c.b16 %v6213, %v6206
  %v7061 = vpack.c.b16 %v6214, %v6207
  %v7062 = vpack.c.b16 %v6215, %v6208
  %v7063 = vpack.c.b16 %v6216, %v6209
  %v7064 = vpack.c.b16 %v6217, %v6210
  %v7065 = vpack.c.b16 %v6218, %v6211
  %v7066 = vpack.c.b16 %v6219, %v6212
  %v7067 = vpack.c.b16 %v6227, %v6220
  %v7068 = vpack.c.b16 %v6228, %v6221
  %v7069 = vpack.c.b16 %v6229, %v6222
  %v7070 = vpack.c.b16 %v6230, %v6223
  %v7071 = vpack.c.b16 %v6231, %v6224
  %v7072 = vpack.c.b16 %v6232, %v6225
  %v7073 = vpack.c.b16 %v6233, %v6226
  %v7074 = vpack.c.b16 %v6241, %v6234
  %v7075 = vpack.c.b16 %v6242, %v6235
  %v7076 = vpack.c.b16 %v6243, %v6236
  %v7077 = vpack.c.b16 %v6244, %v6237
  %v7078 = vpack.c.b16 %v6245, %v6238
  %v7079 = vpack.c.b16 %v6246, %v6239
  %v7080 = vpack.c.b16 %v6247, %v6240
  %v7081 = vpack.c.b16 %v6255, %v6248
  %v7082 = vpack.c.b16 %v6256, %v6249
  %v7083 = vpack.c.b16 %v6257, %v6250
  %v7084 = vpack.c.b16 %v6258, %v6251
  %v7085 = vpack.c.b16 %v6259, %v6252
  %v7086 = vpack.c.b16 %v6260, %v6253
  %v7087 = vpack.c.b16 %v6261, %v6254
  %v7088 = vpack.c.b16 %v6269, %v6262
  %v7089 = vpack.c.b16 %v6270, %v6263
  %v7090 = vpack.c.b16 %v6271, %v6264
  %v7091 = vpack.c.b16 %v6272, %v6265
  %v7092 = vpack.c.b16 %v6273, %v6266
  %v7093 = vpack.c.b16 %v6274, %v6267
  %v7094 = vpack.c.b16 %v6275, %v6268
  %v7095 = vpack.c.b16 %v6283, %v6276
  %v7096 = vpack.c.b16 %v6284, %v6277
  %v7097 = vpack.c.b16 %v6285, %v6278
  %v7098 = vpack.c.b16 %v6286, %v6279
  %v7099 = vpack.c.b16 %v6287, %v6280
  %v7100 = vpack.c.b16 %v6288, %v6281
  %v7101 = vpack.c.b16 %v6289, %v6282
  %v7102 = vpack.c.b16 %v6297, %v6290
  %v7103 = vpack.c.b16 %v6298, %v6291
  %v7104 = vpack.c.b16 %v6299, %v6292
  %v7105 = vpack.c.b16 %v6300, %v6293
  %v7106 = vpack.c.b16 %v6301, %v6294
  %v7107 = vpack.c.b16 %v6302, %v6295
  %v7108 = vpack.c.b16 %v6303, %v6296
  %v7109 = vpack.c.b16 %v6311, %v6304
  %v7110 = vpack.c.b16 %v6312, %v6305
  %v7111 = vpack.c.b16 %v6313, %v6306
  %v7112 = vpack.c.b16 %v6314, %v6307
  %v7113 = vpack.c.b16 %v6315, %v6308
  %v7114 = vpack.c.b16 %v6316, %v6309
  %v7115 = vpack.c.b16 %v6317, %v6310
  %v7116 = vpack.c.b16 %v6325, %v6318
  %v7117 = vpack.c.b16 %v6326, %v6319
  %v7118 = vpack.c.b16 %v6327, %v6320
  %v7119 = vpack.c.b16 %v6328, %v6321
  %v7120 = vpack.c.b16 %v6329, %v6322
  %v7121 = vpack.c.b16 %v6330, %v6323
  %v7122 = vpack.c.b16 %v6331, %v6324
  %v7123 = vpack.c.b16 %v6339, %v6332
  %v7124 = vpack.c.b16 %v6340, %v6333
  %v7125 = vpack.c.b16 %v6341, %v6334
  %v7126 = vpack.c.b16 %v6342, %v6335
  %v7127 = vpack.c.b16 %v6343, %v6336
  %v7128 = vpack.c.b16 %v6344, %v6337
  %v7129 = vpack.c.b16 %v6345, %v6338
  %v7130 = vpack.c.b16 %v6353, %v6346
  %v7131 = vpack.c.b16 %v6354, %v6347
  %v7132 = vpack.c.b16 %v6355, %v6348
  %v7133 = vpack.c.b16 %v6356, %v6349
  %v7134 = vpack.c.b16 %v6357, %v6350
  %v7135 = vpack.c.b16 %v6358, %v6351
  %v7136 = vpack.c.b16 %v6359, %v6352
  %v7137 = vpack.c.b16 %v6367, %v6360
  %v7138 = vpack.c.b16 %v6368, %v6361
  %v7139 = vpack.c.b16 %v6369, %v6362
  %v7140 = vpack.c.b16 %v6370, %v6363
  %v7141 = vpack.c.b16 %v6371, %v6364
  %v7142 = vpack.c.b16 %v6372, %v6365
  %v7143 = vpack.c.b16 %v6373, %v6366
  %v7144 = vpack.c.b16 %v6381, %v6374
  %v7145 = vpack.c.b16 %v6382, %v6375
  %v7146 = vpack.c.b16 %v6383, %v6376
  %v7147 = vpack.c.b16 %v6384, %v6377
  %v7148 = vpack.c.b16 %v6385, %v6378
  %v7149 = vpack.c.b16 %v6386, %v6379
  %v7150 = vpack.c.b16 %v6387, %v6380
  %v7151 = vpack.c.b16 %v6395, %v6388
  %v7152 = vpack.c.b16 %v6396, %v6389
  %v7153 = vpack.c.b16 %v6397, %v6390
  %v7154 = vpack.c.b16 %v6398, %v6391
  %v7155 = vpack.c.b16 %v6399, %v6392
  %v7156 = vpack.c.b16 %v6400, %v6393
  %v7157 = vpack.c.b16 %v6401, %v6394
  %v7158 = vpack.c.b16 %v6409, %v6402
  %v7159 = vpack.c.b16 %v6410, %v6403
  %v7160 = vpack.c.b16 %v6411, %v6404
  %v7161 = vpack.c.b16 %v6412, %v6405
  %v7162 = vpack.c.b16 %v6413, %v6406
  %v7163 = vpack.c.b16 %v6414, %v6407
  %v7164 = vpack.c.b16 %v6415, %v6408
  %v7165 = vpack.c.b16 %v6423, %v6416
  %v7166 = vpack.c.b16 %v6424, %v6417
  %v7167 = vpack.c.b16 %v6425, %v6418
  %v7168 = vpack.c.b16 %v6426, %v6419
  %v7169 = vpack.c.b16 %v6427, %v6420
  %v7170 = vpack.c.b16 %v6428, %v6421
  %v7171 = vpack.c.b16 %v6429, %v6422
  %v7172 = vpack.c.b16 %v6437, %v6430
  %v7173 = vpack.c.b16 %v6438, %v6431
  %v7174 = vpack.c.b16 %v6439, %v6432
  %v7175 = vpack.c.b16 %v6440, %v6433
  %v7176 = vpack.c.b16 %v6441, %v6434
  %v7177 = vpack.c.b16 %v6442, %v6435
  %v7178 = vpack.c.b16 %v6443, %v6436
  %v7179 = vpack.c.b16 %v6451, %v6444
  %v7180 = vpack.c.b16 %v6452, %v6445
  %v7181 = vpack.c.b16 %v6453, %v6446
  %v7182 = vpack.c.b16 %v6454, %v6447
  %v7183 = vpack.c.b16 %v6455, %v6448
  %v7184 = vpack.c.b16 %v6456, %v6449
  %v7185 = vpack.c.b16 %v6457, %v6450
  %v7186 = vpack.c.b16 %v6465, %v6458
  %v7187 = vpack.c.b16 %v6466, %v6459
  %v7188 = vpack.c.b16 %v6467, %v6460
  %v7189 = vpack.c.b16 %v6468, %v6461
  %v7190 = vpack.c.b16 %v6469, %v6462
  %v7191 = vpack.c.b16 %v6470, %v6463
  %v7192 = vpack.c.b16 %v6471, %v6464
  %v7193 = vpack.c.b16 %v6479, %v6472
  %v7194 = vpack.c.b16 %v6480, %v6473
  %v7195 = vpack.c.b16 %v6481, %v6474
  %v7196 = vpack.c.b16 %v6482, %v6475
  %v7197 = vpack.c.b16 %v6483, %v6476
  %v7198 = vpack.c.b16 %v6484, %v6477
  %v7199 = vpack.c.b16 %v6485, %v6478
  %v7200 = vpack.c.b16 %v6493, %v6486
  %v7201 = vpack.c.b16 %v6494, %v6487
  %v7202 = vpack.c.b16 %v6495, %v6488
  %v7203 = vpack.c.b16 %v6496, %v6489
  %v7204 = vpack.c.b16 %v6497, %v6490
  %v7205 = vpack.c.b16 %v6498, %v6491
  %v7206 = vpack.c.b16 %v6499, %v6492
  %v7207 = vpack.c.b16 %v6507, %v6500
  %v7208 = vpack.c.b16 %v6508, %v6501
  %v7209 = vpack.c.b16 %v6509, %v6502
  %v7210 = vpack.c.b16 %v6510, %v6503
  %v7211 = vpack.c.b16 %v6511, %v6504
  %v7212 = vpack.c.b16 %v6512, %v6505
  %v7213 = vpack.c.b16 %v6513, %v6506
  %v7214 = vpack.c.b16 %v6521, %v6514
  %v7215 = vpack.c.b16 %v6522, %v6515
  %v7216 = vpack.c.b16 %v6523, %v6516
  %v7217 = vpack.c.b16 %v6524, %v6517
  %v7218 = vpack.c.b16 %v6525, %v6518
  %v7219 = vpack.c.b16 %v6526, %v6519
  %v7220 = vpack.c.b16 %v6527, %v6520
  %v7221 = vpack.c.b16 %v6535, %v6528
  %v7222 = vpack.c.b16 %v6536, %v6529
  %v7223 = vpack.c.b16 %v6537, %v6530
  %v7224 = vpack.c.b16 %v6538, %v6531
  %v7225 = vpack.c.b16 %v6539, %v6532
  %v7226 = vpack.c.b16 %v6540, %v6533
  %v7227 = vpack.c.b16 %v6541, %v6534
  %v7228 = vpack.c.b16 %v6549, %v6542
  %v7229 = vpack.c.b16 %v6550, %v6543
  %v7230 = vpack.c.b16 %v6551, %v6544
  %v7231 = vpack.c.b16 %v6552, %v6545
  %v7232 = vpack.c.b16 %v6553, %v6546
  %v7233 = vpack.c.b16 %v6554, %v6547
  %v7234 = vpack.c.b16 %v6555, %v6548
  %v7235 = vpack.c.b16 %v6563, %v6556
  %v7236 = vpack.c.b16 %v6564, %v6557
  %v7237 = vpack.c.b16 %v6565, %v6558
  %v7238 = vpack.c.b16 %v6566, %v6559
  %v7239 = vpack.c.b16 %v6567, %v6560
  %v7240 = vpack.c.b16 %v6568, %v6561
  %v7241 = vpack.c.b16 %v6569, %v6562
  %v7242 = vpack.c.b16 %v6577, %v6570
  %v7243 = vpack.c.b16 %v6578, %v6571
  %v7244 = vpack.c.b16 %v6579, %v6572
  %v7245 = vpack.c.b16 %v6580, %v6573
  %v7246 = vpack.c.b16 %v6581, %v6574
  %v7247 = vpack.c.b16 %v6582, %v6575
  %v7248 = vpack.c.b16 %v6583, %v6576
  %v7249 = vpack.c.b16 %v6591, %v6584
  %v7250 = vpack.c.b16 %v6592, %v6585
  %v7251 = vpack.c.b16 %v6593, %v6586
  %v7252 = vpack.c.b16 %v6594, %v6587
  %v7253 = vpack.c.b16 %v6595, %v6588
  %v7254 = vpack.c.b16 %v6596, %v6589
  %v7255 = vpack.c.b16 %v6597, %v6590
  %v7256 = vpack.c.b16 %v6605, %v6598
  %v7257 = vpack.c.b16 %v6606, %v6599
  %v7258 = vpack.c.b16 %v6607, %v6600
  %v7259 = vpack.c.b16 %v6608, %v6601
  %v7260 = vpack.c.b16 %v6609, %v6602
  %v7261 = vpack.c.b16 %v6610, %v6603
  %v7262 = vpack.c.b16 %v6611, %v6604
  %v7263 = vpack.c.b16 %v6619, %v6612
  %v7264 = vpack.c.b16 %v6620, %v6613
  %v7265 = vpack.c.b16 %v6621, %v6614
  %v7266 = vpack.c.b16 %v6622, %v6615
  %v7267 = vpack.c.b16 %v6623, %v6616
  %v7268 = vpack.c.b16 %v6624, %v6617
  %v7269 = vpack.c.b16 %v6625, %v6618
  %v7270 = vpack.c.b16 %v6633, %v6626
  %v7271 = vpack.c.b16 %v6634, %v6627
  %v7272 = vpack.c.b16 %v6635, %v6628
  %v7273 = vpack.c.b16 %v6636, %v6629
  %v7274 = vpack.c.b16 %v6637, %v6630
  %v7275 = vpack.c.b16 %v6638, %v6631
  %v7276 = vpack.c.b16 %v6639, %v6632
  %v7277 = vpack.c.b16 %v6647, %v6640
  %v7278 = vpack.c.b16 %v6648, %v6641
  %v7279 = vpack.c.b16 %v6649, %v6642
  %v7280 = vpack.c.b16 %v6650, %v6643
  %v7281 = vpack.c.b16 %v6651, %v6644
  %v7282 = vpack.c.b16 %v6652, %v6645
  %v7283 = vpack.c.b16 %v6653, %v6646
  %v7284 = vpack.c.b16 %v6661, %v6654
  %v7285 = vpack.c.b16 %v6662, %v6655
  %v7286 = vpack.c.b16 %v6663, %v6656
  %v7287 = vpack.c.b16 %v6664, %v6657
  %v7288 = vpack.c.b16 %v6665, %v6658
  %v7289 = vpack.c.b16 %v6666, %v6659
  %v7290 = vpack.c.b16 %v6667, %v6660
  %v7291 = vpack.c.b16 %v6675, %v6668
  %v7292 = vpack.c.b16 %v6676, %v6669
  %v7293 = vpack.c.b16 %v6677, %v6670
  %v7294 = vpack.c.b16 %v6678, %v6671
  %v7295 = vpack.c.b16 %v6679, %v6672
  %v7296 = vpack.c.b16 %v6680, %v6673
  %v7297 = vpack.c.b16 %v6681, %v6674
  %v7298 = vpack.c.b16 %v6689, %v6682
  %v7299 = vpack.c.b16 %v6690, %v6683
  %v7300 = vpack.c.b16 %v6691, %v6684
  %v7301 = vpack.c.b16 %v6692, %v6685
  %v7302 = vpack.c.b16 %v6693, %v6686
  %v7303 = vpack.c.b16 %v6694, %v6687
  %v7304 = vpack.c.b16 %v6695, %v6688
  %v7305 = vpack.c.b16 %v6703, %v6696
  %v7306 = vpack.c.b16 %v6704, %v6697
  %v7307 = vpack.c.b16 %v6705, %v6698
  %v7308 = vpack.c.b16 %v6706, %v6699
  %v7309 = vpack.c.b16 %v6707, %v6700
  %v7310 = vpack.c.b16 %v6708, %v6701
  %v7311 = vpack.c.b16 %v6709, %v6702
  %v7312 = vpack.c.b16 %v6717, %v6710
  %v7313 = vpack.c.b16 %v6718, %v6711
  %v7314 = vpack.c.b16 %v6719, %v6712
  %v7315 = vpack.c.b16 %v6720, %v6713
  %v7316 = vpack.c.b16 %v6721, %v6714
  %v7317 = vpack.c.b16 %v6722, %v6715
  %v7318 = vpack.c.b16 %v6723, %v6716
  %v7319 = vpack.c.b16 %v6731, %v6724
  %v7320 = vpack.c.b16 %v6732, %v6725
  %v7321 = vpack.c.b16 %v6733, %v6726
  %v7322 = vpack.c.b16 %v6734, %v6727
  %v7323 = vpack.c.b16 %v6735, %v6728
  %v7324 = vpack.c.b16 %v6736, %v6729
  %v7325 = vpack.c.b16 %v6737, %v6730
  %v7326 = vpack.c.b16 %v6745, %v6738
  %v7327 = vpack.c.b16 %v6746, %v6739
  %v7328 = vpack.c.b16 %v6747, %v6740
  %v7329 = vpack.c.b16 %v6748, %v6741
  %v7330 = vpack.c.b16 %v6749, %v6742
  %v7331 = vpack.c.b16 %v6750, %v6743
  %v7332 = vpack.c.b16 %v6751, %v6744
  %v7333 = vpack.c.b16 %v6759, %v6752
  %v7334 = vpack.c.b16 %v6760, %v6753
  %v7335 = vpack.c.b16 %v6761, %v6754
  %v7336 = vpack.c.b16 %v6762, %v6755
  %v7337 = vpack.c.b16 %v6763, %v6756
  %v7338 = vpack.c.b16 %v6764, %v6757
  %v7339 = vpack.c.b16 %v6765, %v6758
  %v7340 = vpack.c.b16 %v6773, %v6766
  %v7341 = vpack.c.b16 %v6774, %v6767
  %v7342 = vpack.c.b16 %v6775, %v6768
  %v7343 = vpack.c.b16 %v6776, %v6769
  %v7344 = vpack.c.b16 %v6777, %v6770
  %v7345 = vpack.c.b16 %v6778, %v6771
  %v7346 = vpack.c.b16 %v6779, %v6772
  %v7347 = vpack.c.b16 %v6787, %v6780
  %v7348 = vpack.c.b16 %v6788, %v6781
  %v7349 = vpack.c.b16 %v6789, %v6782
  %v7350 = vpack.c.b16 %v6790, %v6783
  %v7351 = vpack.c.b16 %v6791, %v6784
  %v7352 = vpack.c.b16 %v6792, %v6785
  %v7353 = vpack.c.b16 %v6793, %v6786
  %v7354 = vpack.c.b16 %v6801, %v6794
  %v7355 = vpack.c.b16 %v6802, %v6795
  %v7356 = vpack.c.b16 %v6803, %v6796
  %v7357 = vpack.c.b16 %v6804, %v6797
  %v7358 = vpack.c.b16 %v6805, %v6798
  %v7359 = vpack.c.b16 %v6806, %v6799
  %v7360 = vpack.c.b16 %v6807, %v6800
  %v7361 = vpack.c.b16 %v6815, %v6808
  %v7362 = vpack.c.b16 %v6816, %v6809
  %v7363 = vpack.c.b16 %v6817, %v6810
  %v7364 = vpack.c.b16 %v6818, %v6811
  %v7365 = vpack.c.b16 %v6819, %v6812
  %v7366 = vpack.c.b16 %v6820, %v6813
  %v7367 = vpack.c.b16 %v6821, %v6814
  %v7368 = vpack.c.b16 %v6829, %v6822
  %v7369 = vpack.c.b16 %v6830, %v6823
  %v7370 = vpack.c.b16 %v6831, %v6824
  %v7371 = vpack.c.b16 %v6832, %v6825
  %v7372 = vpack.c.b16 %v6833, %v6826
  %v7373 = vpack.c.b16 %v6834, %v6827
  %v7374 = vpack.c.b16 %v6835, %v6828
  %v7375 = vpack.c.b16 %v6843, %v6836
  %v7376 = vpack.c.b16 %v6844, %v6837
  %v7377 = vpack.c.b16 %v6845, %v6838
  %v7378 = vpack.c.b16 %v6846, %v6839
  %v7379 = vpack.c.b16 %v6847, %v6840
  %v7380 = vpack.c.b16 %v6848, %v6841
  %v7381 = vpack.c.b16 %v6849, %v6842
  %v7382 = vpack.c.b16 %v6857, %v6850
  %v7383 = vpack.c.b16 %v6858, %v6851
  %v7384 = vpack.c.b16 %v6859, %v6852
  %v7385 = vpack.c.b16 %v6860, %v6853
  %v7386 = vpack.c.b16 %v6861, %v6854
  %v7387 = vpack.c.b16 %v6862, %v6855
  %v7388 = vpack.c.b16 %v6863, %v6856
  %v7389 = vpack.c.b16 %v6871, %v6864
  %v7390 = vpack.c.b16 %v6872, %v6865
  %v7391 = vpack.c.b16 %v6873, %v6866
  %v7392 = vpack.c.b16 %v6874, %v6867
  %v7393 = vpack.c.b16 %v6875, %v6868
  %v7394 = vpack.c.b16 %v6876, %v6869
  %v7395 = vpack.c.b16 %v6877, %v6870
  %v7396 = vpack.c.b16 %v6885, %v6878
  %v7397 = vpack.c.b16 %v6886, %v6879
  %v7398 = vpack.c.b16 %v6887, %v6880
  %v7399 = vpack.c.b16 %v6888, %v6881
  %v7400 = vpack.c.b16 %v6889, %v6882
  %v7401 = vpack.c.b16 %v6890, %v6883
  %v7402 = vpack.c.b16 %v6891, %v6884
  %v7403 = vpack.c.b16 %v6899, %v6892
  %v7404 = vpack.c.b16 %v6900, %v6893
  %v7405 = vpack.c.b16 %v6901, %v6894
  %v7406 = vpack.c.b16 %v6902, %v6895
  %v7407 = vpack.c.b16 %v6903, %v6896
  %v7408 = vpack.c.b16 %v6904, %v6897
  %v7409 = vpack.c.b16 %v6905, %v6898
  %v7410 = vpack.c.b16 %v6913, %v6906
  %v7411 = vpack.c.b16 %v6914, %v6907
  %v7412 = vpack.c.b16 %v6915, %v6908
  %v7413 = vpack.c.b16 %v6916, %v6909
  %v7414 = vpack.c.b16 %v6917, %v6910
  %v7415 = vpack.c.b16 %v6918, %v6911
  %v7416 = vpack.c.b16 %v6919, %v6912
  %v7417 = vpack.c.b16 %v6927, %v6920
  %v7418 = vpack.c.b16 %v6928, %v6921
  %v7419 = vpack.c.b16 %v6929, %v6922
  %v7420 = vpack.c.b16 %v6930, %v6923
  %v7421 = vpack.c.b16 %v6931, %v6924
  %v7422 = vpack.c.b16 %v6932, %v6925
  %v7423 = vpack.c.b16 %v6933, %v6926
  %v7424 = vpack.c.b16 %v6941, %v6934
  %v7425 = vpack.c.b16 %v6942, %v6935
  %v7426 = vpack.c.b16 %v6943, %v6936
  %v7427 = vpack.c.b16 %v6944, %v6937
  %v7428 = vpack.c.b16 %v6945, %v6938
  %v7429 = vpack.c.b16 %v6946, %v6939
  %v7430 = vpack.c.b16 %v6947, %v6940
  %v7431 = vpack.c.b16 %v6955, %v6948
  %v7432 = vpack.c.b16 %v6956, %v6949
  %v7433 = vpack.c.b16 %v6957, %v6950
  %v7434 = vpack.c.b16 %v6958, %v6951
  %v7435 = vpack.c.b16 %v6959, %v6952
  %v7436 = vpack.c.b16 %v6960, %v6953
  %v7437 = vpack.c.b16 %v6961, %v6954
  %v7438 = vpack.c.b16 %v6969, %v6962
  %v7439 = vpack.c.b16 %v6970, %v6963
  %v7440 = vpack.c.b16 %v6971, %v6964
  %v7441 = vpack.c.b16 %v6972, %v6965
  %v7442 = vpack.c.b16 %v6973, %v6966
  %v7443 = vpack.c.b16 %v6974, %v6967
  %v7444 = vpack.c.b16 %v6975, %v6968
  %v7445 = vpack.c.b16 %v6983, %v6976
  %v7446 = vpack.c.b16 %v6984, %v6977
  %v7447 = vpack.c.b16 %v6985, %v6978
  %v7448 = vpack.c.b16 %v6986, %v6979
  %v7449 = vpack.c.b16 %v6987, %v6980
  %v7450 = vpack.c.b16 %v6988, %v6981
  %v7451 = vpack.c.b16 %v6989, %v6982
  %v7452 = vpack.c.b16 %v6997, %v6990
  %v7453 = vpack.c.b16 %v6998, %v6991
  %v7454 = vpack.c.b16 %v6999, %v6992
  %v7455 = vpack.c.b16 %v7000, %v6993
  %v7456 = vpack.c.b16 %v7001, %v6994
  %v7457 = vpack.c.b16 %v7002, %v6995
  %v7458 = vpack.c.b16 %v7003, %v6996
  %v7459 = vpack.c.b16 %v7011, %v7004
  %v7460 = vpack.c.b16 %v7012, %v7005
  %v7461 = vpack.c.b16 %v7013, %v7006
  %v7462 = vpack.c.b16 %v7014, %v7007
  %v7463 = vpack.c.b16 %v7015, %v7008
  %v7464 = vpack.c.b16 %v7016, %v7009
  %v7465 = vpack.c.b16 %v7017, %v7010
  %7914 = vmatpush.bf16.msra.mxu0 %v7067
  %7915 = vmatpush.bf16.msra.mxu0 %v7060
  %7916 = vmatpush.bf16.msra.mxu0 %v7053
  %7917 = vmatpush.bf16.msra.mxu0 %v7046
  %7918 = vmatpush.bf16.msra.mxu0 %v7039
  %7919 = vmatpush.bf16.msra.mxu0 %v7032
  %7920 = vmatpush.bf16.msra.mxu0 %v7025
  %7921 = vmatpush.bf16.msra.mxu0 %v7018
  %7922 = vmatmul.bf16.gmra.mxu0 %v5074
  %v7923 = vpop.f32.mrf.mxu0
  %v7924 = vadd.f32 %v5596, %v7923
  %v7925 = vpop.f32.mrf.mxu0
  %7926 = vdwg.mxu0
  %7927 = vmatpush.bf16.msra.mxu0 %v7123
  %7928 = vmatpush.bf16.msra.mxu0 %v7116
  %7929 = vmatpush.bf16.msra.mxu0 %v7109
  %7930 = vmatpush.bf16.msra.mxu0 %v7102
  %7931 = vmatpush.bf16.msra.mxu0 %v7095
  %7932 = vmatpush.bf16.msra.mxu0 %v7088
  %7933 = vmatpush.bf16.msra.mxu0 %v7081
  %7934 = vmatpush.bf16.msra.mxu0 %v7074
  %7935 = vmatmul.bf16.gmra.mxu0 %v5075
  %v7936 = vpop.f32.mrf.mxu0
  %v7937 = vadd.f32 %v7924, %v7936
  %v7938 = vpop.f32.mrf.mxu0
  %7939 = vdwg.mxu0
  %7940 = vmatpush.bf16.msra.mxu0 %v7179
  %7941 = vmatpush.bf16.msra.mxu0 %v7172
  %7942 = vmatpush.bf16.msra.mxu0 %v7165
  %7943 = vmatpush.bf16.msra.mxu0 %v7158
  %7944 = vmatpush.bf16.msra.mxu0 %v7151
  %7945 = vmatpush.bf16.msra.mxu0 %v7144
  %7946 = vmatpush.bf16.msra.mxu0 %v7137
  %7947 = vmatpush.bf16.msra.mxu0 %v7130
  %7948 = vmatmul.bf16.gmra.mxu0 %v5076
  %v7949 = vpop.f32.mrf.mxu0
  %v7950 = vadd.f32 %v7937, %v7949
  %v7951 = vpop.f32.mrf.mxu0
  %7952 = vdwg.mxu0
  %7953 = vmatpush.bf16.msra.mxu0 %v7235
  %7954 = vmatpush.bf16.msra.mxu0 %v7228
  %7955 = vmatpush.bf16.msra.mxu0 %v7221
  %7956 = vmatpush.bf16.msra.mxu0 %v7214
  %7957 = vmatpush.bf16.msra.mxu0 %v7207
  %7958 = vmatpush.bf16.msra.mxu0 %v7200
  %7959 = vmatpush.bf16.msra.mxu0 %v7193
  %7960 = vmatpush.bf16.msra.mxu0 %v7186
  %7961 = vmatmul.bf16.gmra.mxu0 %v5077
  %v7962 = vpop.f32.mrf.mxu0
  %v7963 = vadd.f32 %v7950, %v7962
  %v7964 = vpop.f32.mrf.mxu0
  %7965 = vdwg.mxu0
  %7966 = vmatpush.bf16.msra.mxu0 %v7291
  %7967 = vmatpush.bf16.msra.mxu0 %v7284
  %7968 = vmatpush.bf16.msra.mxu0 %v7277
  %7969 = vmatpush.bf16.msra.mxu0 %v7270
  %7970 = vmatpush.bf16.msra.mxu0 %v7263
  %7971 = vmatpush.bf16.msra.mxu0 %v7256
  %7972 = vmatpush.bf16.msra.mxu0 %v7249
  %7973 = vmatpush.bf16.msra.mxu0 %v7242
  %7974 = vmatmul.bf16.gmra.mxu0 %v5078
  %v7975 = vpop.f32.mrf.mxu0
  %v7976 = vadd.f32 %v7963, %v7975
  %v7977 = vpop.f32.mrf.mxu0
  %7978 = vdwg.mxu0
  %7979 = vmatpush.bf16.msra.mxu0 %v7347
  %7980 = vmatpush.bf16.msra.mxu0 %v7340
  %7981 = vmatpush.bf16.msra.mxu0 %v7333
  %7982 = vmatpush.bf16.msra.mxu0 %v7326
  %7983 = vmatpush.bf16.msra.mxu0 %v7319
  %7984 = vmatpush.bf16.msra.mxu0 %v7312
  %7985 = vmatpush.bf16.msra.mxu0 %v7305
  %7986 = vmatpush.bf16.msra.mxu0 %v7298
  %7987 = vmatmul.bf16.gmra.mxu0 %v5079
  %v7988 = vpop.f32.mrf.mxu0
  %v7989 = vadd.f32 %v7976, %v7988
  %v7990 = vpop.f32.mrf.mxu0
  %7991 = vdwg.mxu0
  %7992 = vmatpush.bf16.msra.mxu0 %v7403
  %7993 = vmatpush.bf16.msra.mxu0 %v7396
  %7994 = vmatpush.bf16.msra.mxu0 %v7389
  %7995 = vmatpush.bf16.msra.mxu0 %v7382
  %7996 = vmatpush.bf16.msra.mxu0 %v7375
  %7997 = vmatpush.bf16.msra.mxu0 %v7368
  %7998 = vmatpush.bf16.msra.mxu0 %v7361
  %7999 = vmatpush.bf16.msra.mxu0 %v7354
  %8000 = vmatmul.bf16.gmra.mxu0 %v5080
  %v8001 = vpop.f32.mrf.mxu0
  %v8002 = vadd.f32 %v7989, %v8001
  %v8003 = vpop.f32.mrf.mxu0
  %8004 = vdwg.mxu0
  %8005 = vmatpush.bf16.msra.mxu0 %v7459
  %8006 = vmatpush.bf16.msra.mxu0 %v7452
  %8007 = vmatpush.bf16.msra.mxu0 %v7445
  %8008 = vmatpush.bf16.msra.mxu0 %v7438
  %8009 = vmatpush.bf16.msra.mxu0 %v7431
  %8010 = vmatpush.bf16.msra.mxu0 %v7424
  %8011 = vmatpush.bf16.msra.mxu0 %v7417
  %8012 = vmatpush.bf16.msra.mxu0 %v7410
  %8013 = vmatmul.bf16.gmra.mxu0 %v5081
  %v8014 = vpop.f32.mrf.mxu0
  %v8015 = vadd.f32 %v8002, %v8014
  %v8016 = vpop.f32.mrf.mxu0
  %8017 = vdwg.mxu0
  %8018 = vmatpush.bf16.msra.mxu0 %v7068
  %8019 = vmatpush.bf16.msra.mxu0 %v7061
  %8020 = vmatpush.bf16.msra.mxu0 %v7054
  %8021 = vmatpush.bf16.msra.mxu0 %v7047
  %8022 = vmatpush.bf16.msra.mxu0 %v7040
  %8023 = vmatpush.bf16.msra.mxu0 %v7033
  %8024 = vmatpush.bf16.msra.mxu0 %v7026
  %8025 = vmatpush.bf16.msra.mxu0 %v7019
  %8026 = vmatmul.bf16.gmra.mxu0 %v5074
  %v8027 = vpop.f32.mrf.mxu0
  %v8028 = vadd.f32 %v5597, %v8027
  %v8029 = vpop.f32.mrf.mxu0
  %8030 = vdwg.mxu0
  %8031 = vmatpush.bf16.msra.mxu0 %v7124
  %8032 = vmatpush.bf16.msra.mxu0 %v7117
  %8033 = vmatpush.bf16.msra.mxu0 %v7110
  %8034 = vmatpush.bf16.msra.mxu0 %v7103
  %8035 = vmatpush.bf16.msra.mxu0 %v7096
  %8036 = vmatpush.bf16.msra.mxu0 %v7089
  %8037 = vmatpush.bf16.msra.mxu0 %v7082
  %8038 = vmatpush.bf16.msra.mxu0 %v7075
  %8039 = vmatmul.bf16.gmra.mxu0 %v5075
  %v8040 = vpop.f32.mrf.mxu0
  %v8041 = vadd.f32 %v8028, %v8040
  %v8042 = vpop.f32.mrf.mxu0
  %8043 = vdwg.mxu0
  %8044 = vmatpush.bf16.msra.mxu0 %v7180
  %8045 = vmatpush.bf16.msra.mxu0 %v7173
  %8046 = vmatpush.bf16.msra.mxu0 %v7166
  %8047 = vmatpush.bf16.msra.mxu0 %v7159
  %8048 = vmatpush.bf16.msra.mxu0 %v7152
  %8049 = vmatpush.bf16.msra.mxu0 %v7145
  %8050 = vmatpush.bf16.msra.mxu0 %v7138
  %8051 = vmatpush.bf16.msra.mxu0 %v7131
  %8052 = vmatmul.bf16.gmra.mxu0 %v5076
  %v8053 = vpop.f32.mrf.mxu0
  %v8054 = vadd.f32 %v8041, %v8053
  %v8055 = vpop.f32.mrf.mxu0
  %8056 = vdwg.mxu0
  %8057 = vmatpush.bf16.msra.mxu0 %v7236
  %8058 = vmatpush.bf16.msra.mxu0 %v7229
  %8059 = vmatpush.bf16.msra.mxu0 %v7222
  %8060 = vmatpush.bf16.msra.mxu0 %v7215
  %8061 = vmatpush.bf16.msra.mxu0 %v7208
  %8062 = vmatpush.bf16.msra.mxu0 %v7201
  %8063 = vmatpush.bf16.msra.mxu0 %v7194
  %8064 = vmatpush.bf16.msra.mxu0 %v7187
  %8065 = vmatmul.bf16.gmra.mxu0 %v5077
  %v8066 = vpop.f32.mrf.mxu0
  %v8067 = vadd.f32 %v8054, %v8066
  %v8068 = vpop.f32.mrf.mxu0
  %8069 = vdwg.mxu0
  %8070 = vmatpush.bf16.msra.mxu0 %v7292
  %8071 = vmatpush.bf16.msra.mxu0 %v7285
  %8072 = vmatpush.bf16.msra.mxu0 %v7278
  %8073 = vmatpush.bf16.msra.mxu0 %v7271
  %8074 = vmatpush.bf16.msra.mxu0 %v7264
  %8075 = vmatpush.bf16.msra.mxu0 %v7257
  %8076 = vmatpush.bf16.msra.mxu0 %v7250
  %8077 = vmatpush.bf16.msra.mxu0 %v7243
  %8078 = vmatmul.bf16.gmra.mxu0 %v5078
  %v8079 = vpop.f32.mrf.mxu0
  %v8080 = vadd.f32 %v8067, %v8079
  %v8081 = vpop.f32.mrf.mxu0
  %8082 = vdwg.mxu0
  %8083 = vmatpush.bf16.msra.mxu0 %v7348
  %8084 = vmatpush.bf16.msra.mxu0 %v7341
  %8085 = vmatpush.bf16.msra.mxu0 %v7334
  %8086 = vmatpush.bf16.msra.mxu0 %v7327
  %8087 = vmatpush.bf16.msra.mxu0 %v7320
  %8088 = vmatpush.bf16.msra.mxu0 %v7313
  %8089 = vmatpush.bf16.msra.mxu0 %v7306
  %8090 = vmatpush.bf16.msra.mxu0 %v7299
  %8091 = vmatmul.bf16.gmra.mxu0 %v5079
  %v8092 = vpop.f32.mrf.mxu0
  %v8093 = vadd.f32 %v8080, %v8092
  %v8094 = vpop.f32.mrf.mxu0
  %8095 = vdwg.mxu0
  %8096 = vmatpush.bf16.msra.mxu0 %v7404
  %8097 = vmatpush.bf16.msra.mxu0 %v7397
  %8098 = vmatpush.bf16.msra.mxu0 %v7390
  %8099 = vmatpush.bf16.msra.mxu0 %v7383
  %8100 = vmatpush.bf16.msra.mxu0 %v7376
  %8101 = vmatpush.bf16.msra.mxu0 %v7369
  %8102 = vmatpush.bf16.msra.mxu0 %v7362
  %8103 = vmatpush.bf16.msra.mxu0 %v7355
  %8104 = vmatmul.bf16.gmra.mxu0 %v5080
  %v8105 = vpop.f32.mrf.mxu0
  %v8106 = vadd.f32 %v8093, %v8105
  %v8107 = vpop.f32.mrf.mxu0
  %8108 = vdwg.mxu0
  %8109 = vmatpush.bf16.msra.mxu0 %v7460
  %8110 = vmatpush.bf16.msra.mxu0 %v7453
  %8111 = vmatpush.bf16.msra.mxu0 %v7446
  %8112 = vmatpush.bf16.msra.mxu0 %v7439
  %8113 = vmatpush.bf16.msra.mxu0 %v7432
  %8114 = vmatpush.bf16.msra.mxu0 %v7425
  %8115 = vmatpush.bf16.msra.mxu0 %v7418
  %8116 = vmatpush.bf16.msra.mxu0 %v7411
  %8117 = vmatmul.bf16.gmra.mxu0 %v5081
  %v8118 = vpop.f32.mrf.mxu0
  %v8119 = vadd.f32 %v8106, %v8118
  %v8120 = vpop.f32.mrf.mxu0
  %8121 = vdwg.mxu0
  %8122 = vmatpush.bf16.msra.mxu0 %v7069
  %8123 = vmatpush.bf16.msra.mxu0 %v7062
  %8124 = vmatpush.bf16.msra.mxu0 %v7055
  %8125 = vmatpush.bf16.msra.mxu0 %v7048
  %8126 = vmatpush.bf16.msra.mxu0 %v7041
  %8127 = vmatpush.bf16.msra.mxu0 %v7034
  %8128 = vmatpush.bf16.msra.mxu0 %v7027
  %8129 = vmatpush.bf16.msra.mxu0 %v7020
  %8130 = vmatmul.bf16.gmra.mxu0 %v5074
  %v8131 = vpop.f32.mrf.mxu0
  %v8132 = vadd.f32 %v5598, %v8131
  %v8133 = vpop.f32.mrf.mxu0
  %8134 = vdwg.mxu0
  %8135 = vmatpush.bf16.msra.mxu0 %v7125
  %8136 = vmatpush.bf16.msra.mxu0 %v7118
  %8137 = vmatpush.bf16.msra.mxu0 %v7111
  %8138 = vmatpush.bf16.msra.mxu0 %v7104
  %8139 = vmatpush.bf16.msra.mxu0 %v7097
  %8140 = vmatpush.bf16.msra.mxu0 %v7090
  %8141 = vmatpush.bf16.msra.mxu0 %v7083
  %8142 = vmatpush.bf16.msra.mxu0 %v7076
  %8143 = vmatmul.bf16.gmra.mxu0 %v5075
  %v8144 = vpop.f32.mrf.mxu0
  %v8145 = vadd.f32 %v8132, %v8144
  %v8146 = vpop.f32.mrf.mxu0
  %8147 = vdwg.mxu0
  %8148 = vmatpush.bf16.msra.mxu0 %v7181
  %8149 = vmatpush.bf16.msra.mxu0 %v7174
  %8150 = vmatpush.bf16.msra.mxu0 %v7167
  %8151 = vmatpush.bf16.msra.mxu0 %v7160
  %8152 = vmatpush.bf16.msra.mxu0 %v7153
  %8153 = vmatpush.bf16.msra.mxu0 %v7146
  %8154 = vmatpush.bf16.msra.mxu0 %v7139
  %8155 = vmatpush.bf16.msra.mxu0 %v7132
  %8156 = vmatmul.bf16.gmra.mxu0 %v5076
  %v8157 = vpop.f32.mrf.mxu0
  %v8158 = vadd.f32 %v8145, %v8157
  %v8159 = vpop.f32.mrf.mxu0
  %8160 = vdwg.mxu0
  %8161 = vmatpush.bf16.msra.mxu0 %v7237
  %8162 = vmatpush.bf16.msra.mxu0 %v7230
  %8163 = vmatpush.bf16.msra.mxu0 %v7223
  %8164 = vmatpush.bf16.msra.mxu0 %v7216
  %8165 = vmatpush.bf16.msra.mxu0 %v7209
  %8166 = vmatpush.bf16.msra.mxu0 %v7202
  %8167 = vmatpush.bf16.msra.mxu0 %v7195
  %8168 = vmatpush.bf16.msra.mxu0 %v7188
  %8169 = vmatmul.bf16.gmra.mxu0 %v5077
  %v8170 = vpop.f32.mrf.mxu0
  %v8171 = vadd.f32 %v8158, %v8170
  %v8172 = vpop.f32.mrf.mxu0
  %8173 = vdwg.mxu0
  %8174 = vmatpush.bf16.msra.mxu0 %v7293
  %8175 = vmatpush.bf16.msra.mxu0 %v7286
  %8176 = vmatpush.bf16.msra.mxu0 %v7279
  %8177 = vmatpush.bf16.msra.mxu0 %v7272
  %8178 = vmatpush.bf16.msra.mxu0 %v7265
  %8179 = vmatpush.bf16.msra.mxu0 %v7258
  %8180 = vmatpush.bf16.msra.mxu0 %v7251
  %8181 = vmatpush.bf16.msra.mxu0 %v7244
  %8182 = vmatmul.bf16.gmra.mxu0 %v5078
  %v8183 = vpop.f32.mrf.mxu0
  %v8184 = vadd.f32 %v8171, %v8183
  %v8185 = vpop.f32.mrf.mxu0
  %8186 = vdwg.mxu0
  %8187 = vmatpush.bf16.msra.mxu0 %v7349
  %8188 = vmatpush.bf16.msra.mxu0 %v7342
  %8189 = vmatpush.bf16.msra.mxu0 %v7335
  %8190 = vmatpush.bf16.msra.mxu0 %v7328
  %8191 = vmatpush.bf16.msra.mxu0 %v7321
  %8192 = vmatpush.bf16.msra.mxu0 %v7314
  %8193 = vmatpush.bf16.msra.mxu0 %v7307
  %8194 = vmatpush.bf16.msra.mxu0 %v7300
  %8195 = vmatmul.bf16.gmra.mxu0 %v5079
  %v8196 = vpop.f32.mrf.mxu0
  %v8197 = vadd.f32 %v8184, %v8196
  %v8198 = vpop.f32.mrf.mxu0
  %8199 = vdwg.mxu0
  %8200 = vmatpush.bf16.msra.mxu0 %v7405
  %8201 = vmatpush.bf16.msra.mxu0 %v7398
  %8202 = vmatpush.bf16.msra.mxu0 %v7391
  %8203 = vmatpush.bf16.msra.mxu0 %v7384
  %8204 = vmatpush.bf16.msra.mxu0 %v7377
  %8205 = vmatpush.bf16.msra.mxu0 %v7370
  %8206 = vmatpush.bf16.msra.mxu0 %v7363
  %8207 = vmatpush.bf16.msra.mxu0 %v7356
  %8208 = vmatmul.bf16.gmra.mxu0 %v5080
  %v8209 = vpop.f32.mrf.mxu0
  %v8210 = vadd.f32 %v8197, %v8209
  %v8211 = vpop.f32.mrf.mxu0
  %8212 = vdwg.mxu0
  %8213 = vmatpush.bf16.msra.mxu0 %v7461
  %8214 = vmatpush.bf16.msra.mxu0 %v7454
  %8215 = vmatpush.bf16.msra.mxu0 %v7447
  %8216 = vmatpush.bf16.msra.mxu0 %v7440
  %8217 = vmatpush.bf16.msra.mxu0 %v7433
  %8218 = vmatpush.bf16.msra.mxu0 %v7426
  %8219 = vmatpush.bf16.msra.mxu0 %v7419
  %8220 = vmatpush.bf16.msra.mxu0 %v7412
  %8221 = vmatmul.bf16.gmra.mxu0 %v5081
  %v8222 = vpop.f32.mrf.mxu0
  %v8223 = vadd.f32 %v8210, %v8222
  %v8224 = vpop.f32.mrf.mxu0
  %8225 = vdwg.mxu0
  %8226 = vmatpush.bf16.msra.mxu0 %v7070
  %8227 = vmatpush.bf16.msra.mxu0 %v7063
  %8228 = vmatpush.bf16.msra.mxu0 %v7056
  %8229 = vmatpush.bf16.msra.mxu0 %v7049
  %8230 = vmatpush.bf16.msra.mxu0 %v7042
  %8231 = vmatpush.bf16.msra.mxu0 %v7035
  %8232 = vmatpush.bf16.msra.mxu0 %v7028
  %8233 = vmatpush.bf16.msra.mxu0 %v7021
  %8234 = vmatmul.bf16.gmra.mxu0 %v5074
  %v8235 = vpop.f32.mrf.mxu0
  %v8236 = vadd.f32 %v5599, %v8235
  %v8237 = vpop.f32.mrf.mxu0
  %8238 = vdwg.mxu0
  %8239 = vmatpush.bf16.msra.mxu0 %v7126
  %8240 = vmatpush.bf16.msra.mxu0 %v7119
  %8241 = vmatpush.bf16.msra.mxu0 %v7112
  %8242 = vmatpush.bf16.msra.mxu0 %v7105
  %8243 = vmatpush.bf16.msra.mxu0 %v7098
  %8244 = vmatpush.bf16.msra.mxu0 %v7091
  %8245 = vmatpush.bf16.msra.mxu0 %v7084
  %8246 = vmatpush.bf16.msra.mxu0 %v7077
  %8247 = vmatmul.bf16.gmra.mxu0 %v5075
  %v8248 = vpop.f32.mrf.mxu0
  %v8249 = vadd.f32 %v8236, %v8248
  %v8250 = vpop.f32.mrf.mxu0
  %8251 = vdwg.mxu0
  %8252 = vmatpush.bf16.msra.mxu0 %v7182
  %8253 = vmatpush.bf16.msra.mxu0 %v7175
  %8254 = vmatpush.bf16.msra.mxu0 %v7168
  %8255 = vmatpush.bf16.msra.mxu0 %v7161
  %8256 = vmatpush.bf16.msra.mxu0 %v7154
  %8257 = vmatpush.bf16.msra.mxu0 %v7147
  %8258 = vmatpush.bf16.msra.mxu0 %v7140
  %8259 = vmatpush.bf16.msra.mxu0 %v7133
  %8260 = vmatmul.bf16.gmra.mxu0 %v5076
  %v8261 = vpop.f32.mrf.mxu0
  %v8262 = vadd.f32 %v8249, %v8261
  %v8263 = vpop.f32.mrf.mxu0
  %8264 = vdwg.mxu0
  %8265 = vmatpush.bf16.msra.mxu0 %v7238
  %8266 = vmatpush.bf16.msra.mxu0 %v7231
  %8267 = vmatpush.bf16.msra.mxu0 %v7224
  %8268 = vmatpush.bf16.msra.mxu0 %v7217
  %8269 = vmatpush.bf16.msra.mxu0 %v7210
  %8270 = vmatpush.bf16.msra.mxu0 %v7203
  %8271 = vmatpush.bf16.msra.mxu0 %v7196
  %8272 = vmatpush.bf16.msra.mxu0 %v7189
  %8273 = vmatmul.bf16.gmra.mxu0 %v5077
  %v8274 = vpop.f32.mrf.mxu0
  %v8275 = vadd.f32 %v8262, %v8274
  %v8276 = vpop.f32.mrf.mxu0
  %8277 = vdwg.mxu0
  %8278 = vmatpush.bf16.msra.mxu0 %v7294
  %8279 = vmatpush.bf16.msra.mxu0 %v7287
  %8280 = vmatpush.bf16.msra.mxu0 %v7280
  %8281 = vmatpush.bf16.msra.mxu0 %v7273
  %8282 = vmatpush.bf16.msra.mxu0 %v7266
  %8283 = vmatpush.bf16.msra.mxu0 %v7259
  %8284 = vmatpush.bf16.msra.mxu0 %v7252
  %8285 = vmatpush.bf16.msra.mxu0 %v7245
  %8286 = vmatmul.bf16.gmra.mxu0 %v5078
  %v8287 = vpop.f32.mrf.mxu0
  %v8288 = vadd.f32 %v8275, %v8287
  %v8289 = vpop.f32.mrf.mxu0
  %8290 = vdwg.mxu0
  %8291 = vmatpush.bf16.msra.mxu0 %v7350
  %8292 = vmatpush.bf16.msra.mxu0 %v7343
  %8293 = vmatpush.bf16.msra.mxu0 %v7336
  %8294 = vmatpush.bf16.msra.mxu0 %v7329
  %8295 = vmatpush.bf16.msra.mxu0 %v7322
  %8296 = vmatpush.bf16.msra.mxu0 %v7315
  %8297 = vmatpush.bf16.msra.mxu0 %v7308
  %8298 = vmatpush.bf16.msra.mxu0 %v7301
  %8299 = vmatmul.bf16.gmra.mxu0 %v5079
  %v8300 = vpop.f32.mrf.mxu0
  %v8301 = vadd.f32 %v8288, %v8300
  %v8302 = vpop.f32.mrf.mxu0
  %8303 = vdwg.mxu0
  %8304 = vmatpush.bf16.msra.mxu0 %v7406
  %8305 = vmatpush.bf16.msra.mxu0 %v7399
  %8306 = vmatpush.bf16.msra.mxu0 %v7392
  %8307 = vmatpush.bf16.msra.mxu0 %v7385
  %8308 = vmatpush.bf16.msra.mxu0 %v7378
  %8309 = vmatpush.bf16.msra.mxu0 %v7371
  %8310 = vmatpush.bf16.msra.mxu0 %v7364
  %8311 = vmatpush.bf16.msra.mxu0 %v7357
  %8312 = vmatmul.bf16.gmra.mxu0 %v5080
  %v8313 = vpop.f32.mrf.mxu0
  %v8314 = vadd.f32 %v8301, %v8313
  %v8315 = vpop.f32.mrf.mxu0
  %8316 = vdwg.mxu0
  %8317 = vmatpush.bf16.msra.mxu0 %v7462
  %8318 = vmatpush.bf16.msra.mxu0 %v7455
  %8319 = vmatpush.bf16.msra.mxu0 %v7448
  %8320 = vmatpush.bf16.msra.mxu0 %v7441
  %8321 = vmatpush.bf16.msra.mxu0 %v7434
  %8322 = vmatpush.bf16.msra.mxu0 %v7427
  %8323 = vmatpush.bf16.msra.mxu0 %v7420
  %8324 = vmatpush.bf16.msra.mxu0 %v7413
  %8325 = vmatmul.bf16.gmra.mxu0 %v5081
  %v8326 = vpop.f32.mrf.mxu0
  %v8327 = vadd.f32 %v8314, %v8326
  %v8328 = vpop.f32.mrf.mxu0
  %8329 = vdwg.mxu0
  %8330 = vmatpush.bf16.msra.mxu0 %v7071
  %8331 = vmatpush.bf16.msra.mxu0 %v7064
  %8332 = vmatpush.bf16.msra.mxu0 %v7057
  %8333 = vmatpush.bf16.msra.mxu0 %v7050
  %8334 = vmatpush.bf16.msra.mxu0 %v7043
  %8335 = vmatpush.bf16.msra.mxu0 %v7036
  %8336 = vmatpush.bf16.msra.mxu0 %v7029
  %8337 = vmatpush.bf16.msra.mxu0 %v7022
  %8338 = vmatmul.bf16.gmra.mxu0 %v5074
  %v8339 = vpop.f32.mrf.mxu0
  %v8340 = vadd.f32 %v5600, %v8339
  %v8341 = vpop.f32.mrf.mxu0
  %8342 = vdwg.mxu0
  %8343 = vmatpush.bf16.msra.mxu0 %v7127
  %8344 = vmatpush.bf16.msra.mxu0 %v7120
  %8345 = vmatpush.bf16.msra.mxu0 %v7113
  %8346 = vmatpush.bf16.msra.mxu0 %v7106
  %8347 = vmatpush.bf16.msra.mxu0 %v7099
  %8348 = vmatpush.bf16.msra.mxu0 %v7092
  %8349 = vmatpush.bf16.msra.mxu0 %v7085
  %8350 = vmatpush.bf16.msra.mxu0 %v7078
  %8351 = vmatmul.bf16.gmra.mxu0 %v5075
  %v8352 = vpop.f32.mrf.mxu0
  %v8353 = vadd.f32 %v8340, %v8352
  %v8354 = vpop.f32.mrf.mxu0
  %8355 = vdwg.mxu0
  %8356 = vmatpush.bf16.msra.mxu0 %v7183
  %8357 = vmatpush.bf16.msra.mxu0 %v7176
  %8358 = vmatpush.bf16.msra.mxu0 %v7169
  %8359 = vmatpush.bf16.msra.mxu0 %v7162
  %8360 = vmatpush.bf16.msra.mxu0 %v7155
  %8361 = vmatpush.bf16.msra.mxu0 %v7148
  %8362 = vmatpush.bf16.msra.mxu0 %v7141
  %8363 = vmatpush.bf16.msra.mxu0 %v7134
  %8364 = vmatmul.bf16.gmra.mxu0 %v5076
  %v8365 = vpop.f32.mrf.mxu0
  %v8366 = vadd.f32 %v8353, %v8365
  %v8367 = vpop.f32.mrf.mxu0
  %8368 = vdwg.mxu0
  %8369 = vmatpush.bf16.msra.mxu0 %v7239
  %8370 = vmatpush.bf16.msra.mxu0 %v7232
  %8371 = vmatpush.bf16.msra.mxu0 %v7225
  %8372 = vmatpush.bf16.msra.mxu0 %v7218
  %8373 = vmatpush.bf16.msra.mxu0 %v7211
  %8374 = vmatpush.bf16.msra.mxu0 %v7204
  %8375 = vmatpush.bf16.msra.mxu0 %v7197
  %8376 = vmatpush.bf16.msra.mxu0 %v7190
  %8377 = vmatmul.bf16.gmra.mxu0 %v5077
  %v8378 = vpop.f32.mrf.mxu0
  %v8379 = vadd.f32 %v8366, %v8378
  %v8380 = vpop.f32.mrf.mxu0
  %8381 = vdwg.mxu0
  %8382 = vmatpush.bf16.msra.mxu0 %v7295
  %8383 = vmatpush.bf16.msra.mxu0 %v7288
  %8384 = vmatpush.bf16.msra.mxu0 %v7281
  %8385 = vmatpush.bf16.msra.mxu0 %v7274
  %8386 = vmatpush.bf16.msra.mxu0 %v7267
  %8387 = vmatpush.bf16.msra.mxu0 %v7260
  %8388 = vmatpush.bf16.msra.mxu0 %v7253
  %8389 = vmatpush.bf16.msra.mxu0 %v7246
  %8390 = vmatmul.bf16.gmra.mxu0 %v5078
  %v8391 = vpop.f32.mrf.mxu0
  %v8392 = vadd.f32 %v8379, %v8391
  %v8393 = vpop.f32.mrf.mxu0
  %8394 = vdwg.mxu0
  %8395 = vmatpush.bf16.msra.mxu0 %v7351
  %8396 = vmatpush.bf16.msra.mxu0 %v7344
  %8397 = vmatpush.bf16.msra.mxu0 %v7337
  %8398 = vmatpush.bf16.msra.mxu0 %v7330
  %8399 = vmatpush.bf16.msra.mxu0 %v7323
  %8400 = vmatpush.bf16.msra.mxu0 %v7316
  %8401 = vmatpush.bf16.msra.mxu0 %v7309
  %8402 = vmatpush.bf16.msra.mxu0 %v7302
  %8403 = vmatmul.bf16.gmra.mxu0 %v5079
  %v8404 = vpop.f32.mrf.mxu0
  %v8405 = vadd.f32 %v8392, %v8404
  %v8406 = vpop.f32.mrf.mxu0
  %8407 = vdwg.mxu0
  %8408 = vmatpush.bf16.msra.mxu0 %v7407
  %8409 = vmatpush.bf16.msra.mxu0 %v7400
  %8410 = vmatpush.bf16.msra.mxu0 %v7393
  %8411 = vmatpush.bf16.msra.mxu0 %v7386
  %8412 = vmatpush.bf16.msra.mxu0 %v7379
  %8413 = vmatpush.bf16.msra.mxu0 %v7372
  %8414 = vmatpush.bf16.msra.mxu0 %v7365
  %8415 = vmatpush.bf16.msra.mxu0 %v7358
  %8416 = vmatmul.bf16.gmra.mxu0 %v5080
  %v8417 = vpop.f32.mrf.mxu0
  %v8418 = vadd.f32 %v8405, %v8417
  %v8419 = vpop.f32.mrf.mxu0
  %8420 = vdwg.mxu0
  %8421 = vmatpush.bf16.msra.mxu0 %v7463
  %8422 = vmatpush.bf16.msra.mxu0 %v7456
  %8423 = vmatpush.bf16.msra.mxu0 %v7449
  %8424 = vmatpush.bf16.msra.mxu0 %v7442
  %8425 = vmatpush.bf16.msra.mxu0 %v7435
  %8426 = vmatpush.bf16.msra.mxu0 %v7428
  %8427 = vmatpush.bf16.msra.mxu0 %v7421
  %8428 = vmatpush.bf16.msra.mxu0 %v7414
  %8429 = vmatmul.bf16.gmra.mxu0 %v5081
  %v8430 = vpop.f32.mrf.mxu0
  %v8431 = vadd.f32 %v8418, %v8430
  %v8432 = vpop.f32.mrf.mxu0
  %8433 = vdwg.mxu0
  %8434 = vmatpush.bf16.msra.mxu0 %v7072
  %8435 = vmatpush.bf16.msra.mxu0 %v7065
  %8436 = vmatpush.bf16.msra.mxu0 %v7058
  %8437 = vmatpush.bf16.msra.mxu0 %v7051
  %8438 = vmatpush.bf16.msra.mxu0 %v7044
  %8439 = vmatpush.bf16.msra.mxu0 %v7037
  %8440 = vmatpush.bf16.msra.mxu0 %v7030
  %8441 = vmatpush.bf16.msra.mxu0 %v7023
  %8442 = vmatmul.bf16.gmra.mxu0 %v5074
  %v8443 = vpop.f32.mrf.mxu0
  %v8444 = vadd.f32 %v5601, %v8443
  %v8445 = vpop.f32.mrf.mxu0
  %8446 = vdwg.mxu0
  %8447 = vmatpush.bf16.msra.mxu0 %v7128
  %8448 = vmatpush.bf16.msra.mxu0 %v7121
  %8449 = vmatpush.bf16.msra.mxu0 %v7114
  %8450 = vmatpush.bf16.msra.mxu0 %v7107
  %8451 = vmatpush.bf16.msra.mxu0 %v7100
  %8452 = vmatpush.bf16.msra.mxu0 %v7093
  %8453 = vmatpush.bf16.msra.mxu0 %v7086
  %8454 = vmatpush.bf16.msra.mxu0 %v7079
  %8455 = vmatmul.bf16.gmra.mxu0 %v5075
  %v8456 = vpop.f32.mrf.mxu0
  %v8457 = vadd.f32 %v8444, %v8456
  %v8458 = vpop.f32.mrf.mxu0
  %8459 = vdwg.mxu0
  %8460 = vmatpush.bf16.msra.mxu0 %v7184
  %8461 = vmatpush.bf16.msra.mxu0 %v7177
  %8462 = vmatpush.bf16.msra.mxu0 %v7170
  %8463 = vmatpush.bf16.msra.mxu0 %v7163
  %8464 = vmatpush.bf16.msra.mxu0 %v7156
  %8465 = vmatpush.bf16.msra.mxu0 %v7149
  %8466 = vmatpush.bf16.msra.mxu0 %v7142
  %8467 = vmatpush.bf16.msra.mxu0 %v7135
  %8468 = vmatmul.bf16.gmra.mxu0 %v5076
  %v8469 = vpop.f32.mrf.mxu0
  %v8470 = vadd.f32 %v8457, %v8469
  %v8471 = vpop.f32.mrf.mxu0
  %8472 = vdwg.mxu0
  %8473 = vmatpush.bf16.msra.mxu0 %v7240
  %8474 = vmatpush.bf16.msra.mxu0 %v7233
  %8475 = vmatpush.bf16.msra.mxu0 %v7226
  %8476 = vmatpush.bf16.msra.mxu0 %v7219
  %8477 = vmatpush.bf16.msra.mxu0 %v7212
  %8478 = vmatpush.bf16.msra.mxu0 %v7205
  %8479 = vmatpush.bf16.msra.mxu0 %v7198
  %8480 = vmatpush.bf16.msra.mxu0 %v7191
  %8481 = vmatmul.bf16.gmra.mxu0 %v5077
  %v8482 = vpop.f32.mrf.mxu0
  %v8483 = vadd.f32 %v8470, %v8482
  %v8484 = vpop.f32.mrf.mxu0
  %8485 = vdwg.mxu0
  %8486 = vmatpush.bf16.msra.mxu0 %v7296
  %8487 = vmatpush.bf16.msra.mxu0 %v7289
  %8488 = vmatpush.bf16.msra.mxu0 %v7282
  %8489 = vmatpush.bf16.msra.mxu0 %v7275
  %8490 = vmatpush.bf16.msra.mxu0 %v7268
  %8491 = vmatpush.bf16.msra.mxu0 %v7261
  %8492 = vmatpush.bf16.msra.mxu0 %v7254
  %8493 = vmatpush.bf16.msra.mxu0 %v7247
  %8494 = vmatmul.bf16.gmra.mxu0 %v5078
  %v8495 = vpop.f32.mrf.mxu0
  %v8496 = vadd.f32 %v8483, %v8495
  %v8497 = vpop.f32.mrf.mxu0
  %8498 = vdwg.mxu0
  %8499 = vmatpush.bf16.msra.mxu0 %v7352
  %8500 = vmatpush.bf16.msra.mxu0 %v7345
  %8501 = vmatpush.bf16.msra.mxu0 %v7338
  %8502 = vmatpush.bf16.msra.mxu0 %v7331
  %8503 = vmatpush.bf16.msra.mxu0 %v7324
  %8504 = vmatpush.bf16.msra.mxu0 %v7317
  %8505 = vmatpush.bf16.msra.mxu0 %v7310
  %8506 = vmatpush.bf16.msra.mxu0 %v7303
  %8507 = vmatmul.bf16.gmra.mxu0 %v5079
  %v8508 = vpop.f32.mrf.mxu0
  %v8509 = vadd.f32 %v8496, %v8508
  %v8510 = vpop.f32.mrf.mxu0
  %8511 = vdwg.mxu0
  %8512 = vmatpush.bf16.msra.mxu0 %v7408
  %8513 = vmatpush.bf16.msra.mxu0 %v7401
  %8514 = vmatpush.bf16.msra.mxu0 %v7394
  %8515 = vmatpush.bf16.msra.mxu0 %v7387
  %8516 = vmatpush.bf16.msra.mxu0 %v7380
  %8517 = vmatpush.bf16.msra.mxu0 %v7373
  %8518 = vmatpush.bf16.msra.mxu0 %v7366
  %8519 = vmatpush.bf16.msra.mxu0 %v7359
  %8520 = vmatmul.bf16.gmra.mxu0 %v5080
  %v8521 = vpop.f32.mrf.mxu0
  %v8522 = vadd.f32 %v8509, %v8521
  %v8523 = vpop.f32.mrf.mxu0
  %8524 = vdwg.mxu0
  %8525 = vmatpush.bf16.msra.mxu0 %v7464
  %8526 = vmatpush.bf16.msra.mxu0 %v7457
  %8527 = vmatpush.bf16.msra.mxu0 %v7450
  %8528 = vmatpush.bf16.msra.mxu0 %v7443
  %8529 = vmatpush.bf16.msra.mxu0 %v7436
  %8530 = vmatpush.bf16.msra.mxu0 %v7429
  %8531 = vmatpush.bf16.msra.mxu0 %v7422
  %8532 = vmatpush.bf16.msra.mxu0 %v7415
  %8533 = vmatmul.bf16.gmra.mxu0 %v5081
  %v8534 = vpop.f32.mrf.mxu0
  %v8535 = vadd.f32 %v8522, %v8534
  %v8536 = vpop.f32.mrf.mxu0
  %8537 = vdwg.mxu0
  %8538 = vmatpush.bf16.msra.mxu0 %v7073
  %8539 = vmatpush.bf16.msra.mxu0 %v7066
  %8540 = vmatpush.bf16.msra.mxu0 %v7059
  %8541 = vmatpush.bf16.msra.mxu0 %v7052
  %8542 = vmatpush.bf16.msra.mxu0 %v7045
  %8543 = vmatpush.bf16.msra.mxu0 %v7038
  %8544 = vmatpush.bf16.msra.mxu0 %v7031
  %8545 = vmatpush.bf16.msra.mxu0 %v7024
  %8546 = vmatmul.bf16.gmra.mxu0 %v5074
  %v8547 = vpop.f32.mrf.mxu0
  %v8548 = vadd.f32 %v5602, %v8547
  %v8549 = vpop.f32.mrf.mxu0
  %8550 = vdwg.mxu0
  %8551 = vmatpush.bf16.msra.mxu0 %v7129
  %8552 = vmatpush.bf16.msra.mxu0 %v7122
  %8553 = vmatpush.bf16.msra.mxu0 %v7115
  %8554 = vmatpush.bf16.msra.mxu0 %v7108
  %8555 = vmatpush.bf16.msra.mxu0 %v7101
  %8556 = vmatpush.bf16.msra.mxu0 %v7094
  %8557 = vmatpush.bf16.msra.mxu0 %v7087
  %8558 = vmatpush.bf16.msra.mxu0 %v7080
  %8559 = vmatmul.bf16.gmra.mxu0 %v5075
  %v8560 = vpop.f32.mrf.mxu0
  %v8561 = vadd.f32 %v8548, %v8560
  %v8562 = vpop.f32.mrf.mxu0
  %8563 = vdwg.mxu0
  %8564 = vmatpush.bf16.msra.mxu0 %v7185
  %8565 = vmatpush.bf16.msra.mxu0 %v7178
  %8566 = vmatpush.bf16.msra.mxu0 %v7171
  %8567 = vmatpush.bf16.msra.mxu0 %v7164
  %8568 = vmatpush.bf16.msra.mxu0 %v7157
  %8569 = vmatpush.bf16.msra.mxu0 %v7150
  %8570 = vmatpush.bf16.msra.mxu0 %v7143
  %8571 = vmatpush.bf16.msra.mxu0 %v7136
  %8572 = vmatmul.bf16.gmra.mxu0 %v5076
  %v8573 = vpop.f32.mrf.mxu0
  %v8574 = vadd.f32 %v8561, %v8573
  %v8575 = vpop.f32.mrf.mxu0
  %8576 = vdwg.mxu0
  %8577 = vmatpush.bf16.msra.mxu0 %v7241
  %8578 = vmatpush.bf16.msra.mxu0 %v7234
  %8579 = vmatpush.bf16.msra.mxu0 %v7227
  %8580 = vmatpush.bf16.msra.mxu0 %v7220
  %8581 = vmatpush.bf16.msra.mxu0 %v7213
  %8582 = vmatpush.bf16.msra.mxu0 %v7206
  %8583 = vmatpush.bf16.msra.mxu0 %v7199
  %8584 = vmatpush.bf16.msra.mxu0 %v7192
  %8585 = vmatmul.bf16.gmra.mxu0 %v5077
  %v8586 = vpop.f32.mrf.mxu0
  %v8587 = vadd.f32 %v8574, %v8586
  %v8588 = vpop.f32.mrf.mxu0
  %8589 = vdwg.mxu0
  %8590 = vmatpush.bf16.msra.mxu0 %v7297
  %8591 = vmatpush.bf16.msra.mxu0 %v7290
  %8592 = vmatpush.bf16.msra.mxu0 %v7283
  %8593 = vmatpush.bf16.msra.mxu0 %v7276
  %8594 = vmatpush.bf16.msra.mxu0 %v7269
  %8595 = vmatpush.bf16.msra.mxu0 %v7262
  %8596 = vmatpush.bf16.msra.mxu0 %v7255
  %8597 = vmatpush.bf16.msra.mxu0 %v7248
  %8598 = vmatmul.bf16.gmra.mxu0 %v5078
  %v8599 = vpop.f32.mrf.mxu0
  %v8600 = vadd.f32 %v8587, %v8599
  %v8601 = vpop.f32.mrf.mxu0
  %8602 = vdwg.mxu0
  %8603 = vmatpush.bf16.msra.mxu0 %v7353
  %8604 = vmatpush.bf16.msra.mxu0 %v7346
  %8605 = vmatpush.bf16.msra.mxu0 %v7339
  %8606 = vmatpush.bf16.msra.mxu0 %v7332
  %8607 = vmatpush.bf16.msra.mxu0 %v7325
  %8608 = vmatpush.bf16.msra.mxu0 %v7318
  %8609 = vmatpush.bf16.msra.mxu0 %v7311
  %8610 = vmatpush.bf16.msra.mxu0 %v7304
  %8611 = vmatmul.bf16.gmra.mxu0 %v5079
  %v8612 = vpop.f32.mrf.mxu0
  %v8613 = vadd.f32 %v8600, %v8612
  %v8614 = vpop.f32.mrf.mxu0
  %8615 = vdwg.mxu0
  %8616 = vmatpush.bf16.msra.mxu0 %v7409
  %8617 = vmatpush.bf16.msra.mxu0 %v7402
  %8618 = vmatpush.bf16.msra.mxu0 %v7395
  %8619 = vmatpush.bf16.msra.mxu0 %v7388
  %8620 = vmatpush.bf16.msra.mxu0 %v7381
  %8621 = vmatpush.bf16.msra.mxu0 %v7374
  %8622 = vmatpush.bf16.msra.mxu0 %v7367
  %8623 = vmatpush.bf16.msra.mxu0 %v7360
  %8624 = vmatmul.bf16.gmra.mxu0 %v5080
  %v8625 = vpop.f32.mrf.mxu0
  %v8626 = vadd.f32 %v8613, %v8625
  %v8627 = vpop.f32.mrf.mxu0
  %8628 = vdwg.mxu0
  %8629 = vmatpush.bf16.msra.mxu0 %v7465
  %8630 = vmatpush.bf16.msra.mxu0 %v7458
  %8631 = vmatpush.bf16.msra.mxu0 %v7451
  %8632 = vmatpush.bf16.msra.mxu0 %v7444
  %8633 = vmatpush.bf16.msra.mxu0 %v7437
  %8634 = vmatpush.bf16.msra.mxu0 %v7430
  %8635 = vmatpush.bf16.msra.mxu0 %v7423
  %8636 = vmatpush.bf16.msra.mxu0 %v7416
  %8637 = vmatmul.bf16.gmra.mxu0 %v5081
  %v8638 = vpop.f32.mrf.mxu0
  %v8639 = vadd.f32 %v8626, %v8638
  %v8640 = vpop.f32.mrf.mxu0
  %8641 = vdwg.mxu0
  %v8642 = vtanh.pop %v8015
  %v8643 = vtanh.pop %v8119
  %v8644 = vtanh.pop %v8223
  %v8645 = vtanh.pop %v8327
  %v8646 = vtanh.pop %v8431
  %v8647 = vtanh.pop %v8535
  %v8648 = vtanh.pop %v8639
  %8649 = vst [vmem:[%s17] sm:$0xff] %v8642
  %8650 = vst [vmem:[%s17 + $0x8] sm:$0xff] %v8643
  %8651 = vst [vmem:[%s17 + $0x10] sm:$0xff] %v8644
  %8652 = vst [vmem:[%s17 + $0x18] sm:$0xff] %v8645
  %8653 = vst [vmem:[%s17 + $0x20] sm:$0xff] %v8646
  %8654 = vst [vmem:[%s17 + $0x28] sm:$0xff] %v8647
  %vm8655 = vcmask 130048
  %8656 = vst.msk [vmem:[%s17 + $0x30] sm:$0xff] %vm8655, %v8648
  // Predicated region
  $region130: #{generator_forward.1} parent=0 // pred_check
    _
  $region131: #{generator_forward.1} parent=0 // pred_check_branch
    %8658 = sbr.rel (0) target = $region133
  $region132: #{generator_forward.1} parent=0 // pred_region
    _
  $region133: #{generator_forward.1} parent=0 // pred_fallthru
    _
  // Predicated region
  $region134: #{generator_forward.1} parent=0 // pred_check
    _
  $region135: #{generator_forward.1} parent=0 // pred_check_branch
    %8660 = sbr.rel (0) target = $region137
  $region136: #{generator_forward.1} parent=0 // pred_region
    _
  $region137: #{generator_forward.1} parent=0 // pred_fallthru
    _
  %8661 = vsyncmov [#allocation7]
  %s8662 = vpop.sfrf %8661
  %p8663 = scmp.eq.s32.totalorder %s8662, 0
  %p8664 = pneg %p8663
  %8666 = shalt.err (%p8664)
  %s8667 = scalar_lea.sflag [#allocation7], 1
  %8668 = vsyncmov %s8667
  %s8669 = vpop.sfrf %8668
  %p8670 = scmp.eq.s32.totalorder %s8669, 0
  %p8671 = pneg %p8670
  %8673 = shalt.err (%p8671)
  %s8674 = scalar_lea.sflag [#allocation7], 2
  %8675 = vsyncmov %s8674
  %s8676 = vpop.sfrf %8675
  %p8677 = scmp.eq.s32.totalorder %s8676, 0
  %p8678 = pneg %p8677
  %8680 = shalt.err (%p8678)
  %s8681 = scalar_lea.sflag [#allocation7], 3
  %8682 = vsyncmov %s8681
  %s8683 = vpop.sfrf %8682
  %p8684 = scmp.eq.s32.totalorder %s8683, 0
  %p8685 = pneg %p8684
  %8687 = shalt.err (%p8685)

</llo_original>
